<compile_context>
chip_gen: v7x
topology: tpu7x:2x2x1
jax: 0.10.0
libtpu: 0.0.40
codegen_flags: <defaults>
</compile_context>

<pallas_src>
import functools

import jax
import jax.numpy as jnp
from jax.experimental import pallas as pl
from jax.experimental.pallas import tpu as pltpu

EPS = 1e-5


# ----------------------------------------------------------------------------
# In-kernel helpers (pure value-land: static slices, concat, broadcast FMAs)
# ----------------------------------------------------------------------------
def _pad_hw(v, pad):
    """Zero-pad a (H, W, C) value by `pad` on each spatial side."""
    H, W, C = v.shape
    zc = jnp.zeros((H, pad, C), v.dtype)
    v = jnp.concatenate([zc, v, zc], axis=1)            # (H, W+2p, C)
    zr = jnp.zeros((pad, W + 2 * pad, C), v.dtype)
    return jnp.concatenate([zr, v, zr], axis=0)         # (H+2p, W+2p, C)


def _dwconv3x3(xpad, w, ho, wo, dilation):
    """Depthwise 3x3 conv (stride 1) on a padded (Hp, Wp, C) value; w: (3,3,C)."""
    acc = None
    for kh in range(3):
        for kw in range(3):
            tap = xpad[kh * dilation: kh * dilation + ho,
                       kw * dilation: kw * dilation + wo, :]
            term = tap * w[kh, kw]                      # broadcast over C lanes
            acc = term if acc is None else acc + term
    return acc


def _channel_mix(y, wmat, bvec, cin):
    """1x1 conv + bias as unrolled VPU multiply-accumulates over input channels.

    y: (..., C) — uses channels [0, cin); wmat: (8, Cout); bvec: (Cout,).
    (No MXU: K=4/8 would leave the systolic array ~0% utilized.)
    """
    out = None
    for ci in range(cin):
        term = y[..., ci:ci + 1] * wmat[ci]
        out = term if out is None else out + term
    return out + bvec


def _subsample2(v):
    """v[::2, ::2, :] using only static unit slices + concatenation."""
    H, W, _ = v.shape
    rows = jnp.concatenate([v[i:i + 1] for i in range(0, H, 2)], axis=0)
    return jnp.concatenate([rows[:, j:j + 1, :] for j in range(0, W, 2)], axis=1)


# ----------------------------------------------------------------------------
# Fused Block kernel: one grid step == one batch element, everything on-chip
# ----------------------------------------------------------------------------
def _block_kernel(x_ref, dw1_ref, dw23_ref, pw_ref, b_ref, o_ref, *, dilation):
    _, H, W, cin = x_ref.shape
    d = dilation

    dw1 = dw1_ref[...]        # (3, 3, cin)    raw depthwise weights, stage 1
    dw23 = dw23_ref[...]      # (2, 3, 3, 8)   raw depthwise weights, stages 2/3
    pw = pw_ref[...]          # (4, 8, 8)      BN-folded pointwise weights (+skip)
    bias = b_ref[...]         # (4, 8)         BN-folded biases (+skip)

    x = x_ref[0]                                            # (H, W, cin)

    # --- stage 1: ReLU -> pad -> depthwise(cin) -> [BN,1x1,BN folded] -------
    h1 = _pad_hw(jnp.maximum(x, 0.0), d)
    d1 = _dwconv3x3(h1, dw1, H, W, d)                       # (H, W, cin)
    y1 = _channel_mix(d1, pw[0], bias[0], cin)              # (H, W, 8)

    # --- stage 2 -------------------------------------------------------------
    h2 = _pad_hw(jnp.maximum(y1, 0.0), d)
    d2 = _dwconv3x3(h2, dw23[0], H, W, d)
    y2 = _channel_mix(d2, pw[1], bias[1], 8)                # (H, W, 8)

    # --- stage 3 (stride 2, dilation 1 per the module) -----------------------
    h3 = _pad_hw(jnp.maximum(y2, 0.0), 1)
    d3 = _subsample2(_dwconv3x3(h3, dw23[1], H, W, 1))      # (H/2, W/2, 8)
    y3 = _channel_mix(d3, pw[2], bias[2], 8)

    # --- skip path (1x1 stride-2 conv + BN) fused with the residual add -----
    xs = _subsample2(x)                                     # (H/2, W/2, cin)
    skip = _channel_mix(xs, pw[3], bias[3], cin)

    o_ref[0] = y3 + skip


# ----------------------------------------------------------------------------
# Host-side parameter folding / packing (BN fused into pointwise weights)
# ----------------------------------------------------------------------------
def _bn_scale_bias(gamma, beta, mean, var, eps=EPS):
    s = gamma / jnp.sqrt(var + eps)
    return s, beta - mean * s


def _pack_params(P):
    def stage(sp):
        s_in, b_in = _bn_scale_bias(*sp["bn_in"])
        s_out, b_out = _bn_scale_bias(*sp["bn_out"])
        w_pw = sp["pw_w"][:, :, 0, 0].T                      # (Cin, Cout)
        w_eff = (s_in[:, None] * w_pw) * s_out[None, :]
        b_eff = s_out * (b_in @ w_pw) + b_out
        dw_hwc = jnp.transpose(sp["dw_w"][:, 0], (1, 2, 0))  # (3, 3, Cin)
        return dw_hwc, w_eff, b_eff

    dw1, w1, b1 = stage(P["sep1"])
    dw2, w2, b2 = stage(P["sep2"])
    dw3, w3, b3 = stage(P["sep3"])
    s_sk, b_sk = _bn_scale_bias(*P["skipbn"])
    w_sk = P["skip_w"][:, :, 0, 0].T * s_sk[None, :]         # (Cin, Cout)

    cout = w1.shape[1]

    def pad_rows(w):
        if w.shape[0] == cout:
            return w
        return jnp.concatenate(
            [w, jnp.zeros((cout - w.shape[0], cout), w.dtype)], axis=0)

    pw_all = jnp.stack([pad_rows(w1), w2, w3, pad_rows(w_sk)])   # (4, 8, 8)
    b_all = jnp.stack([b1, b2, b3, b_sk])                        # (4, 8)
    dw23 = jnp.stack([dw2, dw3])                                 # (2, 3, 3, 8)
    return dw1, dw23, pw_all, b_all


@functools.partial(jax.jit, static_argnames=("dilation",))
def block_forward(x_nchw, P, dilation=1):
    """Pallas implementation of Block.forward (NCHW in / NCHW out)."""
    x = jnp.transpose(x_nchw, (0, 2, 3, 1)).astype(jnp.float32)  # -> NHWC
    N, H, W, cin = x.shape
    dw1, dw23, pw_all, b_all = _pack_params(P)
    cout = pw_all.shape[-1]

    out = pl.pallas_call(
        functools.partial(_block_kernel, dilation=dilation),
        out_shape=jax.ShapeDtypeStruct((N, H // 2, W // 2, cout), jnp.float32),
        grid=(N,),
        in_specs=[
            pl.BlockSpec((1, H, W, cin), lambda n: (n, 0, 0, 0)),
            pl.BlockSpec((3, 3, cin), lambda n: (0, 0, 0)),
            pl.BlockSpec((2, 3, 3, cout), lambda n: (0, 0, 0, 0)),
            pl.BlockSpec((4, cout, cout), lambda n: (0, 0, 0)),
            pl.BlockSpec((4, cout), lambda n: (0, 0)),
        ],
        out_specs=pl.BlockSpec((1, H // 2, W // 2, cout), lambda n: (n, 0, 0, 0)),
        compiler_params=pltpu.CompilerParams(
            dimension_semantics=("parallel",)),
    )(x, dw1, dw23, pw_all, b_all)

    return jnp.transpose(out, (0, 3, 1, 2))                      # -> NCHW


# ----------------------------------------------------------------------------
# Pure-JAX reference (mirrors the PyTorch module, NCHW)
# ----------------------------------------------------------------------------
def _conv_ref(x, w, stride, dilation, groups):
    return jax.lax.conv_general_dilated(
        x, w, (stride, stride), "VALID",
        rhs_dilation=(dilation, dilation),
        dimension_numbers=("NCHW", "OIHW", "NCHW"),
        feature_group_count=groups,
        precision=jax.lax.Precision.HIGHEST)


def _bn_ref(x, gamma, beta, mean, var, eps=EPS):
    inv = gamma / jnp.sqrt(var + eps)
    return (x - mean[None, :, None, None]) * inv[None, :, None, None] \
        + beta[None, :, None, None]


def _fixed_padding_ref(x, k, d):
    keff = k + (k - 1) * (d - 1)
    pt = keff - 1
    pb, pe = pt // 2, pt - pt // 2
    return jnp.pad(x, ((0, 0), (0, 0), (pb, pe), (pb, pe)))


def _sep_ref(x, sp, stride, dilation):
    x = _fixed_padding_ref(x, 3, dilation)
    x = _conv_ref(x, sp["dw_w"], stride, dilation, x.shape[1])
    x = _bn_ref(x, *sp["bn_in"])
    x = _conv_ref(x, sp["pw_w"], 1, 1, 1)
    return x


def block_ref(inp, P, *, dilation=1):
    x = jax.nn.relu(inp)
    x = _sep_ref(x, P["sep1"], 1, dilation)
    x = _bn_ref(x, *P["sep1"]["bn_out"])
    x = jax.nn.relu(x)
    x = _sep_ref(x, P["sep2"], 1, dilation)
    x = _bn_ref(x, *P["sep2"]["bn_out"])
    x = jax.nn.relu(x)
    x = _sep_ref(x, P["sep3"], 2, 1)
    x = _bn_ref(x, *P["sep3"]["bn_out"])
    skip = _conv_ref(inp, P["skip_w"], 2, 1, 1)
    skip = _bn_ref(skip, *P["skipbn"])
    return x + skip


# ----------------------------------------------------------------------------
# Deterministic parameter construction
# ----------------------------------------------------------------------------
def make_bn(key, c):
    k1, k2, k3, k4 = jax.random.split(key, 4)
    gamma = 1.0 + 0.1 * jax.random.normal(k1, (c,), jnp.float32)
    beta = 0.1 * jax.random.normal(k2, (c,), jnp.float32)
    mean = 0.1 * jax.random.normal(k3, (c,), jnp.float32)
    var = 1.0 + 0.1 * jax.random.uniform(k4, (c,), jnp.float32)
    return (gamma, beta, mean, var)


def make_sep(key, cin, cout):
    k1, k2, k3, k4 = jax.random.split(key, 4)
    dw = 0.2 * jax.random.normal(k1, (cin, 1, 3, 3), jnp.float32)   # OIHW, groups=cin
    pw = 0.2 * jax.random.normal(k2, (cout, cin, 1, 1), jnp.float32)
    return dict(dw_w=dw, pw_w=pw, bn_in=make_bn(k3, cin), bn_out=make_bn(k4, cout))


if __name__ == "__main__":
    INPLANES, PLANES, H = 4, 8, 16
    key = jax.random.PRNGKey(0)
    kx, k1, k2, k3, k4, k5 = jax.random.split(key, 6)

    x = jax.random.normal(kx, (2, INPLANES, H, H), jnp.float32)

    P = {
        "sep1": make_sep(k1, INPLANES, PLANES),
        "sep2": make_sep(k2, PLANES, PLANES),
        "sep3": make_sep(k3, PLANES, PLANES),
        "skip_w": 0.2 * jax.random.normal(k4, (PLANES, INPLANES, 1, 1), jnp.float32),
        "skipbn": make_bn(k5, PLANES),
    }

    out = jax.block_until_ready(block_forward(x, P, dilation=1))
    ref = block_ref(x, P, dilation=1)

    assert out.shape == ref.shape == (2, PLANES, H // 2, H // 2), out.shape
    max_err = float(jnp.max(jnp.abs(out - ref)))
    assert max_err < 5e-2, f"max abs err {max_err}"
    print("KERNEL_OK")
</pallas_src>

<mosaic_0001>
module attributes {stable_mosaic.version = 11 : i64} {
  func.func @_block_kernel(%arg0: i32, %arg1: memref<1x16x16x4xf32, #tpu.memory_space<vmem>>, %arg2: memref<3x3x4xf32, #tpu.memory_space<vmem>>, %arg3: memref<2x3x3x8xf32, #tpu.memory_space<vmem>>, %arg4: memref<4x8x8xf32, #tpu.memory_space<vmem>>, %arg5: memref<4x8xf32, #tpu.memory_space<vmem>>, %arg6: memref<1x8x8x8xf32, #tpu.memory_space<vmem>>) attributes {dimension_semantics = [#tpu.dimension_semantics<parallel>], iteration_bounds = array<i64: 2>, scalar_prefetch = 0 : i64, scratch_operands = 0 : i64, tpu.core_type = #tpu.core_type<tc>, window_params = [{transform_indices = @transform_0, window_bounds = array<i64: 1, 16, 16, 4>}, {pipeline_mode = #tpu.pipeline_mode<synchronous>, transform_indices = @transform_1, window_bounds = array<i64: 3, 3, 4>}, {pipeline_mode = #tpu.pipeline_mode<synchronous>, transform_indices = @transform_2, window_bounds = array<i64: 2, 3, 3, 8>}, {pipeline_mode = #tpu.pipeline_mode<synchronous>, transform_indices = @transform_3, window_bounds = array<i64: 4, 8, 8>}, {pipeline_mode = #tpu.pipeline_mode<synchronous>, transform_indices = @transform_4, window_bounds = array<i64: 4, 8>}, {transform_indices = @transform_5, window_bounds = array<i64: 1, 8, 8, 8>}]} {
    %c0 = arith.constant 0 : index
    %c0_0 = arith.constant 0 : index
    %c0_1 = arith.constant 0 : index
    %0 = vector.load %arg2[%c0, %c0_0, %c0_1] : memref<3x3x4xf32, #tpu.memory_space<vmem>>, vector<3x3x4xf32>
    %c0_2 = arith.constant 0 : index
    %c0_3 = arith.constant 0 : index
    %c0_4 = arith.constant 0 : index
    %c0_5 = arith.constant 0 : index
    %1 = vector.load %arg3[%c0_2, %c0_3, %c0_4, %c0_5] : memref<2x3x3x8xf32, #tpu.memory_space<vmem>>, vector<2x3x3x8xf32>
    %c0_6 = arith.constant 0 : index
    %c0_7 = arith.constant 0 : index
    %c0_8 = arith.constant 0 : index
    %2 = vector.load %arg4[%c0_6, %c0_7, %c0_8] : memref<4x8x8xf32, #tpu.memory_space<vmem>>, vector<4x8x8xf32>
    %c0_9 = arith.constant 0 : index
    %c0_10 = arith.constant 0 : index
    %3 = vector.load %arg5[%c0_9, %c0_10] : memref<4x8xf32, #tpu.memory_space<vmem>>, vector<4x8xf32>
    %c0_11 = arith.constant 0 : index
    %c0_12 = arith.constant 0 : index
    %c0_13 = arith.constant 0 : index
    %c0_14 = arith.constant 0 : index
    %4 = vector.load %arg1[%c0_11, %c0_12, %c0_13, %c0_14] : memref<1x16x16x4xf32, #tpu.memory_space<vmem>>, vector<1x16x16x4xf32>
    %5 = vector.shape_cast %4 : vector<1x16x16x4xf32> to vector<16x16x4xf32>
    %cst = arith.constant 0.000000e+00 : f32
    %6 = vector.broadcast %cst : f32 to vector<16x16x4xf32>
    %7 = arith.maximumf %5, %6 : vector<16x16x4xf32>
    %cst_15 = arith.constant 0.000000e+00 : f32
    %8 = vector.broadcast %cst_15 : f32 to vector<16x1x4xf32>
    %9 = tpu.concatenate %8, %7, %8 in 1 : vector<16x1x4xf32>, vector<16x16x4xf32>, vector<16x1x4xf32> -> vector<16x18x4xf32>
    %cst_16 = arith.constant 0.000000e+00 : f32
    %10 = vector.broadcast %cst_16 : f32 to vector<1x18x4xf32>
    %11 = tpu.concatenate %10, %9, %10 in 0 : vector<1x18x4xf32>, vector<16x18x4xf32>, vector<1x18x4xf32> -> vector<18x18x4xf32>
    %12 = vector.extract_strided_slice %11 {offsets = [0, 0, 0], sizes = [16, 16, 4], strides = [1, 1, 1]} : vector<18x18x4xf32> to vector<16x16x4xf32>
    %13 = vector.extract_strided_slice %0 {offsets = [0, 0, 0], sizes = [1, 1, 4], strides = [1, 1, 1]} : vector<3x3x4xf32> to vector<1x1x4xf32>
    %14 = vector.shape_cast %13 : vector<1x1x4xf32> to vector<4xf32>
    %15 = vector.shape_cast %14 : vector<4xf32> to vector<1x1x4xf32>
    %16 = vector.broadcast %15 : vector<1x1x4xf32> to vector<16x16x4xf32>
    %17 = arith.mulf %12, %16 : vector<16x16x4xf32>
    %18 = vector.extract_strided_slice %11 {offsets = [0, 1, 0], sizes = [16, 16, 4], strides = [1, 1, 1]} : vector<18x18x4xf32> to vector<16x16x4xf32>
    %19 = vector.extract_strided_slice %0 {offsets = [0, 1, 0], sizes = [1, 1, 4], strides = [1, 1, 1]} : vector<3x3x4xf32> to vector<1x1x4xf32>
    %20 = vector.shape_cast %19 : vector<1x1x4xf32> to vector<4xf32>
    %21 = vector.shape_cast %20 : vector<4xf32> to vector<1x1x4xf32>
    %22 = vector.broadcast %21 : vector<1x1x4xf32> to vector<16x16x4xf32>
    %23 = arith.mulf %18, %22 : vector<16x16x4xf32>
    %24 = arith.addf %17, %23 : vector<16x16x4xf32>
    %25 = vector.extract_strided_slice %11 {offsets = [0, 2, 0], sizes = [16, 16, 4], strides = [1, 1, 1]} : vector<18x18x4xf32> to vector<16x16x4xf32>
    %26 = vector.extract_strided_slice %0 {offsets = [0, 2, 0], sizes = [1, 1, 4], strides = [1, 1, 1]} : vector<3x3x4xf32> to vector<1x1x4xf32>
    %27 = vector.shape_cast %26 : vector<1x1x4xf32> to vector<4xf32>
    %28 = vector.shape_cast %27 : vector<4xf32> to vector<1x1x4xf32>
    %29 = vector.broadcast %28 : vector<1x1x4xf32> to vector<16x16x4xf32>
    %30 = arith.mulf %25, %29 : vector<16x16x4xf32>
    %31 = arith.addf %24, %30 : vector<16x16x4xf32>
    %32 = vector.extract_strided_slice %11 {offsets = [1, 0, 0], sizes = [16, 16, 4], strides = [1, 1, 1]} : vector<18x18x4xf32> to vector<16x16x4xf32>
    %33 = vector.extract_strided_slice %0 {offsets = [1, 0, 0], sizes = [1, 1, 4], strides = [1, 1, 1]} : vector<3x3x4xf32> to vector<1x1x4xf32>
    %34 = vector.shape_cast %33 : vector<1x1x4xf32> to vector<4xf32>
    %35 = vector.shape_cast %34 : vector<4xf32> to vector<1x1x4xf32>
    %36 = vector.broadcast %35 : vector<1x1x4xf32> to vector<16x16x4xf32>
    %37 = arith.mulf %32, %36 : vector<16x16x4xf32>
    %38 = arith.addf %31, %37 : vector<16x16x4xf32>
    %39 = vector.extract_strided_slice %11 {offsets = [1, 1, 0], sizes = [16, 16, 4], strides = [1, 1, 1]} : vector<18x18x4xf32> to vector<16x16x4xf32>
    %40 = vector.extract_strided_slice %0 {offsets = [1, 1, 0], sizes = [1, 1, 4], strides = [1, 1, 1]} : vector<3x3x4xf32> to vector<1x1x4xf32>
    %41 = vector.shape_cast %40 : vector<1x1x4xf32> to vector<4xf32>
    %42 = vector.shape_cast %41 : vector<4xf32> to vector<1x1x4xf32>
    %43 = vector.broadcast %42 : vector<1x1x4xf32> to vector<16x16x4xf32>
    %44 = arith.mulf %39, %43 : vector<16x16x4xf32>
    %45 = arith.addf %38, %44 : vector<16x16x4xf32>
    %46 = vector.extract_strided_slice %11 {offsets = [1, 2, 0], sizes = [16, 16, 4], strides = [1, 1, 1]} : vector<18x18x4xf32> to vector<16x16x4xf32>
    %47 = vector.extract_strided_slice %0 {offsets = [1, 2, 0], sizes = [1, 1, 4], strides = [1, 1, 1]} : vector<3x3x4xf32> to vector<1x1x4xf32>
    %48 = vector.shape_cast %47 : vector<1x1x4xf32> to vector<4xf32>
    %49 = vector.shape_cast %48 : vector<4xf32> to vector<1x1x4xf32>
    %50 = vector.broadcast %49 : vector<1x1x4xf32> to vector<16x16x4xf32>
    %51 = arith.mulf %46, %50 : vector<16x16x4xf32>
    %52 = arith.addf %45, %51 : vector<16x16x4xf32>
    %53 = vector.extract_strided_slice %11 {offsets = [2, 0, 0], sizes = [16, 16, 4], strides = [1, 1, 1]} : vector<18x18x4xf32> to vector<16x16x4xf32>
    %54 = vector.extract_strided_slice %0 {offsets = [2, 0, 0], sizes = [1, 1, 4], strides = [1, 1, 1]} : vector<3x3x4xf32> to vector<1x1x4xf32>
    %55 = vector.shape_cast %54 : vector<1x1x4xf32> to vector<4xf32>
    %56 = vector.shape_cast %55 : vector<4xf32> to vector<1x1x4xf32>
    %57 = vector.broadcast %56 : vector<1x1x4xf32> to vector<16x16x4xf32>
    %58 = arith.mulf %53, %57 : vector<16x16x4xf32>
    %59 = arith.addf %52, %58 : vector<16x16x4xf32>
    %60 = vector.extract_strided_slice %11 {offsets = [2, 1, 0], sizes = [16, 16, 4], strides = [1, 1, 1]} : vector<18x18x4xf32> to vector<16x16x4xf32>
    %61 = vector.extract_strided_slice %0 {offsets = [2, 1, 0], sizes = [1, 1, 4], strides = [1, 1, 1]} : vector<3x3x4xf32> to vector<1x1x4xf32>
    %62 = vector.shape_cast %61 : vector<1x1x4xf32> to vector<4xf32>
    %63 = vector.shape_cast %62 : vector<4xf32> to vector<1x1x4xf32>
    %64 = vector.broadcast %63 : vector<1x1x4xf32> to vector<16x16x4xf32>
    %65 = arith.mulf %60, %64 : vector<16x16x4xf32>
    %66 = arith.addf %59, %65 : vector<16x16x4xf32>
    %67 = vector.extract_strided_slice %11 {offsets = [2, 2, 0], sizes = [16, 16, 4], strides = [1, 1, 1]} : vector<18x18x4xf32> to vector<16x16x4xf32>
    %68 = vector.extract_strided_slice %0 {offsets = [2, 2, 0], sizes = [1, 1, 4], strides = [1, 1, 1]} : vector<3x3x4xf32> to vector<1x1x4xf32>
    %69 = vector.shape_cast %68 : vector<1x1x4xf32> to vector<4xf32>
    %70 = vector.shape_cast %69 : vector<4xf32> to vector<1x1x4xf32>
    %71 = vector.broadcast %70 : vector<1x1x4xf32> to vector<16x16x4xf32>
    %72 = arith.mulf %67, %71 : vector<16x16x4xf32>
    %73 = arith.addf %66, %72 : vector<16x16x4xf32>
    %74 = vector.extract_strided_slice %2 {offsets = [0, 0, 0], sizes = [1, 8, 8], strides = [1, 1, 1]} : vector<4x8x8xf32> to vector<1x8x8xf32>
    %75 = vector.shape_cast %74 : vector<1x8x8xf32> to vector<8x8xf32>
    %76 = vector.extract_strided_slice %3 {offsets = [0, 0], sizes = [1, 8], strides = [1, 1]} : vector<4x8xf32> to vector<1x8xf32>
    %77 = vector.shape_cast %76 : vector<1x8xf32> to vector<8xf32>
    %78 = vector.extract_strided_slice %73 {offsets = [0, 0, 0], sizes = [16, 16, 1], strides = [1, 1, 1]} : vector<16x16x4xf32> to vector<16x16x1xf32>
    %79 = vector.extract_strided_slice %75 {offsets = [0, 0], sizes = [1, 8], strides = [1, 1]} : vector<8x8xf32> to vector<1x8xf32>
    %80 = vector.shape_cast %79 : vector<1x8xf32> to vector<8xf32>
    %81 = vector.shape_cast %80 : vector<8xf32> to vector<1x1x8xf32>
    %82 = vector.broadcast %78 : vector<16x16x1xf32> to vector<16x16x8xf32>
    %83 = vector.broadcast %81 : vector<1x1x8xf32> to vector<16x16x8xf32>
    %84 = arith.mulf %82, %83 : vector<16x16x8xf32>
    %85 = vector.extract_strided_slice %73 {offsets = [0, 0, 1], sizes = [16, 16, 1], strides = [1, 1, 1]} : vector<16x16x4xf32> to vector<16x16x1xf32>
    %86 = vector.extract_strided_slice %75 {offsets = [1, 0], sizes = [1, 8], strides = [1, 1]} : vector<8x8xf32> to vector<1x8xf32>
    %87 = vector.shape_cast %86 : vector<1x8xf32> to vector<8xf32>
    %88 = vector.shape_cast %87 : vector<8xf32> to vector<1x1x8xf32>
    %89 = vector.broadcast %85 : vector<16x16x1xf32> to vector<16x16x8xf32>
    %90 = vector.broadcast %88 : vector<1x1x8xf32> to vector<16x16x8xf32>
    %91 = arith.mulf %89, %90 : vector<16x16x8xf32>
    %92 = arith.addf %84, %91 : vector<16x16x8xf32>
    %93 = vector.extract_strided_slice %73 {offsets = [0, 0, 2], sizes = [16, 16, 1], strides = [1, 1, 1]} : vector<16x16x4xf32> to vector<16x16x1xf32>
    %94 = vector.extract_strided_slice %75 {offsets = [2, 0], sizes = [1, 8], strides = [1, 1]} : vector<8x8xf32> to vector<1x8xf32>
    %95 = vector.shape_cast %94 : vector<1x8xf32> to vector<8xf32>
    %96 = vector.shape_cast %95 : vector<8xf32> to vector<1x1x8xf32>
    %97 = vector.broadcast %93 : vector<16x16x1xf32> to vector<16x16x8xf32>
    %98 = vector.broadcast %96 : vector<1x1x8xf32> to vector<16x16x8xf32>
    %99 = arith.mulf %97, %98 : vector<16x16x8xf32>
    %100 = arith.addf %92, %99 : vector<16x16x8xf32>
    %101 = vector.extract_strided_slice %73 {offsets = [0, 0, 3], sizes = [16, 16, 1], strides = [1, 1, 1]} : vector<16x16x4xf32> to vector<16x16x1xf32>
    %102 = vector.extract_strided_slice %75 {offsets = [3, 0], sizes = [1, 8], strides = [1, 1]} : vector<8x8xf32> to vector<1x8xf32>
    %103 = vector.shape_cast %102 : vector<1x8xf32> to vector<8xf32>
    %104 = vector.shape_cast %103 : vector<8xf32> to vector<1x1x8xf32>
    %105 = vector.broadcast %101 : vector<16x16x1xf32> to vector<16x16x8xf32>
    %106 = vector.broadcast %104 : vector<1x1x8xf32> to vector<16x16x8xf32>
    %107 = arith.mulf %105, %106 : vector<16x16x8xf32>
    %108 = arith.addf %100, %107 : vector<16x16x8xf32>
    %109 = vector.shape_cast %77 : vector<8xf32> to vector<1x1x8xf32>
    %110 = vector.broadcast %109 : vector<1x1x8xf32> to vector<16x16x8xf32>
    %111 = arith.addf %108, %110 : vector<16x16x8xf32>
    %cst_17 = arith.constant 0.000000e+00 : f32
    %112 = vector.broadcast %cst_17 : f32 to vector<16x16x8xf32>
    %113 = arith.maximumf %111, %112 : vector<16x16x8xf32>
    %cst_18 = arith.constant 0.000000e+00 : f32
    %114 = vector.broadcast %cst_18 : f32 to vector<16x1x8xf32>
    %115 = tpu.concatenate %114, %113, %114 in 1 : vector<16x1x8xf32>, vector<16x16x8xf32>, vector<16x1x8xf32> -> vector<16x18x8xf32>
    %cst_19 = arith.constant 0.000000e+00 : f32
    %116 = vector.broadcast %cst_19 : f32 to vector<1x18x8xf32>
    %117 = tpu.concatenate %116, %115, %116 in 0 : vector<1x18x8xf32>, vector<16x18x8xf32>, vector<1x18x8xf32> -> vector<18x18x8xf32>
    %118 = vector.extract_strided_slice %1 {offsets = [0, 0, 0, 0], sizes = [1, 3, 3, 8], strides = [1, 1, 1, 1]} : vector<2x3x3x8xf32> to vector<1x3x3x8xf32>
    %119 = vector.shape_cast %118 : vector<1x3x3x8xf32> to vector<3x3x8xf32>
    %120 = vector.extract_strided_slice %117 {offsets = [0, 0, 0], sizes = [16, 16, 8], strides = [1, 1, 1]} : vector<18x18x8xf32> to vector<16x16x8xf32>
    %121 = vector.extract_strided_slice %119 {offsets = [0, 0, 0], sizes = [1, 1, 8], strides = [1, 1, 1]} : vector<3x3x8xf32> to vector<1x1x8xf32>
    %122 = vector.shape_cast %121 : vector<1x1x8xf32> to vector<8xf32>
    %123 = vector.shape_cast %122 : vector<8xf32> to vector<1x1x8xf32>
    %124 = vector.broadcast %123 : vector<1x1x8xf32> to vector<16x16x8xf32>
    %125 = arith.mulf %120, %124 : vector<16x16x8xf32>
    %126 = vector.extract_strided_slice %117 {offsets = [0, 1, 0], sizes = [16, 16, 8], strides = [1, 1, 1]} : vector<18x18x8xf32> to vector<16x16x8xf32>
    %127 = vector.extract_strided_slice %119 {offsets = [0, 1, 0], sizes = [1, 1, 8], strides = [1, 1, 1]} : vector<3x3x8xf32> to vector<1x1x8xf32>
    %128 = vector.shape_cast %127 : vector<1x1x8xf32> to vector<8xf32>
    %129 = vector.shape_cast %128 : vector<8xf32> to vector<1x1x8xf32>
    %130 = vector.broadcast %129 : vector<1x1x8xf32> to vector<16x16x8xf32>
    %131 = arith.mulf %126, %130 : vector<16x16x8xf32>
    %132 = arith.addf %125, %131 : vector<16x16x8xf32>
    %133 = vector.extract_strided_slice %117 {offsets = [0, 2, 0], sizes = [16, 16, 8], strides = [1, 1, 1]} : vector<18x18x8xf32> to vector<16x16x8xf32>
    %134 = vector.extract_strided_slice %119 {offsets = [0, 2, 0], sizes = [1, 1, 8], strides = [1, 1, 1]} : vector<3x3x8xf32> to vector<1x1x8xf32>
    %135 = vector.shape_cast %134 : vector<1x1x8xf32> to vector<8xf32>
    %136 = vector.shape_cast %135 : vector<8xf32> to vector<1x1x8xf32>
    %137 = vector.broadcast %136 : vector<1x1x8xf32> to vector<16x16x8xf32>
    %138 = arith.mulf %133, %137 : vector<16x16x8xf32>
    %139 = arith.addf %132, %138 : vector<16x16x8xf32>
    %140 = vector.extract_strided_slice %117 {offsets = [1, 0, 0], sizes = [16, 16, 8], strides = [1, 1, 1]} : vector<18x18x8xf32> to vector<16x16x8xf32>
    %141 = vector.extract_strided_slice %119 {offsets = [1, 0, 0], sizes = [1, 1, 8], strides = [1, 1, 1]} : vector<3x3x8xf32> to vector<1x1x8xf32>
    %142 = vector.shape_cast %141 : vector<1x1x8xf32> to vector<8xf32>
    %143 = vector.shape_cast %142 : vector<8xf32> to vector<1x1x8xf32>
    %144 = vector.broadcast %143 : vector<1x1x8xf32> to vector<16x16x8xf32>
    %145 = arith.mulf %140, %144 : vector<16x16x8xf32>
    %146 = arith.addf %139, %145 : vector<16x16x8xf32>
    %147 = vector.extract_strided_slice %117 {offsets = [1, 1, 0], sizes = [16, 16, 8], strides = [1, 1, 1]} : vector<18x18x8xf32> to vector<16x16x8xf32>
    %148 = vector.extract_strided_slice %119 {offsets = [1, 1, 0], sizes = [1, 1, 8], strides = [1, 1, 1]} : vector<3x3x8xf32> to vector<1x1x8xf32>
    %149 = vector.shape_cast %148 : vector<1x1x8xf32> to vector<8xf32>
    %150 = vector.shape_cast %149 : vector<8xf32> to vector<1x1x8xf32>
    %151 = vector.broadcast %150 : vector<1x1x8xf32> to vector<16x16x8xf32>
    %152 = arith.mulf %147, %151 : vector<16x16x8xf32>
    %153 = arith.addf %146, %152 : vector<16x16x8xf32>
    %154 = vector.extract_strided_slice %117 {offsets = [1, 2, 0], sizes = [16, 16, 8], strides = [1, 1, 1]} : vector<18x18x8xf32> to vector<16x16x8xf32>
    %155 = vector.extract_strided_slice %119 {offsets = [1, 2, 0], sizes = [1, 1, 8], strides = [1, 1, 1]} : vector<3x3x8xf32> to vector<1x1x8xf32>
    %156 = vector.shape_cast %155 : vector<1x1x8xf32> to vector<8xf32>
    %157 = vector.shape_cast %156 : vector<8xf32> to vector<1x1x8xf32>
    %158 = vector.broadcast %157 : vector<1x1x8xf32> to vector<16x16x8xf32>
    %159 = arith.mulf %154, %158 : vector<16x16x8xf32>
    %160 = arith.addf %153, %159 : vector<16x16x8xf32>
    %161 = vector.extract_strided_slice %117 {offsets = [2, 0, 0], sizes = [16, 16, 8], strides = [1, 1, 1]} : vector<18x18x8xf32> to vector<16x16x8xf32>
    %162 = vector.extract_strided_slice %119 {offsets = [2, 0, 0], sizes = [1, 1, 8], strides = [1, 1, 1]} : vector<3x3x8xf32> to vector<1x1x8xf32>
    %163 = vector.shape_cast %162 : vector<1x1x8xf32> to vector<8xf32>
    %164 = vector.shape_cast %163 : vector<8xf32> to vector<1x1x8xf32>
    %165 = vector.broadcast %164 : vector<1x1x8xf32> to vector<16x16x8xf32>
    %166 = arith.mulf %161, %165 : vector<16x16x8xf32>
    %167 = arith.addf %160, %166 : vector<16x16x8xf32>
    %168 = vector.extract_strided_slice %117 {offsets = [2, 1, 0], sizes = [16, 16, 8], strides = [1, 1, 1]} : vector<18x18x8xf32> to vector<16x16x8xf32>
    %169 = vector.extract_strided_slice %119 {offsets = [2, 1, 0], sizes = [1, 1, 8], strides = [1, 1, 1]} : vector<3x3x8xf32> to vector<1x1x8xf32>
    %170 = vector.shape_cast %169 : vector<1x1x8xf32> to vector<8xf32>
    %171 = vector.shape_cast %170 : vector<8xf32> to vector<1x1x8xf32>
    %172 = vector.broadcast %171 : vector<1x1x8xf32> to vector<16x16x8xf32>
    %173 = arith.mulf %168, %172 : vector<16x16x8xf32>
    %174 = arith.addf %167, %173 : vector<16x16x8xf32>
    %175 = vector.extract_strided_slice %117 {offsets = [2, 2, 0], sizes = [16, 16, 8], strides = [1, 1, 1]} : vector<18x18x8xf32> to vector<16x16x8xf32>
    %176 = vector.extract_strided_slice %119 {offsets = [2, 2, 0], sizes = [1, 1, 8], strides = [1, 1, 1]} : vector<3x3x8xf32> to vector<1x1x8xf32>
    %177 = vector.shape_cast %176 : vector<1x1x8xf32> to vector<8xf32>
    %178 = vector.shape_cast %177 : vector<8xf32> to vector<1x1x8xf32>
    %179 = vector.broadcast %178 : vector<1x1x8xf32> to vector<16x16x8xf32>
    %180 = arith.mulf %175, %179 : vector<16x16x8xf32>
    %181 = arith.addf %174, %180 : vector<16x16x8xf32>
    %182 = vector.extract_strided_slice %2 {offsets = [1, 0, 0], sizes = [1, 8, 8], strides = [1, 1, 1]} : vector<4x8x8xf32> to vector<1x8x8xf32>
    %183 = vector.shape_cast %182 : vector<1x8x8xf32> to vector<8x8xf32>
    %184 = vector.extract_strided_slice %3 {offsets = [1, 0], sizes = [1, 8], strides = [1, 1]} : vector<4x8xf32> to vector<1x8xf32>
    %185 = vector.shape_cast %184 : vector<1x8xf32> to vector<8xf32>
    %186 = vector.extract_strided_slice %181 {offsets = [0, 0, 0], sizes = [16, 16, 1], strides = [1, 1, 1]} : vector<16x16x8xf32> to vector<16x16x1xf32>
    %187 = vector.extract_strided_slice %183 {offsets = [0, 0], sizes = [1, 8], strides = [1, 1]} : vector<8x8xf32> to vector<1x8xf32>
    %188 = vector.shape_cast %187 : vector<1x8xf32> to vector<8xf32>
    %189 = vector.shape_cast %188 : vector<8xf32> to vector<1x1x8xf32>
    %190 = vector.broadcast %186 : vector<16x16x1xf32> to vector<16x16x8xf32>
    %191 = vector.broadcast %189 : vector<1x1x8xf32> to vector<16x16x8xf32>
    %192 = arith.mulf %190, %191 : vector<16x16x8xf32>
    %193 = vector.extract_strided_slice %181 {offsets = [0, 0, 1], sizes = [16, 16, 1], strides = [1, 1, 1]} : vector<16x16x8xf32> to vector<16x16x1xf32>
    %194 = vector.extract_strided_slice %183 {offsets = [1, 0], sizes = [1, 8], strides = [1, 1]} : vector<8x8xf32> to vector<1x8xf32>
    %195 = vector.shape_cast %194 : vector<1x8xf32> to vector<8xf32>
    %196 = vector.shape_cast %195 : vector<8xf32> to vector<1x1x8xf32>
    %197 = vector.broadcast %193 : vector<16x16x1xf32> to vector<16x16x8xf32>
    %198 = vector.broadcast %196 : vector<1x1x8xf32> to vector<16x16x8xf32>
    %199 = arith.mulf %197, %198 : vector<16x16x8xf32>
    %200 = arith.addf %192, %199 : vector<16x16x8xf32>
    %201 = vector.extract_strided_slice %181 {offsets = [0, 0, 2], sizes = [16, 16, 1], strides = [1, 1, 1]} : vector<16x16x8xf32> to vector<16x16x1xf32>
    %202 = vector.extract_strided_slice %183 {offsets = [2, 0], sizes = [1, 8], strides = [1, 1]} : vector<8x8xf32> to vector<1x8xf32>
    %203 = vector.shape_cast %202 : vector<1x8xf32> to vector<8xf32>
    %204 = vector.shape_cast %203 : vector<8xf32> to vector<1x1x8xf32>
    %205 = vector.broadcast %201 : vector<16x16x1xf32> to vector<16x16x8xf32>
    %206 = vector.broadcast %204 : vector<1x1x8xf32> to vector<16x16x8xf32>
    %207 = arith.mulf %205, %206 : vector<16x16x8xf32>
    %208 = arith.addf %200, %207 : vector<16x16x8xf32>
    %209 = vector.extract_strided_slice %181 {offsets = [0, 0, 3], sizes = [16, 16, 1], strides = [1, 1, 1]} : vector<16x16x8xf32> to vector<16x16x1xf32>
    %210 = vector.extract_strided_slice %183 {offsets = [3, 0], sizes = [1, 8], strides = [1, 1]} : vector<8x8xf32> to vector<1x8xf32>
    %211 = vector.shape_cast %210 : vector<1x8xf32> to vector<8xf32>
    %212 = vector.shape_cast %211 : vector<8xf32> to vector<1x1x8xf32>
    %213 = vector.broadcast %209 : vector<16x16x1xf32> to vector<16x16x8xf32>
    %214 = vector.broadcast %212 : vector<1x1x8xf32> to vector<16x16x8xf32>
    %215 = arith.mulf %213, %214 : vector<16x16x8xf32>
    %216 = arith.addf %208, %215 : vector<16x16x8xf32>
    %217 = vector.extract_strided_slice %181 {offsets = [0, 0, 4], sizes = [16, 16, 1], strides = [1, 1, 1]} : vector<16x16x8xf32> to vector<16x16x1xf32>
    %218 = vector.extract_strided_slice %183 {offsets = [4, 0], sizes = [1, 8], strides = [1, 1]} : vector<8x8xf32> to vector<1x8xf32>
    %219 = vector.shape_cast %218 : vector<1x8xf32> to vector<8xf32>
    %220 = vector.shape_cast %219 : vector<8xf32> to vector<1x1x8xf32>
    %221 = vector.broadcast %217 : vector<16x16x1xf32> to vector<16x16x8xf32>
    %222 = vector.broadcast %220 : vector<1x1x8xf32> to vector<16x16x8xf32>
    %223 = arith.mulf %221, %222 : vector<16x16x8xf32>
    %224 = arith.addf %216, %223 : vector<16x16x8xf32>
    %225 = vector.extract_strided_slice %181 {offsets = [0, 0, 5], sizes = [16, 16, 1], strides = [1, 1, 1]} : vector<16x16x8xf32> to vector<16x16x1xf32>
    %226 = vector.extract_strided_slice %183 {offsets = [5, 0], sizes = [1, 8], strides = [1, 1]} : vector<8x8xf32> to vector<1x8xf32>
    %227 = vector.shape_cast %226 : vector<1x8xf32> to vector<8xf32>
    %228 = vector.shape_cast %227 : vector<8xf32> to vector<1x1x8xf32>
    %229 = vector.broadcast %225 : vector<16x16x1xf32> to vector<16x16x8xf32>
    %230 = vector.broadcast %228 : vector<1x1x8xf32> to vector<16x16x8xf32>
    %231 = arith.mulf %229, %230 : vector<16x16x8xf32>
    %232 = arith.addf %224, %231 : vector<16x16x8xf32>
    %233 = vector.extract_strided_slice %181 {offsets = [0, 0, 6], sizes = [16, 16, 1], strides = [1, 1, 1]} : vector<16x16x8xf32> to vector<16x16x1xf32>
    %234 = vector.extract_strided_slice %183 {offsets = [6, 0], sizes = [1, 8], strides = [1, 1]} : vector<8x8xf32> to vector<1x8xf32>
    %235 = vector.shape_cast %234 : vector<1x8xf32> to vector<8xf32>
    %236 = vector.shape_cast %235 : vector<8xf32> to vector<1x1x8xf32>
    %237 = vector.broadcast %233 : vector<16x16x1xf32> to vector<16x16x8xf32>
    %238 = vector.broadcast %236 : vector<1x1x8xf32> to vector<16x16x8xf32>
    %239 = arith.mulf %237, %238 : vector<16x16x8xf32>
    %240 = arith.addf %232, %239 : vector<16x16x8xf32>
    %241 = vector.extract_strided_slice %181 {offsets = [0, 0, 7], sizes = [16, 16, 1], strides = [1, 1, 1]} : vector<16x16x8xf32> to vector<16x16x1xf32>
    %242 = vector.extract_strided_slice %183 {offsets = [7, 0], sizes = [1, 8], strides = [1, 1]} : vector<8x8xf32> to vector<1x8xf32>
    %243 = vector.shape_cast %242 : vector<1x8xf32> to vector<8xf32>
    %244 = vector.shape_cast %243 : vector<8xf32> to vector<1x1x8xf32>
    %245 = vector.broadcast %241 : vector<16x16x1xf32> to vector<16x16x8xf32>
    %246 = vector.broadcast %244 : vector<1x1x8xf32> to vector<16x16x8xf32>
    %247 = arith.mulf %245, %246 : vector<16x16x8xf32>
    %248 = arith.addf %240, %247 : vector<16x16x8xf32>
    %249 = vector.shape_cast %185 : vector<8xf32> to vector<1x1x8xf32>
    %250 = vector.broadcast %249 : vector<1x1x8xf32> to vector<16x16x8xf32>
    %251 = arith.addf %248, %250 : vector<16x16x8xf32>
    %cst_20 = arith.constant 0.000000e+00 : f32
    %252 = vector.broadcast %cst_20 : f32 to vector<16x16x8xf32>
    %253 = arith.maximumf %251, %252 : vector<16x16x8xf32>
    %cst_21 = arith.constant 0.000000e+00 : f32
    %254 = vector.broadcast %cst_21 : f32 to vector<16x1x8xf32>
    %255 = tpu.concatenate %254, %253, %254 in 1 : vector<16x1x8xf32>, vector<16x16x8xf32>, vector<16x1x8xf32> -> vector<16x18x8xf32>
    %cst_22 = arith.constant 0.000000e+00 : f32
    %256 = vector.broadcast %cst_22 : f32 to vector<1x18x8xf32>
    %257 = tpu.concatenate %256, %255, %256 in 0 : vector<1x18x8xf32>, vector<16x18x8xf32>, vector<1x18x8xf32> -> vector<18x18x8xf32>
    %258 = vector.extract_strided_slice %1 {offsets = [1, 0, 0, 0], sizes = [1, 3, 3, 8], strides = [1, 1, 1, 1]} : vector<2x3x3x8xf32> to vector<1x3x3x8xf32>
    %259 = vector.shape_cast %258 : vector<1x3x3x8xf32> to vector<3x3x8xf32>
    %260 = vector.extract_strided_slice %257 {offsets = [0, 0, 0], sizes = [16, 16, 8], strides = [1, 1, 1]} : vector<18x18x8xf32> to vector<16x16x8xf32>
    %261 = vector.extract_strided_slice %259 {offsets = [0, 0, 0], sizes = [1, 1, 8], strides = [1, 1, 1]} : vector<3x3x8xf32> to vector<1x1x8xf32>
    %262 = vector.shape_cast %261 : vector<1x1x8xf32> to vector<8xf32>
    %263 = vector.shape_cast %262 : vector<8xf32> to vector<1x1x8xf32>
    %264 = vector.broadcast %263 : vector<1x1x8xf32> to vector<16x16x8xf32>
    %265 = arith.mulf %260, %264 : vector<16x16x8xf32>
    %266 = vector.extract_strided_slice %257 {offsets = [0, 1, 0], sizes = [16, 16, 8], strides = [1, 1, 1]} : vector<18x18x8xf32> to vector<16x16x8xf32>
    %267 = vector.extract_strided_slice %259 {offsets = [0, 1, 0], sizes = [1, 1, 8], strides = [1, 1, 1]} : vector<3x3x8xf32> to vector<1x1x8xf32>
    %268 = vector.shape_cast %267 : vector<1x1x8xf32> to vector<8xf32>
    %269 = vector.shape_cast %268 : vector<8xf32> to vector<1x1x8xf32>
    %270 = vector.broadcast %269 : vector<1x1x8xf32> to vector<16x16x8xf32>
    %271 = arith.mulf %266, %270 : vector<16x16x8xf32>
    %272 = arith.addf %265, %271 : vector<16x16x8xf32>
    %273 = vector.extract_strided_slice %257 {offsets = [0, 2, 0], sizes = [16, 16, 8], strides = [1, 1, 1]} : vector<18x18x8xf32> to vector<16x16x8xf32>
    %274 = vector.extract_strided_slice %259 {offsets = [0, 2, 0], sizes = [1, 1, 8], strides = [1, 1, 1]} : vector<3x3x8xf32> to vector<1x1x8xf32>
    %275 = vector.shape_cast %274 : vector<1x1x8xf32> to vector<8xf32>
    %276 = vector.shape_cast %275 : vector<8xf32> to vector<1x1x8xf32>
    %277 = vector.broadcast %276 : vector<1x1x8xf32> to vector<16x16x8xf32>
    %278 = arith.mulf %273, %277 : vector<16x16x8xf32>
    %279 = arith.addf %272, %278 : vector<16x16x8xf32>
    %280 = vector.extract_strided_slice %257 {offsets = [1, 0, 0], sizes = [16, 16, 8], strides = [1, 1, 1]} : vector<18x18x8xf32> to vector<16x16x8xf32>
    %281 = vector.extract_strided_slice %259 {offsets = [1, 0, 0], sizes = [1, 1, 8], strides = [1, 1, 1]} : vector<3x3x8xf32> to vector<1x1x8xf32>
    %282 = vector.shape_cast %281 : vector<1x1x8xf32> to vector<8xf32>
    %283 = vector.shape_cast %282 : vector<8xf32> to vector<1x1x8xf32>
    %284 = vector.broadcast %283 : vector<1x1x8xf32> to vector<16x16x8xf32>
    %285 = arith.mulf %280, %284 : vector<16x16x8xf32>
    %286 = arith.addf %279, %285 : vector<16x16x8xf32>
    %287 = vector.extract_strided_slice %257 {offsets = [1, 1, 0], sizes = [16, 16, 8], strides = [1, 1, 1]} : vector<18x18x8xf32> to vector<16x16x8xf32>
    %288 = vector.extract_strided_slice %259 {offsets = [1, 1, 0], sizes = [1, 1, 8], strides = [1, 1, 1]} : vector<3x3x8xf32> to vector<1x1x8xf32>
    %289 = vector.shape_cast %288 : vector<1x1x8xf32> to vector<8xf32>
    %290 = vector.shape_cast %289 : vector<8xf32> to vector<1x1x8xf32>
    %291 = vector.broadcast %290 : vector<1x1x8xf32> to vector<16x16x8xf32>
    %292 = arith.mulf %287, %291 : vector<16x16x8xf32>
    %293 = arith.addf %286, %292 : vector<16x16x8xf32>
    %294 = vector.extract_strided_slice %257 {offsets = [1, 2, 0], sizes = [16, 16, 8], strides = [1, 1, 1]} : vector<18x18x8xf32> to vector<16x16x8xf32>
    %295 = vector.extract_strided_slice %259 {offsets = [1, 2, 0], sizes = [1, 1, 8], strides = [1, 1, 1]} : vector<3x3x8xf32> to vector<1x1x8xf32>
    %296 = vector.shape_cast %295 : vector<1x1x8xf32> to vector<8xf32>
    %297 = vector.shape_cast %296 : vector<8xf32> to vector<1x1x8xf32>
    %298 = vector.broadcast %297 : vector<1x1x8xf32> to vector<16x16x8xf32>
    %299 = arith.mulf %294, %298 : vector<16x16x8xf32>
    %300 = arith.addf %293, %299 : vector<16x16x8xf32>
    %301 = vector.extract_strided_slice %257 {offsets = [2, 0, 0], sizes = [16, 16, 8], strides = [1, 1, 1]} : vector<18x18x8xf32> to vector<16x16x8xf32>
    %302 = vector.extract_strided_slice %259 {offsets = [2, 0, 0], sizes = [1, 1, 8], strides = [1, 1, 1]} : vector<3x3x8xf32> to vector<1x1x8xf32>
    %303 = vector.shape_cast %302 : vector<1x1x8xf32> to vector<8xf32>
    %304 = vector.shape_cast %303 : vector<8xf32> to vector<1x1x8xf32>
    %305 = vector.broadcast %304 : vector<1x1x8xf32> to vector<16x16x8xf32>
    %306 = arith.mulf %301, %305 : vector<16x16x8xf32>
    %307 = arith.addf %300, %306 : vector<16x16x8xf32>
    %308 = vector.extract_strided_slice %257 {offsets = [2, 1, 0], sizes = [16, 16, 8], strides = [1, 1, 1]} : vector<18x18x8xf32> to vector<16x16x8xf32>
    %309 = vector.extract_strided_slice %259 {offsets = [2, 1, 0], sizes = [1, 1, 8], strides = [1, 1, 1]} : vector<3x3x8xf32> to vector<1x1x8xf32>
    %310 = vector.shape_cast %309 : vector<1x1x8xf32> to vector<8xf32>
    %311 = vector.shape_cast %310 : vector<8xf32> to vector<1x1x8xf32>
    %312 = vector.broadcast %311 : vector<1x1x8xf32> to vector<16x16x8xf32>
    %313 = arith.mulf %308, %312 : vector<16x16x8xf32>
    %314 = arith.addf %307, %313 : vector<16x16x8xf32>
    %315 = vector.extract_strided_slice %257 {offsets = [2, 2, 0], sizes = [16, 16, 8], strides = [1, 1, 1]} : vector<18x18x8xf32> to vector<16x16x8xf32>
    %316 = vector.extract_strided_slice %259 {offsets = [2, 2, 0], sizes = [1, 1, 8], strides = [1, 1, 1]} : vector<3x3x8xf32> to vector<1x1x8xf32>
    %317 = vector.shape_cast %316 : vector<1x1x8xf32> to vector<8xf32>
    %318 = vector.shape_cast %317 : vector<8xf32> to vector<1x1x8xf32>
    %319 = vector.broadcast %318 : vector<1x1x8xf32> to vector<16x16x8xf32>
    %320 = arith.mulf %315, %319 : vector<16x16x8xf32>
    %321 = arith.addf %314, %320 : vector<16x16x8xf32>
    %322 = vector.extract_strided_slice %321 {offsets = [0, 0, 0], sizes = [1, 16, 8], strides = [1, 1, 1]} : vector<16x16x8xf32> to vector<1x16x8xf32>
    %323 = vector.extract_strided_slice %321 {offsets = [2, 0, 0], sizes = [1, 16, 8], strides = [1, 1, 1]} : vector<16x16x8xf32> to vector<1x16x8xf32>
    %324 = vector.extract_strided_slice %321 {offsets = [4, 0, 0], sizes = [1, 16, 8], strides = [1, 1, 1]} : vector<16x16x8xf32> to vector<1x16x8xf32>
    %325 = vector.extract_strided_slice %321 {offsets = [6, 0, 0], sizes = [1, 16, 8], strides = [1, 1, 1]} : vector<16x16x8xf32> to vector<1x16x8xf32>
    %326 = vector.extract_strided_slice %321 {offsets = [8, 0, 0], sizes = [1, 16, 8], strides = [1, 1, 1]} : vector<16x16x8xf32> to vector<1x16x8xf32>
    %327 = vector.extract_strided_slice %321 {offsets = [10, 0, 0], sizes = [1, 16, 8], strides = [1, 1, 1]} : vector<16x16x8xf32> to vector<1x16x8xf32>
    %328 = vector.extract_strided_slice %321 {offsets = [12, 0, 0], sizes = [1, 16, 8], strides = [1, 1, 1]} : vector<16x16x8xf32> to vector<1x16x8xf32>
    %329 = vector.extract_strided_slice %321 {offsets = [14, 0, 0], sizes = [1, 16, 8], strides = [1, 1, 1]} : vector<16x16x8xf32> to vector<1x16x8xf32>
    %330 = tpu.concatenate %322, %323, %324, %325, %326, %327, %328, %329 in 0 : vector<1x16x8xf32>, vector<1x16x8xf32>, vector<1x16x8xf32>, vector<1x16x8xf32>, vector<1x16x8xf32>, vector<1x16x8xf32>, vector<1x16x8xf32>, vector<1x16x8xf32> -> vector<8x16x8xf32>
    %331 = vector.extract_strided_slice %330 {offsets = [0, 0, 0], sizes = [8, 1, 8], strides = [1, 1, 1]} : vector<8x16x8xf32> to vector<8x1x8xf32>
    %332 = vector.extract_strided_slice %330 {offsets = [0, 2, 0], sizes = [8, 1, 8], strides = [1, 1, 1]} : vector<8x16x8xf32> to vector<8x1x8xf32>
    %333 = vector.extract_strided_slice %330 {offsets = [0, 4, 0], sizes = [8, 1, 8], strides = [1, 1, 1]} : vector<8x16x8xf32> to vector<8x1x8xf32>
    %334 = vector.extract_strided_slice %330 {offsets = [0, 6, 0], sizes = [8, 1, 8], strides = [1, 1, 1]} : vector<8x16x8xf32> to vector<8x1x8xf32>
    %335 = vector.extract_strided_slice %330 {offsets = [0, 8, 0], sizes = [8, 1, 8], strides = [1, 1, 1]} : vector<8x16x8xf32> to vector<8x1x8xf32>
    %336 = vector.extract_strided_slice %330 {offsets = [0, 10, 0], sizes = [8, 1, 8], strides = [1, 1, 1]} : vector<8x16x8xf32> to vector<8x1x8xf32>
    %337 = vector.extract_strided_slice %330 {offsets = [0, 12, 0], sizes = [8, 1, 8], strides = [1, 1, 1]} : vector<8x16x8xf32> to vector<8x1x8xf32>
    %338 = vector.extract_strided_slice %330 {offsets = [0, 14, 0], sizes = [8, 1, 8], strides = [1, 1, 1]} : vector<8x16x8xf32> to vector<8x1x8xf32>
    %339 = tpu.concatenate %331, %332, %333, %334, %335, %336, %337, %338 in 1 : vector<8x1x8xf32>, vector<8x1x8xf32>, vector<8x1x8xf32>, vector<8x1x8xf32>, vector<8x1x8xf32>, vector<8x1x8xf32>, vector<8x1x8xf32>, vector<8x1x8xf32> -> vector<8x8x8xf32>
    %340 = vector.extract_strided_slice %2 {offsets = [2, 0, 0], sizes = [1, 8, 8], strides = [1, 1, 1]} : vector<4x8x8xf32> to vector<1x8x8xf32>
    %341 = vector.shape_cast %340 : vector<1x8x8xf32> to vector<8x8xf32>
    %342 = vector.extract_strided_slice %3 {offsets = [2, 0], sizes = [1, 8], strides = [1, 1]} : vector<4x8xf32> to vector<1x8xf32>
    %343 = vector.shape_cast %342 : vector<1x8xf32> to vector<8xf32>
    %344 = vector.extract_strided_slice %339 {offsets = [0, 0, 0], sizes = [8, 8, 1], strides = [1, 1, 1]} : vector<8x8x8xf32> to vector<8x8x1xf32>
    %345 = vector.extract_strided_slice %341 {offsets = [0, 0], sizes = [1, 8], strides = [1, 1]} : vector<8x8xf32> to vector<1x8xf32>
    %346 = vector.shape_cast %345 : vector<1x8xf32> to vector<8xf32>
    %347 = vector.shape_cast %346 : vector<8xf32> to vector<1x1x8xf32>
    %348 = vector.broadcast %344 : vector<8x8x1xf32> to vector<8x8x8xf32>
    %349 = vector.broadcast %347 : vector<1x1x8xf32> to vector<8x8x8xf32>
    %350 = arith.mulf %348, %349 : vector<8x8x8xf32>
    %351 = vector.extract_strided_slice %339 {offsets = [0, 0, 1], sizes = [8, 8, 1], strides = [1, 1, 1]} : vector<8x8x8xf32> to vector<8x8x1xf32>
    %352 = vector.extract_strided_slice %341 {offsets = [1, 0], sizes = [1, 8], strides = [1, 1]} : vector<8x8xf32> to vector<1x8xf32>
    %353 = vector.shape_cast %352 : vector<1x8xf32> to vector<8xf32>
    %354 = vector.shape_cast %353 : vector<8xf32> to vector<1x1x8xf32>
    %355 = vector.broadcast %351 : vector<8x8x1xf32> to vector<8x8x8xf32>
    %356 = vector.broadcast %354 : vector<1x1x8xf32> to vector<8x8x8xf32>
    %357 = arith.mulf %355, %356 : vector<8x8x8xf32>
    %358 = arith.addf %350, %357 : vector<8x8x8xf32>
    %359 = vector.extract_strided_slice %339 {offsets = [0, 0, 2], sizes = [8, 8, 1], strides = [1, 1, 1]} : vector<8x8x8xf32> to vector<8x8x1xf32>
    %360 = vector.extract_strided_slice %341 {offsets = [2, 0], sizes = [1, 8], strides = [1, 1]} : vector<8x8xf32> to vector<1x8xf32>
    %361 = vector.shape_cast %360 : vector<1x8xf32> to vector<8xf32>
    %362 = vector.shape_cast %361 : vector<8xf32> to vector<1x1x8xf32>
    %363 = vector.broadcast %359 : vector<8x8x1xf32> to vector<8x8x8xf32>
    %364 = vector.broadcast %362 : vector<1x1x8xf32> to vector<8x8x8xf32>
    %365 = arith.mulf %363, %364 : vector<8x8x8xf32>
    %366 = arith.addf %358, %365 : vector<8x8x8xf32>
    %367 = vector.extract_strided_slice %339 {offsets = [0, 0, 3], sizes = [8, 8, 1], strides = [1, 1, 1]} : vector<8x8x8xf32> to vector<8x8x1xf32>
    %368 = vector.extract_strided_slice %341 {offsets = [3, 0], sizes = [1, 8], strides = [1, 1]} : vector<8x8xf32> to vector<1x8xf32>
    %369 = vector.shape_cast %368 : vector<1x8xf32> to vector<8xf32>
    %370 = vector.shape_cast %369 : vector<8xf32> to vector<1x1x8xf32>
    %371 = vector.broadcast %367 : vector<8x8x1xf32> to vector<8x8x8xf32>
    %372 = vector.broadcast %370 : vector<1x1x8xf32> to vector<8x8x8xf32>
    %373 = arith.mulf %371, %372 : vector<8x8x8xf32>
    %374 = arith.addf %366, %373 : vector<8x8x8xf32>
    %375 = vector.extract_strided_slice %339 {offsets = [0, 0, 4], sizes = [8, 8, 1], strides = [1, 1, 1]} : vector<8x8x8xf32> to vector<8x8x1xf32>
    %376 = vector.extract_strided_slice %341 {offsets = [4, 0], sizes = [1, 8], strides = [1, 1]} : vector<8x8xf32> to vector<1x8xf32>
    %377 = vector.shape_cast %376 : vector<1x8xf32> to vector<8xf32>
    %378 = vector.shape_cast %377 : vector<8xf32> to vector<1x1x8xf32>
    %379 = vector.broadcast %375 : vector<8x8x1xf32> to vector<8x8x8xf32>
    %380 = vector.broadcast %378 : vector<1x1x8xf32> to vector<8x8x8xf32>
    %381 = arith.mulf %379, %380 : vector<8x8x8xf32>
    %382 = arith.addf %374, %381 : vector<8x8x8xf32>
    %383 = vector.extract_strided_slice %339 {offsets = [0, 0, 5], sizes = [8, 8, 1], strides = [1, 1, 1]} : vector<8x8x8xf32> to vector<8x8x1xf32>
    %384 = vector.extract_strided_slice %341 {offsets = [5, 0], sizes = [1, 8], strides = [1, 1]} : vector<8x8xf32> to vector<1x8xf32>
    %385 = vector.shape_cast %384 : vector<1x8xf32> to vector<8xf32>
    %386 = vector.shape_cast %385 : vector<8xf32> to vector<1x1x8xf32>
    %387 = vector.broadcast %383 : vector<8x8x1xf32> to vector<8x8x8xf32>
    %388 = vector.broadcast %386 : vector<1x1x8xf32> to vector<8x8x8xf32>
    %389 = arith.mulf %387, %388 : vector<8x8x8xf32>
    %390 = arith.addf %382, %389 : vector<8x8x8xf32>
    %391 = vector.extract_strided_slice %339 {offsets = [0, 0, 6], sizes = [8, 8, 1], strides = [1, 1, 1]} : vector<8x8x8xf32> to vector<8x8x1xf32>
    %392 = vector.extract_strided_slice %341 {offsets = [6, 0], sizes = [1, 8], strides = [1, 1]} : vector<8x8xf32> to vector<1x8xf32>
    %393 = vector.shape_cast %392 : vector<1x8xf32> to vector<8xf32>
    %394 = vector.shape_cast %393 : vector<8xf32> to vector<1x1x8xf32>
    %395 = vector.broadcast %391 : vector<8x8x1xf32> to vector<8x8x8xf32>
    %396 = vector.broadcast %394 : vector<1x1x8xf32> to vector<8x8x8xf32>
    %397 = arith.mulf %395, %396 : vector<8x8x8xf32>
    %398 = arith.addf %390, %397 : vector<8x8x8xf32>
    %399 = vector.extract_strided_slice %339 {offsets = [0, 0, 7], sizes = [8, 8, 1], strides = [1, 1, 1]} : vector<8x8x8xf32> to vector<8x8x1xf32>
    %400 = vector.extract_strided_slice %341 {offsets = [7, 0], sizes = [1, 8], strides = [1, 1]} : vector<8x8xf32> to vector<1x8xf32>
    %401 = vector.shape_cast %400 : vector<1x8xf32> to vector<8xf32>
    %402 = vector.shape_cast %401 : vector<8xf32> to vector<1x1x8xf32>
    %403 = vector.broadcast %399 : vector<8x8x1xf32> to vector<8x8x8xf32>
    %404 = vector.broadcast %402 : vector<1x1x8xf32> to vector<8x8x8xf32>
    %405 = arith.mulf %403, %404 : vector<8x8x8xf32>
    %406 = arith.addf %398, %405 : vector<8x8x8xf32>
    %407 = vector.shape_cast %343 : vector<8xf32> to vector<1x1x8xf32>
    %408 = vector.broadcast %407 : vector<1x1x8xf32> to vector<8x8x8xf32>
    %409 = arith.addf %406, %408 : vector<8x8x8xf32>
    %410 = vector.extract_strided_slice %5 {offsets = [0, 0, 0], sizes = [1, 16, 4], strides = [1, 1, 1]} : vector<16x16x4xf32> to vector<1x16x4xf32>
    %411 = vector.extract_strided_slice %5 {offsets = [2, 0, 0], sizes = [1, 16, 4], strides = [1, 1, 1]} : vector<16x16x4xf32> to vector<1x16x4xf32>
    %412 = vector.extract_strided_slice %5 {offsets = [4, 0, 0], sizes = [1, 16, 4], strides = [1, 1, 1]} : vector<16x16x4xf32> to vector<1x16x4xf32>
    %413 = vector.extract_strided_slice %5 {offsets = [6, 0, 0], sizes = [1, 16, 4], strides = [1, 1, 1]} : vector<16x16x4xf32> to vector<1x16x4xf32>
    %414 = vector.extract_strided_slice %5 {offsets = [8, 0, 0], sizes = [1, 16, 4], strides = [1, 1, 1]} : vector<16x16x4xf32> to vector<1x16x4xf32>
    %415 = vector.extract_strided_slice %5 {offsets = [10, 0, 0], sizes = [1, 16, 4], strides = [1, 1, 1]} : vector<16x16x4xf32> to vector<1x16x4xf32>
    %416 = vector.extract_strided_slice %5 {offsets = [12, 0, 0], sizes = [1, 16, 4], strides = [1, 1, 1]} : vector<16x16x4xf32> to vector<1x16x4xf32>
    %417 = vector.extract_strided_slice %5 {offsets = [14, 0, 0], sizes = [1, 16, 4], strides = [1, 1, 1]} : vector<16x16x4xf32> to vector<1x16x4xf32>
    %418 = tpu.concatenate %410, %411, %412, %413, %414, %415, %416, %417 in 0 : vector<1x16x4xf32>, vector<1x16x4xf32>, vector<1x16x4xf32>, vector<1x16x4xf32>, vector<1x16x4xf32>, vector<1x16x4xf32>, vector<1x16x4xf32>, vector<1x16x4xf32> -> vector<8x16x4xf32>
    %419 = vector.extract_strided_slice %418 {offsets = [0, 0, 0], sizes = [8, 1, 4], strides = [1, 1, 1]} : vector<8x16x4xf32> to vector<8x1x4xf32>
    %420 = vector.extract_strided_slice %418 {offsets = [0, 2, 0], sizes = [8, 1, 4], strides = [1, 1, 1]} : vector<8x16x4xf32> to vector<8x1x4xf32>
    %421 = vector.extract_strided_slice %418 {offsets = [0, 4, 0], sizes = [8, 1, 4], strides = [1, 1, 1]} : vector<8x16x4xf32> to vector<8x1x4xf32>
    %422 = vector.extract_strided_slice %418 {offsets = [0, 6, 0], sizes = [8, 1, 4], strides = [1, 1, 1]} : vector<8x16x4xf32> to vector<8x1x4xf32>
    %423 = vector.extract_strided_slice %418 {offsets = [0, 8, 0], sizes = [8, 1, 4], strides = [1, 1, 1]} : vector<8x16x4xf32> to vector<8x1x4xf32>
    %424 = vector.extract_strided_slice %418 {offsets = [0, 10, 0], sizes = [8, 1, 4], strides = [1, 1, 1]} : vector<8x16x4xf32> to vector<8x1x4xf32>
    %425 = vector.extract_strided_slice %418 {offsets = [0, 12, 0], sizes = [8, 1, 4], strides = [1, 1, 1]} : vector<8x16x4xf32> to vector<8x1x4xf32>
    %426 = vector.extract_strided_slice %418 {offsets = [0, 14, 0], sizes = [8, 1, 4], strides = [1, 1, 1]} : vector<8x16x4xf32> to vector<8x1x4xf32>
    %427 = tpu.concatenate %419, %420, %421, %422, %423, %424, %425, %426 in 1 : vector<8x1x4xf32>, vector<8x1x4xf32>, vector<8x1x4xf32>, vector<8x1x4xf32>, vector<8x1x4xf32>, vector<8x1x4xf32>, vector<8x1x4xf32>, vector<8x1x4xf32> -> vector<8x8x4xf32>
    %428 = vector.extract_strided_slice %2 {offsets = [3, 0, 0], sizes = [1, 8, 8], strides = [1, 1, 1]} : vector<4x8x8xf32> to vector<1x8x8xf32>
    %429 = vector.shape_cast %428 : vector<1x8x8xf32> to vector<8x8xf32>
    %430 = vector.extract_strided_slice %3 {offsets = [3, 0], sizes = [1, 8], strides = [1, 1]} : vector<4x8xf32> to vector<1x8xf32>
    %431 = vector.shape_cast %430 : vector<1x8xf32> to vector<8xf32>
    %432 = vector.extract_strided_slice %427 {offsets = [0, 0, 0], sizes = [8, 8, 1], strides = [1, 1, 1]} : vector<8x8x4xf32> to vector<8x8x1xf32>
    %433 = vector.extract_strided_slice %429 {offsets = [0, 0], sizes = [1, 8], strides = [1, 1]} : vector<8x8xf32> to vector<1x8xf32>
    %434 = vector.shape_cast %433 : vector<1x8xf32> to vector<8xf32>
    %435 = vector.shape_cast %434 : vector<8xf32> to vector<1x1x8xf32>
    %436 = vector.broadcast %432 : vector<8x8x1xf32> to vector<8x8x8xf32>
    %437 = vector.broadcast %435 : vector<1x1x8xf32> to vector<8x8x8xf32>
    %438 = arith.mulf %436, %437 : vector<8x8x8xf32>
    %439 = vector.extract_strided_slice %427 {offsets = [0, 0, 1], sizes = [8, 8, 1], strides = [1, 1, 1]} : vector<8x8x4xf32> to vector<8x8x1xf32>
    %440 = vector.extract_strided_slice %429 {offsets = [1, 0], sizes = [1, 8], strides = [1, 1]} : vector<8x8xf32> to vector<1x8xf32>
    %441 = vector.shape_cast %440 : vector<1x8xf32> to vector<8xf32>
    %442 = vector.shape_cast %441 : vector<8xf32> to vector<1x1x8xf32>
    %443 = vector.broadcast %439 : vector<8x8x1xf32> to vector<8x8x8xf32>
    %444 = vector.broadcast %442 : vector<1x1x8xf32> to vector<8x8x8xf32>
    %445 = arith.mulf %443, %444 : vector<8x8x8xf32>
    %446 = arith.addf %438, %445 : vector<8x8x8xf32>
    %447 = vector.extract_strided_slice %427 {offsets = [0, 0, 2], sizes = [8, 8, 1], strides = [1, 1, 1]} : vector<8x8x4xf32> to vector<8x8x1xf32>
    %448 = vector.extract_strided_slice %429 {offsets = [2, 0], sizes = [1, 8], strides = [1, 1]} : vector<8x8xf32> to vector<1x8xf32>
    %449 = vector.shape_cast %448 : vector<1x8xf32> to vector<8xf32>
    %450 = vector.shape_cast %449 : vector<8xf32> to vector<1x1x8xf32>
    %451 = vector.broadcast %447 : vector<8x8x1xf32> to vector<8x8x8xf32>
    %452 = vector.broadcast %450 : vector<1x1x8xf32> to vector<8x8x8xf32>
    %453 = arith.mulf %451, %452 : vector<8x8x8xf32>
    %454 = arith.addf %446, %453 : vector<8x8x8xf32>
    %455 = vector.extract_strided_slice %427 {offsets = [0, 0, 3], sizes = [8, 8, 1], strides = [1, 1, 1]} : vector<8x8x4xf32> to vector<8x8x1xf32>
    %456 = vector.extract_strided_slice %429 {offsets = [3, 0], sizes = [1, 8], strides = [1, 1]} : vector<8x8xf32> to vector<1x8xf32>
    %457 = vector.shape_cast %456 : vector<1x8xf32> to vector<8xf32>
    %458 = vector.shape_cast %457 : vector<8xf32> to vector<1x1x8xf32>
    %459 = vector.broadcast %455 : vector<8x8x1xf32> to vector<8x8x8xf32>
    %460 = vector.broadcast %458 : vector<1x1x8xf32> to vector<8x8x8xf32>
    %461 = arith.mulf %459, %460 : vector<8x8x8xf32>
    %462 = arith.addf %454, %461 : vector<8x8x8xf32>
    %463 = vector.shape_cast %431 : vector<8xf32> to vector<1x1x8xf32>
    %464 = vector.broadcast %463 : vector<1x1x8xf32> to vector<8x8x8xf32>
    %465 = arith.addf %462, %464 : vector<8x8x8xf32>
    %466 = arith.addf %409, %465 : vector<8x8x8xf32>
    %c0_23 = arith.constant 0 : index
    %c0_24 = arith.constant 0 : index
    %c0_25 = arith.constant 0 : index
    %c0_26 = arith.constant 0 : index
    %467 = vector.load %arg6[%c0_23, %c0_24, %c0_25, %c0_26] : memref<1x8x8x8xf32, #tpu.memory_space<vmem>>, vector<1x8x8x8xf32>
    %468 = vector.shape_cast %467 : vector<1x8x8x8xf32> to vector<8x8x8xf32>
    %469 = vector.shape_cast %466 : vector<8x8x8xf32> to vector<1x8x8x8xf32>
    tpu.vector_store %arg6[%c0_23, %c0_24, %c0_25, %c0_26], %469 {strides = array<i32>} : memref<1x8x8x8xf32, #tpu.memory_space<vmem>>, vector<1x8x8x8xf32>,
    return
  }
  func.func @transform_0(%arg0: i32) -> (i32, i32, i32, i32) {
    %c0_i32 = arith.constant 0 : i32
    %c0_i32_0 = arith.constant 0 : i32
    %c0_i32_1 = arith.constant 0 : i32
    %c0_i32_2 = arith.constant 0 : i32
    return %arg0, %c0_i32, %c0_i32_0, %c0_i32_1 : i32, i32, i32, i32
  }
  func.func @transform_1(%arg0: i32) -> (i32, i32, i32) {
    %c0_i32 = arith.constant 0 : i32
    %c0_i32_0 = arith.constant 0 : i32
    %c0_i32_1 = arith.constant 0 : i32
    %c0_i32_2 = arith.constant 0 : i32
    return %c0_i32, %c0_i32_0, %c0_i32_1 : i32, i32, i32
  }
  func.func @transform_2(%arg0: i32) -> (i32, i32, i32, i32) {
    %c0_i32 = arith.constant 0 : i32
    %c0_i32_0 = arith.constant 0 : i32
    %c0_i32_1 = arith.constant 0 : i32
    %c0_i32_2 = arith.constant 0 : i32
    %c0_i32_3 = arith.constant 0 : i32
    return %c0_i32, %c0_i32_0, %c0_i32_1, %c0_i32_2 : i32, i32, i32, i32
  }
  func.func @transform_3(%arg0: i32) -> (i32, i32, i32) {
    %c0_i32 = arith.constant 0 : i32
    %c0_i32_0 = arith.constant 0 : i32
    %c0_i32_1 = arith.constant 0 : i32
    %c0_i32_2 = arith.constant 0 : i32
    return %c0_i32, %c0_i32_0, %c0_i32_1 : i32, i32, i32
  }
  func.func @transform_4(%arg0: i32) -> (i32, i32) {
    %c0_i32 = arith.constant 0 : i32
    %c0_i32_0 = arith.constant 0 : i32
    %c0_i32_1 = arith.constant 0 : i32
    return %c0_i32, %c0_i32_0 : i32, i32
  }
  func.func @transform_5(%arg0: i32) -> (i32, i32, i32, i32) {
    %c0_i32 = arith.constant 0 : i32
    %c0_i32_0 = arith.constant 0 : i32
    %c0_i32_1 = arith.constant 0 : i32
    %c0_i32_2 = arith.constant 0 : i32
    return %arg0, %c0_i32, %c0_i32_0, %c0_i32_1 : i32, i32, i32, i32
  }
}

</mosaic_0001>

<llo_original>
// kernel: block_forward.1
$region0: #{block_forward.1}
  #allocation0 [shape = 'u32[]', space=smem, size = 0x4, offset = 0x4, fixed_abs, tag = 'smem constant byte address 0x4 - core index']
  #allocation1 [shape = 'u32[144,128]{1,0:T(1,128)}', space=vmem, size = 0x12000, scoped, tag = 'internal scratch']
  %s0 = inlined_call_operand.vmem [shape: f32[2,16,16,4], index: 0, kind: input, shape index: {}]
  %s1 = inlined_call_operand.vmem [shape: f32[3,3,4], index: 1, kind: input, shape index: {}]
  %s2 = inlined_call_operand.vmem [shape: f32[2,3,3,8], index: 2, kind: input, shape index: {}]
  %s3 = inlined_call_operand.vmem [shape: f32[4,8,8], index: 3, kind: input, shape index: {}]
  %s4 = inlined_call_operand.vmem [shape: f32[4,8], index: 4, kind: input, shape index: {}]
  %s5 = inlined_call_operand.vmem [shape: f32[2,8,8,8], index: 5, kind: output, shape index: {}]
  %s6 = sld [smem:[#allocation0]]
  $region53: #{block_forward.1} parent=0
    _
  %s8 = ssub.s32 1, %s6
  %s9 = scalar_select 0, %s8, %s6
  loop: start=0, step=1, limit=4
  $region2: #{block_forward.1} parent=0 // loop_pre_header
    _
  $region3: #{block_forward.1} parent=0 // loop_header
    %s11 = sphi 0, %s15
    %p12 = scmp.ge.s32.totalorder %s11, 4
    %s21 = sphi 0, %s23
    %s24 = sphi 0, %s21
    %s25 = sphi 0, %s24
    %s41 = sphi 0, %s25
    %s45 = sphi 0, %s45
    %s47 = sphi 0, %s45
    %s48 = sphi 0, %s47
    %s62 = sphi 0, %s48
    %s66 = sphi 0, %s66
    %s68 = sphi 0, %s66
    %s69 = sphi 0, %s68
    %s83 = sphi 0, %s69
    %s87 = sphi 0, %s87
    %s89 = sphi 0, %s87
    %s90 = sphi 0, %s89
    %s104 = sphi 0, %s90
    %s108 = sphi 0, %s108
    %s110 = sphi 0, %s108
    %s111 = sphi 0, %s110
    %s125 = sphi 0, %s111
    %s131 = sphi 0, %s133
    %s134 = sphi 0, %s131
    %s135 = sphi 0, %s134
    %s151 = sphi 0, %s135
  $region4: #{block_forward.1} parent=0 // loop_header_branch
    %14 = sbr.rel (%p12) target = $region8
  $region5: #{block_forward.1} parent=0 // loop_body
    %s16 = ssub.s32 %s11, 1
    %s17 = ssub.s32 %s11, 2
    %s18 = sadd.s32 %s11, 1
    %s19 = ssub.s32 %s11, %s18
    %p20 = scmp.eq.s32.totalorder %s19, 0
    %s22 = sadd.s32 %s21, 1
    %s23 = scalar_select %p20, %s21, %s22
    %p26 = pneg %p20
    %p27 = scmp.eq.s32.totalorder %s11, 1
    %p28 = por %p26, %p27
    %p29 = scmp.ne.s32.totalorder %s21, %s24
    %p30 = scmp.eq.s32.totalorder %s11, 0
    %p31 = por %p29, %p30
    %p32 = scmp.ne.s32.totalorder %s21, %s24
    %p33 = scmp.eq.s32.totalorder %s16, 1
    %p34 = por %p32, %p33
    %p35 = scmp.ne.s32.totalorder %s24, %s25
    %p36 = scmp.eq.s32.totalorder %s16, 0
    %p37 = por %p35, %p36
    %p38 = scmp.ne.s32.totalorder %s24, %s25
    %p39 = scmp.eq.s32.totalorder %s17, 1
    %p40 = por %p38, %p39
    %p42 = scmp.ne.s32.totalorder %s25, %s41
    %p43 = scmp.eq.s32.totalorder %s17, 0
    %p44 = por %p42, %p43
    %s46 = sadd.s32 %s45, 1
    %p49 = scmp.eq.s32.totalorder %s11, 1
    %p50 = scmp.ne.s32.totalorder %s45, %s47
    %p51 = scmp.eq.s32.totalorder %s11, 0
    %p52 = por %p50, %p51
    %p53 = scmp.ne.s32.totalorder %s45, %s47
    %p54 = scmp.eq.s32.totalorder %s16, 1
    %p55 = por %p53, %p54
    %p56 = scmp.ne.s32.totalorder %s47, %s48
    %p57 = scmp.eq.s32.totalorder %s16, 0
    %p58 = por %p56, %p57
    %p59 = scmp.ne.s32.totalorder %s47, %s48
    %p60 = scmp.eq.s32.totalorder %s17, 1
    %p61 = por %p59, %p60
    %p63 = scmp.ne.s32.totalorder %s48, %s62
    %p64 = scmp.eq.s32.totalorder %s17, 0
    %p65 = por %p63, %p64
    %s67 = sadd.s32 %s66, 1
    %p70 = scmp.eq.s32.totalorder %s11, 1
    %p71 = scmp.ne.s32.totalorder %s66, %s68
    %p72 = scmp.eq.s32.totalorder %s11, 0
    %p73 = por %p71, %p72
    %p74 = scmp.ne.s32.totalorder %s66, %s68
    %p75 = scmp.eq.s32.totalorder %s16, 1
    %p76 = por %p74, %p75
    %p77 = scmp.ne.s32.totalorder %s68, %s69
    %p78 = scmp.eq.s32.totalorder %s16, 0
    %p79 = por %p77, %p78
    %p80 = scmp.ne.s32.totalorder %s68, %s69
    %p81 = scmp.eq.s32.totalorder %s17, 1
    %p82 = por %p80, %p81
    %p84 = scmp.ne.s32.totalorder %s69, %s83
    %p85 = scmp.eq.s32.totalorder %s17, 0
    %p86 = por %p84, %p85
    %s88 = sadd.s32 %s87, 1
    %p91 = scmp.eq.s32.totalorder %s11, 1
    %p92 = scmp.ne.s32.totalorder %s87, %s89
    %p93 = scmp.eq.s32.totalorder %s11, 0
    %p94 = por %p92, %p93
    %p95 = scmp.ne.s32.totalorder %s87, %s89
    %p96 = scmp.eq.s32.totalorder %s16, 1
    %p97 = por %p95, %p96
    %p98 = scmp.ne.s32.totalorder %s89, %s90
    %p99 = scmp.eq.s32.totalorder %s16, 0
    %p100 = por %p98, %p99
    %p101 = scmp.ne.s32.totalorder %s89, %s90
    %p102 = scmp.eq.s32.totalorder %s17, 1
    %p103 = por %p101, %p102
    %p105 = scmp.ne.s32.totalorder %s90, %s104
    %p106 = scmp.eq.s32.totalorder %s17, 0
    %p107 = por %p105, %p106
    %s109 = sadd.s32 %s108, 1
    %p112 = scmp.eq.s32.totalorder %s11, 1
    %p113 = scmp.ne.s32.totalorder %s108, %s110
    %p114 = scmp.eq.s32.totalorder %s11, 0
    %p115 = por %p113, %p114
    %p116 = scmp.ne.s32.totalorder %s108, %s110
    %p117 = scmp.eq.s32.totalorder %s16, 1
    %p118 = por %p116, %p117
    %p119 = scmp.ne.s32.totalorder %s110, %s111
    %p120 = scmp.eq.s32.totalorder %s16, 0
    %p121 = por %p119, %p120
    %p122 = scmp.ne.s32.totalorder %s110, %s111
    %p123 = scmp.eq.s32.totalorder %s17, 1
    %p124 = por %p122, %p123
    %p126 = scmp.ne.s32.totalorder %s111, %s125
    %p127 = scmp.eq.s32.totalorder %s17, 0
    %p128 = por %p126, %p127
    %s129 = ssub.s32 %s11, %s18
    %p130 = scmp.eq.s32.totalorder %s129, 0
    %s132 = sadd.s32 %s131, 1
    %s133 = scalar_select %p130, %s131, %s132
    %p136 = pneg %p130
    %p137 = scmp.eq.s32.totalorder %s11, 1
    %p138 = por %p136, %p137
    %p139 = scmp.ne.s32.totalorder %s131, %s134
    %p140 = scmp.eq.s32.totalorder %s11, 0
    %p141 = por %p139, %p140
    %p142 = scmp.ne.s32.totalorder %s131, %s134
    %p143 = scmp.eq.s32.totalorder %s16, 1
    %p144 = por %p142, %p143
    %p145 = scmp.ne.s32.totalorder %s134, %s135
    %p146 = scmp.eq.s32.totalorder %s16, 0
    %p147 = por %p145, %p146
    %p148 = scmp.ne.s32.totalorder %s134, %s135
    %p149 = scmp.eq.s32.totalorder %s17, 1
    %p150 = por %p148, %p149
    %p152 = scmp.ne.s32.totalorder %s135, %s151
    %p153 = scmp.eq.s32.totalorder %s17, 0
    %p154 = por %p152, %p153
    %p155 = scmp.le.s32.totalorder 1, %s11
    %p156 = scmp.lt.s32.totalorder %s11, 3
    %p157 = pnand %p155, %p156
    %p158 = pneg %p157
    // Predicated region
    $region9: #{block_forward.1} parent=5 // pred_check
      _
    $region10: #{block_forward.1} parent=5 // pred_check_branch
      %160 = sbr.rel (%p157) target = $region12
    $region11: #{block_forward.1} parent=5 // pred_region
      %s161 = ssub.s32 %s11, 1
      // Predicated region
      $region13: #{block_forward.1} parent=11 // pred_check
        %p162 = pneg %p58
      $region14: #{block_forward.1} parent=11 // pred_check_branch
        %164 = sbr.rel (%p162) target = $region16
      $region15: #{block_forward.1} parent=11 // pred_region
        _
      $region16: #{block_forward.1} parent=11 // pred_fallthru
        _
      // Predicated region
      $region17: #{block_forward.1} parent=11 // pred_check
        %p165 = pneg %p79
      $region18: #{block_forward.1} parent=11 // pred_check_branch
        %167 = sbr.rel (%p165) target = $region20
      $region19: #{block_forward.1} parent=11 // pred_region
        _
      $region20: #{block_forward.1} parent=11 // pred_fallthru
        _
      // Predicated region
      $region21: #{block_forward.1} parent=11 // pred_check
        %p168 = pneg %p100
      $region22: #{block_forward.1} parent=11 // pred_check_branch
        %170 = sbr.rel (%p168) target = $region24
      $region23: #{block_forward.1} parent=11 // pred_region
        _
      $region24: #{block_forward.1} parent=11 // pred_fallthru
        _
      // Predicated region
      $region25: #{block_forward.1} parent=11 // pred_check
        %p171 = pneg %p121
      $region26: #{block_forward.1} parent=11 // pred_check_branch
        %173 = sbr.rel (%p171) target = $region28
      $region27: #{block_forward.1} parent=11 // pred_region
        _
      $region28: #{block_forward.1} parent=11 // pred_fallthru
        _
    $region12: #{block_forward.1} parent=5 // pred_fallthru
      _
    %p174 = scmp.lt.s32.totalorder %s11, 2
    // Predicated region
    $region29: #{block_forward.1} parent=5 // pred_check
      %p175 = pneg %p174
    $region30: #{block_forward.1} parent=5 // pred_check_branch
      %177 = sbr.rel (%p175) target = $region32
    $region31: #{block_forward.1} parent=5 // pred_region
      // Predicated region
      $region33: #{block_forward.1} parent=31 // pred_check
        %p178 = pneg %p31
      $region34: #{block_forward.1} parent=31 // pred_check_branch
        %180 = sbr.rel (%p178) target = $region36
      $region35: #{block_forward.1} parent=31 // pred_region
        %p181 = scmp.lt.s32.totalorder %s11, 1
        %s182 = scalar_select %p181, %s11, 1
        %s183 = smul.addr %s182, 32
        %s184 = smul.addr %s183, 8
        %s185 = scalar_lea.vmem %s0, %s184
      $region36: #{block_forward.1} parent=31 // pred_fallthru
        _
    $region32: #{block_forward.1} parent=5 // pred_fallthru
      _
    %p186 = scmp.le.s32.totalorder 1, %s11
    %p187 = scmp.lt.s32.totalorder %s11, 3
    %p188 = pnand %p186, %p187
    %p189 = pneg %p188
    // Predicated region
    $region37: #{block_forward.1} parent=5 // pred_check
      _
    $region38: #{block_forward.1} parent=5 // pred_check_branch
      %191 = sbr.rel (%p188) target = $region40
    $region39: #{block_forward.1} parent=5 // pred_region
      %s192 = ssub.s32 %s11, 1
      %p193 = scmp.lt.s32.totalorder %s16, 1
      %s194 = scalar_select %p193, %s16, 1
      %s195 = smul.addr %s194, 32
      %s196 = smul.addr %s195, 8
      %s197 = scalar_lea.vmem %s0, %s196
      %p198 = pneg %p37
      %p199 = pneg %p34
      %p200 = pneg %p58
      %p201 = pneg %p55
      %p202 = pneg %p79
      %p203 = pneg %p76
      %p204 = pneg %p100
      %p205 = pneg %p97
      %p206 = pneg %p121
      %p207 = pneg %p118
      %p208 = pneg %p147
      %p209 = pneg %p144
      %p210 = scmp.lt.s32.totalorder %s16, 1
      %s211 = scalar_select %p210, %s16, 1
      %s212 = smul.addr %s211, 8
      %s213 = smul.addr %s212, 8
      %s214 = scalar_lea.vmem %s5, %s213
      %p215 = scmp.lt.s32.totalorder %s16, 1
      %s216 = scalar_select %p215, %s16, 1
      %s217 = smul.addr %s216, 32
      %s218 = smul.addr %s217, 8
      %s219 = scalar_lea.vmem %s0, %s218
      %p220 = scmp.lt.s32.totalorder %s16, 1
      %s221 = scalar_select %p220, %s16, 1
      %s222 = smul.addr %s221, 8
      %s223 = smul.addr %s222, 8
      %s224 = scalar_lea.vmem %s5, %s223
      %v225 = vld [vmem:[%s1] sm:$0x7]
      %v226 = vld [vmem:[%s1 + $0x4] sm:$0x7]
      %v227 = vld [vmem:[%s1 + $0x8] sm:$0x7]
      %v228 = vld [vmem:[%s2] sm:$0x7]
      %v229 = vld [vmem:[%s2 + $0x4] sm:$0x7]
      %v230 = vld [vmem:[%s2 + $0x8] sm:$0x7]
      %v231 = vld [vmem:[%s2 + $0xc] sm:$0x7]
      %v232 = vld [vmem:[%s2 + $0x10] sm:$0x7]
      %v233 = vld [vmem:[%s2 + $0x14] sm:$0x7]
      %v234 = vld [vmem:[%s3] sm:$0xff]
      %v235 = vld [vmem:[%s3 + $0x8] sm:$0xff]
      %v236 = vld [vmem:[%s3 + $0x10] sm:$0xff]
      %v237 = vld [vmem:[%s3 + $0x18] sm:$0xff]
      %v238 = vld [vmem:[%s4] sm:$0xf]
      %v239 = vld [vmem:[%s219] sm:$0xff]
      %v240 = vld [vmem:[%s219 + $0x8] sm:$0xff]
      %v241 = vld [vmem:[%s219 + $0x10] sm:$0xff]
      %v242 = vld [vmem:[%s219 + $0x18] sm:$0xff]
      %v243 = vld [vmem:[%s219 + $0x20] sm:$0xff]
      %v244 = vld [vmem:[%s219 + $0x28] sm:$0xff]
      %v245 = vld [vmem:[%s219 + $0x30] sm:$0xff]
      %v246 = vld [vmem:[%s219 + $0x38] sm:$0xff]
      %v247 = vld [vmem:[%s219 + $0x40] sm:$0xff]
      %v248 = vld [vmem:[%s219 + $0x48] sm:$0xff]
      %v249 = vld [vmem:[%s219 + $0x50] sm:$0xff]
      %v250 = vld [vmem:[%s219 + $0x58] sm:$0xff]
      %v251 = vld [vmem:[%s219 + $0x60] sm:$0xff]
      %v252 = vld [vmem:[%s219 + $0x68] sm:$0xff]
      %v253 = vld [vmem:[%s219 + $0x70] sm:$0xff]
      %v254 = vld [vmem:[%s219 + $0x78] sm:$0xff]
      %v255 = vld [vmem:[%s219 + $0x80] sm:$0xff]
      %v256 = vld [vmem:[%s219 + $0x88] sm:$0xff]
      %v257 = vld [vmem:[%s219 + $0x90] sm:$0xff]
      %v258 = vld [vmem:[%s219 + $0x98] sm:$0xff]
      %v259 = vld [vmem:[%s219 + $0xa0] sm:$0xff]
      %v260 = vld [vmem:[%s219 + $0xa8] sm:$0xff]
      %v261 = vld [vmem:[%s219 + $0xb0] sm:$0xff]
      %v262 = vld [vmem:[%s219 + $0xb8] sm:$0xff]
      %v263 = vld [vmem:[%s219 + $0xc0] sm:$0xff]
      %v264 = vld [vmem:[%s219 + $0xc8] sm:$0xff]
      %v265 = vld [vmem:[%s219 + $0xd0] sm:$0xff]
      %v266 = vld [vmem:[%s219 + $0xd8] sm:$0xff]
      %v267 = vld [vmem:[%s219 + $0xe0] sm:$0xff]
      %v268 = vld [vmem:[%s219 + $0xe8] sm:$0xff]
      %v269 = vld [vmem:[%s219 + $0xf0] sm:$0xff]
      %v270 = vld [vmem:[%s219 + $0xf8] sm:$0xff]
      %v271 = vmax.f32 %v239, 0.0
      %v272 = vmax.f32 %v240, 0.0
      %v273 = vmax.f32 %v241, 0.0
      %v274 = vmax.f32 %v242, 0.0
      %v275 = vmax.f32 %v243, 0.0
      %v276 = vmax.f32 %v244, 0.0
      %v277 = vmax.f32 %v245, 0.0
      %v278 = vmax.f32 %v246, 0.0
      %v279 = vmax.f32 %v247, 0.0
      %v280 = vmax.f32 %v248, 0.0
      %v281 = vmax.f32 %v249, 0.0
      %v282 = vmax.f32 %v250, 0.0
      %v283 = vmax.f32 %v251, 0.0
      %v284 = vmax.f32 %v252, 0.0
      %v285 = vmax.f32 %v253, 0.0
      %v286 = vmax.f32 %v254, 0.0
      %v287 = vmax.f32 %v255, 0.0
      %v288 = vmax.f32 %v256, 0.0
      %v289 = vmax.f32 %v257, 0.0
      %v290 = vmax.f32 %v258, 0.0
      %v291 = vmax.f32 %v259, 0.0
      %v292 = vmax.f32 %v260, 0.0
      %v293 = vmax.f32 %v261, 0.0
      %v294 = vmax.f32 %v262, 0.0
      %v295 = vmax.f32 %v263, 0.0
      %v296 = vmax.f32 %v264, 0.0
      %v297 = vmax.f32 %v265, 0.0
      %v298 = vmax.f32 %v266, 0.0
      %v299 = vmax.f32 %v267, 0.0
      %v300 = vmax.f32 %v268, 0.0
      %v301 = vmax.f32 %v269, 0.0
      %v302 = vmax.f32 %v270, 0.0
      %vm335 = vcmask 1040384
      %v336 = vrot.slane %v271, 7
      %v337 = vrot.slane %v272, 7
      %v338 = vsel %vm335, %v336, %v337
      %v339 = vrot.slane %v273, 7
      %v340 = vrot.slane %v274, 7
      %v341 = vsel %vm335, %v339, %v340
      %v342 = vrot.slane %v275, 7
      %v343 = vrot.slane %v276, 7
      %v344 = vsel %vm335, %v342, %v343
      %v345 = vrot.slane %v277, 7
      %v346 = vrot.slane %v278, 7
      %v347 = vsel %vm335, %v345, %v346
      %v348 = vrot.slane %v279, 7
      %v349 = vrot.slane %v280, 7
      %v350 = vsel %vm335, %v348, %v349
      %v351 = vrot.slane %v281, 7
      %v352 = vrot.slane %v282, 7
      %v353 = vsel %vm335, %v351, %v352
      %v354 = vrot.slane %v283, 7
      %v355 = vrot.slane %v284, 7
      %v356 = vsel %vm335, %v354, %v355
      %v357 = vrot.slane %v285, 7
      %v358 = vrot.slane %v286, 7
      %v359 = vsel %vm335, %v357, %v358
      %v360 = vrot.slane %v287, 7
      %v361 = vrot.slane %v288, 7
      %v362 = vsel %vm335, %v360, %v361
      %v363 = vrot.slane %v289, 7
      %v364 = vrot.slane %v290, 7
      %v365 = vsel %vm335, %v363, %v364
      %v366 = vrot.slane %v291, 7
      %v367 = vrot.slane %v292, 7
      %v368 = vsel %vm335, %v366, %v367
      %v369 = vrot.slane %v293, 7
      %v370 = vrot.slane %v294, 7
      %v371 = vsel %vm335, %v369, %v370
      %v372 = vrot.slane %v295, 7
      %v373 = vrot.slane %v296, 7
      %v374 = vsel %vm335, %v372, %v373
      %v375 = vrot.slane %v297, 7
      %v376 = vrot.slane %v298, 7
      %v377 = vsel %vm335, %v375, %v376
      %v378 = vrot.slane %v299, 7
      %v379 = vrot.slane %v300, 7
      %v380 = vsel %vm335, %v378, %v379
      %v381 = vrot.slane %v301, 7
      %v382 = vrot.slane %v302, 7
      %v383 = vsel %vm335, %v381, %v382
      %v432 = vsel %vm335, 0.0, %v336
      %v433 = vsel %vm335, 0.0, %v339
      %v434 = vsel %vm335, 0.0, %v342
      %v435 = vsel %vm335, 0.0, %v345
      %v436 = vsel %vm335, 0.0, %v348
      %v437 = vsel %vm335, 0.0, %v351
      %v438 = vsel %vm335, 0.0, %v354
      %v439 = vsel %vm335, 0.0, %v357
      %v440 = vsel %vm335, 0.0, %v360
      %v441 = vsel %vm335, 0.0, %v363
      %v442 = vsel %vm335, 0.0, %v366
      %v443 = vsel %vm335, 0.0, %v369
      %v444 = vsel %vm335, 0.0, %v372
      %v445 = vsel %vm335, 0.0, %v375
      %v446 = vsel %vm335, 0.0, %v378
      %v447 = vsel %vm335, 0.0, %v381
      %v448 = vsel %vm335, %v337, 0.0
      %v449 = vsel %vm335, %v340, 0.0
      %v450 = vsel %vm335, %v343, 0.0
      %v451 = vsel %vm335, %v346, 0.0
      %v452 = vsel %vm335, %v349, 0.0
      %v453 = vsel %vm335, %v352, 0.0
      %v454 = vsel %vm335, %v355, 0.0
      %v455 = vsel %vm335, %v358, 0.0
      %v456 = vsel %vm335, %v361, 0.0
      %v457 = vsel %vm335, %v364, 0.0
      %v458 = vsel %vm335, %v367, 0.0
      %v459 = vsel %vm335, %v370, 0.0
      %v460 = vsel %vm335, %v373, 0.0
      %v461 = vsel %vm335, %v376, 0.0
      %v462 = vsel %vm335, %v379, 0.0
      %v463 = vsel %vm335, %v382, 0.0
      %v464 = vlaneseq
      %v465 = vshrl.u32 %v464, 7
      %v466 = vsub.s32 0, %v465
      %v467 = vrot.slane %v225, %v466
      %v468 = vmul.f32 %v467, 0.0
      %v469 = vmul.f32 %v432, %v467
      %v470 = vmul.f32 %v338, %v467
      %v471 = vmul.f32 %v433, %v467
      %v472 = vmul.f32 %v341, %v467
      %v473 = vmul.f32 %v434, %v467
      %v474 = vmul.f32 %v344, %v467
      %v475 = vmul.f32 %v435, %v467
      %v476 = vmul.f32 %v347, %v467
      %v477 = vmul.f32 %v436, %v467
      %v478 = vmul.f32 %v350, %v467
      %v479 = vmul.f32 %v437, %v467
      %v480 = vmul.f32 %v353, %v467
      %v481 = vmul.f32 %v438, %v467
      %v482 = vmul.f32 %v356, %v467
      %v483 = vmul.f32 %v439, %v467
      %v484 = vmul.f32 %v359, %v467
      %v485 = vmul.f32 %v440, %v467
      %v486 = vmul.f32 %v362, %v467
      %v487 = vmul.f32 %v441, %v467
      %v488 = vmul.f32 %v365, %v467
      %v489 = vmul.f32 %v442, %v467
      %v490 = vmul.f32 %v368, %v467
      %v491 = vmul.f32 %v443, %v467
      %v492 = vmul.f32 %v371, %v467
      %v493 = vmul.f32 %v444, %v467
      %v494 = vmul.f32 %v374, %v467
      %v495 = vmul.f32 %v445, %v467
      %v496 = vmul.f32 %v377, %v467
      %v497 = vmul.f32 %v446, %v467
      %v498 = vmul.f32 %v380, %v467
      %v499 = vlaneseq
      %v500 = vshrl.u32 %v499, 7
      %v501 = vsub.s32 1, %v500
      %v502 = vrot.slane %v225, %v501
      %v503 = vmul.f32 %v502, 0.0
      %v504 = vmul.f32 %v432, %v502
      %v505 = vmul.f32 %v338, %v502
      %v506 = vmul.f32 %v448, %v502
      %v507 = vmul.f32 %v433, %v502
      %v508 = vmul.f32 %v341, %v502
      %v509 = vmul.f32 %v449, %v502
      %v510 = vmul.f32 %v434, %v502
      %v511 = vmul.f32 %v344, %v502
      %v512 = vmul.f32 %v450, %v502
      %v513 = vmul.f32 %v435, %v502
      %v514 = vmul.f32 %v347, %v502
      %v515 = vmul.f32 %v451, %v502
      %v516 = vmul.f32 %v436, %v502
      %v517 = vmul.f32 %v350, %v502
      %v518 = vmul.f32 %v452, %v502
      %v519 = vmul.f32 %v437, %v502
      %v520 = vmul.f32 %v353, %v502
      %v521 = vmul.f32 %v453, %v502
      %v522 = vmul.f32 %v438, %v502
      %v523 = vmul.f32 %v356, %v502
      %v524 = vmul.f32 %v454, %v502
      %v525 = vmul.f32 %v439, %v502
      %v526 = vmul.f32 %v359, %v502
      %v527 = vmul.f32 %v455, %v502
      %v528 = vmul.f32 %v440, %v502
      %v529 = vmul.f32 %v362, %v502
      %v530 = vmul.f32 %v456, %v502
      %v531 = vmul.f32 %v441, %v502
      %v532 = vmul.f32 %v365, %v502
      %v533 = vmul.f32 %v457, %v502
      %v534 = vmul.f32 %v442, %v502
      %v535 = vmul.f32 %v368, %v502
      %v536 = vmul.f32 %v458, %v502
      %v537 = vmul.f32 %v443, %v502
      %v538 = vmul.f32 %v371, %v502
      %v539 = vmul.f32 %v459, %v502
      %v540 = vmul.f32 %v444, %v502
      %v541 = vmul.f32 %v374, %v502
      %v542 = vmul.f32 %v460, %v502
      %v543 = vmul.f32 %v445, %v502
      %v544 = vmul.f32 %v377, %v502
      %v545 = vmul.f32 %v461, %v502
      %v546 = vmul.f32 %v446, %v502
      %v547 = vmul.f32 %v380, %v502
      %v548 = vmul.f32 %v462, %v502
      %vm595 = vcmask 1046528
      %v596 = vrot.slane %v503, 1
      %v597 = vsel %vm595, %v596, %v596
      %v598 = vrot.slane %v504, 1
      %v599 = vrot.slane %v505, 1
      %v600 = vsel %vm595, %v598, %v599
      %v601 = vrot.slane %v506, 1
      %v602 = vsel %vm595, %v599, %v601
      %v603 = vrot.slane %v507, 1
      %v604 = vrot.slane %v508, 1
      %v605 = vsel %vm595, %v603, %v604
      %v606 = vrot.slane %v509, 1
      %v607 = vsel %vm595, %v604, %v606
      %v608 = vrot.slane %v510, 1
      %v609 = vrot.slane %v511, 1
      %v610 = vsel %vm595, %v608, %v609
      %v611 = vrot.slane %v512, 1
      %v612 = vsel %vm595, %v609, %v611
      %v613 = vrot.slane %v513, 1
      %v614 = vrot.slane %v514, 1
      %v615 = vsel %vm595, %v613, %v614
      %v616 = vrot.slane %v515, 1
      %v617 = vsel %vm595, %v614, %v616
      %v618 = vrot.slane %v516, 1
      %v619 = vrot.slane %v517, 1
      %v620 = vsel %vm595, %v618, %v619
      %v621 = vrot.slane %v518, 1
      %v622 = vsel %vm595, %v619, %v621
      %v623 = vrot.slane %v519, 1
      %v624 = vrot.slane %v520, 1
      %v625 = vsel %vm595, %v623, %v624
      %v626 = vrot.slane %v521, 1
      %v627 = vsel %vm595, %v624, %v626
      %v628 = vrot.slane %v522, 1
      %v629 = vrot.slane %v523, 1
      %v630 = vsel %vm595, %v628, %v629
      %v631 = vrot.slane %v524, 1
      %v632 = vsel %vm595, %v629, %v631
      %v633 = vrot.slane %v525, 1
      %v634 = vrot.slane %v526, 1
      %v635 = vsel %vm595, %v633, %v634
      %v636 = vrot.slane %v527, 1
      %v637 = vsel %vm595, %v634, %v636
      %v638 = vrot.slane %v528, 1
      %v639 = vrot.slane %v529, 1
      %v640 = vsel %vm595, %v638, %v639
      %v641 = vrot.slane %v530, 1
      %v642 = vsel %vm595, %v639, %v641
      %v643 = vrot.slane %v531, 1
      %v644 = vrot.slane %v532, 1
      %v645 = vsel %vm595, %v643, %v644
      %v646 = vrot.slane %v533, 1
      %v647 = vsel %vm595, %v644, %v646
      %v648 = vrot.slane %v534, 1
      %v649 = vrot.slane %v535, 1
      %v650 = vsel %vm595, %v648, %v649
      %v651 = vrot.slane %v536, 1
      %v652 = vsel %vm595, %v649, %v651
      %v653 = vrot.slane %v537, 1
      %v654 = vrot.slane %v538, 1
      %v655 = vsel %vm595, %v653, %v654
      %v656 = vrot.slane %v539, 1
      %v657 = vsel %vm595, %v654, %v656
      %v658 = vrot.slane %v540, 1
      %v659 = vrot.slane %v541, 1
      %v660 = vsel %vm595, %v658, %v659
      %v661 = vrot.slane %v542, 1
      %v662 = vsel %vm595, %v659, %v661
      %v663 = vrot.slane %v543, 1
      %v664 = vrot.slane %v544, 1
      %v665 = vsel %vm595, %v663, %v664
      %v666 = vrot.slane %v545, 1
      %v667 = vsel %vm595, %v664, %v666
      %v668 = vrot.slane %v546, 1
      %v669 = vrot.slane %v547, 1
      %v670 = vsel %vm595, %v668, %v669
      %v671 = vrot.slane %v548, 1
      %v672 = vsel %vm595, %v669, %v671
      %v704 = vadd.f32 %v468, %v597
      %v705 = vadd.f32 %v469, %v600
      %v706 = vadd.f32 %v470, %v602
      %v707 = vadd.f32 %v471, %v605
      %v708 = vadd.f32 %v472, %v607
      %v709 = vadd.f32 %v473, %v610
      %v710 = vadd.f32 %v474, %v612
      %v711 = vadd.f32 %v475, %v615
      %v712 = vadd.f32 %v476, %v617
      %v713 = vadd.f32 %v477, %v620
      %v714 = vadd.f32 %v478, %v622
      %v715 = vadd.f32 %v479, %v625
      %v716 = vadd.f32 %v480, %v627
      %v717 = vadd.f32 %v481, %v630
      %v718 = vadd.f32 %v482, %v632
      %v719 = vadd.f32 %v483, %v635
      %v720 = vadd.f32 %v484, %v637
      %v721 = vadd.f32 %v485, %v640
      %v722 = vadd.f32 %v486, %v642
      %v723 = vadd.f32 %v487, %v645
      %v724 = vadd.f32 %v488, %v647
      %v725 = vadd.f32 %v489, %v650
      %v726 = vadd.f32 %v490, %v652
      %v727 = vadd.f32 %v491, %v655
      %v728 = vadd.f32 %v492, %v657
      %v729 = vadd.f32 %v493, %v660
      %v730 = vadd.f32 %v494, %v662
      %v731 = vadd.f32 %v495, %v665
      %v732 = vadd.f32 %v496, %v667
      %v733 = vadd.f32 %v497, %v670
      %v734 = vadd.f32 %v498, %v672
      %v735 = vlaneseq
      %v736 = vshrl.u32 %v735, 7
      %v737 = vsub.s32 2, %v736
      %v738 = vrot.slane %v225, %v737
      %v739 = vmul.f32 %v738, 0.0
      %v740 = vmul.f32 %v432, %v738
      %v741 = vmul.f32 %v338, %v738
      %v742 = vmul.f32 %v448, %v738
      %v743 = vmul.f32 %v433, %v738
      %v744 = vmul.f32 %v341, %v738
      %v745 = vmul.f32 %v449, %v738
      %v746 = vmul.f32 %v434, %v738
      %v747 = vmul.f32 %v344, %v738
      %v748 = vmul.f32 %v450, %v738
      %v749 = vmul.f32 %v435, %v738
      %v750 = vmul.f32 %v347, %v738
      %v751 = vmul.f32 %v451, %v738
      %v752 = vmul.f32 %v436, %v738
      %v753 = vmul.f32 %v350, %v738
      %v754 = vmul.f32 %v452, %v738
      %v755 = vmul.f32 %v437, %v738
      %v756 = vmul.f32 %v353, %v738
      %v757 = vmul.f32 %v453, %v738
      %v758 = vmul.f32 %v438, %v738
      %v759 = vmul.f32 %v356, %v738
      %v760 = vmul.f32 %v454, %v738
      %v761 = vmul.f32 %v439, %v738
      %v762 = vmul.f32 %v359, %v738
      %v763 = vmul.f32 %v455, %v738
      %v764 = vmul.f32 %v440, %v738
      %v765 = vmul.f32 %v362, %v738
      %v766 = vmul.f32 %v456, %v738
      %v767 = vmul.f32 %v441, %v738
      %v768 = vmul.f32 %v365, %v738
      %v769 = vmul.f32 %v457, %v738
      %v770 = vmul.f32 %v442, %v738
      %v771 = vmul.f32 %v368, %v738
      %v772 = vmul.f32 %v458, %v738
      %v773 = vmul.f32 %v443, %v738
      %v774 = vmul.f32 %v371, %v738
      %v775 = vmul.f32 %v459, %v738
      %v776 = vmul.f32 %v444, %v738
      %v777 = vmul.f32 %v374, %v738
      %v778 = vmul.f32 %v460, %v738
      %v779 = vmul.f32 %v445, %v738
      %v780 = vmul.f32 %v377, %v738
      %v781 = vmul.f32 %v461, %v738
      %v782 = vmul.f32 %v446, %v738
      %v783 = vmul.f32 %v380, %v738
      %v784 = vmul.f32 %v462, %v738
      %vm831 = vcmask 1045504
      %v832 = vrot.slane %v739, 2
      %v833 = vsel %vm831, %v832, %v832
      %v834 = vrot.slane %v740, 2
      %v835 = vrot.slane %v741, 2
      %v836 = vsel %vm831, %v834, %v835
      %v837 = vrot.slane %v742, 2
      %v838 = vsel %vm831, %v835, %v837
      %v839 = vrot.slane %v743, 2
      %v840 = vrot.slane %v744, 2
      %v841 = vsel %vm831, %v839, %v840
      %v842 = vrot.slane %v745, 2
      %v843 = vsel %vm831, %v840, %v842
      %v844 = vrot.slane %v746, 2
      %v845 = vrot.slane %v747, 2
      %v846 = vsel %vm831, %v844, %v845
      %v847 = vrot.slane %v748, 2
      %v848 = vsel %vm831, %v845, %v847
      %v849 = vrot.slane %v749, 2
      %v850 = vrot.slane %v750, 2
      %v851 = vsel %vm831, %v849, %v850
      %v852 = vrot.slane %v751, 2
      %v853 = vsel %vm831, %v850, %v852
      %v854 = vrot.slane %v752, 2
      %v855 = vrot.slane %v753, 2
      %v856 = vsel %vm831, %v854, %v855
      %v857 = vrot.slane %v754, 2
      %v858 = vsel %vm831, %v855, %v857
      %v859 = vrot.slane %v755, 2
      %v860 = vrot.slane %v756, 2
      %v861 = vsel %vm831, %v859, %v860
      %v862 = vrot.slane %v757, 2
      %v863 = vsel %vm831, %v860, %v862
      %v864 = vrot.slane %v758, 2
      %v865 = vrot.slane %v759, 2
      %v866 = vsel %vm831, %v864, %v865
      %v867 = vrot.slane %v760, 2
      %v868 = vsel %vm831, %v865, %v867
      %v869 = vrot.slane %v761, 2
      %v870 = vrot.slane %v762, 2
      %v871 = vsel %vm831, %v869, %v870
      %v872 = vrot.slane %v763, 2
      %v873 = vsel %vm831, %v870, %v872
      %v874 = vrot.slane %v764, 2
      %v875 = vrot.slane %v765, 2
      %v876 = vsel %vm831, %v874, %v875
      %v877 = vrot.slane %v766, 2
      %v878 = vsel %vm831, %v875, %v877
      %v879 = vrot.slane %v767, 2
      %v880 = vrot.slane %v768, 2
      %v881 = vsel %vm831, %v879, %v880
      %v882 = vrot.slane %v769, 2
      %v883 = vsel %vm831, %v880, %v882
      %v884 = vrot.slane %v770, 2
      %v885 = vrot.slane %v771, 2
      %v886 = vsel %vm831, %v884, %v885
      %v887 = vrot.slane %v772, 2
      %v888 = vsel %vm831, %v885, %v887
      %v889 = vrot.slane %v773, 2
      %v890 = vrot.slane %v774, 2
      %v891 = vsel %vm831, %v889, %v890
      %v892 = vrot.slane %v775, 2
      %v893 = vsel %vm831, %v890, %v892
      %v894 = vrot.slane %v776, 2
      %v895 = vrot.slane %v777, 2
      %v896 = vsel %vm831, %v894, %v895
      %v897 = vrot.slane %v778, 2
      %v898 = vsel %vm831, %v895, %v897
      %v899 = vrot.slane %v779, 2
      %v900 = vrot.slane %v780, 2
      %v901 = vsel %vm831, %v899, %v900
      %v902 = vrot.slane %v781, 2
      %v903 = vsel %vm831, %v900, %v902
      %v904 = vrot.slane %v782, 2
      %v905 = vrot.slane %v783, 2
      %v906 = vsel %vm831, %v904, %v905
      %v907 = vrot.slane %v784, 2
      %v908 = vsel %vm831, %v905, %v907
      %v940 = vadd.f32 %v704, %v833
      %v941 = vadd.f32 %v705, %v836
      %v942 = vadd.f32 %v706, %v838
      %v943 = vadd.f32 %v707, %v841
      %v944 = vadd.f32 %v708, %v843
      %v945 = vadd.f32 %v709, %v846
      %v946 = vadd.f32 %v710, %v848
      %v947 = vadd.f32 %v711, %v851
      %v948 = vadd.f32 %v712, %v853
      %v949 = vadd.f32 %v713, %v856
      %v950 = vadd.f32 %v714, %v858
      %v951 = vadd.f32 %v715, %v861
      %v952 = vadd.f32 %v716, %v863
      %v953 = vadd.f32 %v717, %v866
      %v954 = vadd.f32 %v718, %v868
      %v955 = vadd.f32 %v719, %v871
      %v956 = vadd.f32 %v720, %v873
      %v957 = vadd.f32 %v721, %v876
      %v958 = vadd.f32 %v722, %v878
      %v959 = vadd.f32 %v723, %v881
      %v960 = vadd.f32 %v724, %v883
      %v961 = vadd.f32 %v725, %v886
      %v962 = vadd.f32 %v726, %v888
      %v963 = vadd.f32 %v727, %v891
      %v964 = vadd.f32 %v728, %v893
      %v965 = vadd.f32 %v729, %v896
      %v966 = vadd.f32 %v730, %v898
      %v967 = vadd.f32 %v731, %v901
      %v968 = vadd.f32 %v732, %v903
      %v969 = vadd.f32 %v733, %v906
      %v970 = vadd.f32 %v734, %v908
      %v971 = vlaneseq
      %v972 = vshrl.u32 %v971, 7
      %v973 = vsub.s32 0, %v972
      %v974 = vrot.slane %v226, %v973
      %v975 = vmul.f32 %v432, %v974
      %v976 = vmul.f32 %v338, %v974
      %v977 = vmul.f32 %v433, %v974
      %v978 = vmul.f32 %v341, %v974
      %v979 = vmul.f32 %v434, %v974
      %v980 = vmul.f32 %v344, %v974
      %v981 = vmul.f32 %v435, %v974
      %v982 = vmul.f32 %v347, %v974
      %v983 = vmul.f32 %v436, %v974
      %v984 = vmul.f32 %v350, %v974
      %v985 = vmul.f32 %v437, %v974
      %v986 = vmul.f32 %v353, %v974
      %v987 = vmul.f32 %v438, %v974
      %v988 = vmul.f32 %v356, %v974
      %v989 = vmul.f32 %v439, %v974
      %v990 = vmul.f32 %v359, %v974
      %v991 = vmul.f32 %v440, %v974
      %v992 = vmul.f32 %v362, %v974
      %v993 = vmul.f32 %v441, %v974
      %v994 = vmul.f32 %v365, %v974
      %v995 = vmul.f32 %v442, %v974
      %v996 = vmul.f32 %v368, %v974
      %v997 = vmul.f32 %v443, %v974
      %v998 = vmul.f32 %v371, %v974
      %v999 = vmul.f32 %v444, %v974
      %v1000 = vmul.f32 %v374, %v974
      %v1001 = vmul.f32 %v445, %v974
      %v1002 = vmul.f32 %v377, %v974
      %v1003 = vmul.f32 %v446, %v974
      %v1004 = vmul.f32 %v380, %v974
      %v1005 = vmul.f32 %v447, %v974
      %v1006 = vmul.f32 %v383, %v974
      %v1007 = vadd.f32 %v940, %v975
      %v1008 = vadd.f32 %v940, %v976
      %v1009 = vadd.f32 %v941, %v977
      %v1010 = vadd.f32 %v942, %v978
      %v1011 = vadd.f32 %v943, %v979
      %v1012 = vadd.f32 %v944, %v980
      %v1013 = vadd.f32 %v945, %v981
      %v1014 = vadd.f32 %v946, %v982
      %v1015 = vadd.f32 %v947, %v983
      %v1016 = vadd.f32 %v948, %v984
      %v1017 = vadd.f32 %v949, %v985
      %v1018 = vadd.f32 %v950, %v986
      %v1019 = vadd.f32 %v951, %v987
      %v1020 = vadd.f32 %v952, %v988
      %v1021 = vadd.f32 %v953, %v989
      %v1022 = vadd.f32 %v954, %v990
      %v1023 = vadd.f32 %v955, %v991
      %v1024 = vadd.f32 %v956, %v992
      %v1025 = vadd.f32 %v957, %v993
      %v1026 = vadd.f32 %v958, %v994
      %v1027 = vadd.f32 %v959, %v995
      %v1028 = vadd.f32 %v960, %v996
      %v1029 = vadd.f32 %v961, %v997
      %v1030 = vadd.f32 %v962, %v998
      %v1031 = vadd.f32 %v963, %v999
      %v1032 = vadd.f32 %v964, %v1000
      %v1033 = vadd.f32 %v965, %v1001
      %v1034 = vadd.f32 %v966, %v1002
      %v1035 = vadd.f32 %v967, %v1003
      %v1036 = vadd.f32 %v968, %v1004
      %v1037 = vadd.f32 %v969, %v1005
      %v1038 = vadd.f32 %v970, %v1006
      %v1039 = vlaneseq
      %v1040 = vshrl.u32 %v1039, 7
      %v1041 = vsub.s32 1, %v1040
      %v1042 = vrot.slane %v226, %v1041
      %v1043 = vmul.f32 %v432, %v1042
      %v1044 = vmul.f32 %v338, %v1042
      %v1045 = vmul.f32 %v448, %v1042
      %v1046 = vmul.f32 %v433, %v1042
      %v1047 = vmul.f32 %v341, %v1042
      %v1048 = vmul.f32 %v449, %v1042
      %v1049 = vmul.f32 %v434, %v1042
      %v1050 = vmul.f32 %v344, %v1042
      %v1051 = vmul.f32 %v450, %v1042
      %v1052 = vmul.f32 %v435, %v1042
      %v1053 = vmul.f32 %v347, %v1042
      %v1054 = vmul.f32 %v451, %v1042
      %v1055 = vmul.f32 %v436, %v1042
      %v1056 = vmul.f32 %v350, %v1042
      %v1057 = vmul.f32 %v452, %v1042
      %v1058 = vmul.f32 %v437, %v1042
      %v1059 = vmul.f32 %v353, %v1042
      %v1060 = vmul.f32 %v453, %v1042
      %v1061 = vmul.f32 %v438, %v1042
      %v1062 = vmul.f32 %v356, %v1042
      %v1063 = vmul.f32 %v454, %v1042
      %v1064 = vmul.f32 %v439, %v1042
      %v1065 = vmul.f32 %v359, %v1042
      %v1066 = vmul.f32 %v455, %v1042
      %v1067 = vmul.f32 %v440, %v1042
      %v1068 = vmul.f32 %v362, %v1042
      %v1069 = vmul.f32 %v456, %v1042
      %v1070 = vmul.f32 %v441, %v1042
      %v1071 = vmul.f32 %v365, %v1042
      %v1072 = vmul.f32 %v457, %v1042
      %v1073 = vmul.f32 %v442, %v1042
      %v1074 = vmul.f32 %v368, %v1042
      %v1075 = vmul.f32 %v458, %v1042
      %v1076 = vmul.f32 %v443, %v1042
      %v1077 = vmul.f32 %v371, %v1042
      %v1078 = vmul.f32 %v459, %v1042
      %v1079 = vmul.f32 %v444, %v1042
      %v1080 = vmul.f32 %v374, %v1042
      %v1081 = vmul.f32 %v460, %v1042
      %v1082 = vmul.f32 %v445, %v1042
      %v1083 = vmul.f32 %v377, %v1042
      %v1084 = vmul.f32 %v461, %v1042
      %v1085 = vmul.f32 %v446, %v1042
      %v1086 = vmul.f32 %v380, %v1042
      %v1087 = vmul.f32 %v462, %v1042
      %v1088 = vmul.f32 %v447, %v1042
      %v1089 = vmul.f32 %v383, %v1042
      %v1090 = vmul.f32 %v463, %v1042
      %v1139 = vrot.slane %v1043, 1
      %v1140 = vrot.slane %v1044, 1
      %v1141 = vsel %vm595, %v1139, %v1140
      %v1142 = vrot.slane %v1045, 1
      %v1143 = vsel %vm595, %v1140, %v1142
      %v1144 = vrot.slane %v1046, 1
      %v1145 = vrot.slane %v1047, 1
      %v1146 = vsel %vm595, %v1144, %v1145
      %v1147 = vrot.slane %v1048, 1
      %v1148 = vsel %vm595, %v1145, %v1147
      %v1149 = vrot.slane %v1049, 1
      %v1150 = vrot.slane %v1050, 1
      %v1151 = vsel %vm595, %v1149, %v1150
      %v1152 = vrot.slane %v1051, 1
      %v1153 = vsel %vm595, %v1150, %v1152
      %v1154 = vrot.slane %v1052, 1
      %v1155 = vrot.slane %v1053, 1
      %v1156 = vsel %vm595, %v1154, %v1155
      %v1157 = vrot.slane %v1054, 1
      %v1158 = vsel %vm595, %v1155, %v1157
      %v1159 = vrot.slane %v1055, 1
      %v1160 = vrot.slane %v1056, 1
      %v1161 = vsel %vm595, %v1159, %v1160
      %v1162 = vrot.slane %v1057, 1
      %v1163 = vsel %vm595, %v1160, %v1162
      %v1164 = vrot.slane %v1058, 1
      %v1165 = vrot.slane %v1059, 1
      %v1166 = vsel %vm595, %v1164, %v1165
      %v1167 = vrot.slane %v1060, 1
      %v1168 = vsel %vm595, %v1165, %v1167
      %v1169 = vrot.slane %v1061, 1
      %v1170 = vrot.slane %v1062, 1
      %v1171 = vsel %vm595, %v1169, %v1170
      %v1172 = vrot.slane %v1063, 1
      %v1173 = vsel %vm595, %v1170, %v1172
      %v1174 = vrot.slane %v1064, 1
      %v1175 = vrot.slane %v1065, 1
      %v1176 = vsel %vm595, %v1174, %v1175
      %v1177 = vrot.slane %v1066, 1
      %v1178 = vsel %vm595, %v1175, %v1177
      %v1179 = vrot.slane %v1067, 1
      %v1180 = vrot.slane %v1068, 1
      %v1181 = vsel %vm595, %v1179, %v1180
      %v1182 = vrot.slane %v1069, 1
      %v1183 = vsel %vm595, %v1180, %v1182
      %v1184 = vrot.slane %v1070, 1
      %v1185 = vrot.slane %v1071, 1
      %v1186 = vsel %vm595, %v1184, %v1185
      %v1187 = vrot.slane %v1072, 1
      %v1188 = vsel %vm595, %v1185, %v1187
      %v1189 = vrot.slane %v1073, 1
      %v1190 = vrot.slane %v1074, 1
      %v1191 = vsel %vm595, %v1189, %v1190
      %v1192 = vrot.slane %v1075, 1
      %v1193 = vsel %vm595, %v1190, %v1192
      %v1194 = vrot.slane %v1076, 1
      %v1195 = vrot.slane %v1077, 1
      %v1196 = vsel %vm595, %v1194, %v1195
      %v1197 = vrot.slane %v1078, 1
      %v1198 = vsel %vm595, %v1195, %v1197
      %v1199 = vrot.slane %v1079, 1
      %v1200 = vrot.slane %v1080, 1
      %v1201 = vsel %vm595, %v1199, %v1200
      %v1202 = vrot.slane %v1081, 1
      %v1203 = vsel %vm595, %v1200, %v1202
      %v1204 = vrot.slane %v1082, 1
      %v1205 = vrot.slane %v1083, 1
      %v1206 = vsel %vm595, %v1204, %v1205
      %v1207 = vrot.slane %v1084, 1
      %v1208 = vsel %vm595, %v1205, %v1207
      %v1209 = vrot.slane %v1085, 1
      %v1210 = vrot.slane %v1086, 1
      %v1211 = vsel %vm595, %v1209, %v1210
      %v1212 = vrot.slane %v1087, 1
      %v1213 = vsel %vm595, %v1210, %v1212
      %v1214 = vrot.slane %v1088, 1
      %v1215 = vrot.slane %v1089, 1
      %v1216 = vsel %vm595, %v1214, %v1215
      %v1217 = vrot.slane %v1090, 1
      %v1218 = vsel %vm595, %v1215, %v1217
      %v1251 = vadd.f32 %v1007, %v1141
      %v1252 = vadd.f32 %v1008, %v1143
      %v1253 = vadd.f32 %v1009, %v1146
      %v1254 = vadd.f32 %v1010, %v1148
      %v1255 = vadd.f32 %v1011, %v1151
      %v1256 = vadd.f32 %v1012, %v1153
      %v1257 = vadd.f32 %v1013, %v1156
      %v1258 = vadd.f32 %v1014, %v1158
      %v1259 = vadd.f32 %v1015, %v1161
      %v1260 = vadd.f32 %v1016, %v1163
      %v1261 = vadd.f32 %v1017, %v1166
      %v1262 = vadd.f32 %v1018, %v1168
      %v1263 = vadd.f32 %v1019, %v1171
      %v1264 = vadd.f32 %v1020, %v1173
      %v1265 = vadd.f32 %v1021, %v1176
      %v1266 = vadd.f32 %v1022, %v1178
      %v1267 = vadd.f32 %v1023, %v1181
      %v1268 = vadd.f32 %v1024, %v1183
      %v1269 = vadd.f32 %v1025, %v1186
      %v1270 = vadd.f32 %v1026, %v1188
      %v1271 = vadd.f32 %v1027, %v1191
      %v1272 = vadd.f32 %v1028, %v1193
      %v1273 = vadd.f32 %v1029, %v1196
      %v1274 = vadd.f32 %v1030, %v1198
      %v1275 = vadd.f32 %v1031, %v1201
      %v1276 = vadd.f32 %v1032, %v1203
      %v1277 = vadd.f32 %v1033, %v1206
      %v1278 = vadd.f32 %v1034, %v1208
      %v1279 = vadd.f32 %v1035, %v1211
      %v1280 = vadd.f32 %v1036, %v1213
      %v1281 = vadd.f32 %v1037, %v1216
      %v1282 = vadd.f32 %v1038, %v1218
      %v1283 = vlaneseq
      %v1284 = vshrl.u32 %v1283, 7
      %v1285 = vsub.s32 2, %v1284
      %v1286 = vrot.slane %v226, %v1285
      %v1287 = vmul.f32 %v432, %v1286
      %v1288 = vmul.f32 %v338, %v1286
      %v1289 = vmul.f32 %v448, %v1286
      %v1290 = vmul.f32 %v433, %v1286
      %v1291 = vmul.f32 %v341, %v1286
      %v1292 = vmul.f32 %v449, %v1286
      %v1293 = vmul.f32 %v434, %v1286
      %v1294 = vmul.f32 %v344, %v1286
      %v1295 = vmul.f32 %v450, %v1286
      %v1296 = vmul.f32 %v435, %v1286
      %v1297 = vmul.f32 %v347, %v1286
      %v1298 = vmul.f32 %v451, %v1286
      %v1299 = vmul.f32 %v436, %v1286
      %v1300 = vmul.f32 %v350, %v1286
      %v1301 = vmul.f32 %v452, %v1286
      %v1302 = vmul.f32 %v437, %v1286
      %v1303 = vmul.f32 %v353, %v1286
      %v1304 = vmul.f32 %v453, %v1286
      %v1305 = vmul.f32 %v438, %v1286
      %v1306 = vmul.f32 %v356, %v1286
      %v1307 = vmul.f32 %v454, %v1286
      %v1308 = vmul.f32 %v439, %v1286
      %v1309 = vmul.f32 %v359, %v1286
      %v1310 = vmul.f32 %v455, %v1286
      %v1311 = vmul.f32 %v440, %v1286
      %v1312 = vmul.f32 %v362, %v1286
      %v1313 = vmul.f32 %v456, %v1286
      %v1314 = vmul.f32 %v441, %v1286
      %v1315 = vmul.f32 %v365, %v1286
      %v1316 = vmul.f32 %v457, %v1286
      %v1317 = vmul.f32 %v442, %v1286
      %v1318 = vmul.f32 %v368, %v1286
      %v1319 = vmul.f32 %v458, %v1286
      %v1320 = vmul.f32 %v443, %v1286
      %v1321 = vmul.f32 %v371, %v1286
      %v1322 = vmul.f32 %v459, %v1286
      %v1323 = vmul.f32 %v444, %v1286
      %v1324 = vmul.f32 %v374, %v1286
      %v1325 = vmul.f32 %v460, %v1286
      %v1326 = vmul.f32 %v445, %v1286
      %v1327 = vmul.f32 %v377, %v1286
      %v1328 = vmul.f32 %v461, %v1286
      %v1329 = vmul.f32 %v446, %v1286
      %v1330 = vmul.f32 %v380, %v1286
      %v1331 = vmul.f32 %v462, %v1286
      %v1332 = vmul.f32 %v447, %v1286
      %v1333 = vmul.f32 %v383, %v1286
      %v1334 = vmul.f32 %v463, %v1286
      %v1383 = vrot.slane %v1287, 2
      %v1384 = vrot.slane %v1288, 2
      %v1385 = vsel %vm831, %v1383, %v1384
      %v1386 = vrot.slane %v1289, 2
      %v1387 = vsel %vm831, %v1384, %v1386
      %v1388 = vrot.slane %v1290, 2
      %v1389 = vrot.slane %v1291, 2
      %v1390 = vsel %vm831, %v1388, %v1389
      %v1391 = vrot.slane %v1292, 2
      %v1392 = vsel %vm831, %v1389, %v1391
      %v1393 = vrot.slane %v1293, 2
      %v1394 = vrot.slane %v1294, 2
      %v1395 = vsel %vm831, %v1393, %v1394
      %v1396 = vrot.slane %v1295, 2
      %v1397 = vsel %vm831, %v1394, %v1396
      %v1398 = vrot.slane %v1296, 2
      %v1399 = vrot.slane %v1297, 2
      %v1400 = vsel %vm831, %v1398, %v1399
      %v1401 = vrot.slane %v1298, 2
      %v1402 = vsel %vm831, %v1399, %v1401
      %v1403 = vrot.slane %v1299, 2
      %v1404 = vrot.slane %v1300, 2
      %v1405 = vsel %vm831, %v1403, %v1404
      %v1406 = vrot.slane %v1301, 2
      %v1407 = vsel %vm831, %v1404, %v1406
      %v1408 = vrot.slane %v1302, 2
      %v1409 = vrot.slane %v1303, 2
      %v1410 = vsel %vm831, %v1408, %v1409
      %v1411 = vrot.slane %v1304, 2
      %v1412 = vsel %vm831, %v1409, %v1411
      %v1413 = vrot.slane %v1305, 2
      %v1414 = vrot.slane %v1306, 2
      %v1415 = vsel %vm831, %v1413, %v1414
      %v1416 = vrot.slane %v1307, 2
      %v1417 = vsel %vm831, %v1414, %v1416
      %v1418 = vrot.slane %v1308, 2
      %v1419 = vrot.slane %v1309, 2
      %v1420 = vsel %vm831, %v1418, %v1419
      %v1421 = vrot.slane %v1310, 2
      %v1422 = vsel %vm831, %v1419, %v1421
      %v1423 = vrot.slane %v1311, 2
      %v1424 = vrot.slane %v1312, 2
      %v1425 = vsel %vm831, %v1423, %v1424
      %v1426 = vrot.slane %v1313, 2
      %v1427 = vsel %vm831, %v1424, %v1426
      %v1428 = vrot.slane %v1314, 2
      %v1429 = vrot.slane %v1315, 2
      %v1430 = vsel %vm831, %v1428, %v1429
      %v1431 = vrot.slane %v1316, 2
      %v1432 = vsel %vm831, %v1429, %v1431
      %v1433 = vrot.slane %v1317, 2
      %v1434 = vrot.slane %v1318, 2
      %v1435 = vsel %vm831, %v1433, %v1434
      %v1436 = vrot.slane %v1319, 2
      %v1437 = vsel %vm831, %v1434, %v1436
      %v1438 = vrot.slane %v1320, 2
      %v1439 = vrot.slane %v1321, 2
      %v1440 = vsel %vm831, %v1438, %v1439
      %v1441 = vrot.slane %v1322, 2
      %v1442 = vsel %vm831, %v1439, %v1441
      %v1443 = vrot.slane %v1323, 2
      %v1444 = vrot.slane %v1324, 2
      %v1445 = vsel %vm831, %v1443, %v1444
      %v1446 = vrot.slane %v1325, 2
      %v1447 = vsel %vm831, %v1444, %v1446
      %v1448 = vrot.slane %v1326, 2
      %v1449 = vrot.slane %v1327, 2
      %v1450 = vsel %vm831, %v1448, %v1449
      %v1451 = vrot.slane %v1328, 2
      %v1452 = vsel %vm831, %v1449, %v1451
      %v1453 = vrot.slane %v1329, 2
      %v1454 = vrot.slane %v1330, 2
      %v1455 = vsel %vm831, %v1453, %v1454
      %v1456 = vrot.slane %v1331, 2
      %v1457 = vsel %vm831, %v1454, %v1456
      %v1458 = vrot.slane %v1332, 2
      %v1459 = vrot.slane %v1333, 2
      %v1460 = vsel %vm831, %v1458, %v1459
      %v1461 = vrot.slane %v1334, 2
      %v1462 = vsel %vm831, %v1459, %v1461
      %v1495 = vadd.f32 %v1251, %v1385
      %v1496 = vadd.f32 %v1252, %v1387
      %v1497 = vadd.f32 %v1253, %v1390
      %v1498 = vadd.f32 %v1254, %v1392
      %v1499 = vadd.f32 %v1255, %v1395
      %v1500 = vadd.f32 %v1256, %v1397
      %v1501 = vadd.f32 %v1257, %v1400
      %v1502 = vadd.f32 %v1258, %v1402
      %v1503 = vadd.f32 %v1259, %v1405
      %v1504 = vadd.f32 %v1260, %v1407
      %v1505 = vadd.f32 %v1261, %v1410
      %v1506 = vadd.f32 %v1262, %v1412
      %v1507 = vadd.f32 %v1263, %v1415
      %v1508 = vadd.f32 %v1264, %v1417
      %v1509 = vadd.f32 %v1265, %v1420
      %v1510 = vadd.f32 %v1266, %v1422
      %v1511 = vadd.f32 %v1267, %v1425
      %v1512 = vadd.f32 %v1268, %v1427
      %v1513 = vadd.f32 %v1269, %v1430
      %v1514 = vadd.f32 %v1270, %v1432
      %v1515 = vadd.f32 %v1271, %v1435
      %v1516 = vadd.f32 %v1272, %v1437
      %v1517 = vadd.f32 %v1273, %v1440
      %v1518 = vadd.f32 %v1274, %v1442
      %v1519 = vadd.f32 %v1275, %v1445
      %v1520 = vadd.f32 %v1276, %v1447
      %v1521 = vadd.f32 %v1277, %v1450
      %v1522 = vadd.f32 %v1278, %v1452
      %v1523 = vadd.f32 %v1279, %v1455
      %v1524 = vadd.f32 %v1280, %v1457
      %v1525 = vadd.f32 %v1281, %v1460
      %v1526 = vadd.f32 %v1282, %v1462
      %v1527 = vlaneseq
      %v1528 = vshrl.u32 %v1527, 7
      %v1529 = vsub.s32 0, %v1528
      %v1530 = vrot.slane %v227, %v1529
      %v1531 = vmul.f32 %v433, %v1530
      %v1532 = vmul.f32 %v341, %v1530
      %v1533 = vmul.f32 %v434, %v1530
      %v1534 = vmul.f32 %v344, %v1530
      %v1535 = vmul.f32 %v435, %v1530
      %v1536 = vmul.f32 %v347, %v1530
      %v1537 = vmul.f32 %v436, %v1530
      %v1538 = vmul.f32 %v350, %v1530
      %v1539 = vmul.f32 %v437, %v1530
      %v1540 = vmul.f32 %v353, %v1530
      %v1541 = vmul.f32 %v438, %v1530
      %v1542 = vmul.f32 %v356, %v1530
      %v1543 = vmul.f32 %v439, %v1530
      %v1544 = vmul.f32 %v359, %v1530
      %v1545 = vmul.f32 %v440, %v1530
      %v1546 = vmul.f32 %v362, %v1530
      %v1547 = vmul.f32 %v441, %v1530
      %v1548 = vmul.f32 %v365, %v1530
      %v1549 = vmul.f32 %v442, %v1530
      %v1550 = vmul.f32 %v368, %v1530
      %v1551 = vmul.f32 %v443, %v1530
      %v1552 = vmul.f32 %v371, %v1530
      %v1553 = vmul.f32 %v444, %v1530
      %v1554 = vmul.f32 %v374, %v1530
      %v1555 = vmul.f32 %v445, %v1530
      %v1556 = vmul.f32 %v377, %v1530
      %v1557 = vmul.f32 %v446, %v1530
      %v1558 = vmul.f32 %v380, %v1530
      %v1559 = vmul.f32 %v447, %v1530
      %v1560 = vmul.f32 %v383, %v1530
      %v1561 = vmul.f32 %v1530, 0.0
      %v1562 = vadd.f32 %v1495, %v1531
      %v1563 = vadd.f32 %v1496, %v1532
      %v1564 = vadd.f32 %v1497, %v1533
      %v1565 = vadd.f32 %v1498, %v1534
      %v1566 = vadd.f32 %v1499, %v1535
      %v1567 = vadd.f32 %v1500, %v1536
      %v1568 = vadd.f32 %v1501, %v1537
      %v1569 = vadd.f32 %v1502, %v1538
      %v1570 = vadd.f32 %v1503, %v1539
      %v1571 = vadd.f32 %v1504, %v1540
      %v1572 = vadd.f32 %v1505, %v1541
      %v1573 = vadd.f32 %v1506, %v1542
      %v1574 = vadd.f32 %v1507, %v1543
      %v1575 = vadd.f32 %v1508, %v1544
      %v1576 = vadd.f32 %v1509, %v1545
      %v1577 = vadd.f32 %v1510, %v1546
      %v1578 = vadd.f32 %v1511, %v1547
      %v1579 = vadd.f32 %v1512, %v1548
      %v1580 = vadd.f32 %v1513, %v1549
      %v1581 = vadd.f32 %v1514, %v1550
      %v1582 = vadd.f32 %v1515, %v1551
      %v1583 = vadd.f32 %v1516, %v1552
      %v1584 = vadd.f32 %v1517, %v1553
      %v1585 = vadd.f32 %v1518, %v1554
      %v1586 = vadd.f32 %v1519, %v1555
      %v1587 = vadd.f32 %v1520, %v1556
      %v1588 = vadd.f32 %v1521, %v1557
      %v1589 = vadd.f32 %v1522, %v1558
      %v1590 = vadd.f32 %v1523, %v1559
      %v1591 = vadd.f32 %v1524, %v1560
      %v1592 = vadd.f32 %v1525, %v1561
      %v1593 = vadd.f32 %v1526, %v1561
      %v1594 = vlaneseq
      %v1595 = vshrl.u32 %v1594, 7
      %v1596 = vsub.s32 1, %v1595
      %v1597 = vrot.slane %v227, %v1596
      %v1598 = vmul.f32 %v433, %v1597
      %v1599 = vmul.f32 %v341, %v1597
      %v1600 = vmul.f32 %v449, %v1597
      %v1601 = vmul.f32 %v434, %v1597
      %v1602 = vmul.f32 %v344, %v1597
      %v1603 = vmul.f32 %v450, %v1597
      %v1604 = vmul.f32 %v435, %v1597
      %v1605 = vmul.f32 %v347, %v1597
      %v1606 = vmul.f32 %v451, %v1597
      %v1607 = vmul.f32 %v436, %v1597
      %v1608 = vmul.f32 %v350, %v1597
      %v1609 = vmul.f32 %v452, %v1597
      %v1610 = vmul.f32 %v437, %v1597
      %v1611 = vmul.f32 %v353, %v1597
      %v1612 = vmul.f32 %v453, %v1597
      %v1613 = vmul.f32 %v438, %v1597
      %v1614 = vmul.f32 %v356, %v1597
      %v1615 = vmul.f32 %v454, %v1597
      %v1616 = vmul.f32 %v439, %v1597
      %v1617 = vmul.f32 %v359, %v1597
      %v1618 = vmul.f32 %v455, %v1597
      %v1619 = vmul.f32 %v440, %v1597
      %v1620 = vmul.f32 %v362, %v1597
      %v1621 = vmul.f32 %v456, %v1597
      %v1622 = vmul.f32 %v441, %v1597
      %v1623 = vmul.f32 %v365, %v1597
      %v1624 = vmul.f32 %v457, %v1597
      %v1625 = vmul.f32 %v442, %v1597
      %v1626 = vmul.f32 %v368, %v1597
      %v1627 = vmul.f32 %v458, %v1597
      %v1628 = vmul.f32 %v443, %v1597
      %v1629 = vmul.f32 %v371, %v1597
      %v1630 = vmul.f32 %v459, %v1597
      %v1631 = vmul.f32 %v444, %v1597
      %v1632 = vmul.f32 %v374, %v1597
      %v1633 = vmul.f32 %v460, %v1597
      %v1634 = vmul.f32 %v445, %v1597
      %v1635 = vmul.f32 %v377, %v1597
      %v1636 = vmul.f32 %v461, %v1597
      %v1637 = vmul.f32 %v446, %v1597
      %v1638 = vmul.f32 %v380, %v1597
      %v1639 = vmul.f32 %v462, %v1597
      %v1640 = vmul.f32 %v447, %v1597
      %v1641 = vmul.f32 %v383, %v1597
      %v1642 = vmul.f32 %v463, %v1597
      %v1643 = vmul.f32 %v1597, 0.0
      %v1690 = vrot.slane %v1598, 1
      %v1691 = vrot.slane %v1599, 1
      %v1692 = vsel %vm595, %v1690, %v1691
      %v1693 = vrot.slane %v1600, 1
      %v1694 = vsel %vm595, %v1691, %v1693
      %v1695 = vrot.slane %v1601, 1
      %v1696 = vrot.slane %v1602, 1
      %v1697 = vsel %vm595, %v1695, %v1696
      %v1698 = vrot.slane %v1603, 1
      %v1699 = vsel %vm595, %v1696, %v1698
      %v1700 = vrot.slane %v1604, 1
      %v1701 = vrot.slane %v1605, 1
      %v1702 = vsel %vm595, %v1700, %v1701
      %v1703 = vrot.slane %v1606, 1
      %v1704 = vsel %vm595, %v1701, %v1703
      %v1705 = vrot.slane %v1607, 1
      %v1706 = vrot.slane %v1608, 1
      %v1707 = vsel %vm595, %v1705, %v1706
      %v1708 = vrot.slane %v1609, 1
      %v1709 = vsel %vm595, %v1706, %v1708
      %v1710 = vrot.slane %v1610, 1
      %v1711 = vrot.slane %v1611, 1
      %v1712 = vsel %vm595, %v1710, %v1711
      %v1713 = vrot.slane %v1612, 1
      %v1714 = vsel %vm595, %v1711, %v1713
      %v1715 = vrot.slane %v1613, 1
      %v1716 = vrot.slane %v1614, 1
      %v1717 = vsel %vm595, %v1715, %v1716
      %v1718 = vrot.slane %v1615, 1
      %v1719 = vsel %vm595, %v1716, %v1718
      %v1720 = vrot.slane %v1616, 1
      %v1721 = vrot.slane %v1617, 1
      %v1722 = vsel %vm595, %v1720, %v1721
      %v1723 = vrot.slane %v1618, 1
      %v1724 = vsel %vm595, %v1721, %v1723
      %v1725 = vrot.slane %v1619, 1
      %v1726 = vrot.slane %v1620, 1
      %v1727 = vsel %vm595, %v1725, %v1726
      %v1728 = vrot.slane %v1621, 1
      %v1729 = vsel %vm595, %v1726, %v1728
      %v1730 = vrot.slane %v1622, 1
      %v1731 = vrot.slane %v1623, 1
      %v1732 = vsel %vm595, %v1730, %v1731
      %v1733 = vrot.slane %v1624, 1
      %v1734 = vsel %vm595, %v1731, %v1733
      %v1735 = vrot.slane %v1625, 1
      %v1736 = vrot.slane %v1626, 1
      %v1737 = vsel %vm595, %v1735, %v1736
      %v1738 = vrot.slane %v1627, 1
      %v1739 = vsel %vm595, %v1736, %v1738
      %v1740 = vrot.slane %v1628, 1
      %v1741 = vrot.slane %v1629, 1
      %v1742 = vsel %vm595, %v1740, %v1741
      %v1743 = vrot.slane %v1630, 1
      %v1744 = vsel %vm595, %v1741, %v1743
      %v1745 = vrot.slane %v1631, 1
      %v1746 = vrot.slane %v1632, 1
      %v1747 = vsel %vm595, %v1745, %v1746
      %v1748 = vrot.slane %v1633, 1
      %v1749 = vsel %vm595, %v1746, %v1748
      %v1750 = vrot.slane %v1634, 1
      %v1751 = vrot.slane %v1635, 1
      %v1752 = vsel %vm595, %v1750, %v1751
      %v1753 = vrot.slane %v1636, 1
      %v1754 = vsel %vm595, %v1751, %v1753
      %v1755 = vrot.slane %v1637, 1
      %v1756 = vrot.slane %v1638, 1
      %v1757 = vsel %vm595, %v1755, %v1756
      %v1758 = vrot.slane %v1639, 1
      %v1759 = vsel %vm595, %v1756, %v1758
      %v1760 = vrot.slane %v1640, 1
      %v1761 = vrot.slane %v1641, 1
      %v1762 = vsel %vm595, %v1760, %v1761
      %v1763 = vrot.slane %v1642, 1
      %v1764 = vsel %vm595, %v1761, %v1763
      %v1765 = vrot.slane %v1643, 1
      %v1766 = vsel %vm595, %v1765, %v1765
      %v1798 = vadd.f32 %v1562, %v1692
      %v1799 = vadd.f32 %v1563, %v1694
      %v1800 = vadd.f32 %v1564, %v1697
      %v1801 = vadd.f32 %v1565, %v1699
      %v1802 = vadd.f32 %v1566, %v1702
      %v1803 = vadd.f32 %v1567, %v1704
      %v1804 = vadd.f32 %v1568, %v1707
      %v1805 = vadd.f32 %v1569, %v1709
      %v1806 = vadd.f32 %v1570, %v1712
      %v1807 = vadd.f32 %v1571, %v1714
      %v1808 = vadd.f32 %v1572, %v1717
      %v1809 = vadd.f32 %v1573, %v1719
      %v1810 = vadd.f32 %v1574, %v1722
      %v1811 = vadd.f32 %v1575, %v1724
      %v1812 = vadd.f32 %v1576, %v1727
      %v1813 = vadd.f32 %v1577, %v1729
      %v1814 = vadd.f32 %v1578, %v1732
      %v1815 = vadd.f32 %v1579, %v1734
      %v1816 = vadd.f32 %v1580, %v1737
      %v1817 = vadd.f32 %v1581, %v1739
      %v1818 = vadd.f32 %v1582, %v1742
      %v1819 = vadd.f32 %v1583, %v1744
      %v1820 = vadd.f32 %v1584, %v1747
      %v1821 = vadd.f32 %v1585, %v1749
      %v1822 = vadd.f32 %v1586, %v1752
      %v1823 = vadd.f32 %v1587, %v1754
      %v1824 = vadd.f32 %v1588, %v1757
      %v1825 = vadd.f32 %v1589, %v1759
      %v1826 = vadd.f32 %v1590, %v1762
      %v1827 = vadd.f32 %v1591, %v1764
      %v1828 = vadd.f32 %v1592, %v1766
      %v1829 = vadd.f32 %v1593, %v1766
      %v1830 = vlaneseq
      %v1831 = vshrl.u32 %v1830, 7
      %v1832 = vsub.s32 2, %v1831
      %v1833 = vrot.slane %v227, %v1832
      %v1834 = vmul.f32 %v433, %v1833
      %v1835 = vmul.f32 %v341, %v1833
      %v1836 = vmul.f32 %v449, %v1833
      %v1837 = vmul.f32 %v434, %v1833
      %v1838 = vmul.f32 %v344, %v1833
      %v1839 = vmul.f32 %v450, %v1833
      %v1840 = vmul.f32 %v435, %v1833
      %v1841 = vmul.f32 %v347, %v1833
      %v1842 = vmul.f32 %v451, %v1833
      %v1843 = vmul.f32 %v436, %v1833
      %v1844 = vmul.f32 %v350, %v1833
      %v1845 = vmul.f32 %v452, %v1833
      %v1846 = vmul.f32 %v437, %v1833
      %v1847 = vmul.f32 %v353, %v1833
      %v1848 = vmul.f32 %v453, %v1833
      %v1849 = vmul.f32 %v438, %v1833
      %v1850 = vmul.f32 %v356, %v1833
      %v1851 = vmul.f32 %v454, %v1833
      %v1852 = vmul.f32 %v439, %v1833
      %v1853 = vmul.f32 %v359, %v1833
      %v1854 = vmul.f32 %v455, %v1833
      %v1855 = vmul.f32 %v440, %v1833
      %v1856 = vmul.f32 %v362, %v1833
      %v1857 = vmul.f32 %v456, %v1833
      %v1858 = vmul.f32 %v441, %v1833
      %v1859 = vmul.f32 %v365, %v1833
      %v1860 = vmul.f32 %v457, %v1833
      %v1861 = vmul.f32 %v442, %v1833
      %v1862 = vmul.f32 %v368, %v1833
      %v1863 = vmul.f32 %v458, %v1833
      %v1864 = vmul.f32 %v443, %v1833
      %v1865 = vmul.f32 %v371, %v1833
      %v1866 = vmul.f32 %v459, %v1833
      %v1867 = vmul.f32 %v444, %v1833
      %v1868 = vmul.f32 %v374, %v1833
      %v1869 = vmul.f32 %v460, %v1833
      %v1870 = vmul.f32 %v445, %v1833
      %v1871 = vmul.f32 %v377, %v1833
      %v1872 = vmul.f32 %v461, %v1833
      %v1873 = vmul.f32 %v446, %v1833
      %v1874 = vmul.f32 %v380, %v1833
      %v1875 = vmul.f32 %v462, %v1833
      %v1876 = vmul.f32 %v447, %v1833
      %v1877 = vmul.f32 %v383, %v1833
      %v1878 = vmul.f32 %v463, %v1833
      %v1879 = vmul.f32 %v1833, 0.0
      %v1926 = vrot.slane %v1834, 2
      %v1927 = vrot.slane %v1835, 2
      %v1928 = vsel %vm831, %v1926, %v1927
      %v1929 = vrot.slane %v1836, 2
      %v1930 = vsel %vm831, %v1927, %v1929
      %v1931 = vrot.slane %v1837, 2
      %v1932 = vrot.slane %v1838, 2
      %v1933 = vsel %vm831, %v1931, %v1932
      %v1934 = vrot.slane %v1839, 2
      %v1935 = vsel %vm831, %v1932, %v1934
      %v1936 = vrot.slane %v1840, 2
      %v1937 = vrot.slane %v1841, 2
      %v1938 = vsel %vm831, %v1936, %v1937
      %v1939 = vrot.slane %v1842, 2
      %v1940 = vsel %vm831, %v1937, %v1939
      %v1941 = vrot.slane %v1843, 2
      %v1942 = vrot.slane %v1844, 2
      %v1943 = vsel %vm831, %v1941, %v1942
      %v1944 = vrot.slane %v1845, 2
      %v1945 = vsel %vm831, %v1942, %v1944
      %v1946 = vrot.slane %v1846, 2
      %v1947 = vrot.slane %v1847, 2
      %v1948 = vsel %vm831, %v1946, %v1947
      %v1949 = vrot.slane %v1848, 2
      %v1950 = vsel %vm831, %v1947, %v1949
      %v1951 = vrot.slane %v1849, 2
      %v1952 = vrot.slane %v1850, 2
      %v1953 = vsel %vm831, %v1951, %v1952
      %v1954 = vrot.slane %v1851, 2
      %v1955 = vsel %vm831, %v1952, %v1954
      %v1956 = vrot.slane %v1852, 2
      %v1957 = vrot.slane %v1853, 2
      %v1958 = vsel %vm831, %v1956, %v1957
      %v1959 = vrot.slane %v1854, 2
      %v1960 = vsel %vm831, %v1957, %v1959
      %v1961 = vrot.slane %v1855, 2
      %v1962 = vrot.slane %v1856, 2
      %v1963 = vsel %vm831, %v1961, %v1962
      %v1964 = vrot.slane %v1857, 2
      %v1965 = vsel %vm831, %v1962, %v1964
      %v1966 = vrot.slane %v1858, 2
      %v1967 = vrot.slane %v1859, 2
      %v1968 = vsel %vm831, %v1966, %v1967
      %v1969 = vrot.slane %v1860, 2
      %v1970 = vsel %vm831, %v1967, %v1969
      %v1971 = vrot.slane %v1861, 2
      %v1972 = vrot.slane %v1862, 2
      %v1973 = vsel %vm831, %v1971, %v1972
      %v1974 = vrot.slane %v1863, 2
      %v1975 = vsel %vm831, %v1972, %v1974
      %v1976 = vrot.slane %v1864, 2
      %v1977 = vrot.slane %v1865, 2
      %v1978 = vsel %vm831, %v1976, %v1977
      %v1979 = vrot.slane %v1866, 2
      %v1980 = vsel %vm831, %v1977, %v1979
      %v1981 = vrot.slane %v1867, 2
      %v1982 = vrot.slane %v1868, 2
      %v1983 = vsel %vm831, %v1981, %v1982
      %v1984 = vrot.slane %v1869, 2
      %v1985 = vsel %vm831, %v1982, %v1984
      %v1986 = vrot.slane %v1870, 2
      %v1987 = vrot.slane %v1871, 2
      %v1988 = vsel %vm831, %v1986, %v1987
      %v1989 = vrot.slane %v1872, 2
      %v1990 = vsel %vm831, %v1987, %v1989
      %v1991 = vrot.slane %v1873, 2
      %v1992 = vrot.slane %v1874, 2
      %v1993 = vsel %vm831, %v1991, %v1992
      %v1994 = vrot.slane %v1875, 2
      %v1995 = vsel %vm831, %v1992, %v1994
      %v1996 = vrot.slane %v1876, 2
      %v1997 = vrot.slane %v1877, 2
      %v1998 = vsel %vm831, %v1996, %v1997
      %v1999 = vrot.slane %v1878, 2
      %v2000 = vsel %vm831, %v1997, %v1999
      %v2001 = vrot.slane %v1879, 2
      %v2002 = vsel %vm831, %v2001, %v2001
      %v2034 = vadd.f32 %v1798, %v1928
      %v2035 = vadd.f32 %v1799, %v1930
      %v2036 = vadd.f32 %v1800, %v1933
      %v2037 = vadd.f32 %v1801, %v1935
      %v2038 = vadd.f32 %v1802, %v1938
      %v2039 = vadd.f32 %v1803, %v1940
      %v2040 = vadd.f32 %v1804, %v1943
      %v2041 = vadd.f32 %v1805, %v1945
      %v2042 = vadd.f32 %v1806, %v1948
      %v2043 = vadd.f32 %v1807, %v1950
      %v2044 = vadd.f32 %v1808, %v1953
      %v2045 = vadd.f32 %v1809, %v1955
      %v2046 = vadd.f32 %v1810, %v1958
      %v2047 = vadd.f32 %v1811, %v1960
      %v2048 = vadd.f32 %v1812, %v1963
      %v2049 = vadd.f32 %v1813, %v1965
      %v2050 = vadd.f32 %v1814, %v1968
      %v2051 = vadd.f32 %v1815, %v1970
      %v2052 = vadd.f32 %v1816, %v1973
      %v2053 = vadd.f32 %v1817, %v1975
      %v2054 = vadd.f32 %v1818, %v1978
      %v2055 = vadd.f32 %v1819, %v1980
      %v2056 = vadd.f32 %v1820, %v1983
      %v2057 = vadd.f32 %v1821, %v1985
      %v2058 = vadd.f32 %v1822, %v1988
      %v2059 = vadd.f32 %v1823, %v1990
      %v2060 = vadd.f32 %v1824, %v1993
      %v2061 = vadd.f32 %v1825, %v1995
      %v2062 = vadd.f32 %v1826, %v1998
      %v2063 = vadd.f32 %v1827, %v2000
      %v2064 = vadd.f32 %v1828, %v2002
      %v2065 = vadd.f32 %v1829, %v2002
      %2067 = vset.pattern.permute.xlu0 0
      %2068 = vperm.xlu0 %2067, %v2034
      %v2069 = vpop.permute.xlu0 %2068
      %2072 = vset.pattern.permute.xlu0 0
      %2073 = vperm.xlu0 %2072, %v2035
      %v2074 = vpop.permute.xlu0 %2073
      %2077 = vset.pattern.permute.xlu0 0
      %2078 = vperm.xlu0 %2077, %v2036
      %v2079 = vpop.permute.xlu0 %2078
      %2082 = vset.pattern.permute.xlu0 0
      %2083 = vperm.xlu0 %2082, %v2037
      %v2084 = vpop.permute.xlu0 %2083
      %2087 = vset.pattern.permute.xlu0 0
      %2088 = vperm.xlu0 %2087, %v2038
      %v2089 = vpop.permute.xlu0 %2088
      %2092 = vset.pattern.permute.xlu0 0
      %2093 = vperm.xlu0 %2092, %v2039
      %v2094 = vpop.permute.xlu0 %2093
      %2097 = vset.pattern.permute.xlu0 0
      %2098 = vperm.xlu0 %2097, %v2040
      %v2099 = vpop.permute.xlu0 %2098
      %2102 = vset.pattern.permute.xlu0 0
      %2103 = vperm.xlu0 %2102, %v2041
      %v2104 = vpop.permute.xlu0 %2103
      %2107 = vset.pattern.permute.xlu0 0
      %2108 = vperm.xlu0 %2107, %v2042
      %v2109 = vpop.permute.xlu0 %2108
      %2112 = vset.pattern.permute.xlu0 0
      %2113 = vperm.xlu0 %2112, %v2043
      %v2114 = vpop.permute.xlu0 %2113
      %2117 = vset.pattern.permute.xlu0 0
      %2118 = vperm.xlu0 %2117, %v2044
      %v2119 = vpop.permute.xlu0 %2118
      %2122 = vset.pattern.permute.xlu0 0
      %2123 = vperm.xlu0 %2122, %v2045
      %v2124 = vpop.permute.xlu0 %2123
      %2127 = vset.pattern.permute.xlu0 0
      %2128 = vperm.xlu0 %2127, %v2046
      %v2129 = vpop.permute.xlu0 %2128
      %2132 = vset.pattern.permute.xlu0 0
      %2133 = vperm.xlu0 %2132, %v2047
      %v2134 = vpop.permute.xlu0 %2133
      %2137 = vset.pattern.permute.xlu0 0
      %2138 = vperm.xlu0 %2137, %v2048
      %v2139 = vpop.permute.xlu0 %2138
      %2142 = vset.pattern.permute.xlu0 0
      %2143 = vperm.xlu0 %2142, %v2049
      %v2144 = vpop.permute.xlu0 %2143
      %2147 = vset.pattern.permute.xlu0 0
      %2148 = vperm.xlu0 %2147, %v2050
      %v2149 = vpop.permute.xlu0 %2148
      %2152 = vset.pattern.permute.xlu0 0
      %2153 = vperm.xlu0 %2152, %v2051
      %v2154 = vpop.permute.xlu0 %2153
      %2157 = vset.pattern.permute.xlu0 0
      %2158 = vperm.xlu0 %2157, %v2052
      %v2159 = vpop.permute.xlu0 %2158
      %2162 = vset.pattern.permute.xlu0 0
      %2163 = vperm.xlu0 %2162, %v2053
      %v2164 = vpop.permute.xlu0 %2163
      %2167 = vset.pattern.permute.xlu0 0
      %2168 = vperm.xlu0 %2167, %v2054
      %v2169 = vpop.permute.xlu0 %2168
      %2172 = vset.pattern.permute.xlu0 0
      %2173 = vperm.xlu0 %2172, %v2055
      %v2174 = vpop.permute.xlu0 %2173
      %2177 = vset.pattern.permute.xlu0 0
      %2178 = vperm.xlu0 %2177, %v2056
      %v2179 = vpop.permute.xlu0 %2178
      %2182 = vset.pattern.permute.xlu0 0
      %2183 = vperm.xlu0 %2182, %v2057
      %v2184 = vpop.permute.xlu0 %2183
      %2187 = vset.pattern.permute.xlu0 0
      %2188 = vperm.xlu0 %2187, %v2058
      %v2189 = vpop.permute.xlu0 %2188
      %2192 = vset.pattern.permute.xlu0 0
      %2193 = vperm.xlu0 %2192, %v2059
      %v2194 = vpop.permute.xlu0 %2193
      %2197 = vset.pattern.permute.xlu0 0
      %2198 = vperm.xlu0 %2197, %v2060
      %v2199 = vpop.permute.xlu0 %2198
      %2202 = vset.pattern.permute.xlu0 0
      %2203 = vperm.xlu0 %2202, %v2061
      %v2204 = vpop.permute.xlu0 %2203
      %2207 = vset.pattern.permute.xlu0 0
      %2208 = vperm.xlu0 %2207, %v2062
      %v2209 = vpop.permute.xlu0 %2208
      %2212 = vset.pattern.permute.xlu0 0
      %2213 = vperm.xlu0 %2212, %v2063
      %v2214 = vpop.permute.xlu0 %2213
      %2217 = vset.pattern.permute.xlu0 0
      %2218 = vperm.xlu0 %2217, %v2064
      %v2219 = vpop.permute.xlu0 %2218
      %2222 = vset.pattern.permute.xlu0 0
      %2223 = vperm.xlu0 %2222, %v2065
      %v2224 = vpop.permute.xlu0 %2223
      %v2226 = vlaneseq
      %v2227 = vshrl.u32 %v2226, 7
      %v2228 = vsub.s32 0, %v2227
      %v2229 = vrot.slane %v234, %v2228
      %v2230 = vmul.f32 %v2069, %v2229
      %v2231 = vmul.f32 %v2074, %v2229
      %v2232 = vmul.f32 %v2079, %v2229
      %v2233 = vmul.f32 %v2084, %v2229
      %v2234 = vmul.f32 %v2089, %v2229
      %v2235 = vmul.f32 %v2094, %v2229
      %v2236 = vmul.f32 %v2099, %v2229
      %v2237 = vmul.f32 %v2104, %v2229
      %v2238 = vmul.f32 %v2109, %v2229
      %v2239 = vmul.f32 %v2114, %v2229
      %v2240 = vmul.f32 %v2119, %v2229
      %v2241 = vmul.f32 %v2124, %v2229
      %v2242 = vmul.f32 %v2129, %v2229
      %v2243 = vmul.f32 %v2134, %v2229
      %v2244 = vmul.f32 %v2139, %v2229
      %v2245 = vmul.f32 %v2144, %v2229
      %v2246 = vmul.f32 %v2149, %v2229
      %v2247 = vmul.f32 %v2154, %v2229
      %v2248 = vmul.f32 %v2159, %v2229
      %v2249 = vmul.f32 %v2164, %v2229
      %v2250 = vmul.f32 %v2169, %v2229
      %v2251 = vmul.f32 %v2174, %v2229
      %v2252 = vmul.f32 %v2179, %v2229
      %v2253 = vmul.f32 %v2184, %v2229
      %v2254 = vmul.f32 %v2189, %v2229
      %v2255 = vmul.f32 %v2194, %v2229
      %v2256 = vmul.f32 %v2199, %v2229
      %v2257 = vmul.f32 %v2204, %v2229
      %v2258 = vmul.f32 %v2209, %v2229
      %v2259 = vmul.f32 %v2214, %v2229
      %v2260 = vmul.f32 %v2219, %v2229
      %v2261 = vmul.f32 %v2224, %v2229
      %2262 = vset.pattern.permute.xlu0 1
      %2263 = vperm.xlu0 %2262, %v2034
      %v2264 = vpop.permute.xlu0 %2263
      %2266 = vset.pattern.permute.xlu0 1
      %2267 = vperm.xlu0 %2266, %v2035
      %v2268 = vpop.permute.xlu0 %2267
      %2270 = vset.pattern.permute.xlu0 1
      %2271 = vperm.xlu0 %2270, %v2036
      %v2272 = vpop.permute.xlu0 %2271
      %2274 = vset.pattern.permute.xlu0 1
      %2275 = vperm.xlu0 %2274, %v2037
      %v2276 = vpop.permute.xlu0 %2275
      %2278 = vset.pattern.permute.xlu0 1
      %2279 = vperm.xlu0 %2278, %v2038
      %v2280 = vpop.permute.xlu0 %2279
      %2282 = vset.pattern.permute.xlu0 1
      %2283 = vperm.xlu0 %2282, %v2039
      %v2284 = vpop.permute.xlu0 %2283
      %2286 = vset.pattern.permute.xlu0 1
      %2287 = vperm.xlu0 %2286, %v2040
      %v2288 = vpop.permute.xlu0 %2287
      %2290 = vset.pattern.permute.xlu0 1
      %2291 = vperm.xlu0 %2290, %v2041
      %v2292 = vpop.permute.xlu0 %2291
      %2294 = vset.pattern.permute.xlu0 1
      %2295 = vperm.xlu0 %2294, %v2042
      %v2296 = vpop.permute.xlu0 %2295
      %2298 = vset.pattern.permute.xlu0 1
      %2299 = vperm.xlu0 %2298, %v2043
      %v2300 = vpop.permute.xlu0 %2299
      %2302 = vset.pattern.permute.xlu0 1
      %2303 = vperm.xlu0 %2302, %v2044
      %v2304 = vpop.permute.xlu0 %2303
      %2306 = vset.pattern.permute.xlu0 1
      %2307 = vperm.xlu0 %2306, %v2045
      %v2308 = vpop.permute.xlu0 %2307
      %2310 = vset.pattern.permute.xlu0 1
      %2311 = vperm.xlu0 %2310, %v2046
      %v2312 = vpop.permute.xlu0 %2311
      %2314 = vset.pattern.permute.xlu0 1
      %2315 = vperm.xlu0 %2314, %v2047
      %v2316 = vpop.permute.xlu0 %2315
      %2318 = vset.pattern.permute.xlu0 1
      %2319 = vperm.xlu0 %2318, %v2048
      %v2320 = vpop.permute.xlu0 %2319
      %2322 = vset.pattern.permute.xlu0 1
      %2323 = vperm.xlu0 %2322, %v2049
      %v2324 = vpop.permute.xlu0 %2323
      %2326 = vset.pattern.permute.xlu0 1
      %2327 = vperm.xlu0 %2326, %v2050
      %v2328 = vpop.permute.xlu0 %2327
      %2330 = vset.pattern.permute.xlu0 1
      %2331 = vperm.xlu0 %2330, %v2051
      %v2332 = vpop.permute.xlu0 %2331
      %2334 = vset.pattern.permute.xlu0 1
      %2335 = vperm.xlu0 %2334, %v2052
      %v2336 = vpop.permute.xlu0 %2335
      %2338 = vset.pattern.permute.xlu0 1
      %2339 = vperm.xlu0 %2338, %v2053
      %v2340 = vpop.permute.xlu0 %2339
      %2342 = vset.pattern.permute.xlu0 1
      %2343 = vperm.xlu0 %2342, %v2054
      %v2344 = vpop.permute.xlu0 %2343
      %2346 = vset.pattern.permute.xlu0 1
      %2347 = vperm.xlu0 %2346, %v2055
      %v2348 = vpop.permute.xlu0 %2347
      %2350 = vset.pattern.permute.xlu0 1
      %2351 = vperm.xlu0 %2350, %v2056
      %v2352 = vpop.permute.xlu0 %2351
      %2354 = vset.pattern.permute.xlu0 1
      %2355 = vperm.xlu0 %2354, %v2057
      %v2356 = vpop.permute.xlu0 %2355
      %2358 = vset.pattern.permute.xlu0 1
      %2359 = vperm.xlu0 %2358, %v2058
      %v2360 = vpop.permute.xlu0 %2359
      %2362 = vset.pattern.permute.xlu0 1
      %2363 = vperm.xlu0 %2362, %v2059
      %v2364 = vpop.permute.xlu0 %2363
      %2366 = vset.pattern.permute.xlu0 1
      %2367 = vperm.xlu0 %2366, %v2060
      %v2368 = vpop.permute.xlu0 %2367
      %2370 = vset.pattern.permute.xlu0 1
      %2371 = vperm.xlu0 %2370, %v2061
      %v2372 = vpop.permute.xlu0 %2371
      %2374 = vset.pattern.permute.xlu0 1
      %2375 = vperm.xlu0 %2374, %v2062
      %v2376 = vpop.permute.xlu0 %2375
      %2378 = vset.pattern.permute.xlu0 1
      %2379 = vperm.xlu0 %2378, %v2063
      %v2380 = vpop.permute.xlu0 %2379
      %2382 = vset.pattern.permute.xlu0 1
      %2383 = vperm.xlu0 %2382, %v2064
      %v2384 = vpop.permute.xlu0 %2383
      %2386 = vset.pattern.permute.xlu0 1
      %2387 = vperm.xlu0 %2386, %v2065
      %v2388 = vpop.permute.xlu0 %2387
      %v2390 = vlaneseq
      %v2391 = vshrl.u32 %v2390, 7
      %v2392 = vsub.s32 1, %v2391
      %v2393 = vrot.slane %v234, %v2392
      %v2394 = vmul.f32 %v2264, %v2393
      %v2395 = vmul.f32 %v2268, %v2393
      %v2396 = vmul.f32 %v2272, %v2393
      %v2397 = vmul.f32 %v2276, %v2393
      %v2398 = vmul.f32 %v2280, %v2393
      %v2399 = vmul.f32 %v2284, %v2393
      %v2400 = vmul.f32 %v2288, %v2393
      %v2401 = vmul.f32 %v2292, %v2393
      %v2402 = vmul.f32 %v2296, %v2393
      %v2403 = vmul.f32 %v2300, %v2393
      %v2404 = vmul.f32 %v2304, %v2393
      %v2405 = vmul.f32 %v2308, %v2393
      %v2406 = vmul.f32 %v2312, %v2393
      %v2407 = vmul.f32 %v2316, %v2393
      %v2408 = vmul.f32 %v2320, %v2393
      %v2409 = vmul.f32 %v2324, %v2393
      %v2410 = vmul.f32 %v2328, %v2393
      %v2411 = vmul.f32 %v2332, %v2393
      %v2412 = vmul.f32 %v2336, %v2393
      %v2413 = vmul.f32 %v2340, %v2393
      %v2414 = vmul.f32 %v2344, %v2393
      %v2415 = vmul.f32 %v2348, %v2393
      %v2416 = vmul.f32 %v2352, %v2393
      %v2417 = vmul.f32 %v2356, %v2393
      %v2418 = vmul.f32 %v2360, %v2393
      %v2419 = vmul.f32 %v2364, %v2393
      %v2420 = vmul.f32 %v2368, %v2393
      %v2421 = vmul.f32 %v2372, %v2393
      %v2422 = vmul.f32 %v2376, %v2393
      %v2423 = vmul.f32 %v2380, %v2393
      %v2424 = vmul.f32 %v2384, %v2393
      %v2425 = vmul.f32 %v2388, %v2393
      %v2426 = vadd.f32 %v2230, %v2394
      %v2427 = vadd.f32 %v2231, %v2395
      %v2428 = vadd.f32 %v2232, %v2396
      %v2429 = vadd.f32 %v2233, %v2397
      %v2430 = vadd.f32 %v2234, %v2398
      %v2431 = vadd.f32 %v2235, %v2399
      %v2432 = vadd.f32 %v2236, %v2400
      %v2433 = vadd.f32 %v2237, %v2401
      %v2434 = vadd.f32 %v2238, %v2402
      %v2435 = vadd.f32 %v2239, %v2403
      %v2436 = vadd.f32 %v2240, %v2404
      %v2437 = vadd.f32 %v2241, %v2405
      %v2438 = vadd.f32 %v2242, %v2406
      %v2439 = vadd.f32 %v2243, %v2407
      %v2440 = vadd.f32 %v2244, %v2408
      %v2441 = vadd.f32 %v2245, %v2409
      %v2442 = vadd.f32 %v2246, %v2410
      %v2443 = vadd.f32 %v2247, %v2411
      %v2444 = vadd.f32 %v2248, %v2412
      %v2445 = vadd.f32 %v2249, %v2413
      %v2446 = vadd.f32 %v2250, %v2414
      %v2447 = vadd.f32 %v2251, %v2415
      %v2448 = vadd.f32 %v2252, %v2416
      %v2449 = vadd.f32 %v2253, %v2417
      %v2450 = vadd.f32 %v2254, %v2418
      %v2451 = vadd.f32 %v2255, %v2419
      %v2452 = vadd.f32 %v2256, %v2420
      %v2453 = vadd.f32 %v2257, %v2421
      %v2454 = vadd.f32 %v2258, %v2422
      %v2455 = vadd.f32 %v2259, %v2423
      %v2456 = vadd.f32 %v2260, %v2424
      %v2457 = vadd.f32 %v2261, %v2425
      %2458 = vset.pattern.permute.xlu0 2
      %2459 = vperm.xlu0 %2458, %v2034
      %v2460 = vpop.permute.xlu0 %2459
      %2462 = vset.pattern.permute.xlu0 2
      %2463 = vperm.xlu0 %2462, %v2035
      %v2464 = vpop.permute.xlu0 %2463
      %2466 = vset.pattern.permute.xlu0 2
      %2467 = vperm.xlu0 %2466, %v2036
      %v2468 = vpop.permute.xlu0 %2467
      %2470 = vset.pattern.permute.xlu0 2
      %2471 = vperm.xlu0 %2470, %v2037
      %v2472 = vpop.permute.xlu0 %2471
      %2474 = vset.pattern.permute.xlu0 2
      %2475 = vperm.xlu0 %2474, %v2038
      %v2476 = vpop.permute.xlu0 %2475
      %2478 = vset.pattern.permute.xlu0 2
      %2479 = vperm.xlu0 %2478, %v2039
      %v2480 = vpop.permute.xlu0 %2479
      %2482 = vset.pattern.permute.xlu0 2
      %2483 = vperm.xlu0 %2482, %v2040
      %v2484 = vpop.permute.xlu0 %2483
      %2486 = vset.pattern.permute.xlu0 2
      %2487 = vperm.xlu0 %2486, %v2041
      %v2488 = vpop.permute.xlu0 %2487
      %2490 = vset.pattern.permute.xlu0 2
      %2491 = vperm.xlu0 %2490, %v2042
      %v2492 = vpop.permute.xlu0 %2491
      %2494 = vset.pattern.permute.xlu0 2
      %2495 = vperm.xlu0 %2494, %v2043
      %v2496 = vpop.permute.xlu0 %2495
      %2498 = vset.pattern.permute.xlu0 2
      %2499 = vperm.xlu0 %2498, %v2044
      %v2500 = vpop.permute.xlu0 %2499
      %2502 = vset.pattern.permute.xlu0 2
      %2503 = vperm.xlu0 %2502, %v2045
      %v2504 = vpop.permute.xlu0 %2503
      %2506 = vset.pattern.permute.xlu0 2
      %2507 = vperm.xlu0 %2506, %v2046
      %v2508 = vpop.permute.xlu0 %2507
      %2510 = vset.pattern.permute.xlu0 2
      %2511 = vperm.xlu0 %2510, %v2047
      %v2512 = vpop.permute.xlu0 %2511
      %2514 = vset.pattern.permute.xlu0 2
      %2515 = vperm.xlu0 %2514, %v2048
      %v2516 = vpop.permute.xlu0 %2515
      %2518 = vset.pattern.permute.xlu0 2
      %2519 = vperm.xlu0 %2518, %v2049
      %v2520 = vpop.permute.xlu0 %2519
      %2522 = vset.pattern.permute.xlu0 2
      %2523 = vperm.xlu0 %2522, %v2050
      %v2524 = vpop.permute.xlu0 %2523
      %2526 = vset.pattern.permute.xlu0 2
      %2527 = vperm.xlu0 %2526, %v2051
      %v2528 = vpop.permute.xlu0 %2527
      %2530 = vset.pattern.permute.xlu0 2
      %2531 = vperm.xlu0 %2530, %v2052
      %v2532 = vpop.permute.xlu0 %2531
      %2534 = vset.pattern.permute.xlu0 2
      %2535 = vperm.xlu0 %2534, %v2053
      %v2536 = vpop.permute.xlu0 %2535
      %2538 = vset.pattern.permute.xlu0 2
      %2539 = vperm.xlu0 %2538, %v2054
      %v2540 = vpop.permute.xlu0 %2539
      %2542 = vset.pattern.permute.xlu0 2
      %2543 = vperm.xlu0 %2542, %v2055
      %v2544 = vpop.permute.xlu0 %2543
      %2546 = vset.pattern.permute.xlu0 2
      %2547 = vperm.xlu0 %2546, %v2056
      %v2548 = vpop.permute.xlu0 %2547
      %2550 = vset.pattern.permute.xlu0 2
      %2551 = vperm.xlu0 %2550, %v2057
      %v2552 = vpop.permute.xlu0 %2551
      %2554 = vset.pattern.permute.xlu0 2
      %2555 = vperm.xlu0 %2554, %v2058
      %v2556 = vpop.permute.xlu0 %2555
      %2558 = vset.pattern.permute.xlu0 2
      %2559 = vperm.xlu0 %2558, %v2059
      %v2560 = vpop.permute.xlu0 %2559
      %2562 = vset.pattern.permute.xlu0 2
      %2563 = vperm.xlu0 %2562, %v2060
      %v2564 = vpop.permute.xlu0 %2563
      %2566 = vset.pattern.permute.xlu0 2
      %2567 = vperm.xlu0 %2566, %v2061
      %v2568 = vpop.permute.xlu0 %2567
      %2570 = vset.pattern.permute.xlu0 2
      %2571 = vperm.xlu0 %2570, %v2062
      %v2572 = vpop.permute.xlu0 %2571
      %2574 = vset.pattern.permute.xlu0 2
      %2575 = vperm.xlu0 %2574, %v2063
      %v2576 = vpop.permute.xlu0 %2575
      %2578 = vset.pattern.permute.xlu0 2
      %2579 = vperm.xlu0 %2578, %v2064
      %v2580 = vpop.permute.xlu0 %2579
      %2582 = vset.pattern.permute.xlu0 2
      %2583 = vperm.xlu0 %2582, %v2065
      %v2584 = vpop.permute.xlu0 %2583
      %v2586 = vlaneseq
      %v2587 = vshrl.u32 %v2586, 7
      %v2588 = vsub.s32 2, %v2587
      %v2589 = vrot.slane %v234, %v2588
      %v2590 = vmul.f32 %v2460, %v2589
      %v2591 = vmul.f32 %v2464, %v2589
      %v2592 = vmul.f32 %v2468, %v2589
      %v2593 = vmul.f32 %v2472, %v2589
      %v2594 = vmul.f32 %v2476, %v2589
      %v2595 = vmul.f32 %v2480, %v2589
      %v2596 = vmul.f32 %v2484, %v2589
      %v2597 = vmul.f32 %v2488, %v2589
      %v2598 = vmul.f32 %v2492, %v2589
      %v2599 = vmul.f32 %v2496, %v2589
      %v2600 = vmul.f32 %v2500, %v2589
      %v2601 = vmul.f32 %v2504, %v2589
      %v2602 = vmul.f32 %v2508, %v2589
      %v2603 = vmul.f32 %v2512, %v2589
      %v2604 = vmul.f32 %v2516, %v2589
      %v2605 = vmul.f32 %v2520, %v2589
      %v2606 = vmul.f32 %v2524, %v2589
      %v2607 = vmul.f32 %v2528, %v2589
      %v2608 = vmul.f32 %v2532, %v2589
      %v2609 = vmul.f32 %v2536, %v2589
      %v2610 = vmul.f32 %v2540, %v2589
      %v2611 = vmul.f32 %v2544, %v2589
      %v2612 = vmul.f32 %v2548, %v2589
      %v2613 = vmul.f32 %v2552, %v2589
      %v2614 = vmul.f32 %v2556, %v2589
      %v2615 = vmul.f32 %v2560, %v2589
      %v2616 = vmul.f32 %v2564, %v2589
      %v2617 = vmul.f32 %v2568, %v2589
      %v2618 = vmul.f32 %v2572, %v2589
      %v2619 = vmul.f32 %v2576, %v2589
      %v2620 = vmul.f32 %v2580, %v2589
      %v2621 = vmul.f32 %v2584, %v2589
      %v2622 = vadd.f32 %v2426, %v2590
      %v2623 = vadd.f32 %v2427, %v2591
      %v2624 = vadd.f32 %v2428, %v2592
      %v2625 = vadd.f32 %v2429, %v2593
      %v2626 = vadd.f32 %v2430, %v2594
      %v2627 = vadd.f32 %v2431, %v2595
      %v2628 = vadd.f32 %v2432, %v2596
      %v2629 = vadd.f32 %v2433, %v2597
      %v2630 = vadd.f32 %v2434, %v2598
      %v2631 = vadd.f32 %v2435, %v2599
      %v2632 = vadd.f32 %v2436, %v2600
      %v2633 = vadd.f32 %v2437, %v2601
      %v2634 = vadd.f32 %v2438, %v2602
      %v2635 = vadd.f32 %v2439, %v2603
      %v2636 = vadd.f32 %v2440, %v2604
      %v2637 = vadd.f32 %v2441, %v2605
      %v2638 = vadd.f32 %v2442, %v2606
      %v2639 = vadd.f32 %v2443, %v2607
      %v2640 = vadd.f32 %v2444, %v2608
      %v2641 = vadd.f32 %v2445, %v2609
      %v2642 = vadd.f32 %v2446, %v2610
      %v2643 = vadd.f32 %v2447, %v2611
      %v2644 = vadd.f32 %v2448, %v2612
      %v2645 = vadd.f32 %v2449, %v2613
      %v2646 = vadd.f32 %v2450, %v2614
      %v2647 = vadd.f32 %v2451, %v2615
      %v2648 = vadd.f32 %v2452, %v2616
      %v2649 = vadd.f32 %v2453, %v2617
      %v2650 = vadd.f32 %v2454, %v2618
      %v2651 = vadd.f32 %v2455, %v2619
      %v2652 = vadd.f32 %v2456, %v2620
      %v2653 = vadd.f32 %v2457, %v2621
      %2654 = vset.pattern.permute.xlu0 3
      %2655 = vperm.xlu0 %2654, %v2034
      %v2656 = vpop.permute.xlu0 %2655
      %2658 = vset.pattern.permute.xlu0 3
      %2659 = vperm.xlu0 %2658, %v2035
      %v2660 = vpop.permute.xlu0 %2659
      %2662 = vset.pattern.permute.xlu0 3
      %2663 = vperm.xlu0 %2662, %v2036
      %v2664 = vpop.permute.xlu0 %2663
      %2666 = vset.pattern.permute.xlu0 3
      %2667 = vperm.xlu0 %2666, %v2037
      %v2668 = vpop.permute.xlu0 %2667
      %2670 = vset.pattern.permute.xlu0 3
      %2671 = vperm.xlu0 %2670, %v2038
      %v2672 = vpop.permute.xlu0 %2671
      %2674 = vset.pattern.permute.xlu0 3
      %2675 = vperm.xlu0 %2674, %v2039
      %v2676 = vpop.permute.xlu0 %2675
      %2678 = vset.pattern.permute.xlu0 3
      %2679 = vperm.xlu0 %2678, %v2040
      %v2680 = vpop.permute.xlu0 %2679
      %2682 = vset.pattern.permute.xlu0 3
      %2683 = vperm.xlu0 %2682, %v2041
      %v2684 = vpop.permute.xlu0 %2683
      %2686 = vset.pattern.permute.xlu0 3
      %2687 = vperm.xlu0 %2686, %v2042
      %v2688 = vpop.permute.xlu0 %2687
      %2690 = vset.pattern.permute.xlu0 3
      %2691 = vperm.xlu0 %2690, %v2043
      %v2692 = vpop.permute.xlu0 %2691
      %2694 = vset.pattern.permute.xlu0 3
      %2695 = vperm.xlu0 %2694, %v2044
      %v2696 = vpop.permute.xlu0 %2695
      %2698 = vset.pattern.permute.xlu0 3
      %2699 = vperm.xlu0 %2698, %v2045
      %v2700 = vpop.permute.xlu0 %2699
      %2702 = vset.pattern.permute.xlu0 3
      %2703 = vperm.xlu0 %2702, %v2046
      %v2704 = vpop.permute.xlu0 %2703
      %2706 = vset.pattern.permute.xlu0 3
      %2707 = vperm.xlu0 %2706, %v2047
      %v2708 = vpop.permute.xlu0 %2707
      %2710 = vset.pattern.permute.xlu0 3
      %2711 = vperm.xlu0 %2710, %v2048
      %v2712 = vpop.permute.xlu0 %2711
      %2714 = vset.pattern.permute.xlu0 3
      %2715 = vperm.xlu0 %2714, %v2049
      %v2716 = vpop.permute.xlu0 %2715
      %2718 = vset.pattern.permute.xlu0 3
      %2719 = vperm.xlu0 %2718, %v2050
      %v2720 = vpop.permute.xlu0 %2719
      %2722 = vset.pattern.permute.xlu0 3
      %2723 = vperm.xlu0 %2722, %v2051
      %v2724 = vpop.permute.xlu0 %2723
      %2726 = vset.pattern.permute.xlu0 3
      %2727 = vperm.xlu0 %2726, %v2052
      %v2728 = vpop.permute.xlu0 %2727
      %2730 = vset.pattern.permute.xlu0 3
      %2731 = vperm.xlu0 %2730, %v2053
      %v2732 = vpop.permute.xlu0 %2731
      %2734 = vset.pattern.permute.xlu0 3
      %2735 = vperm.xlu0 %2734, %v2054
      %v2736 = vpop.permute.xlu0 %2735
      %2738 = vset.pattern.permute.xlu0 3
      %2739 = vperm.xlu0 %2738, %v2055
      %v2740 = vpop.permute.xlu0 %2739
      %2742 = vset.pattern.permute.xlu0 3
      %2743 = vperm.xlu0 %2742, %v2056
      %v2744 = vpop.permute.xlu0 %2743
      %2746 = vset.pattern.permute.xlu0 3
      %2747 = vperm.xlu0 %2746, %v2057
      %v2748 = vpop.permute.xlu0 %2747
      %2750 = vset.pattern.permute.xlu0 3
      %2751 = vperm.xlu0 %2750, %v2058
      %v2752 = vpop.permute.xlu0 %2751
      %2754 = vset.pattern.permute.xlu0 3
      %2755 = vperm.xlu0 %2754, %v2059
      %v2756 = vpop.permute.xlu0 %2755
      %2758 = vset.pattern.permute.xlu0 3
      %2759 = vperm.xlu0 %2758, %v2060
      %v2760 = vpop.permute.xlu0 %2759
      %2762 = vset.pattern.permute.xlu0 3
      %2763 = vperm.xlu0 %2762, %v2061
      %v2764 = vpop.permute.xlu0 %2763
      %2766 = vset.pattern.permute.xlu0 3
      %2767 = vperm.xlu0 %2766, %v2062
      %v2768 = vpop.permute.xlu0 %2767
      %2770 = vset.pattern.permute.xlu0 3
      %2771 = vperm.xlu0 %2770, %v2063
      %v2772 = vpop.permute.xlu0 %2771
      %2774 = vset.pattern.permute.xlu0 3
      %2775 = vperm.xlu0 %2774, %v2064
      %v2776 = vpop.permute.xlu0 %2775
      %2778 = vset.pattern.permute.xlu0 3
      %2779 = vperm.xlu0 %2778, %v2065
      %v2780 = vpop.permute.xlu0 %2779
      %v2782 = vlaneseq
      %v2783 = vshrl.u32 %v2782, 7
      %v2784 = vsub.s32 3, %v2783
      %v2785 = vrot.slane %v234, %v2784
      %v2786 = vmul.f32 %v2656, %v2785
      %v2787 = vmul.f32 %v2660, %v2785
      %v2788 = vmul.f32 %v2664, %v2785
      %v2789 = vmul.f32 %v2668, %v2785
      %v2790 = vmul.f32 %v2672, %v2785
      %v2791 = vmul.f32 %v2676, %v2785
      %v2792 = vmul.f32 %v2680, %v2785
      %v2793 = vmul.f32 %v2684, %v2785
      %v2794 = vmul.f32 %v2688, %v2785
      %v2795 = vmul.f32 %v2692, %v2785
      %v2796 = vmul.f32 %v2696, %v2785
      %v2797 = vmul.f32 %v2700, %v2785
      %v2798 = vmul.f32 %v2704, %v2785
      %v2799 = vmul.f32 %v2708, %v2785
      %v2800 = vmul.f32 %v2712, %v2785
      %v2801 = vmul.f32 %v2716, %v2785
      %v2802 = vmul.f32 %v2720, %v2785
      %v2803 = vmul.f32 %v2724, %v2785
      %v2804 = vmul.f32 %v2728, %v2785
      %v2805 = vmul.f32 %v2732, %v2785
      %v2806 = vmul.f32 %v2736, %v2785
      %v2807 = vmul.f32 %v2740, %v2785
      %v2808 = vmul.f32 %v2744, %v2785
      %v2809 = vmul.f32 %v2748, %v2785
      %v2810 = vmul.f32 %v2752, %v2785
      %v2811 = vmul.f32 %v2756, %v2785
      %v2812 = vmul.f32 %v2760, %v2785
      %v2813 = vmul.f32 %v2764, %v2785
      %v2814 = vmul.f32 %v2768, %v2785
      %v2815 = vmul.f32 %v2772, %v2785
      %v2816 = vmul.f32 %v2776, %v2785
      %v2817 = vmul.f32 %v2780, %v2785
      %v2818 = vadd.f32 %v2622, %v2786
      %v2819 = vadd.f32 %v2623, %v2787
      %v2820 = vadd.f32 %v2624, %v2788
      %v2821 = vadd.f32 %v2625, %v2789
      %v2822 = vadd.f32 %v2626, %v2790
      %v2823 = vadd.f32 %v2627, %v2791
      %v2824 = vadd.f32 %v2628, %v2792
      %v2825 = vadd.f32 %v2629, %v2793
      %v2826 = vadd.f32 %v2630, %v2794
      %v2827 = vadd.f32 %v2631, %v2795
      %v2828 = vadd.f32 %v2632, %v2796
      %v2829 = vadd.f32 %v2633, %v2797
      %v2830 = vadd.f32 %v2634, %v2798
      %v2831 = vadd.f32 %v2635, %v2799
      %v2832 = vadd.f32 %v2636, %v2800
      %v2833 = vadd.f32 %v2637, %v2801
      %v2834 = vadd.f32 %v2638, %v2802
      %v2835 = vadd.f32 %v2639, %v2803
      %v2836 = vadd.f32 %v2640, %v2804
      %v2837 = vadd.f32 %v2641, %v2805
      %v2838 = vadd.f32 %v2642, %v2806
      %v2839 = vadd.f32 %v2643, %v2807
      %v2840 = vadd.f32 %v2644, %v2808
      %v2841 = vadd.f32 %v2645, %v2809
      %v2842 = vadd.f32 %v2646, %v2810
      %v2843 = vadd.f32 %v2647, %v2811
      %v2844 = vadd.f32 %v2648, %v2812
      %v2845 = vadd.f32 %v2649, %v2813
      %v2846 = vadd.f32 %v2650, %v2814
      %v2847 = vadd.f32 %v2651, %v2815
      %v2848 = vadd.f32 %v2652, %v2816
      %v2849 = vadd.f32 %v2653, %v2817
      %v2850 = vlaneseq
      %v2851 = vshrl.u32 %v2850, 7
      %v2852 = vsub.s32 0, %v2851
      %v2853 = vrot.slane %v238, %v2852
      %v2854 = vadd.f32 %v2818, %v2853
      %v2855 = vadd.f32 %v2819, %v2853
      %v2856 = vadd.f32 %v2820, %v2853
      %v2857 = vadd.f32 %v2821, %v2853
      %v2858 = vadd.f32 %v2822, %v2853
      %v2859 = vadd.f32 %v2823, %v2853
      %v2860 = vadd.f32 %v2824, %v2853
      %v2861 = vadd.f32 %v2825, %v2853
      %v2862 = vadd.f32 %v2826, %v2853
      %v2863 = vadd.f32 %v2827, %v2853
      %v2864 = vadd.f32 %v2828, %v2853
      %v2865 = vadd.f32 %v2829, %v2853
      %v2866 = vadd.f32 %v2830, %v2853
      %v2867 = vadd.f32 %v2831, %v2853
      %v2868 = vadd.f32 %v2832, %v2853
      %v2869 = vadd.f32 %v2833, %v2853
      %v2870 = vadd.f32 %v2834, %v2853
      %v2871 = vadd.f32 %v2835, %v2853
      %v2872 = vadd.f32 %v2836, %v2853
      %v2873 = vadd.f32 %v2837, %v2853
      %v2874 = vadd.f32 %v2838, %v2853
      %v2875 = vadd.f32 %v2839, %v2853
      %v2876 = vadd.f32 %v2840, %v2853
      %v2877 = vadd.f32 %v2841, %v2853
      %v2878 = vadd.f32 %v2842, %v2853
      %v2879 = vadd.f32 %v2843, %v2853
      %v2880 = vadd.f32 %v2844, %v2853
      %v2881 = vadd.f32 %v2845, %v2853
      %v2882 = vadd.f32 %v2846, %v2853
      %v2883 = vadd.f32 %v2847, %v2853
      %v2884 = vadd.f32 %v2848, %v2853
      %v2885 = vadd.f32 %v2849, %v2853
      %v2886 = vmax.f32 %v2854, 0.0
      %v2887 = vmax.f32 %v2855, 0.0
      %v2888 = vmax.f32 %v2856, 0.0
      %v2889 = vmax.f32 %v2857, 0.0
      %v2890 = vmax.f32 %v2858, 0.0
      %v2891 = vmax.f32 %v2859, 0.0
      %v2892 = vmax.f32 %v2860, 0.0
      %v2893 = vmax.f32 %v2861, 0.0
      %v2894 = vmax.f32 %v2862, 0.0
      %v2895 = vmax.f32 %v2863, 0.0
      %v2896 = vmax.f32 %v2864, 0.0
      %v2897 = vmax.f32 %v2865, 0.0
      %v2898 = vmax.f32 %v2866, 0.0
      %v2899 = vmax.f32 %v2867, 0.0
      %v2900 = vmax.f32 %v2868, 0.0
      %v2901 = vmax.f32 %v2869, 0.0
      %v2902 = vmax.f32 %v2870, 0.0
      %v2903 = vmax.f32 %v2871, 0.0
      %v2904 = vmax.f32 %v2872, 0.0
      %v2905 = vmax.f32 %v2873, 0.0
      %v2906 = vmax.f32 %v2874, 0.0
      %v2907 = vmax.f32 %v2875, 0.0
      %v2908 = vmax.f32 %v2876, 0.0
      %v2909 = vmax.f32 %v2877, 0.0
      %v2910 = vmax.f32 %v2878, 0.0
      %v2911 = vmax.f32 %v2879, 0.0
      %v2912 = vmax.f32 %v2880, 0.0
      %v2913 = vmax.f32 %v2881, 0.0
      %v2914 = vmax.f32 %v2882, 0.0
      %v2915 = vmax.f32 %v2883, 0.0
      %v2916 = vmax.f32 %v2884, 0.0
      %v2917 = vmax.f32 %v2885, 0.0
      %v2950 = vrot.slane %v2886, 7
      %v2951 = vrot.slane %v2887, 7
      %v2952 = vsel %vm335, %v2950, %v2951
      %v2953 = vrot.slane %v2888, 7
      %v2954 = vrot.slane %v2889, 7
      %v2955 = vsel %vm335, %v2953, %v2954
      %v2956 = vrot.slane %v2890, 7
      %v2957 = vrot.slane %v2891, 7
      %v2958 = vsel %vm335, %v2956, %v2957
      %v2959 = vrot.slane %v2892, 7
      %v2960 = vrot.slane %v2893, 7
      %v2961 = vsel %vm335, %v2959, %v2960
      %v2962 = vrot.slane %v2894, 7
      %v2963 = vrot.slane %v2895, 7
      %v2964 = vsel %vm335, %v2962, %v2963
      %v2965 = vrot.slane %v2896, 7
      %v2966 = vrot.slane %v2897, 7
      %v2967 = vsel %vm335, %v2965, %v2966
      %v2968 = vrot.slane %v2898, 7
      %v2969 = vrot.slane %v2899, 7
      %v2970 = vsel %vm335, %v2968, %v2969
      %v2971 = vrot.slane %v2900, 7
      %v2972 = vrot.slane %v2901, 7
      %v2973 = vsel %vm335, %v2971, %v2972
      %v2974 = vrot.slane %v2902, 7
      %v2975 = vrot.slane %v2903, 7
      %v2976 = vsel %vm335, %v2974, %v2975
      %v2977 = vrot.slane %v2904, 7
      %v2978 = vrot.slane %v2905, 7
      %v2979 = vsel %vm335, %v2977, %v2978
      %v2980 = vrot.slane %v2906, 7
      %v2981 = vrot.slane %v2907, 7
      %v2982 = vsel %vm335, %v2980, %v2981
      %v2983 = vrot.slane %v2908, 7
      %v2984 = vrot.slane %v2909, 7
      %v2985 = vsel %vm335, %v2983, %v2984
      %v2986 = vrot.slane %v2910, 7
      %v2987 = vrot.slane %v2911, 7
      %v2988 = vsel %vm335, %v2986, %v2987
      %v2989 = vrot.slane %v2912, 7
      %v2990 = vrot.slane %v2913, 7
      %v2991 = vsel %vm335, %v2989, %v2990
      %v2992 = vrot.slane %v2914, 7
      %v2993 = vrot.slane %v2915, 7
      %v2994 = vsel %vm335, %v2992, %v2993
      %v2995 = vrot.slane %v2916, 7
      %v2996 = vrot.slane %v2917, 7
      %v2997 = vsel %vm335, %v2995, %v2996
      %v3046 = vsel %vm335, 0.0, %v2950
      %v3047 = vsel %vm335, 0.0, %v2953
      %v3048 = vsel %vm335, 0.0, %v2956
      %v3049 = vsel %vm335, 0.0, %v2959
      %v3050 = vsel %vm335, 0.0, %v2962
      %v3051 = vsel %vm335, 0.0, %v2965
      %v3052 = vsel %vm335, 0.0, %v2968
      %v3053 = vsel %vm335, 0.0, %v2971
      %v3054 = vsel %vm335, 0.0, %v2974
      %v3055 = vsel %vm335, 0.0, %v2977
      %v3056 = vsel %vm335, 0.0, %v2980
      %v3057 = vsel %vm335, 0.0, %v2983
      %v3058 = vsel %vm335, 0.0, %v2986
      %v3059 = vsel %vm335, 0.0, %v2989
      %v3060 = vsel %vm335, 0.0, %v2992
      %v3061 = vsel %vm335, 0.0, %v2995
      %v3062 = vsel %vm335, %v2951, 0.0
      %v3063 = vsel %vm335, %v2954, 0.0
      %v3064 = vsel %vm335, %v2957, 0.0
      %v3065 = vsel %vm335, %v2960, 0.0
      %v3066 = vsel %vm335, %v2963, 0.0
      %v3067 = vsel %vm335, %v2966, 0.0
      %v3068 = vsel %vm335, %v2969, 0.0
      %v3069 = vsel %vm335, %v2972, 0.0
      %v3070 = vsel %vm335, %v2975, 0.0
      %v3071 = vsel %vm335, %v2978, 0.0
      %v3072 = vsel %vm335, %v2981, 0.0
      %v3073 = vsel %vm335, %v2984, 0.0
      %v3074 = vsel %vm335, %v2987, 0.0
      %v3075 = vsel %vm335, %v2990, 0.0
      %v3076 = vsel %vm335, %v2993, 0.0
      %v3077 = vsel %vm335, %v2996, 0.0
      %v3078 = vlaneseq
      %v3079 = vshrl.u32 %v3078, 7
      %v3080 = vsub.s32 0, %v3079
      %v3081 = vrot.slane %v228, %v3080
      %v3082 = vmul.f32 %v3081, 0.0
      %v3083 = vmul.f32 %v3046, %v3081
      %v3084 = vmul.f32 %v2952, %v3081
      %v3085 = vmul.f32 %v3047, %v3081
      %v3086 = vmul.f32 %v2955, %v3081
      %v3087 = vmul.f32 %v3048, %v3081
      %v3088 = vmul.f32 %v2958, %v3081
      %v3089 = vmul.f32 %v3049, %v3081
      %v3090 = vmul.f32 %v2961, %v3081
      %v3091 = vmul.f32 %v3050, %v3081
      %v3092 = vmul.f32 %v2964, %v3081
      %v3093 = vmul.f32 %v3051, %v3081
      %v3094 = vmul.f32 %v2967, %v3081
      %v3095 = vmul.f32 %v3052, %v3081
      %v3096 = vmul.f32 %v2970, %v3081
      %v3097 = vmul.f32 %v3053, %v3081
      %v3098 = vmul.f32 %v2973, %v3081
      %v3099 = vmul.f32 %v3054, %v3081
      %v3100 = vmul.f32 %v2976, %v3081
      %v3101 = vmul.f32 %v3055, %v3081
      %v3102 = vmul.f32 %v2979, %v3081
      %v3103 = vmul.f32 %v3056, %v3081
      %v3104 = vmul.f32 %v2982, %v3081
      %v3105 = vmul.f32 %v3057, %v3081
      %v3106 = vmul.f32 %v2985, %v3081
      %v3107 = vmul.f32 %v3058, %v3081
      %v3108 = vmul.f32 %v2988, %v3081
      %v3109 = vmul.f32 %v3059, %v3081
      %v3110 = vmul.f32 %v2991, %v3081
      %v3111 = vmul.f32 %v3060, %v3081
      %v3112 = vmul.f32 %v2994, %v3081
      %v3113 = vlaneseq
      %v3114 = vshrl.u32 %v3113, 7
      %v3115 = vsub.s32 1, %v3114
      %v3116 = vrot.slane %v228, %v3115
      %v3117 = vmul.f32 %v3116, 0.0
      %v3118 = vmul.f32 %v3046, %v3116
      %v3119 = vmul.f32 %v2952, %v3116
      %v3120 = vmul.f32 %v3062, %v3116
      %v3121 = vmul.f32 %v3047, %v3116
      %v3122 = vmul.f32 %v2955, %v3116
      %v3123 = vmul.f32 %v3063, %v3116
      %v3124 = vmul.f32 %v3048, %v3116
      %v3125 = vmul.f32 %v2958, %v3116
      %v3126 = vmul.f32 %v3064, %v3116
      %v3127 = vmul.f32 %v3049, %v3116
      %v3128 = vmul.f32 %v2961, %v3116
      %v3129 = vmul.f32 %v3065, %v3116
      %v3130 = vmul.f32 %v3050, %v3116
      %v3131 = vmul.f32 %v2964, %v3116
      %v3132 = vmul.f32 %v3066, %v3116
      %v3133 = vmul.f32 %v3051, %v3116
      %v3134 = vmul.f32 %v2967, %v3116
      %v3135 = vmul.f32 %v3067, %v3116
      %v3136 = vmul.f32 %v3052, %v3116
      %v3137 = vmul.f32 %v2970, %v3116
      %v3138 = vmul.f32 %v3068, %v3116
      %v3139 = vmul.f32 %v3053, %v3116
      %v3140 = vmul.f32 %v2973, %v3116
      %v3141 = vmul.f32 %v3069, %v3116
      %v3142 = vmul.f32 %v3054, %v3116
      %v3143 = vmul.f32 %v2976, %v3116
      %v3144 = vmul.f32 %v3070, %v3116
      %v3145 = vmul.f32 %v3055, %v3116
      %v3146 = vmul.f32 %v2979, %v3116
      %v3147 = vmul.f32 %v3071, %v3116
      %v3148 = vmul.f32 %v3056, %v3116
      %v3149 = vmul.f32 %v2982, %v3116
      %v3150 = vmul.f32 %v3072, %v3116
      %v3151 = vmul.f32 %v3057, %v3116
      %v3152 = vmul.f32 %v2985, %v3116
      %v3153 = vmul.f32 %v3073, %v3116
      %v3154 = vmul.f32 %v3058, %v3116
      %v3155 = vmul.f32 %v2988, %v3116
      %v3156 = vmul.f32 %v3074, %v3116
      %v3157 = vmul.f32 %v3059, %v3116
      %v3158 = vmul.f32 %v2991, %v3116
      %v3159 = vmul.f32 %v3075, %v3116
      %v3160 = vmul.f32 %v3060, %v3116
      %v3161 = vmul.f32 %v2994, %v3116
      %v3162 = vmul.f32 %v3076, %v3116
      %v3209 = vrot.slane %v3117, 1
      %v3210 = vsel %vm595, %v3209, %v3209
      %v3211 = vrot.slane %v3118, 1
      %v3212 = vrot.slane %v3119, 1
      %v3213 = vsel %vm595, %v3211, %v3212
      %v3214 = vrot.slane %v3120, 1
      %v3215 = vsel %vm595, %v3212, %v3214
      %v3216 = vrot.slane %v3121, 1
      %v3217 = vrot.slane %v3122, 1
      %v3218 = vsel %vm595, %v3216, %v3217
      %v3219 = vrot.slane %v3123, 1
      %v3220 = vsel %vm595, %v3217, %v3219
      %v3221 = vrot.slane %v3124, 1
      %v3222 = vrot.slane %v3125, 1
      %v3223 = vsel %vm595, %v3221, %v3222
      %v3224 = vrot.slane %v3126, 1
      %v3225 = vsel %vm595, %v3222, %v3224
      %v3226 = vrot.slane %v3127, 1
      %v3227 = vrot.slane %v3128, 1
      %v3228 = vsel %vm595, %v3226, %v3227
      %v3229 = vrot.slane %v3129, 1
      %v3230 = vsel %vm595, %v3227, %v3229
      %v3231 = vrot.slane %v3130, 1
      %v3232 = vrot.slane %v3131, 1
      %v3233 = vsel %vm595, %v3231, %v3232
      %v3234 = vrot.slane %v3132, 1
      %v3235 = vsel %vm595, %v3232, %v3234
      %v3236 = vrot.slane %v3133, 1
      %v3237 = vrot.slane %v3134, 1
      %v3238 = vsel %vm595, %v3236, %v3237
      %v3239 = vrot.slane %v3135, 1
      %v3240 = vsel %vm595, %v3237, %v3239
      %v3241 = vrot.slane %v3136, 1
      %v3242 = vrot.slane %v3137, 1
      %v3243 = vsel %vm595, %v3241, %v3242
      %v3244 = vrot.slane %v3138, 1
      %v3245 = vsel %vm595, %v3242, %v3244
      %v3246 = vrot.slane %v3139, 1
      %v3247 = vrot.slane %v3140, 1
      %v3248 = vsel %vm595, %v3246, %v3247
      %v3249 = vrot.slane %v3141, 1
      %v3250 = vsel %vm595, %v3247, %v3249
      %v3251 = vrot.slane %v3142, 1
      %v3252 = vrot.slane %v3143, 1
      %v3253 = vsel %vm595, %v3251, %v3252
      %v3254 = vrot.slane %v3144, 1
      %v3255 = vsel %vm595, %v3252, %v3254
      %v3256 = vrot.slane %v3145, 1
      %v3257 = vrot.slane %v3146, 1
      %v3258 = vsel %vm595, %v3256, %v3257
      %v3259 = vrot.slane %v3147, 1
      %v3260 = vsel %vm595, %v3257, %v3259
      %v3261 = vrot.slane %v3148, 1
      %v3262 = vrot.slane %v3149, 1
      %v3263 = vsel %vm595, %v3261, %v3262
      %v3264 = vrot.slane %v3150, 1
      %v3265 = vsel %vm595, %v3262, %v3264
      %v3266 = vrot.slane %v3151, 1
      %v3267 = vrot.slane %v3152, 1
      %v3268 = vsel %vm595, %v3266, %v3267
      %v3269 = vrot.slane %v3153, 1
      %v3270 = vsel %vm595, %v3267, %v3269
      %v3271 = vrot.slane %v3154, 1
      %v3272 = vrot.slane %v3155, 1
      %v3273 = vsel %vm595, %v3271, %v3272
      %v3274 = vrot.slane %v3156, 1
      %v3275 = vsel %vm595, %v3272, %v3274
      %v3276 = vrot.slane %v3157, 1
      %v3277 = vrot.slane %v3158, 1
      %v3278 = vsel %vm595, %v3276, %v3277
      %v3279 = vrot.slane %v3159, 1
      %v3280 = vsel %vm595, %v3277, %v3279
      %v3281 = vrot.slane %v3160, 1
      %v3282 = vrot.slane %v3161, 1
      %v3283 = vsel %vm595, %v3281, %v3282
      %v3284 = vrot.slane %v3162, 1
      %v3285 = vsel %vm595, %v3282, %v3284
      %v3317 = vadd.f32 %v3082, %v3210
      %v3318 = vadd.f32 %v3083, %v3213
      %v3319 = vadd.f32 %v3084, %v3215
      %v3320 = vadd.f32 %v3085, %v3218
      %v3321 = vadd.f32 %v3086, %v3220
      %v3322 = vadd.f32 %v3087, %v3223
      %v3323 = vadd.f32 %v3088, %v3225
      %v3324 = vadd.f32 %v3089, %v3228
      %v3325 = vadd.f32 %v3090, %v3230
      %v3326 = vadd.f32 %v3091, %v3233
      %v3327 = vadd.f32 %v3092, %v3235
      %v3328 = vadd.f32 %v3093, %v3238
      %v3329 = vadd.f32 %v3094, %v3240
      %v3330 = vadd.f32 %v3095, %v3243
      %v3331 = vadd.f32 %v3096, %v3245
      %v3332 = vadd.f32 %v3097, %v3248
      %v3333 = vadd.f32 %v3098, %v3250
      %v3334 = vadd.f32 %v3099, %v3253
      %v3335 = vadd.f32 %v3100, %v3255
      %v3336 = vadd.f32 %v3101, %v3258
      %v3337 = vadd.f32 %v3102, %v3260
      %v3338 = vadd.f32 %v3103, %v3263
      %v3339 = vadd.f32 %v3104, %v3265
      %v3340 = vadd.f32 %v3105, %v3268
      %v3341 = vadd.f32 %v3106, %v3270
      %v3342 = vadd.f32 %v3107, %v3273
      %v3343 = vadd.f32 %v3108, %v3275
      %v3344 = vadd.f32 %v3109, %v3278
      %v3345 = vadd.f32 %v3110, %v3280
      %v3346 = vadd.f32 %v3111, %v3283
      %v3347 = vadd.f32 %v3112, %v3285
      %v3348 = vlaneseq
      %v3349 = vshrl.u32 %v3348, 7
      %v3350 = vsub.s32 2, %v3349
      %v3351 = vrot.slane %v228, %v3350
      %v3352 = vmul.f32 %v3351, 0.0
      %v3353 = vmul.f32 %v3046, %v3351
      %v3354 = vmul.f32 %v2952, %v3351
      %v3355 = vmul.f32 %v3062, %v3351
      %v3356 = vmul.f32 %v3047, %v3351
      %v3357 = vmul.f32 %v2955, %v3351
      %v3358 = vmul.f32 %v3063, %v3351
      %v3359 = vmul.f32 %v3048, %v3351
      %v3360 = vmul.f32 %v2958, %v3351
      %v3361 = vmul.f32 %v3064, %v3351
      %v3362 = vmul.f32 %v3049, %v3351
      %v3363 = vmul.f32 %v2961, %v3351
      %v3364 = vmul.f32 %v3065, %v3351
      %v3365 = vmul.f32 %v3050, %v3351
      %v3366 = vmul.f32 %v2964, %v3351
      %v3367 = vmul.f32 %v3066, %v3351
      %v3368 = vmul.f32 %v3051, %v3351
      %v3369 = vmul.f32 %v2967, %v3351
      %v3370 = vmul.f32 %v3067, %v3351
      %v3371 = vmul.f32 %v3052, %v3351
      %v3372 = vmul.f32 %v2970, %v3351
      %v3373 = vmul.f32 %v3068, %v3351
      %v3374 = vmul.f32 %v3053, %v3351
      %v3375 = vmul.f32 %v2973, %v3351
      %v3376 = vmul.f32 %v3069, %v3351
      %v3377 = vmul.f32 %v3054, %v3351
      %v3378 = vmul.f32 %v2976, %v3351
      %v3379 = vmul.f32 %v3070, %v3351
      %v3380 = vmul.f32 %v3055, %v3351
      %v3381 = vmul.f32 %v2979, %v3351
      %v3382 = vmul.f32 %v3071, %v3351
      %v3383 = vmul.f32 %v3056, %v3351
      %v3384 = vmul.f32 %v2982, %v3351
      %v3385 = vmul.f32 %v3072, %v3351
      %v3386 = vmul.f32 %v3057, %v3351
      %v3387 = vmul.f32 %v2985, %v3351
      %v3388 = vmul.f32 %v3073, %v3351
      %v3389 = vmul.f32 %v3058, %v3351
      %v3390 = vmul.f32 %v2988, %v3351
      %v3391 = vmul.f32 %v3074, %v3351
      %v3392 = vmul.f32 %v3059, %v3351
      %v3393 = vmul.f32 %v2991, %v3351
      %v3394 = vmul.f32 %v3075, %v3351
      %v3395 = vmul.f32 %v3060, %v3351
      %v3396 = vmul.f32 %v2994, %v3351
      %v3397 = vmul.f32 %v3076, %v3351
      %v3444 = vrot.slane %v3352, 2
      %v3445 = vsel %vm831, %v3444, %v3444
      %v3446 = vrot.slane %v3353, 2
      %v3447 = vrot.slane %v3354, 2
      %v3448 = vsel %vm831, %v3446, %v3447
      %v3449 = vrot.slane %v3355, 2
      %v3450 = vsel %vm831, %v3447, %v3449
      %v3451 = vrot.slane %v3356, 2
      %v3452 = vrot.slane %v3357, 2
      %v3453 = vsel %vm831, %v3451, %v3452
      %v3454 = vrot.slane %v3358, 2
      %v3455 = vsel %vm831, %v3452, %v3454
      %v3456 = vrot.slane %v3359, 2
      %v3457 = vrot.slane %v3360, 2
      %v3458 = vsel %vm831, %v3456, %v3457
      %v3459 = vrot.slane %v3361, 2
      %v3460 = vsel %vm831, %v3457, %v3459
      %v3461 = vrot.slane %v3362, 2
      %v3462 = vrot.slane %v3363, 2
      %v3463 = vsel %vm831, %v3461, %v3462
      %v3464 = vrot.slane %v3364, 2
      %v3465 = vsel %vm831, %v3462, %v3464
      %v3466 = vrot.slane %v3365, 2
      %v3467 = vrot.slane %v3366, 2
      %v3468 = vsel %vm831, %v3466, %v3467
      %v3469 = vrot.slane %v3367, 2
      %v3470 = vsel %vm831, %v3467, %v3469
      %v3471 = vrot.slane %v3368, 2
      %v3472 = vrot.slane %v3369, 2
      %v3473 = vsel %vm831, %v3471, %v3472
      %v3474 = vrot.slane %v3370, 2
      %v3475 = vsel %vm831, %v3472, %v3474
      %v3476 = vrot.slane %v3371, 2
      %v3477 = vrot.slane %v3372, 2
      %v3478 = vsel %vm831, %v3476, %v3477
      %v3479 = vrot.slane %v3373, 2
      %v3480 = vsel %vm831, %v3477, %v3479
      %v3481 = vrot.slane %v3374, 2
      %v3482 = vrot.slane %v3375, 2
      %v3483 = vsel %vm831, %v3481, %v3482
      %v3484 = vrot.slane %v3376, 2
      %v3485 = vsel %vm831, %v3482, %v3484
      %v3486 = vrot.slane %v3377, 2
      %v3487 = vrot.slane %v3378, 2
      %v3488 = vsel %vm831, %v3486, %v3487
      %v3489 = vrot.slane %v3379, 2
      %v3490 = vsel %vm831, %v3487, %v3489
      %v3491 = vrot.slane %v3380, 2
      %v3492 = vrot.slane %v3381, 2
      %v3493 = vsel %vm831, %v3491, %v3492
      %v3494 = vrot.slane %v3382, 2
      %v3495 = vsel %vm831, %v3492, %v3494
      %v3496 = vrot.slane %v3383, 2
      %v3497 = vrot.slane %v3384, 2
      %v3498 = vsel %vm831, %v3496, %v3497
      %v3499 = vrot.slane %v3385, 2
      %v3500 = vsel %vm831, %v3497, %v3499
      %v3501 = vrot.slane %v3386, 2
      %v3502 = vrot.slane %v3387, 2
      %v3503 = vsel %vm831, %v3501, %v3502
      %v3504 = vrot.slane %v3388, 2
      %v3505 = vsel %vm831, %v3502, %v3504
      %v3506 = vrot.slane %v3389, 2
      %v3507 = vrot.slane %v3390, 2
      %v3508 = vsel %vm831, %v3506, %v3507
      %v3509 = vrot.slane %v3391, 2
      %v3510 = vsel %vm831, %v3507, %v3509
      %v3511 = vrot.slane %v3392, 2
      %v3512 = vrot.slane %v3393, 2
      %v3513 = vsel %vm831, %v3511, %v3512
      %v3514 = vrot.slane %v3394, 2
      %v3515 = vsel %vm831, %v3512, %v3514
      %v3516 = vrot.slane %v3395, 2
      %v3517 = vrot.slane %v3396, 2
      %v3518 = vsel %vm831, %v3516, %v3517
      %v3519 = vrot.slane %v3397, 2
      %v3520 = vsel %vm831, %v3517, %v3519
      %v3552 = vadd.f32 %v3317, %v3445
      %v3553 = vadd.f32 %v3318, %v3448
      %v3554 = vadd.f32 %v3319, %v3450
      %v3555 = vadd.f32 %v3320, %v3453
      %v3556 = vadd.f32 %v3321, %v3455
      %v3557 = vadd.f32 %v3322, %v3458
      %v3558 = vadd.f32 %v3323, %v3460
      %v3559 = vadd.f32 %v3324, %v3463
      %v3560 = vadd.f32 %v3325, %v3465
      %v3561 = vadd.f32 %v3326, %v3468
      %v3562 = vadd.f32 %v3327, %v3470
      %v3563 = vadd.f32 %v3328, %v3473
      %v3564 = vadd.f32 %v3329, %v3475
      %v3565 = vadd.f32 %v3330, %v3478
      %v3566 = vadd.f32 %v3331, %v3480
      %v3567 = vadd.f32 %v3332, %v3483
      %v3568 = vadd.f32 %v3333, %v3485
      %v3569 = vadd.f32 %v3334, %v3488
      %v3570 = vadd.f32 %v3335, %v3490
      %v3571 = vadd.f32 %v3336, %v3493
      %v3572 = vadd.f32 %v3337, %v3495
      %v3573 = vadd.f32 %v3338, %v3498
      %v3574 = vadd.f32 %v3339, %v3500
      %v3575 = vadd.f32 %v3340, %v3503
      %v3576 = vadd.f32 %v3341, %v3505
      %v3577 = vadd.f32 %v3342, %v3508
      %v3578 = vadd.f32 %v3343, %v3510
      %v3579 = vadd.f32 %v3344, %v3513
      %v3580 = vadd.f32 %v3345, %v3515
      %v3581 = vadd.f32 %v3346, %v3518
      %v3582 = vadd.f32 %v3347, %v3520
      %v3583 = vlaneseq
      %v3584 = vshrl.u32 %v3583, 7
      %v3585 = vsub.s32 0, %v3584
      %v3586 = vrot.slane %v229, %v3585
      %v3587 = vmul.f32 %v3046, %v3586
      %v3588 = vmul.f32 %v2952, %v3586
      %v3589 = vmul.f32 %v3047, %v3586
      %v3590 = vmul.f32 %v2955, %v3586
      %v3591 = vmul.f32 %v3048, %v3586
      %v3592 = vmul.f32 %v2958, %v3586
      %v3593 = vmul.f32 %v3049, %v3586
      %v3594 = vmul.f32 %v2961, %v3586
      %v3595 = vmul.f32 %v3050, %v3586
      %v3596 = vmul.f32 %v2964, %v3586
      %v3597 = vmul.f32 %v3051, %v3586
      %v3598 = vmul.f32 %v2967, %v3586
      %v3599 = vmul.f32 %v3052, %v3586
      %v3600 = vmul.f32 %v2970, %v3586
      %v3601 = vmul.f32 %v3053, %v3586
      %v3602 = vmul.f32 %v2973, %v3586
      %v3603 = vmul.f32 %v3054, %v3586
      %v3604 = vmul.f32 %v2976, %v3586
      %v3605 = vmul.f32 %v3055, %v3586
      %v3606 = vmul.f32 %v2979, %v3586
      %v3607 = vmul.f32 %v3056, %v3586
      %v3608 = vmul.f32 %v2982, %v3586
      %v3609 = vmul.f32 %v3057, %v3586
      %v3610 = vmul.f32 %v2985, %v3586
      %v3611 = vmul.f32 %v3058, %v3586
      %v3612 = vmul.f32 %v2988, %v3586
      %v3613 = vmul.f32 %v3059, %v3586
      %v3614 = vmul.f32 %v2991, %v3586
      %v3615 = vmul.f32 %v3060, %v3586
      %v3616 = vmul.f32 %v2994, %v3586
      %v3617 = vmul.f32 %v3061, %v3586
      %v3618 = vmul.f32 %v2997, %v3586
      %v3619 = vadd.f32 %v3552, %v3587
      %v3620 = vadd.f32 %v3552, %v3588
      %v3621 = vadd.f32 %v3553, %v3589
      %v3622 = vadd.f32 %v3554, %v3590
      %v3623 = vadd.f32 %v3555, %v3591
      %v3624 = vadd.f32 %v3556, %v3592
      %v3625 = vadd.f32 %v3557, %v3593
      %v3626 = vadd.f32 %v3558, %v3594
      %v3627 = vadd.f32 %v3559, %v3595
      %v3628 = vadd.f32 %v3560, %v3596
      %v3629 = vadd.f32 %v3561, %v3597
      %v3630 = vadd.f32 %v3562, %v3598
      %v3631 = vadd.f32 %v3563, %v3599
      %v3632 = vadd.f32 %v3564, %v3600
      %v3633 = vadd.f32 %v3565, %v3601
      %v3634 = vadd.f32 %v3566, %v3602
      %v3635 = vadd.f32 %v3567, %v3603
      %v3636 = vadd.f32 %v3568, %v3604
      %v3637 = vadd.f32 %v3569, %v3605
      %v3638 = vadd.f32 %v3570, %v3606
      %v3639 = vadd.f32 %v3571, %v3607
      %v3640 = vadd.f32 %v3572, %v3608
      %v3641 = vadd.f32 %v3573, %v3609
      %v3642 = vadd.f32 %v3574, %v3610
      %v3643 = vadd.f32 %v3575, %v3611
      %v3644 = vadd.f32 %v3576, %v3612
      %v3645 = vadd.f32 %v3577, %v3613
      %v3646 = vadd.f32 %v3578, %v3614
      %v3647 = vadd.f32 %v3579, %v3615
      %v3648 = vadd.f32 %v3580, %v3616
      %v3649 = vadd.f32 %v3581, %v3617
      %v3650 = vadd.f32 %v3582, %v3618
      %v3651 = vlaneseq
      %v3652 = vshrl.u32 %v3651, 7
      %v3653 = vsub.s32 1, %v3652
      %v3654 = vrot.slane %v229, %v3653
      %v3655 = vmul.f32 %v3046, %v3654
      %v3656 = vmul.f32 %v2952, %v3654
      %v3657 = vmul.f32 %v3062, %v3654
      %v3658 = vmul.f32 %v3047, %v3654
      %v3659 = vmul.f32 %v2955, %v3654
      %v3660 = vmul.f32 %v3063, %v3654
      %v3661 = vmul.f32 %v3048, %v3654
      %v3662 = vmul.f32 %v2958, %v3654
      %v3663 = vmul.f32 %v3064, %v3654
      %v3664 = vmul.f32 %v3049, %v3654
      %v3665 = vmul.f32 %v2961, %v3654
      %v3666 = vmul.f32 %v3065, %v3654
      %v3667 = vmul.f32 %v3050, %v3654
      %v3668 = vmul.f32 %v2964, %v3654
      %v3669 = vmul.f32 %v3066, %v3654
      %v3670 = vmul.f32 %v3051, %v3654
      %v3671 = vmul.f32 %v2967, %v3654
      %v3672 = vmul.f32 %v3067, %v3654
      %v3673 = vmul.f32 %v3052, %v3654
      %v3674 = vmul.f32 %v2970, %v3654
      %v3675 = vmul.f32 %v3068, %v3654
      %v3676 = vmul.f32 %v3053, %v3654
      %v3677 = vmul.f32 %v2973, %v3654
      %v3678 = vmul.f32 %v3069, %v3654
      %v3679 = vmul.f32 %v3054, %v3654
      %v3680 = vmul.f32 %v2976, %v3654
      %v3681 = vmul.f32 %v3070, %v3654
      %v3682 = vmul.f32 %v3055, %v3654
      %v3683 = vmul.f32 %v2979, %v3654
      %v3684 = vmul.f32 %v3071, %v3654
      %v3685 = vmul.f32 %v3056, %v3654
      %v3686 = vmul.f32 %v2982, %v3654
      %v3687 = vmul.f32 %v3072, %v3654
      %v3688 = vmul.f32 %v3057, %v3654
      %v3689 = vmul.f32 %v2985, %v3654
      %v3690 = vmul.f32 %v3073, %v3654
      %v3691 = vmul.f32 %v3058, %v3654
      %v3692 = vmul.f32 %v2988, %v3654
      %v3693 = vmul.f32 %v3074, %v3654
      %v3694 = vmul.f32 %v3059, %v3654
      %v3695 = vmul.f32 %v2991, %v3654
      %v3696 = vmul.f32 %v3075, %v3654
      %v3697 = vmul.f32 %v3060, %v3654
      %v3698 = vmul.f32 %v2994, %v3654
      %v3699 = vmul.f32 %v3076, %v3654
      %v3700 = vmul.f32 %v3061, %v3654
      %v3701 = vmul.f32 %v2997, %v3654
      %v3702 = vmul.f32 %v3077, %v3654
      %v3751 = vrot.slane %v3655, 1
      %v3752 = vrot.slane %v3656, 1
      %v3753 = vsel %vm595, %v3751, %v3752
      %v3754 = vrot.slane %v3657, 1
      %v3755 = vsel %vm595, %v3752, %v3754
      %v3756 = vrot.slane %v3658, 1
      %v3757 = vrot.slane %v3659, 1
      %v3758 = vsel %vm595, %v3756, %v3757
      %v3759 = vrot.slane %v3660, 1
      %v3760 = vsel %vm595, %v3757, %v3759
      %v3761 = vrot.slane %v3661, 1
      %v3762 = vrot.slane %v3662, 1
      %v3763 = vsel %vm595, %v3761, %v3762
      %v3764 = vrot.slane %v3663, 1
      %v3765 = vsel %vm595, %v3762, %v3764
      %v3766 = vrot.slane %v3664, 1
      %v3767 = vrot.slane %v3665, 1
      %v3768 = vsel %vm595, %v3766, %v3767
      %v3769 = vrot.slane %v3666, 1
      %v3770 = vsel %vm595, %v3767, %v3769
      %v3771 = vrot.slane %v3667, 1
      %v3772 = vrot.slane %v3668, 1
      %v3773 = vsel %vm595, %v3771, %v3772
      %v3774 = vrot.slane %v3669, 1
      %v3775 = vsel %vm595, %v3772, %v3774
      %v3776 = vrot.slane %v3670, 1
      %v3777 = vrot.slane %v3671, 1
      %v3778 = vsel %vm595, %v3776, %v3777
      %v3779 = vrot.slane %v3672, 1
      %v3780 = vsel %vm595, %v3777, %v3779
      %v3781 = vrot.slane %v3673, 1
      %v3782 = vrot.slane %v3674, 1
      %v3783 = vsel %vm595, %v3781, %v3782
      %v3784 = vrot.slane %v3675, 1
      %v3785 = vsel %vm595, %v3782, %v3784
      %v3786 = vrot.slane %v3676, 1
      %v3787 = vrot.slane %v3677, 1
      %v3788 = vsel %vm595, %v3786, %v3787
      %v3789 = vrot.slane %v3678, 1
      %v3790 = vsel %vm595, %v3787, %v3789
      %v3791 = vrot.slane %v3679, 1
      %v3792 = vrot.slane %v3680, 1
      %v3793 = vsel %vm595, %v3791, %v3792
      %v3794 = vrot.slane %v3681, 1
      %v3795 = vsel %vm595, %v3792, %v3794
      %v3796 = vrot.slane %v3682, 1
      %v3797 = vrot.slane %v3683, 1
      %v3798 = vsel %vm595, %v3796, %v3797
      %v3799 = vrot.slane %v3684, 1
      %v3800 = vsel %vm595, %v3797, %v3799
      %v3801 = vrot.slane %v3685, 1
      %v3802 = vrot.slane %v3686, 1
      %v3803 = vsel %vm595, %v3801, %v3802
      %v3804 = vrot.slane %v3687, 1
      %v3805 = vsel %vm595, %v3802, %v3804
      %v3806 = vrot.slane %v3688, 1
      %v3807 = vrot.slane %v3689, 1
      %v3808 = vsel %vm595, %v3806, %v3807
      %v3809 = vrot.slane %v3690, 1
      %v3810 = vsel %vm595, %v3807, %v3809
      %v3811 = vrot.slane %v3691, 1
      %v3812 = vrot.slane %v3692, 1
      %v3813 = vsel %vm595, %v3811, %v3812
      %v3814 = vrot.slane %v3693, 1
      %v3815 = vsel %vm595, %v3812, %v3814
      %v3816 = vrot.slane %v3694, 1
      %v3817 = vrot.slane %v3695, 1
      %v3818 = vsel %vm595, %v3816, %v3817
      %v3819 = vrot.slane %v3696, 1
      %v3820 = vsel %vm595, %v3817, %v3819
      %v3821 = vrot.slane %v3697, 1
      %v3822 = vrot.slane %v3698, 1
      %v3823 = vsel %vm595, %v3821, %v3822
      %v3824 = vrot.slane %v3699, 1
      %v3825 = vsel %vm595, %v3822, %v3824
      %v3826 = vrot.slane %v3700, 1
      %v3827 = vrot.slane %v3701, 1
      %v3828 = vsel %vm595, %v3826, %v3827
      %v3829 = vrot.slane %v3702, 1
      %v3830 = vsel %vm595, %v3827, %v3829
      %v3863 = vadd.f32 %v3619, %v3753
      %v3864 = vadd.f32 %v3620, %v3755
      %v3865 = vadd.f32 %v3621, %v3758
      %v3866 = vadd.f32 %v3622, %v3760
      %v3867 = vadd.f32 %v3623, %v3763
      %v3868 = vadd.f32 %v3624, %v3765
      %v3869 = vadd.f32 %v3625, %v3768
      %v3870 = vadd.f32 %v3626, %v3770
      %v3871 = vadd.f32 %v3627, %v3773
      %v3872 = vadd.f32 %v3628, %v3775
      %v3873 = vadd.f32 %v3629, %v3778
      %v3874 = vadd.f32 %v3630, %v3780
      %v3875 = vadd.f32 %v3631, %v3783
      %v3876 = vadd.f32 %v3632, %v3785
      %v3877 = vadd.f32 %v3633, %v3788
      %v3878 = vadd.f32 %v3634, %v3790
      %v3879 = vadd.f32 %v3635, %v3793
      %v3880 = vadd.f32 %v3636, %v3795
      %v3881 = vadd.f32 %v3637, %v3798
      %v3882 = vadd.f32 %v3638, %v3800
      %v3883 = vadd.f32 %v3639, %v3803
      %v3884 = vadd.f32 %v3640, %v3805
      %v3885 = vadd.f32 %v3641, %v3808
      %v3886 = vadd.f32 %v3642, %v3810
      %v3887 = vadd.f32 %v3643, %v3813
      %v3888 = vadd.f32 %v3644, %v3815
      %v3889 = vadd.f32 %v3645, %v3818
      %v3890 = vadd.f32 %v3646, %v3820
      %v3891 = vadd.f32 %v3647, %v3823
      %v3892 = vadd.f32 %v3648, %v3825
      %v3893 = vadd.f32 %v3649, %v3828
      %v3894 = vadd.f32 %v3650, %v3830
      %v3895 = vlaneseq
      %v3896 = vshrl.u32 %v3895, 7
      %v3897 = vsub.s32 2, %v3896
      %v3898 = vrot.slane %v229, %v3897
      %v3899 = vmul.f32 %v3046, %v3898
      %v3900 = vmul.f32 %v2952, %v3898
      %v3901 = vmul.f32 %v3062, %v3898
      %v3902 = vmul.f32 %v3047, %v3898
      %v3903 = vmul.f32 %v2955, %v3898
      %v3904 = vmul.f32 %v3063, %v3898
      %v3905 = vmul.f32 %v3048, %v3898
      %v3906 = vmul.f32 %v2958, %v3898
      %v3907 = vmul.f32 %v3064, %v3898
      %v3908 = vmul.f32 %v3049, %v3898
      %v3909 = vmul.f32 %v2961, %v3898
      %v3910 = vmul.f32 %v3065, %v3898
      %v3911 = vmul.f32 %v3050, %v3898
      %v3912 = vmul.f32 %v2964, %v3898
      %v3913 = vmul.f32 %v3066, %v3898
      %v3914 = vmul.f32 %v3051, %v3898
      %v3915 = vmul.f32 %v2967, %v3898
      %v3916 = vmul.f32 %v3067, %v3898
      %v3917 = vmul.f32 %v3052, %v3898
      %v3918 = vmul.f32 %v2970, %v3898
      %v3919 = vmul.f32 %v3068, %v3898
      %v3920 = vmul.f32 %v3053, %v3898
      %v3921 = vmul.f32 %v2973, %v3898
      %v3922 = vmul.f32 %v3069, %v3898
      %v3923 = vmul.f32 %v3054, %v3898
      %v3924 = vmul.f32 %v2976, %v3898
      %v3925 = vmul.f32 %v3070, %v3898
      %v3926 = vmul.f32 %v3055, %v3898
      %v3927 = vmul.f32 %v2979, %v3898
      %v3928 = vmul.f32 %v3071, %v3898
      %v3929 = vmul.f32 %v3056, %v3898
      %v3930 = vmul.f32 %v2982, %v3898
      %v3931 = vmul.f32 %v3072, %v3898
      %v3932 = vmul.f32 %v3057, %v3898
      %v3933 = vmul.f32 %v2985, %v3898
      %v3934 = vmul.f32 %v3073, %v3898
      %v3935 = vmul.f32 %v3058, %v3898
      %v3936 = vmul.f32 %v2988, %v3898
      %v3937 = vmul.f32 %v3074, %v3898
      %v3938 = vmul.f32 %v3059, %v3898
      %v3939 = vmul.f32 %v2991, %v3898
      %v3940 = vmul.f32 %v3075, %v3898
      %v3941 = vmul.f32 %v3060, %v3898
      %v3942 = vmul.f32 %v2994, %v3898
      %v3943 = vmul.f32 %v3076, %v3898
      %v3944 = vmul.f32 %v3061, %v3898
      %v3945 = vmul.f32 %v2997, %v3898
      %v3946 = vmul.f32 %v3077, %v3898
      %v3995 = vrot.slane %v3899, 2
      %v3996 = vrot.slane %v3900, 2
      %v3997 = vsel %vm831, %v3995, %v3996
      %v3998 = vrot.slane %v3901, 2
      %v3999 = vsel %vm831, %v3996, %v3998
      %v4000 = vrot.slane %v3902, 2
      %v4001 = vrot.slane %v3903, 2
      %v4002 = vsel %vm831, %v4000, %v4001
      %v4003 = vrot.slane %v3904, 2
      %v4004 = vsel %vm831, %v4001, %v4003
      %v4005 = vrot.slane %v3905, 2
      %v4006 = vrot.slane %v3906, 2
      %v4007 = vsel %vm831, %v4005, %v4006
      %v4008 = vrot.slane %v3907, 2
      %v4009 = vsel %vm831, %v4006, %v4008
      %v4010 = vrot.slane %v3908, 2
      %v4011 = vrot.slane %v3909, 2
      %v4012 = vsel %vm831, %v4010, %v4011
      %v4013 = vrot.slane %v3910, 2
      %v4014 = vsel %vm831, %v4011, %v4013
      %v4015 = vrot.slane %v3911, 2
      %v4016 = vrot.slane %v3912, 2
      %v4017 = vsel %vm831, %v4015, %v4016
      %v4018 = vrot.slane %v3913, 2
      %v4019 = vsel %vm831, %v4016, %v4018
      %v4020 = vrot.slane %v3914, 2
      %v4021 = vrot.slane %v3915, 2
      %v4022 = vsel %vm831, %v4020, %v4021
      %v4023 = vrot.slane %v3916, 2
      %v4024 = vsel %vm831, %v4021, %v4023
      %v4025 = vrot.slane %v3917, 2
      %v4026 = vrot.slane %v3918, 2
      %v4027 = vsel %vm831, %v4025, %v4026
      %v4028 = vrot.slane %v3919, 2
      %v4029 = vsel %vm831, %v4026, %v4028
      %v4030 = vrot.slane %v3920, 2
      %v4031 = vrot.slane %v3921, 2
      %v4032 = vsel %vm831, %v4030, %v4031
      %v4033 = vrot.slane %v3922, 2
      %v4034 = vsel %vm831, %v4031, %v4033
      %v4035 = vrot.slane %v3923, 2
      %v4036 = vrot.slane %v3924, 2
      %v4037 = vsel %vm831, %v4035, %v4036
      %v4038 = vrot.slane %v3925, 2
      %v4039 = vsel %vm831, %v4036, %v4038
      %v4040 = vrot.slane %v3926, 2
      %v4041 = vrot.slane %v3927, 2
      %v4042 = vsel %vm831, %v4040, %v4041
      %v4043 = vrot.slane %v3928, 2
      %v4044 = vsel %vm831, %v4041, %v4043
      %v4045 = vrot.slane %v3929, 2
      %v4046 = vrot.slane %v3930, 2
      %v4047 = vsel %vm831, %v4045, %v4046
      %v4048 = vrot.slane %v3931, 2
      %v4049 = vsel %vm831, %v4046, %v4048
      %v4050 = vrot.slane %v3932, 2
      %v4051 = vrot.slane %v3933, 2
      %v4052 = vsel %vm831, %v4050, %v4051
      %v4053 = vrot.slane %v3934, 2
      %v4054 = vsel %vm831, %v4051, %v4053
      %v4055 = vrot.slane %v3935, 2
      %v4056 = vrot.slane %v3936, 2
      %v4057 = vsel %vm831, %v4055, %v4056
      %v4058 = vrot.slane %v3937, 2
      %v4059 = vsel %vm831, %v4056, %v4058
      %v4060 = vrot.slane %v3938, 2
      %v4061 = vrot.slane %v3939, 2
      %v4062 = vsel %vm831, %v4060, %v4061
      %v4063 = vrot.slane %v3940, 2
      %v4064 = vsel %vm831, %v4061, %v4063
      %v4065 = vrot.slane %v3941, 2
      %v4066 = vrot.slane %v3942, 2
      %v4067 = vsel %vm831, %v4065, %v4066
      %v4068 = vrot.slane %v3943, 2
      %v4069 = vsel %vm831, %v4066, %v4068
      %v4070 = vrot.slane %v3944, 2
      %v4071 = vrot.slane %v3945, 2
      %v4072 = vsel %vm831, %v4070, %v4071
      %v4073 = vrot.slane %v3946, 2
      %v4074 = vsel %vm831, %v4071, %v4073
      %v4107 = vadd.f32 %v3863, %v3997
      %v4108 = vadd.f32 %v3864, %v3999
      %v4109 = vadd.f32 %v3865, %v4002
      %v4110 = vadd.f32 %v3866, %v4004
      %v4111 = vadd.f32 %v3867, %v4007
      %v4112 = vadd.f32 %v3868, %v4009
      %v4113 = vadd.f32 %v3869, %v4012
      %v4114 = vadd.f32 %v3870, %v4014
      %v4115 = vadd.f32 %v3871, %v4017
      %v4116 = vadd.f32 %v3872, %v4019
      %v4117 = vadd.f32 %v3873, %v4022
      %v4118 = vadd.f32 %v3874, %v4024
      %v4119 = vadd.f32 %v3875, %v4027
      %v4120 = vadd.f32 %v3876, %v4029
      %v4121 = vadd.f32 %v3877, %v4032
      %v4122 = vadd.f32 %v3878, %v4034
      %v4123 = vadd.f32 %v3879, %v4037
      %v4124 = vadd.f32 %v3880, %v4039
      %v4125 = vadd.f32 %v3881, %v4042
      %v4126 = vadd.f32 %v3882, %v4044
      %v4127 = vadd.f32 %v3883, %v4047
      %v4128 = vadd.f32 %v3884, %v4049
      %v4129 = vadd.f32 %v3885, %v4052
      %v4130 = vadd.f32 %v3886, %v4054
      %v4131 = vadd.f32 %v3887, %v4057
      %v4132 = vadd.f32 %v3888, %v4059
      %v4133 = vadd.f32 %v3889, %v4062
      %v4134 = vadd.f32 %v3890, %v4064
      %v4135 = vadd.f32 %v3891, %v4067
      %v4136 = vadd.f32 %v3892, %v4069
      %v4137 = vadd.f32 %v3893, %v4072
      %v4138 = vadd.f32 %v3894, %v4074
      %v4139 = vlaneseq
      %v4140 = vshrl.u32 %v4139, 7
      %v4141 = vsub.s32 0, %v4140
      %v4142 = vrot.slane %v230, %v4141
      %v4143 = vmul.f32 %v3047, %v4142
      %v4144 = vmul.f32 %v2955, %v4142
      %v4145 = vmul.f32 %v3048, %v4142
      %v4146 = vmul.f32 %v2958, %v4142
      %v4147 = vmul.f32 %v3049, %v4142
      %v4148 = vmul.f32 %v2961, %v4142
      %v4149 = vmul.f32 %v3050, %v4142
      %v4150 = vmul.f32 %v2964, %v4142
      %v4151 = vmul.f32 %v3051, %v4142
      %v4152 = vmul.f32 %v2967, %v4142
      %v4153 = vmul.f32 %v3052, %v4142
      %v4154 = vmul.f32 %v2970, %v4142
      %v4155 = vmul.f32 %v3053, %v4142
      %v4156 = vmul.f32 %v2973, %v4142
      %v4157 = vmul.f32 %v3054, %v4142
      %v4158 = vmul.f32 %v2976, %v4142
      %v4159 = vmul.f32 %v3055, %v4142
      %v4160 = vmul.f32 %v2979, %v4142
      %v4161 = vmul.f32 %v3056, %v4142
      %v4162 = vmul.f32 %v2982, %v4142
      %v4163 = vmul.f32 %v3057, %v4142
      %v4164 = vmul.f32 %v2985, %v4142
      %v4165 = vmul.f32 %v3058, %v4142
      %v4166 = vmul.f32 %v2988, %v4142
      %v4167 = vmul.f32 %v3059, %v4142
      %v4168 = vmul.f32 %v2991, %v4142
      %v4169 = vmul.f32 %v3060, %v4142
      %v4170 = vmul.f32 %v2994, %v4142
      %v4171 = vmul.f32 %v3061, %v4142
      %v4172 = vmul.f32 %v2997, %v4142
      %v4173 = vmul.f32 %v4142, 0.0
      %v4174 = vadd.f32 %v4107, %v4143
      %v4175 = vadd.f32 %v4108, %v4144
      %v4176 = vadd.f32 %v4109, %v4145
      %v4177 = vadd.f32 %v4110, %v4146
      %v4178 = vadd.f32 %v4111, %v4147
      %v4179 = vadd.f32 %v4112, %v4148
      %v4180 = vadd.f32 %v4113, %v4149
      %v4181 = vadd.f32 %v4114, %v4150
      %v4182 = vadd.f32 %v4115, %v4151
      %v4183 = vadd.f32 %v4116, %v4152
      %v4184 = vadd.f32 %v4117, %v4153
      %v4185 = vadd.f32 %v4118, %v4154
      %v4186 = vadd.f32 %v4119, %v4155
      %v4187 = vadd.f32 %v4120, %v4156
      %v4188 = vadd.f32 %v4121, %v4157
      %v4189 = vadd.f32 %v4122, %v4158
      %v4190 = vadd.f32 %v4123, %v4159
      %v4191 = vadd.f32 %v4124, %v4160
      %v4192 = vadd.f32 %v4125, %v4161
      %v4193 = vadd.f32 %v4126, %v4162
      %v4194 = vadd.f32 %v4127, %v4163
      %v4195 = vadd.f32 %v4128, %v4164
      %v4196 = vadd.f32 %v4129, %v4165
      %v4197 = vadd.f32 %v4130, %v4166
      %v4198 = vadd.f32 %v4131, %v4167
      %v4199 = vadd.f32 %v4132, %v4168
      %v4200 = vadd.f32 %v4133, %v4169
      %v4201 = vadd.f32 %v4134, %v4170
      %v4202 = vadd.f32 %v4135, %v4171
      %v4203 = vadd.f32 %v4136, %v4172
      %v4204 = vadd.f32 %v4137, %v4173
      %v4205 = vadd.f32 %v4138, %v4173
      %v4206 = vlaneseq
      %v4207 = vshrl.u32 %v4206, 7
      %v4208 = vsub.s32 1, %v4207
      %v4209 = vrot.slane %v230, %v4208
      %v4210 = vmul.f32 %v3047, %v4209
      %v4211 = vmul.f32 %v2955, %v4209
      %v4212 = vmul.f32 %v3063, %v4209
      %v4213 = vmul.f32 %v3048, %v4209
      %v4214 = vmul.f32 %v2958, %v4209
      %v4215 = vmul.f32 %v3064, %v4209
      %v4216 = vmul.f32 %v3049, %v4209
      %v4217 = vmul.f32 %v2961, %v4209
      %v4218 = vmul.f32 %v3065, %v4209
      %v4219 = vmul.f32 %v3050, %v4209
      %v4220 = vmul.f32 %v2964, %v4209
      %v4221 = vmul.f32 %v3066, %v4209
      %v4222 = vmul.f32 %v3051, %v4209
      %v4223 = vmul.f32 %v2967, %v4209
      %v4224 = vmul.f32 %v3067, %v4209
      %v4225 = vmul.f32 %v3052, %v4209
      %v4226 = vmul.f32 %v2970, %v4209
      %v4227 = vmul.f32 %v3068, %v4209
      %v4228 = vmul.f32 %v3053, %v4209
      %v4229 = vmul.f32 %v2973, %v4209
      %v4230 = vmul.f32 %v3069, %v4209
      %v4231 = vmul.f32 %v3054, %v4209
      %v4232 = vmul.f32 %v2976, %v4209
      %v4233 = vmul.f32 %v3070, %v4209
      %v4234 = vmul.f32 %v3055, %v4209
      %v4235 = vmul.f32 %v2979, %v4209
      %v4236 = vmul.f32 %v3071, %v4209
      %v4237 = vmul.f32 %v3056, %v4209
      %v4238 = vmul.f32 %v2982, %v4209
      %v4239 = vmul.f32 %v3072, %v4209
      %v4240 = vmul.f32 %v3057, %v4209
      %v4241 = vmul.f32 %v2985, %v4209
      %v4242 = vmul.f32 %v3073, %v4209
      %v4243 = vmul.f32 %v3058, %v4209
      %v4244 = vmul.f32 %v2988, %v4209
      %v4245 = vmul.f32 %v3074, %v4209
      %v4246 = vmul.f32 %v3059, %v4209
      %v4247 = vmul.f32 %v2991, %v4209
      %v4248 = vmul.f32 %v3075, %v4209
      %v4249 = vmul.f32 %v3060, %v4209
      %v4250 = vmul.f32 %v2994, %v4209
      %v4251 = vmul.f32 %v3076, %v4209
      %v4252 = vmul.f32 %v3061, %v4209
      %v4253 = vmul.f32 %v2997, %v4209
      %v4254 = vmul.f32 %v3077, %v4209
      %v4255 = vmul.f32 %v4209, 0.0
      %v4302 = vrot.slane %v4210, 1
      %v4303 = vrot.slane %v4211, 1
      %v4304 = vsel %vm595, %v4302, %v4303
      %v4305 = vrot.slane %v4212, 1
      %v4306 = vsel %vm595, %v4303, %v4305
      %v4307 = vrot.slane %v4213, 1
      %v4308 = vrot.slane %v4214, 1
      %v4309 = vsel %vm595, %v4307, %v4308
      %v4310 = vrot.slane %v4215, 1
      %v4311 = vsel %vm595, %v4308, %v4310
      %v4312 = vrot.slane %v4216, 1
      %v4313 = vrot.slane %v4217, 1
      %v4314 = vsel %vm595, %v4312, %v4313
      %v4315 = vrot.slane %v4218, 1
      %v4316 = vsel %vm595, %v4313, %v4315
      %v4317 = vrot.slane %v4219, 1
      %v4318 = vrot.slane %v4220, 1
      %v4319 = vsel %vm595, %v4317, %v4318
      %v4320 = vrot.slane %v4221, 1
      %v4321 = vsel %vm595, %v4318, %v4320
      %v4322 = vrot.slane %v4222, 1
      %v4323 = vrot.slane %v4223, 1
      %v4324 = vsel %vm595, %v4322, %v4323
      %v4325 = vrot.slane %v4224, 1
      %v4326 = vsel %vm595, %v4323, %v4325
      %v4327 = vrot.slane %v4225, 1
      %v4328 = vrot.slane %v4226, 1
      %v4329 = vsel %vm595, %v4327, %v4328
      %v4330 = vrot.slane %v4227, 1
      %v4331 = vsel %vm595, %v4328, %v4330
      %v4332 = vrot.slane %v4228, 1
      %v4333 = vrot.slane %v4229, 1
      %v4334 = vsel %vm595, %v4332, %v4333
      %v4335 = vrot.slane %v4230, 1
      %v4336 = vsel %vm595, %v4333, %v4335
      %v4337 = vrot.slane %v4231, 1
      %v4338 = vrot.slane %v4232, 1
      %v4339 = vsel %vm595, %v4337, %v4338
      %v4340 = vrot.slane %v4233, 1
      %v4341 = vsel %vm595, %v4338, %v4340
      %v4342 = vrot.slane %v4234, 1
      %v4343 = vrot.slane %v4235, 1
      %v4344 = vsel %vm595, %v4342, %v4343
      %v4345 = vrot.slane %v4236, 1
      %v4346 = vsel %vm595, %v4343, %v4345
      %v4347 = vrot.slane %v4237, 1
      %v4348 = vrot.slane %v4238, 1
      %v4349 = vsel %vm595, %v4347, %v4348
      %v4350 = vrot.slane %v4239, 1
      %v4351 = vsel %vm595, %v4348, %v4350
      %v4352 = vrot.slane %v4240, 1
      %v4353 = vrot.slane %v4241, 1
      %v4354 = vsel %vm595, %v4352, %v4353
      %v4355 = vrot.slane %v4242, 1
      %v4356 = vsel %vm595, %v4353, %v4355
      %v4357 = vrot.slane %v4243, 1
      %v4358 = vrot.slane %v4244, 1
      %v4359 = vsel %vm595, %v4357, %v4358
      %v4360 = vrot.slane %v4245, 1
      %v4361 = vsel %vm595, %v4358, %v4360
      %v4362 = vrot.slane %v4246, 1
      %v4363 = vrot.slane %v4247, 1
      %v4364 = vsel %vm595, %v4362, %v4363
      %v4365 = vrot.slane %v4248, 1
      %v4366 = vsel %vm595, %v4363, %v4365
      %v4367 = vrot.slane %v4249, 1
      %v4368 = vrot.slane %v4250, 1
      %v4369 = vsel %vm595, %v4367, %v4368
      %v4370 = vrot.slane %v4251, 1
      %v4371 = vsel %vm595, %v4368, %v4370
      %v4372 = vrot.slane %v4252, 1
      %v4373 = vrot.slane %v4253, 1
      %v4374 = vsel %vm595, %v4372, %v4373
      %v4375 = vrot.slane %v4254, 1
      %v4376 = vsel %vm595, %v4373, %v4375
      %v4377 = vrot.slane %v4255, 1
      %v4378 = vsel %vm595, %v4377, %v4377
      %v4410 = vadd.f32 %v4174, %v4304
      %v4411 = vadd.f32 %v4175, %v4306
      %v4412 = vadd.f32 %v4176, %v4309
      %v4413 = vadd.f32 %v4177, %v4311
      %v4414 = vadd.f32 %v4178, %v4314
      %v4415 = vadd.f32 %v4179, %v4316
      %v4416 = vadd.f32 %v4180, %v4319
      %v4417 = vadd.f32 %v4181, %v4321
      %v4418 = vadd.f32 %v4182, %v4324
      %v4419 = vadd.f32 %v4183, %v4326
      %v4420 = vadd.f32 %v4184, %v4329
      %v4421 = vadd.f32 %v4185, %v4331
      %v4422 = vadd.f32 %v4186, %v4334
      %v4423 = vadd.f32 %v4187, %v4336
      %v4424 = vadd.f32 %v4188, %v4339
      %v4425 = vadd.f32 %v4189, %v4341
      %v4426 = vadd.f32 %v4190, %v4344
      %v4427 = vadd.f32 %v4191, %v4346
      %v4428 = vadd.f32 %v4192, %v4349
      %v4429 = vadd.f32 %v4193, %v4351
      %v4430 = vadd.f32 %v4194, %v4354
      %v4431 = vadd.f32 %v4195, %v4356
      %v4432 = vadd.f32 %v4196, %v4359
      %v4433 = vadd.f32 %v4197, %v4361
      %v4434 = vadd.f32 %v4198, %v4364
      %v4435 = vadd.f32 %v4199, %v4366
      %v4436 = vadd.f32 %v4200, %v4369
      %v4437 = vadd.f32 %v4201, %v4371
      %v4438 = vadd.f32 %v4202, %v4374
      %v4439 = vadd.f32 %v4203, %v4376
      %v4440 = vadd.f32 %v4204, %v4378
      %v4441 = vadd.f32 %v4205, %v4378
      %v4442 = vlaneseq
      %v4443 = vshrl.u32 %v4442, 7
      %v4444 = vsub.s32 2, %v4443
      %v4445 = vrot.slane %v230, %v4444
      %v4446 = vmul.f32 %v3047, %v4445
      %v4447 = vmul.f32 %v2955, %v4445
      %v4448 = vmul.f32 %v3063, %v4445
      %v4449 = vmul.f32 %v3048, %v4445
      %v4450 = vmul.f32 %v2958, %v4445
      %v4451 = vmul.f32 %v3064, %v4445
      %v4452 = vmul.f32 %v3049, %v4445
      %v4453 = vmul.f32 %v2961, %v4445
      %v4454 = vmul.f32 %v3065, %v4445
      %v4455 = vmul.f32 %v3050, %v4445
      %v4456 = vmul.f32 %v2964, %v4445
      %v4457 = vmul.f32 %v3066, %v4445
      %v4458 = vmul.f32 %v3051, %v4445
      %v4459 = vmul.f32 %v2967, %v4445
      %v4460 = vmul.f32 %v3067, %v4445
      %v4461 = vmul.f32 %v3052, %v4445
      %v4462 = vmul.f32 %v2970, %v4445
      %v4463 = vmul.f32 %v3068, %v4445
      %v4464 = vmul.f32 %v3053, %v4445
      %v4465 = vmul.f32 %v2973, %v4445
      %v4466 = vmul.f32 %v3069, %v4445
      %v4467 = vmul.f32 %v3054, %v4445
      %v4468 = vmul.f32 %v2976, %v4445
      %v4469 = vmul.f32 %v3070, %v4445
      %v4470 = vmul.f32 %v3055, %v4445
      %v4471 = vmul.f32 %v2979, %v4445
      %v4472 = vmul.f32 %v3071, %v4445
      %v4473 = vmul.f32 %v3056, %v4445
      %v4474 = vmul.f32 %v2982, %v4445
      %v4475 = vmul.f32 %v3072, %v4445
      %v4476 = vmul.f32 %v3057, %v4445
      %v4477 = vmul.f32 %v2985, %v4445
      %v4478 = vmul.f32 %v3073, %v4445
      %v4479 = vmul.f32 %v3058, %v4445
      %v4480 = vmul.f32 %v2988, %v4445
      %v4481 = vmul.f32 %v3074, %v4445
      %v4482 = vmul.f32 %v3059, %v4445
      %v4483 = vmul.f32 %v2991, %v4445
      %v4484 = vmul.f32 %v3075, %v4445
      %v4485 = vmul.f32 %v3060, %v4445
      %v4486 = vmul.f32 %v2994, %v4445
      %v4487 = vmul.f32 %v3076, %v4445
      %v4488 = vmul.f32 %v3061, %v4445
      %v4489 = vmul.f32 %v2997, %v4445
      %v4490 = vmul.f32 %v3077, %v4445
      %v4491 = vmul.f32 %v4445, 0.0
      %v4538 = vrot.slane %v4446, 2
      %v4539 = vrot.slane %v4447, 2
      %v4540 = vsel %vm831, %v4538, %v4539
      %v4541 = vrot.slane %v4448, 2
      %v4542 = vsel %vm831, %v4539, %v4541
      %v4543 = vrot.slane %v4449, 2
      %v4544 = vrot.slane %v4450, 2
      %v4545 = vsel %vm831, %v4543, %v4544
      %v4546 = vrot.slane %v4451, 2
      %v4547 = vsel %vm831, %v4544, %v4546
      %v4548 = vrot.slane %v4452, 2
      %v4549 = vrot.slane %v4453, 2
      %v4550 = vsel %vm831, %v4548, %v4549
      %v4551 = vrot.slane %v4454, 2
      %v4552 = vsel %vm831, %v4549, %v4551
      %v4553 = vrot.slane %v4455, 2
      %v4554 = vrot.slane %v4456, 2
      %v4555 = vsel %vm831, %v4553, %v4554
      %v4556 = vrot.slane %v4457, 2
      %v4557 = vsel %vm831, %v4554, %v4556
      %v4558 = vrot.slane %v4458, 2
      %v4559 = vrot.slane %v4459, 2
      %v4560 = vsel %vm831, %v4558, %v4559
      %v4561 = vrot.slane %v4460, 2
      %v4562 = vsel %vm831, %v4559, %v4561
      %v4563 = vrot.slane %v4461, 2
      %v4564 = vrot.slane %v4462, 2
      %v4565 = vsel %vm831, %v4563, %v4564
      %v4566 = vrot.slane %v4463, 2
      %v4567 = vsel %vm831, %v4564, %v4566
      %v4568 = vrot.slane %v4464, 2
      %v4569 = vrot.slane %v4465, 2
      %v4570 = vsel %vm831, %v4568, %v4569
      %v4571 = vrot.slane %v4466, 2
      %v4572 = vsel %vm831, %v4569, %v4571
      %v4573 = vrot.slane %v4467, 2
      %v4574 = vrot.slane %v4468, 2
      %v4575 = vsel %vm831, %v4573, %v4574
      %v4576 = vrot.slane %v4469, 2
      %v4577 = vsel %vm831, %v4574, %v4576
      %v4578 = vrot.slane %v4470, 2
      %v4579 = vrot.slane %v4471, 2
      %v4580 = vsel %vm831, %v4578, %v4579
      %v4581 = vrot.slane %v4472, 2
      %v4582 = vsel %vm831, %v4579, %v4581
      %v4583 = vrot.slane %v4473, 2
      %v4584 = vrot.slane %v4474, 2
      %v4585 = vsel %vm831, %v4583, %v4584
      %v4586 = vrot.slane %v4475, 2
      %v4587 = vsel %vm831, %v4584, %v4586
      %v4588 = vrot.slane %v4476, 2
      %v4589 = vrot.slane %v4477, 2
      %v4590 = vsel %vm831, %v4588, %v4589
      %v4591 = vrot.slane %v4478, 2
      %v4592 = vsel %vm831, %v4589, %v4591
      %v4593 = vrot.slane %v4479, 2
      %v4594 = vrot.slane %v4480, 2
      %v4595 = vsel %vm831, %v4593, %v4594
      %v4596 = vrot.slane %v4481, 2
      %v4597 = vsel %vm831, %v4594, %v4596
      %v4598 = vrot.slane %v4482, 2
      %v4599 = vrot.slane %v4483, 2
      %v4600 = vsel %vm831, %v4598, %v4599
      %v4601 = vrot.slane %v4484, 2
      %v4602 = vsel %vm831, %v4599, %v4601
      %v4603 = vrot.slane %v4485, 2
      %v4604 = vrot.slane %v4486, 2
      %v4605 = vsel %vm831, %v4603, %v4604
      %v4606 = vrot.slane %v4487, 2
      %v4607 = vsel %vm831, %v4604, %v4606
      %v4608 = vrot.slane %v4488, 2
      %v4609 = vrot.slane %v4489, 2
      %v4610 = vsel %vm831, %v4608, %v4609
      %v4611 = vrot.slane %v4490, 2
      %v4612 = vsel %vm831, %v4609, %v4611
      %v4613 = vrot.slane %v4491, 2
      %v4614 = vsel %vm831, %v4613, %v4613
      %v4646 = vadd.f32 %v4410, %v4540
      %v4647 = vadd.f32 %v4411, %v4542
      %v4648 = vadd.f32 %v4412, %v4545
      %v4649 = vadd.f32 %v4413, %v4547
      %v4650 = vadd.f32 %v4414, %v4550
      %v4651 = vadd.f32 %v4415, %v4552
      %v4652 = vadd.f32 %v4416, %v4555
      %v4653 = vadd.f32 %v4417, %v4557
      %v4654 = vadd.f32 %v4418, %v4560
      %v4655 = vadd.f32 %v4419, %v4562
      %v4656 = vadd.f32 %v4420, %v4565
      %v4657 = vadd.f32 %v4421, %v4567
      %v4658 = vadd.f32 %v4422, %v4570
      %v4659 = vadd.f32 %v4423, %v4572
      %v4660 = vadd.f32 %v4424, %v4575
      %v4661 = vadd.f32 %v4425, %v4577
      %v4662 = vadd.f32 %v4426, %v4580
      %v4663 = vadd.f32 %v4427, %v4582
      %v4664 = vadd.f32 %v4428, %v4585
      %v4665 = vadd.f32 %v4429, %v4587
      %v4666 = vadd.f32 %v4430, %v4590
      %v4667 = vadd.f32 %v4431, %v4592
      %v4668 = vadd.f32 %v4432, %v4595
      %v4669 = vadd.f32 %v4433, %v4597
      %v4670 = vadd.f32 %v4434, %v4600
      %v4671 = vadd.f32 %v4435, %v4602
      %v4672 = vadd.f32 %v4436, %v4605
      %v4673 = vadd.f32 %v4437, %v4607
      %v4674 = vadd.f32 %v4438, %v4610
      %v4675 = vadd.f32 %v4439, %v4612
      %v4676 = vadd.f32 %v4440, %v4614
      %v4677 = vadd.f32 %v4441, %v4614
      %4679 = vset.pattern.permute.xlu0 0
      %4680 = vperm.xlu0 %4679, %v4646
      %v4681 = vpop.permute.xlu0 %4680
      %4684 = vset.pattern.permute.xlu0 0
      %4685 = vperm.xlu0 %4684, %v4647
      %v4686 = vpop.permute.xlu0 %4685
      %4689 = vset.pattern.permute.xlu0 0
      %4690 = vperm.xlu0 %4689, %v4648
      %v4691 = vpop.permute.xlu0 %4690
      %4694 = vset.pattern.permute.xlu0 0
      %4695 = vperm.xlu0 %4694, %v4649
      %v4696 = vpop.permute.xlu0 %4695
      %4699 = vset.pattern.permute.xlu0 0
      %4700 = vperm.xlu0 %4699, %v4650
      %v4701 = vpop.permute.xlu0 %4700
      %4704 = vset.pattern.permute.xlu0 0
      %4705 = vperm.xlu0 %4704, %v4651
      %v4706 = vpop.permute.xlu0 %4705
      %4709 = vset.pattern.permute.xlu0 0
      %4710 = vperm.xlu0 %4709, %v4652
      %v4711 = vpop.permute.xlu0 %4710
      %4714 = vset.pattern.permute.xlu0 0
      %4715 = vperm.xlu0 %4714, %v4653
      %v4716 = vpop.permute.xlu0 %4715
      %4719 = vset.pattern.permute.xlu0 0
      %4720 = vperm.xlu0 %4719, %v4654
      %v4721 = vpop.permute.xlu0 %4720
      %4724 = vset.pattern.permute.xlu0 0
      %4725 = vperm.xlu0 %4724, %v4655
      %v4726 = vpop.permute.xlu0 %4725
      %4729 = vset.pattern.permute.xlu0 0
      %4730 = vperm.xlu0 %4729, %v4656
      %v4731 = vpop.permute.xlu0 %4730
      %4734 = vset.pattern.permute.xlu0 0
      %4735 = vperm.xlu0 %4734, %v4657
      %v4736 = vpop.permute.xlu0 %4735
      %4739 = vset.pattern.permute.xlu0 0
      %4740 = vperm.xlu0 %4739, %v4658
      %v4741 = vpop.permute.xlu0 %4740
      %4744 = vset.pattern.permute.xlu0 0
      %4745 = vperm.xlu0 %4744, %v4659
      %v4746 = vpop.permute.xlu0 %4745
      %4749 = vset.pattern.permute.xlu0 0
      %4750 = vperm.xlu0 %4749, %v4660
      %v4751 = vpop.permute.xlu0 %4750
      %4754 = vset.pattern.permute.xlu0 0
      %4755 = vperm.xlu0 %4754, %v4661
      %v4756 = vpop.permute.xlu0 %4755
      %4759 = vset.pattern.permute.xlu0 0
      %4760 = vperm.xlu0 %4759, %v4662
      %v4761 = vpop.permute.xlu0 %4760
      %4764 = vset.pattern.permute.xlu0 0
      %4765 = vperm.xlu0 %4764, %v4663
      %v4766 = vpop.permute.xlu0 %4765
      %4769 = vset.pattern.permute.xlu0 0
      %4770 = vperm.xlu0 %4769, %v4664
      %v4771 = vpop.permute.xlu0 %4770
      %4774 = vset.pattern.permute.xlu0 0
      %4775 = vperm.xlu0 %4774, %v4665
      %v4776 = vpop.permute.xlu0 %4775
      %4779 = vset.pattern.permute.xlu0 0
      %4780 = vperm.xlu0 %4779, %v4666
      %v4781 = vpop.permute.xlu0 %4780
      %4784 = vset.pattern.permute.xlu0 0
      %4785 = vperm.xlu0 %4784, %v4667
      %v4786 = vpop.permute.xlu0 %4785
      %4789 = vset.pattern.permute.xlu0 0
      %4790 = vperm.xlu0 %4789, %v4668
      %v4791 = vpop.permute.xlu0 %4790
      %4794 = vset.pattern.permute.xlu0 0
      %4795 = vperm.xlu0 %4794, %v4669
      %v4796 = vpop.permute.xlu0 %4795
      %4799 = vset.pattern.permute.xlu0 0
      %4800 = vperm.xlu0 %4799, %v4670
      %v4801 = vpop.permute.xlu0 %4800
      %4804 = vset.pattern.permute.xlu0 0
      %4805 = vperm.xlu0 %4804, %v4671
      %v4806 = vpop.permute.xlu0 %4805
      %4809 = vset.pattern.permute.xlu0 0
      %4810 = vperm.xlu0 %4809, %v4672
      %v4811 = vpop.permute.xlu0 %4810
      %4814 = vset.pattern.permute.xlu0 0
      %4815 = vperm.xlu0 %4814, %v4673
      %v4816 = vpop.permute.xlu0 %4815
      %4819 = vset.pattern.permute.xlu0 0
      %4820 = vperm.xlu0 %4819, %v4674
      %v4821 = vpop.permute.xlu0 %4820
      %4824 = vset.pattern.permute.xlu0 0
      %4825 = vperm.xlu0 %4824, %v4675
      %v4826 = vpop.permute.xlu0 %4825
      %4829 = vset.pattern.permute.xlu0 0
      %4830 = vperm.xlu0 %4829, %v4676
      %v4831 = vpop.permute.xlu0 %4830
      %4834 = vset.pattern.permute.xlu0 0
      %4835 = vperm.xlu0 %4834, %v4677
      %v4836 = vpop.permute.xlu0 %4835
      %v4838 = vlaneseq
      %v4839 = vshrl.u32 %v4838, 7
      %v4840 = vsub.s32 0, %v4839
      %v4841 = vrot.slane %v235, %v4840
      %v4842 = vmul.f32 %v4681, %v4841
      %v4843 = vmul.f32 %v4686, %v4841
      %v4844 = vmul.f32 %v4691, %v4841
      %v4845 = vmul.f32 %v4696, %v4841
      %v4846 = vmul.f32 %v4701, %v4841
      %v4847 = vmul.f32 %v4706, %v4841
      %v4848 = vmul.f32 %v4711, %v4841
      %v4849 = vmul.f32 %v4716, %v4841
      %v4850 = vmul.f32 %v4721, %v4841
      %v4851 = vmul.f32 %v4726, %v4841
      %v4852 = vmul.f32 %v4731, %v4841
      %v4853 = vmul.f32 %v4736, %v4841
      %v4854 = vmul.f32 %v4741, %v4841
      %v4855 = vmul.f32 %v4746, %v4841
      %v4856 = vmul.f32 %v4751, %v4841
      %v4857 = vmul.f32 %v4756, %v4841
      %v4858 = vmul.f32 %v4761, %v4841
      %v4859 = vmul.f32 %v4766, %v4841
      %v4860 = vmul.f32 %v4771, %v4841
      %v4861 = vmul.f32 %v4776, %v4841
      %v4862 = vmul.f32 %v4781, %v4841
      %v4863 = vmul.f32 %v4786, %v4841
      %v4864 = vmul.f32 %v4791, %v4841
      %v4865 = vmul.f32 %v4796, %v4841
      %v4866 = vmul.f32 %v4801, %v4841
      %v4867 = vmul.f32 %v4806, %v4841
      %v4868 = vmul.f32 %v4811, %v4841
      %v4869 = vmul.f32 %v4816, %v4841
      %v4870 = vmul.f32 %v4821, %v4841
      %v4871 = vmul.f32 %v4826, %v4841
      %v4872 = vmul.f32 %v4831, %v4841
      %v4873 = vmul.f32 %v4836, %v4841
      %4874 = vset.pattern.permute.xlu0 1
      %4875 = vperm.xlu0 %4874, %v4646
      %v4876 = vpop.permute.xlu0 %4875
      %4878 = vset.pattern.permute.xlu0 1
      %4879 = vperm.xlu0 %4878, %v4647
      %v4880 = vpop.permute.xlu0 %4879
      %4882 = vset.pattern.permute.xlu0 1
      %4883 = vperm.xlu0 %4882, %v4648
      %v4884 = vpop.permute.xlu0 %4883
      %4886 = vset.pattern.permute.xlu0 1
      %4887 = vperm.xlu0 %4886, %v4649
      %v4888 = vpop.permute.xlu0 %4887
      %4890 = vset.pattern.permute.xlu0 1
      %4891 = vperm.xlu0 %4890, %v4650
      %v4892 = vpop.permute.xlu0 %4891
      %4894 = vset.pattern.permute.xlu0 1
      %4895 = vperm.xlu0 %4894, %v4651
      %v4896 = vpop.permute.xlu0 %4895
      %4898 = vset.pattern.permute.xlu0 1
      %4899 = vperm.xlu0 %4898, %v4652
      %v4900 = vpop.permute.xlu0 %4899
      %4902 = vset.pattern.permute.xlu0 1
      %4903 = vperm.xlu0 %4902, %v4653
      %v4904 = vpop.permute.xlu0 %4903
      %4906 = vset.pattern.permute.xlu0 1
      %4907 = vperm.xlu0 %4906, %v4654
      %v4908 = vpop.permute.xlu0 %4907
      %4910 = vset.pattern.permute.xlu0 1
      %4911 = vperm.xlu0 %4910, %v4655
      %v4912 = vpop.permute.xlu0 %4911
      %4914 = vset.pattern.permute.xlu0 1
      %4915 = vperm.xlu0 %4914, %v4656
      %v4916 = vpop.permute.xlu0 %4915
      %4918 = vset.pattern.permute.xlu0 1
      %4919 = vperm.xlu0 %4918, %v4657
      %v4920 = vpop.permute.xlu0 %4919
      %4922 = vset.pattern.permute.xlu0 1
      %4923 = vperm.xlu0 %4922, %v4658
      %v4924 = vpop.permute.xlu0 %4923
      %4926 = vset.pattern.permute.xlu0 1
      %4927 = vperm.xlu0 %4926, %v4659
      %v4928 = vpop.permute.xlu0 %4927
      %4930 = vset.pattern.permute.xlu0 1
      %4931 = vperm.xlu0 %4930, %v4660
      %v4932 = vpop.permute.xlu0 %4931
      %4934 = vset.pattern.permute.xlu0 1
      %4935 = vperm.xlu0 %4934, %v4661
      %v4936 = vpop.permute.xlu0 %4935
      %4938 = vset.pattern.permute.xlu0 1
      %4939 = vperm.xlu0 %4938, %v4662
      %v4940 = vpop.permute.xlu0 %4939
      %4942 = vset.pattern.permute.xlu0 1
      %4943 = vperm.xlu0 %4942, %v4663
      %v4944 = vpop.permute.xlu0 %4943
      %4946 = vset.pattern.permute.xlu0 1
      %4947 = vperm.xlu0 %4946, %v4664
      %v4948 = vpop.permute.xlu0 %4947
      %4950 = vset.pattern.permute.xlu0 1
      %4951 = vperm.xlu0 %4950, %v4665
      %v4952 = vpop.permute.xlu0 %4951
      %4954 = vset.pattern.permute.xlu0 1
      %4955 = vperm.xlu0 %4954, %v4666
      %v4956 = vpop.permute.xlu0 %4955
      %4958 = vset.pattern.permute.xlu0 1
      %4959 = vperm.xlu0 %4958, %v4667
      %v4960 = vpop.permute.xlu0 %4959
      %4962 = vset.pattern.permute.xlu0 1
      %4963 = vperm.xlu0 %4962, %v4668
      %v4964 = vpop.permute.xlu0 %4963
      %4966 = vset.pattern.permute.xlu0 1
      %4967 = vperm.xlu0 %4966, %v4669
      %v4968 = vpop.permute.xlu0 %4967
      %4970 = vset.pattern.permute.xlu0 1
      %4971 = vperm.xlu0 %4970, %v4670
      %v4972 = vpop.permute.xlu0 %4971
      %4974 = vset.pattern.permute.xlu0 1
      %4975 = vperm.xlu0 %4974, %v4671
      %v4976 = vpop.permute.xlu0 %4975
      %4978 = vset.pattern.permute.xlu0 1
      %4979 = vperm.xlu0 %4978, %v4672
      %v4980 = vpop.permute.xlu0 %4979
      %4982 = vset.pattern.permute.xlu0 1
      %4983 = vperm.xlu0 %4982, %v4673
      %v4984 = vpop.permute.xlu0 %4983
      %4986 = vset.pattern.permute.xlu0 1
      %4987 = vperm.xlu0 %4986, %v4674
      %v4988 = vpop.permute.xlu0 %4987
      %4990 = vset.pattern.permute.xlu0 1
      %4991 = vperm.xlu0 %4990, %v4675
      %v4992 = vpop.permute.xlu0 %4991
      %4994 = vset.pattern.permute.xlu0 1
      %4995 = vperm.xlu0 %4994, %v4676
      %v4996 = vpop.permute.xlu0 %4995
      %4998 = vset.pattern.permute.xlu0 1
      %4999 = vperm.xlu0 %4998, %v4677
      %v5000 = vpop.permute.xlu0 %4999
      %v5002 = vlaneseq
      %v5003 = vshrl.u32 %v5002, 7
      %v5004 = vsub.s32 1, %v5003
      %v5005 = vrot.slane %v235, %v5004
      %v5006 = vmul.f32 %v4876, %v5005
      %v5007 = vmul.f32 %v4880, %v5005
      %v5008 = vmul.f32 %v4884, %v5005
      %v5009 = vmul.f32 %v4888, %v5005
      %v5010 = vmul.f32 %v4892, %v5005
      %v5011 = vmul.f32 %v4896, %v5005
      %v5012 = vmul.f32 %v4900, %v5005
      %v5013 = vmul.f32 %v4904, %v5005
      %v5014 = vmul.f32 %v4908, %v5005
      %v5015 = vmul.f32 %v4912, %v5005
      %v5016 = vmul.f32 %v4916, %v5005
      %v5017 = vmul.f32 %v4920, %v5005
      %v5018 = vmul.f32 %v4924, %v5005
      %v5019 = vmul.f32 %v4928, %v5005
      %v5020 = vmul.f32 %v4932, %v5005
      %v5021 = vmul.f32 %v4936, %v5005
      %v5022 = vmul.f32 %v4940, %v5005
      %v5023 = vmul.f32 %v4944, %v5005
      %v5024 = vmul.f32 %v4948, %v5005
      %v5025 = vmul.f32 %v4952, %v5005
      %v5026 = vmul.f32 %v4956, %v5005
      %v5027 = vmul.f32 %v4960, %v5005
      %v5028 = vmul.f32 %v4964, %v5005
      %v5029 = vmul.f32 %v4968, %v5005
      %v5030 = vmul.f32 %v4972, %v5005
      %v5031 = vmul.f32 %v4976, %v5005
      %v5032 = vmul.f32 %v4980, %v5005
      %v5033 = vmul.f32 %v4984, %v5005
      %v5034 = vmul.f32 %v4988, %v5005
      %v5035 = vmul.f32 %v4992, %v5005
      %v5036 = vmul.f32 %v4996, %v5005
      %v5037 = vmul.f32 %v5000, %v5005
      %v5038 = vadd.f32 %v4842, %v5006
      %v5039 = vadd.f32 %v4843, %v5007
      %v5040 = vadd.f32 %v4844, %v5008
      %v5041 = vadd.f32 %v4845, %v5009
      %v5042 = vadd.f32 %v4846, %v5010
      %v5043 = vadd.f32 %v4847, %v5011
      %v5044 = vadd.f32 %v4848, %v5012
      %v5045 = vadd.f32 %v4849, %v5013
      %v5046 = vadd.f32 %v4850, %v5014
      %v5047 = vadd.f32 %v4851, %v5015
      %v5048 = vadd.f32 %v4852, %v5016
      %v5049 = vadd.f32 %v4853, %v5017
      %v5050 = vadd.f32 %v4854, %v5018
      %v5051 = vadd.f32 %v4855, %v5019
      %v5052 = vadd.f32 %v4856, %v5020
      %v5053 = vadd.f32 %v4857, %v5021
      %v5054 = vadd.f32 %v4858, %v5022
      %v5055 = vadd.f32 %v4859, %v5023
      %v5056 = vadd.f32 %v4860, %v5024
      %v5057 = vadd.f32 %v4861, %v5025
      %v5058 = vadd.f32 %v4862, %v5026
      %v5059 = vadd.f32 %v4863, %v5027
      %v5060 = vadd.f32 %v4864, %v5028
      %v5061 = vadd.f32 %v4865, %v5029
      %v5062 = vadd.f32 %v4866, %v5030
      %v5063 = vadd.f32 %v4867, %v5031
      %v5064 = vadd.f32 %v4868, %v5032
      %v5065 = vadd.f32 %v4869, %v5033
      %v5066 = vadd.f32 %v4870, %v5034
      %v5067 = vadd.f32 %v4871, %v5035
      %v5068 = vadd.f32 %v4872, %v5036
      %v5069 = vadd.f32 %v4873, %v5037
      %5070 = vset.pattern.permute.xlu0 2
      %5071 = vperm.xlu0 %5070, %v4646
      %v5072 = vpop.permute.xlu0 %5071
      %5074 = vset.pattern.permute.xlu0 2
      %5075 = vperm.xlu0 %5074, %v4647
      %v5076 = vpop.permute.xlu0 %5075
      %5078 = vset.pattern.permute.xlu0 2
      %5079 = vperm.xlu0 %5078, %v4648
      %v5080 = vpop.permute.xlu0 %5079
      %5082 = vset.pattern.permute.xlu0 2
      %5083 = vperm.xlu0 %5082, %v4649
      %v5084 = vpop.permute.xlu0 %5083
      %5086 = vset.pattern.permute.xlu0 2
      %5087 = vperm.xlu0 %5086, %v4650
      %v5088 = vpop.permute.xlu0 %5087
      %5090 = vset.pattern.permute.xlu0 2
      %5091 = vperm.xlu0 %5090, %v4651
      %v5092 = vpop.permute.xlu0 %5091
      %5094 = vset.pattern.permute.xlu0 2
      %5095 = vperm.xlu0 %5094, %v4652
      %v5096 = vpop.permute.xlu0 %5095
      %5098 = vset.pattern.permute.xlu0 2
      %5099 = vperm.xlu0 %5098, %v4653
      %v5100 = vpop.permute.xlu0 %5099
      %5102 = vset.pattern.permute.xlu0 2
      %5103 = vperm.xlu0 %5102, %v4654
      %v5104 = vpop.permute.xlu0 %5103
      %5106 = vset.pattern.permute.xlu0 2
      %5107 = vperm.xlu0 %5106, %v4655
      %v5108 = vpop.permute.xlu0 %5107
      %5110 = vset.pattern.permute.xlu0 2
      %5111 = vperm.xlu0 %5110, %v4656
      %v5112 = vpop.permute.xlu0 %5111
      %5114 = vset.pattern.permute.xlu0 2
      %5115 = vperm.xlu0 %5114, %v4657
      %v5116 = vpop.permute.xlu0 %5115
      %5118 = vset.pattern.permute.xlu0 2
      %5119 = vperm.xlu0 %5118, %v4658
      %v5120 = vpop.permute.xlu0 %5119
      %5122 = vset.pattern.permute.xlu0 2
      %5123 = vperm.xlu0 %5122, %v4659
      %v5124 = vpop.permute.xlu0 %5123
      %5126 = vset.pattern.permute.xlu0 2
      %5127 = vperm.xlu0 %5126, %v4660
      %v5128 = vpop.permute.xlu0 %5127
      %5130 = vset.pattern.permute.xlu0 2
      %5131 = vperm.xlu0 %5130, %v4661
      %v5132 = vpop.permute.xlu0 %5131
      %5134 = vset.pattern.permute.xlu0 2
      %5135 = vperm.xlu0 %5134, %v4662
      %v5136 = vpop.permute.xlu0 %5135
      %5138 = vset.pattern.permute.xlu0 2
      %5139 = vperm.xlu0 %5138, %v4663
      %v5140 = vpop.permute.xlu0 %5139
      %5142 = vset.pattern.permute.xlu0 2
      %5143 = vperm.xlu0 %5142, %v4664
      %v5144 = vpop.permute.xlu0 %5143
      %5146 = vset.pattern.permute.xlu0 2
      %5147 = vperm.xlu0 %5146, %v4665
      %v5148 = vpop.permute.xlu0 %5147
      %5150 = vset.pattern.permute.xlu0 2
      %5151 = vperm.xlu0 %5150, %v4666
      %v5152 = vpop.permute.xlu0 %5151
      %5154 = vset.pattern.permute.xlu0 2
      %5155 = vperm.xlu0 %5154, %v4667
      %v5156 = vpop.permute.xlu0 %5155
      %5158 = vset.pattern.permute.xlu0 2
      %5159 = vperm.xlu0 %5158, %v4668
      %v5160 = vpop.permute.xlu0 %5159
      %5162 = vset.pattern.permute.xlu0 2
      %5163 = vperm.xlu0 %5162, %v4669
      %v5164 = vpop.permute.xlu0 %5163
      %5166 = vset.pattern.permute.xlu0 2
      %5167 = vperm.xlu0 %5166, %v4670
      %v5168 = vpop.permute.xlu0 %5167
      %5170 = vset.pattern.permute.xlu0 2
      %5171 = vperm.xlu0 %5170, %v4671
      %v5172 = vpop.permute.xlu0 %5171
      %5174 = vset.pattern.permute.xlu0 2
      %5175 = vperm.xlu0 %5174, %v4672
      %v5176 = vpop.permute.xlu0 %5175
      %5178 = vset.pattern.permute.xlu0 2
      %5179 = vperm.xlu0 %5178, %v4673
      %v5180 = vpop.permute.xlu0 %5179
      %5182 = vset.pattern.permute.xlu0 2
      %5183 = vperm.xlu0 %5182, %v4674
      %v5184 = vpop.permute.xlu0 %5183
      %5186 = vset.pattern.permute.xlu0 2
      %5187 = vperm.xlu0 %5186, %v4675
      %v5188 = vpop.permute.xlu0 %5187
      %5190 = vset.pattern.permute.xlu0 2
      %5191 = vperm.xlu0 %5190, %v4676
      %v5192 = vpop.permute.xlu0 %5191
      %5194 = vset.pattern.permute.xlu0 2
      %5195 = vperm.xlu0 %5194, %v4677
      %v5196 = vpop.permute.xlu0 %5195
      %v5198 = vlaneseq
      %v5199 = vshrl.u32 %v5198, 7
      %v5200 = vsub.s32 2, %v5199
      %v5201 = vrot.slane %v235, %v5200
      %v5202 = vmul.f32 %v5072, %v5201
      %v5203 = vmul.f32 %v5076, %v5201
      %v5204 = vmul.f32 %v5080, %v5201
      %v5205 = vmul.f32 %v5084, %v5201
      %v5206 = vmul.f32 %v5088, %v5201
      %v5207 = vmul.f32 %v5092, %v5201
      %v5208 = vmul.f32 %v5096, %v5201
      %v5209 = vmul.f32 %v5100, %v5201
      %v5210 = vmul.f32 %v5104, %v5201
      %v5211 = vmul.f32 %v5108, %v5201
      %v5212 = vmul.f32 %v5112, %v5201
      %v5213 = vmul.f32 %v5116, %v5201
      %v5214 = vmul.f32 %v5120, %v5201
      %v5215 = vmul.f32 %v5124, %v5201
      %v5216 = vmul.f32 %v5128, %v5201
      %v5217 = vmul.f32 %v5132, %v5201
      %v5218 = vmul.f32 %v5136, %v5201
      %v5219 = vmul.f32 %v5140, %v5201
      %v5220 = vmul.f32 %v5144, %v5201
      %v5221 = vmul.f32 %v5148, %v5201
      %v5222 = vmul.f32 %v5152, %v5201
      %v5223 = vmul.f32 %v5156, %v5201
      %v5224 = vmul.f32 %v5160, %v5201
      %v5225 = vmul.f32 %v5164, %v5201
      %v5226 = vmul.f32 %v5168, %v5201
      %v5227 = vmul.f32 %v5172, %v5201
      %v5228 = vmul.f32 %v5176, %v5201
      %v5229 = vmul.f32 %v5180, %v5201
      %v5230 = vmul.f32 %v5184, %v5201
      %v5231 = vmul.f32 %v5188, %v5201
      %v5232 = vmul.f32 %v5192, %v5201
      %v5233 = vmul.f32 %v5196, %v5201
      %v5234 = vadd.f32 %v5038, %v5202
      %v5235 = vadd.f32 %v5039, %v5203
      %v5236 = vadd.f32 %v5040, %v5204
      %v5237 = vadd.f32 %v5041, %v5205
      %v5238 = vadd.f32 %v5042, %v5206
      %v5239 = vadd.f32 %v5043, %v5207
      %v5240 = vadd.f32 %v5044, %v5208
      %v5241 = vadd.f32 %v5045, %v5209
      %v5242 = vadd.f32 %v5046, %v5210
      %v5243 = vadd.f32 %v5047, %v5211
      %v5244 = vadd.f32 %v5048, %v5212
      %v5245 = vadd.f32 %v5049, %v5213
      %v5246 = vadd.f32 %v5050, %v5214
      %v5247 = vadd.f32 %v5051, %v5215
      %v5248 = vadd.f32 %v5052, %v5216
      %v5249 = vadd.f32 %v5053, %v5217
      %v5250 = vadd.f32 %v5054, %v5218
      %v5251 = vadd.f32 %v5055, %v5219
      %v5252 = vadd.f32 %v5056, %v5220
      %v5253 = vadd.f32 %v5057, %v5221
      %v5254 = vadd.f32 %v5058, %v5222
      %v5255 = vadd.f32 %v5059, %v5223
      %v5256 = vadd.f32 %v5060, %v5224
      %v5257 = vadd.f32 %v5061, %v5225
      %v5258 = vadd.f32 %v5062, %v5226
      %v5259 = vadd.f32 %v5063, %v5227
      %v5260 = vadd.f32 %v5064, %v5228
      %v5261 = vadd.f32 %v5065, %v5229
      %v5262 = vadd.f32 %v5066, %v5230
      %v5263 = vadd.f32 %v5067, %v5231
      %v5264 = vadd.f32 %v5068, %v5232
      %v5265 = vadd.f32 %v5069, %v5233
      %5266 = vset.pattern.permute.xlu0 3
      %5267 = vperm.xlu0 %5266, %v4646
      %v5268 = vpop.permute.xlu0 %5267
      %5270 = vset.pattern.permute.xlu0 3
      %5271 = vperm.xlu0 %5270, %v4647
      %v5272 = vpop.permute.xlu0 %5271
      %5274 = vset.pattern.permute.xlu0 3
      %5275 = vperm.xlu0 %5274, %v4648
      %v5276 = vpop.permute.xlu0 %5275
      %5278 = vset.pattern.permute.xlu0 3
      %5279 = vperm.xlu0 %5278, %v4649
      %v5280 = vpop.permute.xlu0 %5279
      %5282 = vset.pattern.permute.xlu0 3
      %5283 = vperm.xlu0 %5282, %v4650
      %v5284 = vpop.permute.xlu0 %5283
      %5286 = vset.pattern.permute.xlu0 3
      %5287 = vperm.xlu0 %5286, %v4651
      %v5288 = vpop.permute.xlu0 %5287
      %5290 = vset.pattern.permute.xlu0 3
      %5291 = vperm.xlu0 %5290, %v4652
      %v5292 = vpop.permute.xlu0 %5291
      %5294 = vset.pattern.permute.xlu0 3
      %5295 = vperm.xlu0 %5294, %v4653
      %v5296 = vpop.permute.xlu0 %5295
      %5298 = vset.pattern.permute.xlu0 3
      %5299 = vperm.xlu0 %5298, %v4654
      %v5300 = vpop.permute.xlu0 %5299
      %5302 = vset.pattern.permute.xlu0 3
      %5303 = vperm.xlu0 %5302, %v4655
      %v5304 = vpop.permute.xlu0 %5303
      %5306 = vset.pattern.permute.xlu0 3
      %5307 = vperm.xlu0 %5306, %v4656
      %v5308 = vpop.permute.xlu0 %5307
      %5310 = vset.pattern.permute.xlu0 3
      %5311 = vperm.xlu0 %5310, %v4657
      %v5312 = vpop.permute.xlu0 %5311
      %5314 = vset.pattern.permute.xlu0 3
      %5315 = vperm.xlu0 %5314, %v4658
      %v5316 = vpop.permute.xlu0 %5315
      %5318 = vset.pattern.permute.xlu0 3
      %5319 = vperm.xlu0 %5318, %v4659
      %v5320 = vpop.permute.xlu0 %5319
      %5322 = vset.pattern.permute.xlu0 3
      %5323 = vperm.xlu0 %5322, %v4660
      %v5324 = vpop.permute.xlu0 %5323
      %5326 = vset.pattern.permute.xlu0 3
      %5327 = vperm.xlu0 %5326, %v4661
      %v5328 = vpop.permute.xlu0 %5327
      %5330 = vset.pattern.permute.xlu0 3
      %5331 = vperm.xlu0 %5330, %v4662
      %v5332 = vpop.permute.xlu0 %5331
      %5334 = vset.pattern.permute.xlu0 3
      %5335 = vperm.xlu0 %5334, %v4663
      %v5336 = vpop.permute.xlu0 %5335
      %5338 = vset.pattern.permute.xlu0 3
      %5339 = vperm.xlu0 %5338, %v4664
      %v5340 = vpop.permute.xlu0 %5339
      %5342 = vset.pattern.permute.xlu0 3
      %5343 = vperm.xlu0 %5342, %v4665
      %v5344 = vpop.permute.xlu0 %5343
      %5346 = vset.pattern.permute.xlu0 3
      %5347 = vperm.xlu0 %5346, %v4666
      %v5348 = vpop.permute.xlu0 %5347
      %5350 = vset.pattern.permute.xlu0 3
      %5351 = vperm.xlu0 %5350, %v4667
      %v5352 = vpop.permute.xlu0 %5351
      %5354 = vset.pattern.permute.xlu0 3
      %5355 = vperm.xlu0 %5354, %v4668
      %v5356 = vpop.permute.xlu0 %5355
      %5358 = vset.pattern.permute.xlu0 3
      %5359 = vperm.xlu0 %5358, %v4669
      %v5360 = vpop.permute.xlu0 %5359
      %5362 = vset.pattern.permute.xlu0 3
      %5363 = vperm.xlu0 %5362, %v4670
      %v5364 = vpop.permute.xlu0 %5363
      %5366 = vset.pattern.permute.xlu0 3
      %5367 = vperm.xlu0 %5366, %v4671
      %v5368 = vpop.permute.xlu0 %5367
      %5370 = vset.pattern.permute.xlu0 3
      %5371 = vperm.xlu0 %5370, %v4672
      %v5372 = vpop.permute.xlu0 %5371
      %5374 = vset.pattern.permute.xlu0 3
      %5375 = vperm.xlu0 %5374, %v4673
      %v5376 = vpop.permute.xlu0 %5375
      %5378 = vset.pattern.permute.xlu0 3
      %5379 = vperm.xlu0 %5378, %v4674
      %v5380 = vpop.permute.xlu0 %5379
      %5382 = vset.pattern.permute.xlu0 3
      %5383 = vperm.xlu0 %5382, %v4675
      %v5384 = vpop.permute.xlu0 %5383
      %5386 = vset.pattern.permute.xlu0 3
      %5387 = vperm.xlu0 %5386, %v4676
      %v5388 = vpop.permute.xlu0 %5387
      %5390 = vset.pattern.permute.xlu0 3
      %5391 = vperm.xlu0 %5390, %v4677
      %v5392 = vpop.permute.xlu0 %5391
      %v5394 = vlaneseq
      %v5395 = vshrl.u32 %v5394, 7
      %v5396 = vsub.s32 3, %v5395
      %v5397 = vrot.slane %v235, %v5396
      %v5398 = vmul.f32 %v5268, %v5397
      %v5399 = vmul.f32 %v5272, %v5397
      %v5400 = vmul.f32 %v5276, %v5397
      %v5401 = vmul.f32 %v5280, %v5397
      %v5402 = vmul.f32 %v5284, %v5397
      %v5403 = vmul.f32 %v5288, %v5397
      %v5404 = vmul.f32 %v5292, %v5397
      %v5405 = vmul.f32 %v5296, %v5397
      %v5406 = vmul.f32 %v5300, %v5397
      %v5407 = vmul.f32 %v5304, %v5397
      %v5408 = vmul.f32 %v5308, %v5397
      %v5409 = vmul.f32 %v5312, %v5397
      %v5410 = vmul.f32 %v5316, %v5397
      %v5411 = vmul.f32 %v5320, %v5397
      %v5412 = vmul.f32 %v5324, %v5397
      %v5413 = vmul.f32 %v5328, %v5397
      %v5414 = vmul.f32 %v5332, %v5397
      %v5415 = vmul.f32 %v5336, %v5397
      %v5416 = vmul.f32 %v5340, %v5397
      %v5417 = vmul.f32 %v5344, %v5397
      %v5418 = vmul.f32 %v5348, %v5397
      %v5419 = vmul.f32 %v5352, %v5397
      %v5420 = vmul.f32 %v5356, %v5397
      %v5421 = vmul.f32 %v5360, %v5397
      %v5422 = vmul.f32 %v5364, %v5397
      %v5423 = vmul.f32 %v5368, %v5397
      %v5424 = vmul.f32 %v5372, %v5397
      %v5425 = vmul.f32 %v5376, %v5397
      %v5426 = vmul.f32 %v5380, %v5397
      %v5427 = vmul.f32 %v5384, %v5397
      %v5428 = vmul.f32 %v5388, %v5397
      %v5429 = vmul.f32 %v5392, %v5397
      %v5430 = vadd.f32 %v5234, %v5398
      %v5431 = vadd.f32 %v5235, %v5399
      %v5432 = vadd.f32 %v5236, %v5400
      %v5433 = vadd.f32 %v5237, %v5401
      %v5434 = vadd.f32 %v5238, %v5402
      %v5435 = vadd.f32 %v5239, %v5403
      %v5436 = vadd.f32 %v5240, %v5404
      %v5437 = vadd.f32 %v5241, %v5405
      %v5438 = vadd.f32 %v5242, %v5406
      %v5439 = vadd.f32 %v5243, %v5407
      %v5440 = vadd.f32 %v5244, %v5408
      %v5441 = vadd.f32 %v5245, %v5409
      %v5442 = vadd.f32 %v5246, %v5410
      %v5443 = vadd.f32 %v5247, %v5411
      %v5444 = vadd.f32 %v5248, %v5412
      %v5445 = vadd.f32 %v5249, %v5413
      %v5446 = vadd.f32 %v5250, %v5414
      %v5447 = vadd.f32 %v5251, %v5415
      %v5448 = vadd.f32 %v5252, %v5416
      %v5449 = vadd.f32 %v5253, %v5417
      %v5450 = vadd.f32 %v5254, %v5418
      %v5451 = vadd.f32 %v5255, %v5419
      %v5452 = vadd.f32 %v5256, %v5420
      %v5453 = vadd.f32 %v5257, %v5421
      %v5454 = vadd.f32 %v5258, %v5422
      %v5455 = vadd.f32 %v5259, %v5423
      %v5456 = vadd.f32 %v5260, %v5424
      %v5457 = vadd.f32 %v5261, %v5425
      %v5458 = vadd.f32 %v5262, %v5426
      %v5459 = vadd.f32 %v5263, %v5427
      %v5460 = vadd.f32 %v5264, %v5428
      %v5461 = vadd.f32 %v5265, %v5429
      %5462 = vset.pattern.permute.xlu0 4
      %5463 = vperm.xlu0 %5462, %v4646
      %v5464 = vpop.permute.xlu0 %5463
      %5466 = vset.pattern.permute.xlu0 4
      %5467 = vperm.xlu0 %5466, %v4647
      %v5468 = vpop.permute.xlu0 %5467
      %5470 = vset.pattern.permute.xlu0 4
      %5471 = vperm.xlu0 %5470, %v4648
      %v5472 = vpop.permute.xlu0 %5471
      %5474 = vset.pattern.permute.xlu0 4
      %5475 = vperm.xlu0 %5474, %v4649
      %v5476 = vpop.permute.xlu0 %5475
      %5478 = vset.pattern.permute.xlu0 4
      %5479 = vperm.xlu0 %5478, %v4650
      %v5480 = vpop.permute.xlu0 %5479
      %5482 = vset.pattern.permute.xlu0 4
      %5483 = vperm.xlu0 %5482, %v4651
      %v5484 = vpop.permute.xlu0 %5483
      %5486 = vset.pattern.permute.xlu0 4
      %5487 = vperm.xlu0 %5486, %v4652
      %v5488 = vpop.permute.xlu0 %5487
      %5490 = vset.pattern.permute.xlu0 4
      %5491 = vperm.xlu0 %5490, %v4653
      %v5492 = vpop.permute.xlu0 %5491
      %5494 = vset.pattern.permute.xlu0 4
      %5495 = vperm.xlu0 %5494, %v4654
      %v5496 = vpop.permute.xlu0 %5495
      %5498 = vset.pattern.permute.xlu0 4
      %5499 = vperm.xlu0 %5498, %v4655
      %v5500 = vpop.permute.xlu0 %5499
      %5502 = vset.pattern.permute.xlu0 4
      %5503 = vperm.xlu0 %5502, %v4656
      %v5504 = vpop.permute.xlu0 %5503
      %5506 = vset.pattern.permute.xlu0 4
      %5507 = vperm.xlu0 %5506, %v4657
      %v5508 = vpop.permute.xlu0 %5507
      %5510 = vset.pattern.permute.xlu0 4
      %5511 = vperm.xlu0 %5510, %v4658
      %v5512 = vpop.permute.xlu0 %5511
      %5514 = vset.pattern.permute.xlu0 4
      %5515 = vperm.xlu0 %5514, %v4659
      %v5516 = vpop.permute.xlu0 %5515
      %5518 = vset.pattern.permute.xlu0 4
      %5519 = vperm.xlu0 %5518, %v4660
      %v5520 = vpop.permute.xlu0 %5519
      %5522 = vset.pattern.permute.xlu0 4
      %5523 = vperm.xlu0 %5522, %v4661
      %v5524 = vpop.permute.xlu0 %5523
      %5526 = vset.pattern.permute.xlu0 4
      %5527 = vperm.xlu0 %5526, %v4662
      %v5528 = vpop.permute.xlu0 %5527
      %5530 = vset.pattern.permute.xlu0 4
      %5531 = vperm.xlu0 %5530, %v4663
      %v5532 = vpop.permute.xlu0 %5531
      %5534 = vset.pattern.permute.xlu0 4
      %5535 = vperm.xlu0 %5534, %v4664
      %v5536 = vpop.permute.xlu0 %5535
      %5538 = vset.pattern.permute.xlu0 4
      %5539 = vperm.xlu0 %5538, %v4665
      %v5540 = vpop.permute.xlu0 %5539
      %5542 = vset.pattern.permute.xlu0 4
      %5543 = vperm.xlu0 %5542, %v4666
      %v5544 = vpop.permute.xlu0 %5543
      %5546 = vset.pattern.permute.xlu0 4
      %5547 = vperm.xlu0 %5546, %v4667
      %v5548 = vpop.permute.xlu0 %5547
      %5550 = vset.pattern.permute.xlu0 4
      %5551 = vperm.xlu0 %5550, %v4668
      %v5552 = vpop.permute.xlu0 %5551
      %5554 = vset.pattern.permute.xlu0 4
      %5555 = vperm.xlu0 %5554, %v4669
      %v5556 = vpop.permute.xlu0 %5555
      %5558 = vset.pattern.permute.xlu0 4
      %5559 = vperm.xlu0 %5558, %v4670
      %v5560 = vpop.permute.xlu0 %5559
      %5562 = vset.pattern.permute.xlu0 4
      %5563 = vperm.xlu0 %5562, %v4671
      %v5564 = vpop.permute.xlu0 %5563
      %5566 = vset.pattern.permute.xlu0 4
      %5567 = vperm.xlu0 %5566, %v4672
      %v5568 = vpop.permute.xlu0 %5567
      %5570 = vset.pattern.permute.xlu0 4
      %5571 = vperm.xlu0 %5570, %v4673
      %v5572 = vpop.permute.xlu0 %5571
      %5574 = vset.pattern.permute.xlu0 4
      %5575 = vperm.xlu0 %5574, %v4674
      %v5576 = vpop.permute.xlu0 %5575
      %5578 = vset.pattern.permute.xlu0 4
      %5579 = vperm.xlu0 %5578, %v4675
      %v5580 = vpop.permute.xlu0 %5579
      %5582 = vset.pattern.permute.xlu0 4
      %5583 = vperm.xlu0 %5582, %v4676
      %v5584 = vpop.permute.xlu0 %5583
      %5586 = vset.pattern.permute.xlu0 4
      %5587 = vperm.xlu0 %5586, %v4677
      %v5588 = vpop.permute.xlu0 %5587
      %v5590 = vlaneseq
      %v5591 = vshrl.u32 %v5590, 7
      %v5592 = vsub.s32 4, %v5591
      %v5593 = vrot.slane %v235, %v5592
      %v5594 = vmul.f32 %v5464, %v5593
      %v5595 = vmul.f32 %v5468, %v5593
      %v5596 = vmul.f32 %v5472, %v5593
      %v5597 = vmul.f32 %v5476, %v5593
      %v5598 = vmul.f32 %v5480, %v5593
      %v5599 = vmul.f32 %v5484, %v5593
      %v5600 = vmul.f32 %v5488, %v5593
      %v5601 = vmul.f32 %v5492, %v5593
      %v5602 = vmul.f32 %v5496, %v5593
      %v5603 = vmul.f32 %v5500, %v5593
      %v5604 = vmul.f32 %v5504, %v5593
      %v5605 = vmul.f32 %v5508, %v5593
      %v5606 = vmul.f32 %v5512, %v5593
      %v5607 = vmul.f32 %v5516, %v5593
      %v5608 = vmul.f32 %v5520, %v5593
      %v5609 = vmul.f32 %v5524, %v5593
      %v5610 = vmul.f32 %v5528, %v5593
      %v5611 = vmul.f32 %v5532, %v5593
      %v5612 = vmul.f32 %v5536, %v5593
      %v5613 = vmul.f32 %v5540, %v5593
      %v5614 = vmul.f32 %v5544, %v5593
      %v5615 = vmul.f32 %v5548, %v5593
      %v5616 = vmul.f32 %v5552, %v5593
      %v5617 = vmul.f32 %v5556, %v5593
      %v5618 = vmul.f32 %v5560, %v5593
      %v5619 = vmul.f32 %v5564, %v5593
      %v5620 = vmul.f32 %v5568, %v5593
      %v5621 = vmul.f32 %v5572, %v5593
      %v5622 = vmul.f32 %v5576, %v5593
      %v5623 = vmul.f32 %v5580, %v5593
      %v5624 = vmul.f32 %v5584, %v5593
      %v5625 = vmul.f32 %v5588, %v5593
      %v5626 = vadd.f32 %v5430, %v5594
      %v5627 = vadd.f32 %v5431, %v5595
      %v5628 = vadd.f32 %v5432, %v5596
      %v5629 = vadd.f32 %v5433, %v5597
      %v5630 = vadd.f32 %v5434, %v5598
      %v5631 = vadd.f32 %v5435, %v5599
      %v5632 = vadd.f32 %v5436, %v5600
      %v5633 = vadd.f32 %v5437, %v5601
      %v5634 = vadd.f32 %v5438, %v5602
      %v5635 = vadd.f32 %v5439, %v5603
      %v5636 = vadd.f32 %v5440, %v5604
      %v5637 = vadd.f32 %v5441, %v5605
      %v5638 = vadd.f32 %v5442, %v5606
      %v5639 = vadd.f32 %v5443, %v5607
      %v5640 = vadd.f32 %v5444, %v5608
      %v5641 = vadd.f32 %v5445, %v5609
      %v5642 = vadd.f32 %v5446, %v5610
      %v5643 = vadd.f32 %v5447, %v5611
      %v5644 = vadd.f32 %v5448, %v5612
      %v5645 = vadd.f32 %v5449, %v5613
      %v5646 = vadd.f32 %v5450, %v5614
      %v5647 = vadd.f32 %v5451, %v5615
      %v5648 = vadd.f32 %v5452, %v5616
      %v5649 = vadd.f32 %v5453, %v5617
      %v5650 = vadd.f32 %v5454, %v5618
      %v5651 = vadd.f32 %v5455, %v5619
      %v5652 = vadd.f32 %v5456, %v5620
      %v5653 = vadd.f32 %v5457, %v5621
      %v5654 = vadd.f32 %v5458, %v5622
      %v5655 = vadd.f32 %v5459, %v5623
      %v5656 = vadd.f32 %v5460, %v5624
      %v5657 = vadd.f32 %v5461, %v5625
      %5658 = vset.pattern.permute.xlu0 5
      %5659 = vperm.xlu0 %5658, %v4646
      %v5660 = vpop.permute.xlu0 %5659
      %5662 = vset.pattern.permute.xlu0 5
      %5663 = vperm.xlu0 %5662, %v4647
      %v5664 = vpop.permute.xlu0 %5663
      %5666 = vset.pattern.permute.xlu0 5
      %5667 = vperm.xlu0 %5666, %v4648
      %v5668 = vpop.permute.xlu0 %5667
      %5670 = vset.pattern.permute.xlu0 5
      %5671 = vperm.xlu0 %5670, %v4649
      %v5672 = vpop.permute.xlu0 %5671
      %5674 = vset.pattern.permute.xlu0 5
      %5675 = vperm.xlu0 %5674, %v4650
      %v5676 = vpop.permute.xlu0 %5675
      %5678 = vset.pattern.permute.xlu0 5
      %5679 = vperm.xlu0 %5678, %v4651
      %v5680 = vpop.permute.xlu0 %5679
      %5682 = vset.pattern.permute.xlu0 5
      %5683 = vperm.xlu0 %5682, %v4652
      %v5684 = vpop.permute.xlu0 %5683
      %5686 = vset.pattern.permute.xlu0 5
      %5687 = vperm.xlu0 %5686, %v4653
      %v5688 = vpop.permute.xlu0 %5687
      %5690 = vset.pattern.permute.xlu0 5
      %5691 = vperm.xlu0 %5690, %v4654
      %v5692 = vpop.permute.xlu0 %5691
      %5694 = vset.pattern.permute.xlu0 5
      %5695 = vperm.xlu0 %5694, %v4655
      %v5696 = vpop.permute.xlu0 %5695
      %5698 = vset.pattern.permute.xlu0 5
      %5699 = vperm.xlu0 %5698, %v4656
      %v5700 = vpop.permute.xlu0 %5699
      %5702 = vset.pattern.permute.xlu0 5
      %5703 = vperm.xlu0 %5702, %v4657
      %v5704 = vpop.permute.xlu0 %5703
      %5706 = vset.pattern.permute.xlu0 5
      %5707 = vperm.xlu0 %5706, %v4658
      %v5708 = vpop.permute.xlu0 %5707
      %5710 = vset.pattern.permute.xlu0 5
      %5711 = vperm.xlu0 %5710, %v4659
      %v5712 = vpop.permute.xlu0 %5711
      %5714 = vset.pattern.permute.xlu0 5
      %5715 = vperm.xlu0 %5714, %v4660
      %v5716 = vpop.permute.xlu0 %5715
      %5718 = vset.pattern.permute.xlu0 5
      %5719 = vperm.xlu0 %5718, %v4661
      %v5720 = vpop.permute.xlu0 %5719
      %5722 = vset.pattern.permute.xlu0 5
      %5723 = vperm.xlu0 %5722, %v4662
      %v5724 = vpop.permute.xlu0 %5723
      %5726 = vset.pattern.permute.xlu0 5
      %5727 = vperm.xlu0 %5726, %v4663
      %v5728 = vpop.permute.xlu0 %5727
      %5730 = vset.pattern.permute.xlu0 5
      %5731 = vperm.xlu0 %5730, %v4664
      %v5732 = vpop.permute.xlu0 %5731
      %5734 = vset.pattern.permute.xlu0 5
      %5735 = vperm.xlu0 %5734, %v4665
      %v5736 = vpop.permute.xlu0 %5735
      %5738 = vset.pattern.permute.xlu0 5
      %5739 = vperm.xlu0 %5738, %v4666
      %v5740 = vpop.permute.xlu0 %5739
      %5742 = vset.pattern.permute.xlu0 5
      %5743 = vperm.xlu0 %5742, %v4667
      %v5744 = vpop.permute.xlu0 %5743
      %5746 = vset.pattern.permute.xlu0 5
      %5747 = vperm.xlu0 %5746, %v4668
      %v5748 = vpop.permute.xlu0 %5747
      %5750 = vset.pattern.permute.xlu0 5
      %5751 = vperm.xlu0 %5750, %v4669
      %v5752 = vpop.permute.xlu0 %5751
      %5754 = vset.pattern.permute.xlu0 5
      %5755 = vperm.xlu0 %5754, %v4670
      %v5756 = vpop.permute.xlu0 %5755
      %5758 = vset.pattern.permute.xlu0 5
      %5759 = vperm.xlu0 %5758, %v4671
      %v5760 = vpop.permute.xlu0 %5759
      %5762 = vset.pattern.permute.xlu0 5
      %5763 = vperm.xlu0 %5762, %v4672
      %v5764 = vpop.permute.xlu0 %5763
      %5766 = vset.pattern.permute.xlu0 5
      %5767 = vperm.xlu0 %5766, %v4673
      %v5768 = vpop.permute.xlu0 %5767
      %5770 = vset.pattern.permute.xlu0 5
      %5771 = vperm.xlu0 %5770, %v4674
      %v5772 = vpop.permute.xlu0 %5771
      %5774 = vset.pattern.permute.xlu0 5
      %5775 = vperm.xlu0 %5774, %v4675
      %v5776 = vpop.permute.xlu0 %5775
      %5778 = vset.pattern.permute.xlu0 5
      %5779 = vperm.xlu0 %5778, %v4676
      %v5780 = vpop.permute.xlu0 %5779
      %5782 = vset.pattern.permute.xlu0 5
      %5783 = vperm.xlu0 %5782, %v4677
      %v5784 = vpop.permute.xlu0 %5783
      %v5786 = vlaneseq
      %v5787 = vshrl.u32 %v5786, 7
      %v5788 = vsub.s32 5, %v5787
      %v5789 = vrot.slane %v235, %v5788
      %v5790 = vmul.f32 %v5660, %v5789
      %v5791 = vmul.f32 %v5664, %v5789
      %v5792 = vmul.f32 %v5668, %v5789
      %v5793 = vmul.f32 %v5672, %v5789
      %v5794 = vmul.f32 %v5676, %v5789
      %v5795 = vmul.f32 %v5680, %v5789
      %v5796 = vmul.f32 %v5684, %v5789
      %v5797 = vmul.f32 %v5688, %v5789
      %v5798 = vmul.f32 %v5692, %v5789
      %v5799 = vmul.f32 %v5696, %v5789
      %v5800 = vmul.f32 %v5700, %v5789
      %v5801 = vmul.f32 %v5704, %v5789
      %v5802 = vmul.f32 %v5708, %v5789
      %v5803 = vmul.f32 %v5712, %v5789
      %v5804 = vmul.f32 %v5716, %v5789
      %v5805 = vmul.f32 %v5720, %v5789
      %v5806 = vmul.f32 %v5724, %v5789
      %v5807 = vmul.f32 %v5728, %v5789
      %v5808 = vmul.f32 %v5732, %v5789
      %v5809 = vmul.f32 %v5736, %v5789
      %v5810 = vmul.f32 %v5740, %v5789
      %v5811 = vmul.f32 %v5744, %v5789
      %v5812 = vmul.f32 %v5748, %v5789
      %v5813 = vmul.f32 %v5752, %v5789
      %v5814 = vmul.f32 %v5756, %v5789
      %v5815 = vmul.f32 %v5760, %v5789
      %v5816 = vmul.f32 %v5764, %v5789
      %v5817 = vmul.f32 %v5768, %v5789
      %v5818 = vmul.f32 %v5772, %v5789
      %v5819 = vmul.f32 %v5776, %v5789
      %v5820 = vmul.f32 %v5780, %v5789
      %v5821 = vmul.f32 %v5784, %v5789
      %v5822 = vadd.f32 %v5626, %v5790
      %v5823 = vadd.f32 %v5627, %v5791
      %v5824 = vadd.f32 %v5628, %v5792
      %v5825 = vadd.f32 %v5629, %v5793
      %v5826 = vadd.f32 %v5630, %v5794
      %v5827 = vadd.f32 %v5631, %v5795
      %v5828 = vadd.f32 %v5632, %v5796
      %v5829 = vadd.f32 %v5633, %v5797
      %v5830 = vadd.f32 %v5634, %v5798
      %v5831 = vadd.f32 %v5635, %v5799
      %v5832 = vadd.f32 %v5636, %v5800
      %v5833 = vadd.f32 %v5637, %v5801
      %v5834 = vadd.f32 %v5638, %v5802
      %v5835 = vadd.f32 %v5639, %v5803
      %v5836 = vadd.f32 %v5640, %v5804
      %v5837 = vadd.f32 %v5641, %v5805
      %v5838 = vadd.f32 %v5642, %v5806
      %v5839 = vadd.f32 %v5643, %v5807
      %v5840 = vadd.f32 %v5644, %v5808
      %v5841 = vadd.f32 %v5645, %v5809
      %v5842 = vadd.f32 %v5646, %v5810
      %v5843 = vadd.f32 %v5647, %v5811
      %v5844 = vadd.f32 %v5648, %v5812
      %v5845 = vadd.f32 %v5649, %v5813
      %v5846 = vadd.f32 %v5650, %v5814
      %v5847 = vadd.f32 %v5651, %v5815
      %v5848 = vadd.f32 %v5652, %v5816
      %v5849 = vadd.f32 %v5653, %v5817
      %v5850 = vadd.f32 %v5654, %v5818
      %v5851 = vadd.f32 %v5655, %v5819
      %v5852 = vadd.f32 %v5656, %v5820
      %v5853 = vadd.f32 %v5657, %v5821
      %5854 = vset.pattern.permute.xlu0 6
      %5855 = vperm.xlu0 %5854, %v4646
      %v5856 = vpop.permute.xlu0 %5855
      %5858 = vset.pattern.permute.xlu0 6
      %5859 = vperm.xlu0 %5858, %v4647
      %v5860 = vpop.permute.xlu0 %5859
      %5862 = vset.pattern.permute.xlu0 6
      %5863 = vperm.xlu0 %5862, %v4648
      %v5864 = vpop.permute.xlu0 %5863
      %5866 = vset.pattern.permute.xlu0 6
      %5867 = vperm.xlu0 %5866, %v4649
      %v5868 = vpop.permute.xlu0 %5867
      %5870 = vset.pattern.permute.xlu0 6
      %5871 = vperm.xlu0 %5870, %v4650
      %v5872 = vpop.permute.xlu0 %5871
      %5874 = vset.pattern.permute.xlu0 6
      %5875 = vperm.xlu0 %5874, %v4651
      %v5876 = vpop.permute.xlu0 %5875
      %5878 = vset.pattern.permute.xlu0 6
      %5879 = vperm.xlu0 %5878, %v4652
      %v5880 = vpop.permute.xlu0 %5879
      %5882 = vset.pattern.permute.xlu0 6
      %5883 = vperm.xlu0 %5882, %v4653
      %v5884 = vpop.permute.xlu0 %5883
      %5886 = vset.pattern.permute.xlu0 6
      %5887 = vperm.xlu0 %5886, %v4654
      %v5888 = vpop.permute.xlu0 %5887
      %5890 = vset.pattern.permute.xlu0 6
      %5891 = vperm.xlu0 %5890, %v4655
      %v5892 = vpop.permute.xlu0 %5891
      %5894 = vset.pattern.permute.xlu0 6
      %5895 = vperm.xlu0 %5894, %v4656
      %v5896 = vpop.permute.xlu0 %5895
      %5898 = vset.pattern.permute.xlu0 6
      %5899 = vperm.xlu0 %5898, %v4657
      %v5900 = vpop.permute.xlu0 %5899
      %5902 = vset.pattern.permute.xlu0 6
      %5903 = vperm.xlu0 %5902, %v4658
      %v5904 = vpop.permute.xlu0 %5903
      %5906 = vset.pattern.permute.xlu0 6
      %5907 = vperm.xlu0 %5906, %v4659
      %v5908 = vpop.permute.xlu0 %5907
      %5910 = vset.pattern.permute.xlu0 6
      %5911 = vperm.xlu0 %5910, %v4660
      %v5912 = vpop.permute.xlu0 %5911
      %5914 = vset.pattern.permute.xlu0 6
      %5915 = vperm.xlu0 %5914, %v4661
      %v5916 = vpop.permute.xlu0 %5915
      %5918 = vset.pattern.permute.xlu0 6
      %5919 = vperm.xlu0 %5918, %v4662
      %v5920 = vpop.permute.xlu0 %5919
      %5922 = vset.pattern.permute.xlu0 6
      %5923 = vperm.xlu0 %5922, %v4663
      %v5924 = vpop.permute.xlu0 %5923
      %5926 = vset.pattern.permute.xlu0 6
      %5927 = vperm.xlu0 %5926, %v4664
      %v5928 = vpop.permute.xlu0 %5927
      %5930 = vset.pattern.permute.xlu0 6
      %5931 = vperm.xlu0 %5930, %v4665
      %v5932 = vpop.permute.xlu0 %5931
      %5934 = vset.pattern.permute.xlu0 6
      %5935 = vperm.xlu0 %5934, %v4666
      %v5936 = vpop.permute.xlu0 %5935
      %5938 = vset.pattern.permute.xlu0 6
      %5939 = vperm.xlu0 %5938, %v4667
      %v5940 = vpop.permute.xlu0 %5939
      %5942 = vset.pattern.permute.xlu0 6
      %5943 = vperm.xlu0 %5942, %v4668
      %v5944 = vpop.permute.xlu0 %5943
      %5946 = vset.pattern.permute.xlu0 6
      %5947 = vperm.xlu0 %5946, %v4669
      %v5948 = vpop.permute.xlu0 %5947
      %5950 = vset.pattern.permute.xlu0 6
      %5951 = vperm.xlu0 %5950, %v4670
      %v5952 = vpop.permute.xlu0 %5951
      %5954 = vset.pattern.permute.xlu0 6
      %5955 = vperm.xlu0 %5954, %v4671
      %v5956 = vpop.permute.xlu0 %5955
      %5958 = vset.pattern.permute.xlu0 6
      %5959 = vperm.xlu0 %5958, %v4672
      %v5960 = vpop.permute.xlu0 %5959
      %5962 = vset.pattern.permute.xlu0 6
      %5963 = vperm.xlu0 %5962, %v4673
      %v5964 = vpop.permute.xlu0 %5963
      %5966 = vset.pattern.permute.xlu0 6
      %5967 = vperm.xlu0 %5966, %v4674
      %v5968 = vpop.permute.xlu0 %5967
      %5970 = vset.pattern.permute.xlu0 6
      %5971 = vperm.xlu0 %5970, %v4675
      %v5972 = vpop.permute.xlu0 %5971
      %5974 = vset.pattern.permute.xlu0 6
      %5975 = vperm.xlu0 %5974, %v4676
      %v5976 = vpop.permute.xlu0 %5975
      %5978 = vset.pattern.permute.xlu0 6
      %5979 = vperm.xlu0 %5978, %v4677
      %v5980 = vpop.permute.xlu0 %5979
      %v5982 = vlaneseq
      %v5983 = vshrl.u32 %v5982, 7
      %v5984 = vsub.s32 6, %v5983
      %v5985 = vrot.slane %v235, %v5984
      %v5986 = vmul.f32 %v5856, %v5985
      %v5987 = vmul.f32 %v5860, %v5985
      %v5988 = vmul.f32 %v5864, %v5985
      %v5989 = vmul.f32 %v5868, %v5985
      %v5990 = vmul.f32 %v5872, %v5985
      %v5991 = vmul.f32 %v5876, %v5985
      %v5992 = vmul.f32 %v5880, %v5985
      %v5993 = vmul.f32 %v5884, %v5985
      %v5994 = vmul.f32 %v5888, %v5985
      %v5995 = vmul.f32 %v5892, %v5985
      %v5996 = vmul.f32 %v5896, %v5985
      %v5997 = vmul.f32 %v5900, %v5985
      %v5998 = vmul.f32 %v5904, %v5985
      %v5999 = vmul.f32 %v5908, %v5985
      %v6000 = vmul.f32 %v5912, %v5985
      %v6001 = vmul.f32 %v5916, %v5985
      %v6002 = vmul.f32 %v5920, %v5985
      %v6003 = vmul.f32 %v5924, %v5985
      %v6004 = vmul.f32 %v5928, %v5985
      %v6005 = vmul.f32 %v5932, %v5985
      %v6006 = vmul.f32 %v5936, %v5985
      %v6007 = vmul.f32 %v5940, %v5985
      %v6008 = vmul.f32 %v5944, %v5985
      %v6009 = vmul.f32 %v5948, %v5985
      %v6010 = vmul.f32 %v5952, %v5985
      %v6011 = vmul.f32 %v5956, %v5985
      %v6012 = vmul.f32 %v5960, %v5985
      %v6013 = vmul.f32 %v5964, %v5985
      %v6014 = vmul.f32 %v5968, %v5985
      %v6015 = vmul.f32 %v5972, %v5985
      %v6016 = vmul.f32 %v5976, %v5985
      %v6017 = vmul.f32 %v5980, %v5985
      %v6018 = vadd.f32 %v5822, %v5986
      %v6019 = vadd.f32 %v5823, %v5987
      %v6020 = vadd.f32 %v5824, %v5988
      %v6021 = vadd.f32 %v5825, %v5989
      %v6022 = vadd.f32 %v5826, %v5990
      %v6023 = vadd.f32 %v5827, %v5991
      %v6024 = vadd.f32 %v5828, %v5992
      %v6025 = vadd.f32 %v5829, %v5993
      %v6026 = vadd.f32 %v5830, %v5994
      %v6027 = vadd.f32 %v5831, %v5995
      %v6028 = vadd.f32 %v5832, %v5996
      %v6029 = vadd.f32 %v5833, %v5997
      %v6030 = vadd.f32 %v5834, %v5998
      %v6031 = vadd.f32 %v5835, %v5999
      %v6032 = vadd.f32 %v5836, %v6000
      %v6033 = vadd.f32 %v5837, %v6001
      %v6034 = vadd.f32 %v5838, %v6002
      %v6035 = vadd.f32 %v5839, %v6003
      %v6036 = vadd.f32 %v5840, %v6004
      %v6037 = vadd.f32 %v5841, %v6005
      %v6038 = vadd.f32 %v5842, %v6006
      %v6039 = vadd.f32 %v5843, %v6007
      %v6040 = vadd.f32 %v5844, %v6008
      %v6041 = vadd.f32 %v5845, %v6009
      %v6042 = vadd.f32 %v5846, %v6010
      %v6043 = vadd.f32 %v5847, %v6011
      %v6044 = vadd.f32 %v5848, %v6012
      %v6045 = vadd.f32 %v5849, %v6013
      %v6046 = vadd.f32 %v5850, %v6014
      %v6047 = vadd.f32 %v5851, %v6015
      %v6048 = vadd.f32 %v5852, %v6016
      %v6049 = vadd.f32 %v5853, %v6017
      %6050 = vset.pattern.permute.xlu0 7
      %6051 = vperm.xlu0 %6050, %v4646
      %v6052 = vpop.permute.xlu0 %6051
      %6054 = vset.pattern.permute.xlu0 7
      %6055 = vperm.xlu0 %6054, %v4647
      %v6056 = vpop.permute.xlu0 %6055
      %6058 = vset.pattern.permute.xlu0 7
      %6059 = vperm.xlu0 %6058, %v4648
      %v6060 = vpop.permute.xlu0 %6059
      %6062 = vset.pattern.permute.xlu0 7
      %6063 = vperm.xlu0 %6062, %v4649
      %v6064 = vpop.permute.xlu0 %6063
      %6066 = vset.pattern.permute.xlu0 7
      %6067 = vperm.xlu0 %6066, %v4650
      %v6068 = vpop.permute.xlu0 %6067
      %6070 = vset.pattern.permute.xlu0 7
      %6071 = vperm.xlu0 %6070, %v4651
      %v6072 = vpop.permute.xlu0 %6071
      %6074 = vset.pattern.permute.xlu0 7
      %6075 = vperm.xlu0 %6074, %v4652
      %v6076 = vpop.permute.xlu0 %6075
      %6078 = vset.pattern.permute.xlu0 7
      %6079 = vperm.xlu0 %6078, %v4653
      %v6080 = vpop.permute.xlu0 %6079
      %6082 = vset.pattern.permute.xlu0 7
      %6083 = vperm.xlu0 %6082, %v4654
      %v6084 = vpop.permute.xlu0 %6083
      %6086 = vset.pattern.permute.xlu0 7
      %6087 = vperm.xlu0 %6086, %v4655
      %v6088 = vpop.permute.xlu0 %6087
      %6090 = vset.pattern.permute.xlu0 7
      %6091 = vperm.xlu0 %6090, %v4656
      %v6092 = vpop.permute.xlu0 %6091
      %6094 = vset.pattern.permute.xlu0 7
      %6095 = vperm.xlu0 %6094, %v4657
      %v6096 = vpop.permute.xlu0 %6095
      %6098 = vset.pattern.permute.xlu0 7
      %6099 = vperm.xlu0 %6098, %v4658
      %v6100 = vpop.permute.xlu0 %6099
      %6102 = vset.pattern.permute.xlu0 7
      %6103 = vperm.xlu0 %6102, %v4659
      %v6104 = vpop.permute.xlu0 %6103
      %6106 = vset.pattern.permute.xlu0 7
      %6107 = vperm.xlu0 %6106, %v4660
      %v6108 = vpop.permute.xlu0 %6107
      %6110 = vset.pattern.permute.xlu0 7
      %6111 = vperm.xlu0 %6110, %v4661
      %v6112 = vpop.permute.xlu0 %6111
      %6114 = vset.pattern.permute.xlu0 7
      %6115 = vperm.xlu0 %6114, %v4662
      %v6116 = vpop.permute.xlu0 %6115
      %6118 = vset.pattern.permute.xlu0 7
      %6119 = vperm.xlu0 %6118, %v4663
      %v6120 = vpop.permute.xlu0 %6119
      %6122 = vset.pattern.permute.xlu0 7
      %6123 = vperm.xlu0 %6122, %v4664
      %v6124 = vpop.permute.xlu0 %6123
      %6126 = vset.pattern.permute.xlu0 7
      %6127 = vperm.xlu0 %6126, %v4665
      %v6128 = vpop.permute.xlu0 %6127
      %6130 = vset.pattern.permute.xlu0 7
      %6131 = vperm.xlu0 %6130, %v4666
      %v6132 = vpop.permute.xlu0 %6131
      %6134 = vset.pattern.permute.xlu0 7
      %6135 = vperm.xlu0 %6134, %v4667
      %v6136 = vpop.permute.xlu0 %6135
      %6138 = vset.pattern.permute.xlu0 7
      %6139 = vperm.xlu0 %6138, %v4668
      %v6140 = vpop.permute.xlu0 %6139
      %6142 = vset.pattern.permute.xlu0 7
      %6143 = vperm.xlu0 %6142, %v4669
      %v6144 = vpop.permute.xlu0 %6143
      %6146 = vset.pattern.permute.xlu0 7
      %6147 = vperm.xlu0 %6146, %v4670
      %v6148 = vpop.permute.xlu0 %6147
      %6150 = vset.pattern.permute.xlu0 7
      %6151 = vperm.xlu0 %6150, %v4671
      %v6152 = vpop.permute.xlu0 %6151
      %6154 = vset.pattern.permute.xlu0 7
      %6155 = vperm.xlu0 %6154, %v4672
      %v6156 = vpop.permute.xlu0 %6155
      %6158 = vset.pattern.permute.xlu0 7
      %6159 = vperm.xlu0 %6158, %v4673
      %v6160 = vpop.permute.xlu0 %6159
      %6162 = vset.pattern.permute.xlu0 7
      %6163 = vperm.xlu0 %6162, %v4674
      %v6164 = vpop.permute.xlu0 %6163
      %6166 = vset.pattern.permute.xlu0 7
      %6167 = vperm.xlu0 %6166, %v4675
      %v6168 = vpop.permute.xlu0 %6167
      %6170 = vset.pattern.permute.xlu0 7
      %6171 = vperm.xlu0 %6170, %v4676
      %v6172 = vpop.permute.xlu0 %6171
      %6174 = vset.pattern.permute.xlu0 7
      %6175 = vperm.xlu0 %6174, %v4677
      %v6176 = vpop.permute.xlu0 %6175
      %v6178 = vlaneseq
      %v6179 = vshrl.u32 %v6178, 7
      %v6180 = vsub.s32 7, %v6179
      %v6181 = vrot.slane %v235, %v6180
      %v6182 = vmul.f32 %v6052, %v6181
      %v6183 = vmul.f32 %v6056, %v6181
      %v6184 = vmul.f32 %v6060, %v6181
      %v6185 = vmul.f32 %v6064, %v6181
      %v6186 = vmul.f32 %v6068, %v6181
      %v6187 = vmul.f32 %v6072, %v6181
      %v6188 = vmul.f32 %v6076, %v6181
      %v6189 = vmul.f32 %v6080, %v6181
      %v6190 = vmul.f32 %v6084, %v6181
      %v6191 = vmul.f32 %v6088, %v6181
      %v6192 = vmul.f32 %v6092, %v6181
      %v6193 = vmul.f32 %v6096, %v6181
      %v6194 = vmul.f32 %v6100, %v6181
      %v6195 = vmul.f32 %v6104, %v6181
      %v6196 = vmul.f32 %v6108, %v6181
      %v6197 = vmul.f32 %v6112, %v6181
      %v6198 = vmul.f32 %v6116, %v6181
      %v6199 = vmul.f32 %v6120, %v6181
      %v6200 = vmul.f32 %v6124, %v6181
      %v6201 = vmul.f32 %v6128, %v6181
      %v6202 = vmul.f32 %v6132, %v6181
      %v6203 = vmul.f32 %v6136, %v6181
      %v6204 = vmul.f32 %v6140, %v6181
      %v6205 = vmul.f32 %v6144, %v6181
      %v6206 = vmul.f32 %v6148, %v6181
      %v6207 = vmul.f32 %v6152, %v6181
      %v6208 = vmul.f32 %v6156, %v6181
      %v6209 = vmul.f32 %v6160, %v6181
      %v6210 = vmul.f32 %v6164, %v6181
      %v6211 = vmul.f32 %v6168, %v6181
      %v6212 = vmul.f32 %v6172, %v6181
      %v6213 = vmul.f32 %v6176, %v6181
      %v6214 = vadd.f32 %v6018, %v6182
      %v6215 = vadd.f32 %v6019, %v6183
      %v6216 = vadd.f32 %v6020, %v6184
      %v6217 = vadd.f32 %v6021, %v6185
      %v6218 = vadd.f32 %v6022, %v6186
      %v6219 = vadd.f32 %v6023, %v6187
      %v6220 = vadd.f32 %v6024, %v6188
      %v6221 = vadd.f32 %v6025, %v6189
      %v6222 = vadd.f32 %v6026, %v6190
      %v6223 = vadd.f32 %v6027, %v6191
      %v6224 = vadd.f32 %v6028, %v6192
      %v6225 = vadd.f32 %v6029, %v6193
      %v6226 = vadd.f32 %v6030, %v6194
      %v6227 = vadd.f32 %v6031, %v6195
      %v6228 = vadd.f32 %v6032, %v6196
      %v6229 = vadd.f32 %v6033, %v6197
      %v6230 = vadd.f32 %v6034, %v6198
      %v6231 = vadd.f32 %v6035, %v6199
      %v6232 = vadd.f32 %v6036, %v6200
      %v6233 = vadd.f32 %v6037, %v6201
      %v6234 = vadd.f32 %v6038, %v6202
      %v6235 = vadd.f32 %v6039, %v6203
      %v6236 = vadd.f32 %v6040, %v6204
      %v6237 = vadd.f32 %v6041, %v6205
      %v6238 = vadd.f32 %v6042, %v6206
      %v6239 = vadd.f32 %v6043, %v6207
      %v6240 = vadd.f32 %v6044, %v6208
      %v6241 = vadd.f32 %v6045, %v6209
      %v6242 = vadd.f32 %v6046, %v6210
      %v6243 = vadd.f32 %v6047, %v6211
      %v6244 = vadd.f32 %v6048, %v6212
      %v6245 = vadd.f32 %v6049, %v6213
      %v6246 = vlaneseq
      %v6247 = vshrl.u32 %v6246, 7
      %v6248 = vsub.s32 1, %v6247
      %v6249 = vrot.slane %v238, %v6248
      %v6250 = vadd.f32 %v6214, %v6249
      %v6251 = vadd.f32 %v6215, %v6249
      %v6252 = vadd.f32 %v6216, %v6249
      %v6253 = vadd.f32 %v6217, %v6249
      %v6254 = vadd.f32 %v6218, %v6249
      %v6255 = vadd.f32 %v6219, %v6249
      %v6256 = vadd.f32 %v6220, %v6249
      %v6257 = vadd.f32 %v6221, %v6249
      %v6258 = vadd.f32 %v6222, %v6249
      %v6259 = vadd.f32 %v6223, %v6249
      %v6260 = vadd.f32 %v6224, %v6249
      %v6261 = vadd.f32 %v6225, %v6249
      %v6262 = vadd.f32 %v6226, %v6249
      %v6263 = vadd.f32 %v6227, %v6249
      %v6264 = vadd.f32 %v6228, %v6249
      %v6265 = vadd.f32 %v6229, %v6249
      %v6266 = vadd.f32 %v6230, %v6249
      %v6267 = vadd.f32 %v6231, %v6249
      %v6268 = vadd.f32 %v6232, %v6249
      %v6269 = vadd.f32 %v6233, %v6249
      %v6270 = vadd.f32 %v6234, %v6249
      %v6271 = vadd.f32 %v6235, %v6249
      %v6272 = vadd.f32 %v6236, %v6249
      %v6273 = vadd.f32 %v6237, %v6249
      %v6274 = vadd.f32 %v6238, %v6249
      %v6275 = vadd.f32 %v6239, %v6249
      %v6276 = vadd.f32 %v6240, %v6249
      %v6277 = vadd.f32 %v6241, %v6249
      %v6278 = vadd.f32 %v6242, %v6249
      %v6279 = vadd.f32 %v6243, %v6249
      %v6280 = vadd.f32 %v6244, %v6249
      %v6281 = vadd.f32 %v6245, %v6249
      %v6282 = vmax.f32 %v6250, 0.0
      %v6283 = vmax.f32 %v6251, 0.0
      %v6284 = vmax.f32 %v6252, 0.0
      %v6285 = vmax.f32 %v6253, 0.0
      %v6286 = vmax.f32 %v6254, 0.0
      %v6287 = vmax.f32 %v6255, 0.0
      %v6288 = vmax.f32 %v6256, 0.0
      %v6289 = vmax.f32 %v6257, 0.0
      %v6290 = vmax.f32 %v6258, 0.0
      %v6291 = vmax.f32 %v6259, 0.0
      %v6292 = vmax.f32 %v6260, 0.0
      %v6293 = vmax.f32 %v6261, 0.0
      %v6294 = vmax.f32 %v6262, 0.0
      %v6295 = vmax.f32 %v6263, 0.0
      %v6296 = vmax.f32 %v6264, 0.0
      %v6297 = vmax.f32 %v6265, 0.0
      %v6298 = vmax.f32 %v6266, 0.0
      %v6299 = vmax.f32 %v6267, 0.0
      %v6300 = vmax.f32 %v6268, 0.0
      %v6301 = vmax.f32 %v6269, 0.0
      %v6302 = vmax.f32 %v6270, 0.0
      %v6303 = vmax.f32 %v6271, 0.0
      %v6304 = vmax.f32 %v6272, 0.0
      %v6305 = vmax.f32 %v6273, 0.0
      %v6306 = vmax.f32 %v6274, 0.0
      %v6307 = vmax.f32 %v6275, 0.0
      %v6308 = vmax.f32 %v6276, 0.0
      %v6309 = vmax.f32 %v6277, 0.0
      %v6310 = vmax.f32 %v6278, 0.0
      %v6311 = vmax.f32 %v6279, 0.0
      %v6312 = vmax.f32 %v6280, 0.0
      %v6313 = vmax.f32 %v6281, 0.0
      %v6346 = vrot.slane %v6282, 7
      %v6347 = vrot.slane %v6283, 7
      %v6348 = vsel %vm335, %v6346, %v6347
      %v6349 = vrot.slane %v6284, 7
      %v6350 = vrot.slane %v6285, 7
      %v6351 = vsel %vm335, %v6349, %v6350
      %v6352 = vrot.slane %v6286, 7
      %v6353 = vrot.slane %v6287, 7
      %v6354 = vsel %vm335, %v6352, %v6353
      %v6355 = vrot.slane %v6288, 7
      %v6356 = vrot.slane %v6289, 7
      %v6357 = vsel %vm335, %v6355, %v6356
      %v6358 = vrot.slane %v6290, 7
      %v6359 = vrot.slane %v6291, 7
      %v6360 = vsel %vm335, %v6358, %v6359
      %v6361 = vrot.slane %v6292, 7
      %v6362 = vrot.slane %v6293, 7
      %v6363 = vsel %vm335, %v6361, %v6362
      %v6364 = vrot.slane %v6294, 7
      %v6365 = vrot.slane %v6295, 7
      %v6366 = vsel %vm335, %v6364, %v6365
      %v6367 = vrot.slane %v6296, 7
      %v6368 = vrot.slane %v6297, 7
      %v6369 = vsel %vm335, %v6367, %v6368
      %v6370 = vrot.slane %v6298, 7
      %v6371 = vrot.slane %v6299, 7
      %v6372 = vsel %vm335, %v6370, %v6371
      %v6373 = vrot.slane %v6300, 7
      %v6374 = vrot.slane %v6301, 7
      %v6375 = vsel %vm335, %v6373, %v6374
      %v6376 = vrot.slane %v6302, 7
      %v6377 = vrot.slane %v6303, 7
      %v6378 = vsel %vm335, %v6376, %v6377
      %v6379 = vrot.slane %v6304, 7
      %v6380 = vrot.slane %v6305, 7
      %v6381 = vsel %vm335, %v6379, %v6380
      %v6382 = vrot.slane %v6306, 7
      %v6383 = vrot.slane %v6307, 7
      %v6384 = vsel %vm335, %v6382, %v6383
      %v6385 = vrot.slane %v6308, 7
      %v6386 = vrot.slane %v6309, 7
      %v6387 = vsel %vm335, %v6385, %v6386
      %v6388 = vrot.slane %v6310, 7
      %v6389 = vrot.slane %v6311, 7
      %v6390 = vsel %vm335, %v6388, %v6389
      %v6391 = vrot.slane %v6312, 7
      %v6392 = vrot.slane %v6313, 7
      %v6393 = vsel %vm335, %v6391, %v6392
      %v6442 = vsel %vm335, 0.0, %v6346
      %v6443 = vsel %vm335, 0.0, %v6349
      %v6444 = vsel %vm335, 0.0, %v6352
      %v6445 = vsel %vm335, 0.0, %v6355
      %v6446 = vsel %vm335, 0.0, %v6358
      %v6447 = vsel %vm335, 0.0, %v6361
      %v6448 = vsel %vm335, 0.0, %v6364
      %v6449 = vsel %vm335, 0.0, %v6367
      %v6450 = vsel %vm335, 0.0, %v6370
      %v6451 = vsel %vm335, 0.0, %v6373
      %v6452 = vsel %vm335, 0.0, %v6376
      %v6453 = vsel %vm335, 0.0, %v6379
      %v6454 = vsel %vm335, 0.0, %v6382
      %v6455 = vsel %vm335, 0.0, %v6385
      %v6456 = vsel %vm335, 0.0, %v6388
      %v6457 = vsel %vm335, 0.0, %v6391
      %v6458 = vsel %vm335, %v6347, 0.0
      %v6459 = vsel %vm335, %v6350, 0.0
      %v6460 = vsel %vm335, %v6353, 0.0
      %v6461 = vsel %vm335, %v6356, 0.0
      %v6462 = vsel %vm335, %v6359, 0.0
      %v6463 = vsel %vm335, %v6362, 0.0
      %v6464 = vsel %vm335, %v6365, 0.0
      %v6465 = vsel %vm335, %v6368, 0.0
      %v6466 = vsel %vm335, %v6371, 0.0
      %v6467 = vsel %vm335, %v6374, 0.0
      %v6468 = vsel %vm335, %v6377, 0.0
      %v6469 = vsel %vm335, %v6380, 0.0
      %v6470 = vsel %vm335, %v6383, 0.0
      %v6471 = vsel %vm335, %v6386, 0.0
      %v6472 = vsel %vm335, %v6389, 0.0
      %v6473 = vsel %vm335, %v6392, 0.0
      %v6474 = vlaneseq
      %v6475 = vshrl.u32 %v6474, 7
      %v6476 = vsub.s32 0, %v6475
      %v6477 = vrot.slane %v231, %v6476
      %v6478 = vmul.f32 %v6477, 0.0
      %v6479 = vmul.f32 %v6443, %v6477
      %v6480 = vmul.f32 %v6351, %v6477
      %v6481 = vmul.f32 %v6445, %v6477
      %v6482 = vmul.f32 %v6357, %v6477
      %v6483 = vmul.f32 %v6447, %v6477
      %v6484 = vmul.f32 %v6363, %v6477
      %v6485 = vmul.f32 %v6449, %v6477
      %v6486 = vmul.f32 %v6369, %v6477
      %v6487 = vmul.f32 %v6451, %v6477
      %v6488 = vmul.f32 %v6375, %v6477
      %v6489 = vmul.f32 %v6453, %v6477
      %v6490 = vmul.f32 %v6381, %v6477
      %v6491 = vmul.f32 %v6455, %v6477
      %v6492 = vmul.f32 %v6387, %v6477
      %v6493 = vlaneseq
      %v6494 = vshrl.u32 %v6493, 7
      %v6495 = vsub.s32 1, %v6494
      %v6496 = vrot.slane %v231, %v6495
      %v6497 = vmul.f32 %v6496, 0.0
      %v6498 = vmul.f32 %v6443, %v6496
      %v6499 = vmul.f32 %v6351, %v6496
      %v6500 = vmul.f32 %v6459, %v6496
      %v6501 = vmul.f32 %v6445, %v6496
      %v6502 = vmul.f32 %v6357, %v6496
      %v6503 = vmul.f32 %v6461, %v6496
      %v6504 = vmul.f32 %v6447, %v6496
      %v6505 = vmul.f32 %v6363, %v6496
      %v6506 = vmul.f32 %v6463, %v6496
      %v6507 = vmul.f32 %v6449, %v6496
      %v6508 = vmul.f32 %v6369, %v6496
      %v6509 = vmul.f32 %v6465, %v6496
      %v6510 = vmul.f32 %v6451, %v6496
      %v6511 = vmul.f32 %v6375, %v6496
      %v6512 = vmul.f32 %v6467, %v6496
      %v6513 = vmul.f32 %v6453, %v6496
      %v6514 = vmul.f32 %v6381, %v6496
      %v6515 = vmul.f32 %v6469, %v6496
      %v6516 = vmul.f32 %v6455, %v6496
      %v6517 = vmul.f32 %v6387, %v6496
      %v6518 = vmul.f32 %v6471, %v6496
      %v6541 = vrot.slane %v6497, 1
      %v6542 = vsel %vm595, %v6541, %v6541
      %v6543 = vrot.slane %v6498, 1
      %v6544 = vrot.slane %v6499, 1
      %v6545 = vsel %vm595, %v6543, %v6544
      %v6546 = vrot.slane %v6500, 1
      %v6547 = vsel %vm595, %v6544, %v6546
      %v6548 = vrot.slane %v6501, 1
      %v6549 = vrot.slane %v6502, 1
      %v6550 = vsel %vm595, %v6548, %v6549
      %v6551 = vrot.slane %v6503, 1
      %v6552 = vsel %vm595, %v6549, %v6551
      %v6553 = vrot.slane %v6504, 1
      %v6554 = vrot.slane %v6505, 1
      %v6555 = vsel %vm595, %v6553, %v6554
      %v6556 = vrot.slane %v6506, 1
      %v6557 = vsel %vm595, %v6554, %v6556
      %v6558 = vrot.slane %v6507, 1
      %v6559 = vrot.slane %v6508, 1
      %v6560 = vsel %vm595, %v6558, %v6559
      %v6561 = vrot.slane %v6509, 1
      %v6562 = vsel %vm595, %v6559, %v6561
      %v6563 = vrot.slane %v6510, 1
      %v6564 = vrot.slane %v6511, 1
      %v6565 = vsel %vm595, %v6563, %v6564
      %v6566 = vrot.slane %v6512, 1
      %v6567 = vsel %vm595, %v6564, %v6566
      %v6568 = vrot.slane %v6513, 1
      %v6569 = vrot.slane %v6514, 1
      %v6570 = vsel %vm595, %v6568, %v6569
      %v6571 = vrot.slane %v6515, 1
      %v6572 = vsel %vm595, %v6569, %v6571
      %v6573 = vrot.slane %v6516, 1
      %v6574 = vrot.slane %v6517, 1
      %v6575 = vsel %vm595, %v6573, %v6574
      %v6576 = vrot.slane %v6518, 1
      %v6577 = vsel %vm595, %v6574, %v6576
      %v6593 = vadd.f32 %v6478, %v6542
      %v6594 = vadd.f32 %v6479, %v6545
      %v6595 = vadd.f32 %v6480, %v6547
      %v6596 = vadd.f32 %v6481, %v6550
      %v6597 = vadd.f32 %v6482, %v6552
      %v6598 = vadd.f32 %v6483, %v6555
      %v6599 = vadd.f32 %v6484, %v6557
      %v6600 = vadd.f32 %v6485, %v6560
      %v6601 = vadd.f32 %v6486, %v6562
      %v6602 = vadd.f32 %v6487, %v6565
      %v6603 = vadd.f32 %v6488, %v6567
      %v6604 = vadd.f32 %v6489, %v6570
      %v6605 = vadd.f32 %v6490, %v6572
      %v6606 = vadd.f32 %v6491, %v6575
      %v6607 = vadd.f32 %v6492, %v6577
      %v6608 = vlaneseq
      %v6609 = vshrl.u32 %v6608, 7
      %v6610 = vsub.s32 2, %v6609
      %v6611 = vrot.slane %v231, %v6610
      %v6612 = vmul.f32 %v6611, 0.0
      %v6613 = vmul.f32 %v6443, %v6611
      %v6614 = vmul.f32 %v6351, %v6611
      %v6615 = vmul.f32 %v6459, %v6611
      %v6616 = vmul.f32 %v6445, %v6611
      %v6617 = vmul.f32 %v6357, %v6611
      %v6618 = vmul.f32 %v6461, %v6611
      %v6619 = vmul.f32 %v6447, %v6611
      %v6620 = vmul.f32 %v6363, %v6611
      %v6621 = vmul.f32 %v6463, %v6611
      %v6622 = vmul.f32 %v6449, %v6611
      %v6623 = vmul.f32 %v6369, %v6611
      %v6624 = vmul.f32 %v6465, %v6611
      %v6625 = vmul.f32 %v6451, %v6611
      %v6626 = vmul.f32 %v6375, %v6611
      %v6627 = vmul.f32 %v6467, %v6611
      %v6628 = vmul.f32 %v6453, %v6611
      %v6629 = vmul.f32 %v6381, %v6611
      %v6630 = vmul.f32 %v6469, %v6611
      %v6631 = vmul.f32 %v6455, %v6611
      %v6632 = vmul.f32 %v6387, %v6611
      %v6633 = vmul.f32 %v6471, %v6611
      %v6656 = vrot.slane %v6612, 2
      %v6657 = vsel %vm831, %v6656, %v6656
      %v6658 = vrot.slane %v6613, 2
      %v6659 = vrot.slane %v6614, 2
      %v6660 = vsel %vm831, %v6658, %v6659
      %v6661 = vrot.slane %v6615, 2
      %v6662 = vsel %vm831, %v6659, %v6661
      %v6663 = vrot.slane %v6616, 2
      %v6664 = vrot.slane %v6617, 2
      %v6665 = vsel %vm831, %v6663, %v6664
      %v6666 = vrot.slane %v6618, 2
      %v6667 = vsel %vm831, %v6664, %v6666
      %v6668 = vrot.slane %v6619, 2
      %v6669 = vrot.slane %v6620, 2
      %v6670 = vsel %vm831, %v6668, %v6669
      %v6671 = vrot.slane %v6621, 2
      %v6672 = vsel %vm831, %v6669, %v6671
      %v6673 = vrot.slane %v6622, 2
      %v6674 = vrot.slane %v6623, 2
      %v6675 = vsel %vm831, %v6673, %v6674
      %v6676 = vrot.slane %v6624, 2
      %v6677 = vsel %vm831, %v6674, %v6676
      %v6678 = vrot.slane %v6625, 2
      %v6679 = vrot.slane %v6626, 2
      %v6680 = vsel %vm831, %v6678, %v6679
      %v6681 = vrot.slane %v6627, 2
      %v6682 = vsel %vm831, %v6679, %v6681
      %v6683 = vrot.slane %v6628, 2
      %v6684 = vrot.slane %v6629, 2
      %v6685 = vsel %vm831, %v6683, %v6684
      %v6686 = vrot.slane %v6630, 2
      %v6687 = vsel %vm831, %v6684, %v6686
      %v6688 = vrot.slane %v6631, 2
      %v6689 = vrot.slane %v6632, 2
      %v6690 = vsel %vm831, %v6688, %v6689
      %v6691 = vrot.slane %v6633, 2
      %v6692 = vsel %vm831, %v6689, %v6691
      %v6708 = vadd.f32 %v6593, %v6657
      %v6709 = vadd.f32 %v6594, %v6660
      %v6710 = vadd.f32 %v6595, %v6662
      %v6711 = vadd.f32 %v6596, %v6665
      %v6712 = vadd.f32 %v6597, %v6667
      %v6713 = vadd.f32 %v6598, %v6670
      %v6714 = vadd.f32 %v6599, %v6672
      %v6715 = vadd.f32 %v6600, %v6675
      %v6716 = vadd.f32 %v6601, %v6677
      %v6717 = vadd.f32 %v6602, %v6680
      %v6718 = vadd.f32 %v6603, %v6682
      %v6719 = vadd.f32 %v6604, %v6685
      %v6720 = vadd.f32 %v6605, %v6687
      %v6721 = vadd.f32 %v6606, %v6690
      %v6722 = vadd.f32 %v6607, %v6692
      %v6723 = vlaneseq
      %v6724 = vshrl.u32 %v6723, 7
      %v6725 = vsub.s32 0, %v6724
      %v6726 = vrot.slane %v232, %v6725
      %v6727 = vmul.f32 %v6442, %v6726
      %v6728 = vmul.f32 %v6348, %v6726
      %v6729 = vmul.f32 %v6444, %v6726
      %v6730 = vmul.f32 %v6354, %v6726
      %v6731 = vmul.f32 %v6446, %v6726
      %v6732 = vmul.f32 %v6360, %v6726
      %v6733 = vmul.f32 %v6448, %v6726
      %v6734 = vmul.f32 %v6366, %v6726
      %v6735 = vmul.f32 %v6450, %v6726
      %v6736 = vmul.f32 %v6372, %v6726
      %v6737 = vmul.f32 %v6452, %v6726
      %v6738 = vmul.f32 %v6378, %v6726
      %v6739 = vmul.f32 %v6454, %v6726
      %v6740 = vmul.f32 %v6384, %v6726
      %v6741 = vmul.f32 %v6456, %v6726
      %v6742 = vmul.f32 %v6390, %v6726
      %v6743 = vadd.f32 %v6708, %v6727
      %v6744 = vadd.f32 %v6708, %v6728
      %v6745 = vadd.f32 %v6709, %v6729
      %v6746 = vadd.f32 %v6710, %v6730
      %v6747 = vadd.f32 %v6711, %v6731
      %v6748 = vadd.f32 %v6712, %v6732
      %v6749 = vadd.f32 %v6713, %v6733
      %v6750 = vadd.f32 %v6714, %v6734
      %v6751 = vadd.f32 %v6715, %v6735
      %v6752 = vadd.f32 %v6716, %v6736
      %v6753 = vadd.f32 %v6717, %v6737
      %v6754 = vadd.f32 %v6718, %v6738
      %v6755 = vadd.f32 %v6719, %v6739
      %v6756 = vadd.f32 %v6720, %v6740
      %v6757 = vadd.f32 %v6721, %v6741
      %v6758 = vadd.f32 %v6722, %v6742
      %v6759 = vlaneseq
      %v6760 = vshrl.u32 %v6759, 7
      %v6761 = vsub.s32 1, %v6760
      %v6762 = vrot.slane %v232, %v6761
      %v6763 = vmul.f32 %v6442, %v6762
      %v6764 = vmul.f32 %v6348, %v6762
      %v6765 = vmul.f32 %v6458, %v6762
      %v6766 = vmul.f32 %v6444, %v6762
      %v6767 = vmul.f32 %v6354, %v6762
      %v6768 = vmul.f32 %v6460, %v6762
      %v6769 = vmul.f32 %v6446, %v6762
      %v6770 = vmul.f32 %v6360, %v6762
      %v6771 = vmul.f32 %v6462, %v6762
      %v6772 = vmul.f32 %v6448, %v6762
      %v6773 = vmul.f32 %v6366, %v6762
      %v6774 = vmul.f32 %v6464, %v6762
      %v6775 = vmul.f32 %v6450, %v6762
      %v6776 = vmul.f32 %v6372, %v6762
      %v6777 = vmul.f32 %v6466, %v6762
      %v6778 = vmul.f32 %v6452, %v6762
      %v6779 = vmul.f32 %v6378, %v6762
      %v6780 = vmul.f32 %v6468, %v6762
      %v6781 = vmul.f32 %v6454, %v6762
      %v6782 = vmul.f32 %v6384, %v6762
      %v6783 = vmul.f32 %v6470, %v6762
      %v6784 = vmul.f32 %v6456, %v6762
      %v6785 = vmul.f32 %v6390, %v6762
      %v6786 = vmul.f32 %v6472, %v6762
      %v6811 = vrot.slane %v6763, 1
      %v6812 = vrot.slane %v6764, 1
      %v6813 = vsel %vm595, %v6811, %v6812
      %v6814 = vrot.slane %v6765, 1
      %v6815 = vsel %vm595, %v6812, %v6814
      %v6816 = vrot.slane %v6766, 1
      %v6817 = vrot.slane %v6767, 1
      %v6818 = vsel %vm595, %v6816, %v6817
      %v6819 = vrot.slane %v6768, 1
      %v6820 = vsel %vm595, %v6817, %v6819
      %v6821 = vrot.slane %v6769, 1
      %v6822 = vrot.slane %v6770, 1
      %v6823 = vsel %vm595, %v6821, %v6822
      %v6824 = vrot.slane %v6771, 1
      %v6825 = vsel %vm595, %v6822, %v6824
      %v6826 = vrot.slane %v6772, 1
      %v6827 = vrot.slane %v6773, 1
      %v6828 = vsel %vm595, %v6826, %v6827
      %v6829 = vrot.slane %v6774, 1
      %v6830 = vsel %vm595, %v6827, %v6829
      %v6831 = vrot.slane %v6775, 1
      %v6832 = vrot.slane %v6776, 1
      %v6833 = vsel %vm595, %v6831, %v6832
      %v6834 = vrot.slane %v6777, 1
      %v6835 = vsel %vm595, %v6832, %v6834
      %v6836 = vrot.slane %v6778, 1
      %v6837 = vrot.slane %v6779, 1
      %v6838 = vsel %vm595, %v6836, %v6837
      %v6839 = vrot.slane %v6780, 1
      %v6840 = vsel %vm595, %v6837, %v6839
      %v6841 = vrot.slane %v6781, 1
      %v6842 = vrot.slane %v6782, 1
      %v6843 = vsel %vm595, %v6841, %v6842
      %v6844 = vrot.slane %v6783, 1
      %v6845 = vsel %vm595, %v6842, %v6844
      %v6846 = vrot.slane %v6784, 1
      %v6847 = vrot.slane %v6785, 1
      %v6848 = vsel %vm595, %v6846, %v6847
      %v6849 = vrot.slane %v6786, 1
      %v6850 = vsel %vm595, %v6847, %v6849
      %v6867 = vadd.f32 %v6743, %v6813
      %v6868 = vadd.f32 %v6744, %v6815
      %v6869 = vadd.f32 %v6745, %v6818
      %v6870 = vadd.f32 %v6746, %v6820
      %v6871 = vadd.f32 %v6747, %v6823
      %v6872 = vadd.f32 %v6748, %v6825
      %v6873 = vadd.f32 %v6749, %v6828
      %v6874 = vadd.f32 %v6750, %v6830
      %v6875 = vadd.f32 %v6751, %v6833
      %v6876 = vadd.f32 %v6752, %v6835
      %v6877 = vadd.f32 %v6753, %v6838
      %v6878 = vadd.f32 %v6754, %v6840
      %v6879 = vadd.f32 %v6755, %v6843
      %v6880 = vadd.f32 %v6756, %v6845
      %v6881 = vadd.f32 %v6757, %v6848
      %v6882 = vadd.f32 %v6758, %v6850
      %v6883 = vlaneseq
      %v6884 = vshrl.u32 %v6883, 7
      %v6885 = vsub.s32 2, %v6884
      %v6886 = vrot.slane %v232, %v6885
      %v6887 = vmul.f32 %v6442, %v6886
      %v6888 = vmul.f32 %v6348, %v6886
      %v6889 = vmul.f32 %v6458, %v6886
      %v6890 = vmul.f32 %v6444, %v6886
      %v6891 = vmul.f32 %v6354, %v6886
      %v6892 = vmul.f32 %v6460, %v6886
      %v6893 = vmul.f32 %v6446, %v6886
      %v6894 = vmul.f32 %v6360, %v6886
      %v6895 = vmul.f32 %v6462, %v6886
      %v6896 = vmul.f32 %v6448, %v6886
      %v6897 = vmul.f32 %v6366, %v6886
      %v6898 = vmul.f32 %v6464, %v6886
      %v6899 = vmul.f32 %v6450, %v6886
      %v6900 = vmul.f32 %v6372, %v6886
      %v6901 = vmul.f32 %v6466, %v6886
      %v6902 = vmul.f32 %v6452, %v6886
      %v6903 = vmul.f32 %v6378, %v6886
      %v6904 = vmul.f32 %v6468, %v6886
      %v6905 = vmul.f32 %v6454, %v6886
      %v6906 = vmul.f32 %v6384, %v6886
      %v6907 = vmul.f32 %v6470, %v6886
      %v6908 = vmul.f32 %v6456, %v6886
      %v6909 = vmul.f32 %v6390, %v6886
      %v6910 = vmul.f32 %v6472, %v6886
      %v6935 = vrot.slane %v6887, 2
      %v6936 = vrot.slane %v6888, 2
      %v6937 = vsel %vm831, %v6935, %v6936
      %v6938 = vrot.slane %v6889, 2
      %v6939 = vsel %vm831, %v6936, %v6938
      %v6940 = vrot.slane %v6890, 2
      %v6941 = vrot.slane %v6891, 2
      %v6942 = vsel %vm831, %v6940, %v6941
      %v6943 = vrot.slane %v6892, 2
      %v6944 = vsel %vm831, %v6941, %v6943
      %v6945 = vrot.slane %v6893, 2
      %v6946 = vrot.slane %v6894, 2
      %v6947 = vsel %vm831, %v6945, %v6946
      %v6948 = vrot.slane %v6895, 2
      %v6949 = vsel %vm831, %v6946, %v6948
      %v6950 = vrot.slane %v6896, 2
      %v6951 = vrot.slane %v6897, 2
      %v6952 = vsel %vm831, %v6950, %v6951
      %v6953 = vrot.slane %v6898, 2
      %v6954 = vsel %vm831, %v6951, %v6953
      %v6955 = vrot.slane %v6899, 2
      %v6956 = vrot.slane %v6900, 2
      %v6957 = vsel %vm831, %v6955, %v6956
      %v6958 = vrot.slane %v6901, 2
      %v6959 = vsel %vm831, %v6956, %v6958
      %v6960 = vrot.slane %v6902, 2
      %v6961 = vrot.slane %v6903, 2
      %v6962 = vsel %vm831, %v6960, %v6961
      %v6963 = vrot.slane %v6904, 2
      %v6964 = vsel %vm831, %v6961, %v6963
      %v6965 = vrot.slane %v6905, 2
      %v6966 = vrot.slane %v6906, 2
      %v6967 = vsel %vm831, %v6965, %v6966
      %v6968 = vrot.slane %v6907, 2
      %v6969 = vsel %vm831, %v6966, %v6968
      %v6970 = vrot.slane %v6908, 2
      %v6971 = vrot.slane %v6909, 2
      %v6972 = vsel %vm831, %v6970, %v6971
      %v6973 = vrot.slane %v6910, 2
      %v6974 = vsel %vm831, %v6971, %v6973
      %v6991 = vadd.f32 %v6867, %v6937
      %v6992 = vadd.f32 %v6868, %v6939
      %v6993 = vadd.f32 %v6869, %v6942
      %v6994 = vadd.f32 %v6870, %v6944
      %v6995 = vadd.f32 %v6871, %v6947
      %v6996 = vadd.f32 %v6872, %v6949
      %v6997 = vadd.f32 %v6873, %v6952
      %v6998 = vadd.f32 %v6874, %v6954
      %v6999 = vadd.f32 %v6875, %v6957
      %v7000 = vadd.f32 %v6876, %v6959
      %v7001 = vadd.f32 %v6877, %v6962
      %v7002 = vadd.f32 %v6878, %v6964
      %v7003 = vadd.f32 %v6879, %v6967
      %v7004 = vadd.f32 %v6880, %v6969
      %v7005 = vadd.f32 %v6881, %v6972
      %v7006 = vadd.f32 %v6882, %v6974
      %v7007 = vlaneseq
      %v7008 = vshrl.u32 %v7007, 7
      %v7009 = vsub.s32 0, %v7008
      %v7010 = vrot.slane %v233, %v7009
      %v7011 = vmul.f32 %v6443, %v7010
      %v7012 = vmul.f32 %v6351, %v7010
      %v7013 = vmul.f32 %v6445, %v7010
      %v7014 = vmul.f32 %v6357, %v7010
      %v7015 = vmul.f32 %v6447, %v7010
      %v7016 = vmul.f32 %v6363, %v7010
      %v7017 = vmul.f32 %v6449, %v7010
      %v7018 = vmul.f32 %v6369, %v7010
      %v7019 = vmul.f32 %v6451, %v7010
      %v7020 = vmul.f32 %v6375, %v7010
      %v7021 = vmul.f32 %v6453, %v7010
      %v7022 = vmul.f32 %v6381, %v7010
      %v7023 = vmul.f32 %v6455, %v7010
      %v7024 = vmul.f32 %v6387, %v7010
      %v7025 = vmul.f32 %v6457, %v7010
      %v7026 = vmul.f32 %v6393, %v7010
      %v7027 = vadd.f32 %v6991, %v7011
      %v7028 = vadd.f32 %v6992, %v7012
      %v7029 = vadd.f32 %v6993, %v7013
      %v7030 = vadd.f32 %v6994, %v7014
      %v7031 = vadd.f32 %v6995, %v7015
      %v7032 = vadd.f32 %v6996, %v7016
      %v7033 = vadd.f32 %v6997, %v7017
      %v7034 = vadd.f32 %v6998, %v7018
      %v7035 = vadd.f32 %v6999, %v7019
      %v7036 = vadd.f32 %v7000, %v7020
      %v7037 = vadd.f32 %v7001, %v7021
      %v7038 = vadd.f32 %v7002, %v7022
      %v7039 = vadd.f32 %v7003, %v7023
      %v7040 = vadd.f32 %v7004, %v7024
      %v7041 = vadd.f32 %v7005, %v7025
      %v7042 = vadd.f32 %v7006, %v7026
      %v7043 = vlaneseq
      %v7044 = vshrl.u32 %v7043, 7
      %v7045 = vsub.s32 1, %v7044
      %v7046 = vrot.slane %v233, %v7045
      %v7047 = vmul.f32 %v6443, %v7046
      %v7048 = vmul.f32 %v6351, %v7046
      %v7049 = vmul.f32 %v6459, %v7046
      %v7050 = vmul.f32 %v6445, %v7046
      %v7051 = vmul.f32 %v6357, %v7046
      %v7052 = vmul.f32 %v6461, %v7046
      %v7053 = vmul.f32 %v6447, %v7046
      %v7054 = vmul.f32 %v6363, %v7046
      %v7055 = vmul.f32 %v6463, %v7046
      %v7056 = vmul.f32 %v6449, %v7046
      %v7057 = vmul.f32 %v6369, %v7046
      %v7058 = vmul.f32 %v6465, %v7046
      %v7059 = vmul.f32 %v6451, %v7046
      %v7060 = vmul.f32 %v6375, %v7046
      %v7061 = vmul.f32 %v6467, %v7046
      %v7062 = vmul.f32 %v6453, %v7046
      %v7063 = vmul.f32 %v6381, %v7046
      %v7064 = vmul.f32 %v6469, %v7046
      %v7065 = vmul.f32 %v6455, %v7046
      %v7066 = vmul.f32 %v6387, %v7046
      %v7067 = vmul.f32 %v6471, %v7046
      %v7068 = vmul.f32 %v6457, %v7046
      %v7069 = vmul.f32 %v6393, %v7046
      %v7070 = vmul.f32 %v6473, %v7046
      %v7095 = vrot.slane %v7047, 1
      %v7096 = vrot.slane %v7048, 1
      %v7097 = vsel %vm595, %v7095, %v7096
      %v7098 = vrot.slane %v7049, 1
      %v7099 = vsel %vm595, %v7096, %v7098
      %v7100 = vrot.slane %v7050, 1
      %v7101 = vrot.slane %v7051, 1
      %v7102 = vsel %vm595, %v7100, %v7101
      %v7103 = vrot.slane %v7052, 1
      %v7104 = vsel %vm595, %v7101, %v7103
      %v7105 = vrot.slane %v7053, 1
      %v7106 = vrot.slane %v7054, 1
      %v7107 = vsel %vm595, %v7105, %v7106
      %v7108 = vrot.slane %v7055, 1
      %v7109 = vsel %vm595, %v7106, %v7108
      %v7110 = vrot.slane %v7056, 1
      %v7111 = vrot.slane %v7057, 1
      %v7112 = vsel %vm595, %v7110, %v7111
      %v7113 = vrot.slane %v7058, 1
      %v7114 = vsel %vm595, %v7111, %v7113
      %v7115 = vrot.slane %v7059, 1
      %v7116 = vrot.slane %v7060, 1
      %v7117 = vsel %vm595, %v7115, %v7116
      %v7118 = vrot.slane %v7061, 1
      %v7119 = vsel %vm595, %v7116, %v7118
      %v7120 = vrot.slane %v7062, 1
      %v7121 = vrot.slane %v7063, 1
      %v7122 = vsel %vm595, %v7120, %v7121
      %v7123 = vrot.slane %v7064, 1
      %v7124 = vsel %vm595, %v7121, %v7123
      %v7125 = vrot.slane %v7065, 1
      %v7126 = vrot.slane %v7066, 1
      %v7127 = vsel %vm595, %v7125, %v7126
      %v7128 = vrot.slane %v7067, 1
      %v7129 = vsel %vm595, %v7126, %v7128
      %v7130 = vrot.slane %v7068, 1
      %v7131 = vrot.slane %v7069, 1
      %v7132 = vsel %vm595, %v7130, %v7131
      %v7133 = vrot.slane %v7070, 1
      %v7134 = vsel %vm595, %v7131, %v7133
      %v7151 = vadd.f32 %v7027, %v7097
      %v7152 = vadd.f32 %v7028, %v7099
      %v7153 = vadd.f32 %v7029, %v7102
      %v7154 = vadd.f32 %v7030, %v7104
      %v7155 = vadd.f32 %v7031, %v7107
      %v7156 = vadd.f32 %v7032, %v7109
      %v7157 = vadd.f32 %v7033, %v7112
      %v7158 = vadd.f32 %v7034, %v7114
      %v7159 = vadd.f32 %v7035, %v7117
      %v7160 = vadd.f32 %v7036, %v7119
      %v7161 = vadd.f32 %v7037, %v7122
      %v7162 = vadd.f32 %v7038, %v7124
      %v7163 = vadd.f32 %v7039, %v7127
      %v7164 = vadd.f32 %v7040, %v7129
      %v7165 = vadd.f32 %v7041, %v7132
      %v7166 = vadd.f32 %v7042, %v7134
      %v7167 = vlaneseq
      %v7168 = vshrl.u32 %v7167, 7
      %v7169 = vsub.s32 2, %v7168
      %v7170 = vrot.slane %v233, %v7169
      %v7171 = vmul.f32 %v6443, %v7170
      %v7172 = vmul.f32 %v6351, %v7170
      %v7173 = vmul.f32 %v6459, %v7170
      %v7174 = vmul.f32 %v6445, %v7170
      %v7175 = vmul.f32 %v6357, %v7170
      %v7176 = vmul.f32 %v6461, %v7170
      %v7177 = vmul.f32 %v6447, %v7170
      %v7178 = vmul.f32 %v6363, %v7170
      %v7179 = vmul.f32 %v6463, %v7170
      %v7180 = vmul.f32 %v6449, %v7170
      %v7181 = vmul.f32 %v6369, %v7170
      %v7182 = vmul.f32 %v6465, %v7170
      %v7183 = vmul.f32 %v6451, %v7170
      %v7184 = vmul.f32 %v6375, %v7170
      %v7185 = vmul.f32 %v6467, %v7170
      %v7186 = vmul.f32 %v6453, %v7170
      %v7187 = vmul.f32 %v6381, %v7170
      %v7188 = vmul.f32 %v6469, %v7170
      %v7189 = vmul.f32 %v6455, %v7170
      %v7190 = vmul.f32 %v6387, %v7170
      %v7191 = vmul.f32 %v6471, %v7170
      %v7192 = vmul.f32 %v6457, %v7170
      %v7193 = vmul.f32 %v6393, %v7170
      %v7194 = vmul.f32 %v6473, %v7170
      %v7219 = vrot.slane %v7171, 2
      %v7220 = vrot.slane %v7172, 2
      %v7221 = vsel %vm831, %v7219, %v7220
      %v7222 = vrot.slane %v7173, 2
      %v7223 = vsel %vm831, %v7220, %v7222
      %v7224 = vrot.slane %v7174, 2
      %v7225 = vrot.slane %v7175, 2
      %v7226 = vsel %vm831, %v7224, %v7225
      %v7227 = vrot.slane %v7176, 2
      %v7228 = vsel %vm831, %v7225, %v7227
      %v7229 = vrot.slane %v7177, 2
      %v7230 = vrot.slane %v7178, 2
      %v7231 = vsel %vm831, %v7229, %v7230
      %v7232 = vrot.slane %v7179, 2
      %v7233 = vsel %vm831, %v7230, %v7232
      %v7234 = vrot.slane %v7180, 2
      %v7235 = vrot.slane %v7181, 2
      %v7236 = vsel %vm831, %v7234, %v7235
      %v7237 = vrot.slane %v7182, 2
      %v7238 = vsel %vm831, %v7235, %v7237
      %v7239 = vrot.slane %v7183, 2
      %v7240 = vrot.slane %v7184, 2
      %v7241 = vsel %vm831, %v7239, %v7240
      %v7242 = vrot.slane %v7185, 2
      %v7243 = vsel %vm831, %v7240, %v7242
      %v7244 = vrot.slane %v7186, 2
      %v7245 = vrot.slane %v7187, 2
      %v7246 = vsel %vm831, %v7244, %v7245
      %v7247 = vrot.slane %v7188, 2
      %v7248 = vsel %vm831, %v7245, %v7247
      %v7249 = vrot.slane %v7189, 2
      %v7250 = vrot.slane %v7190, 2
      %v7251 = vsel %vm831, %v7249, %v7250
      %v7252 = vrot.slane %v7191, 2
      %v7253 = vsel %vm831, %v7250, %v7252
      %v7254 = vrot.slane %v7192, 2
      %v7255 = vrot.slane %v7193, 2
      %v7256 = vsel %vm831, %v7254, %v7255
      %v7257 = vrot.slane %v7194, 2
      %v7258 = vsel %vm831, %v7255, %v7257
      %v7275 = vadd.f32 %v7151, %v7221
      %v7276 = vadd.f32 %v7152, %v7223
      %v7277 = vadd.f32 %v7153, %v7226
      %v7278 = vadd.f32 %v7154, %v7228
      %v7279 = vadd.f32 %v7155, %v7231
      %v7280 = vadd.f32 %v7156, %v7233
      %v7281 = vadd.f32 %v7157, %v7236
      %v7282 = vadd.f32 %v7158, %v7238
      %v7283 = vadd.f32 %v7159, %v7241
      %v7284 = vadd.f32 %v7160, %v7243
      %v7285 = vadd.f32 %v7161, %v7246
      %v7286 = vadd.f32 %v7162, %v7248
      %v7287 = vadd.f32 %v7163, %v7251
      %v7288 = vadd.f32 %v7164, %v7253
      %v7289 = vadd.f32 %v7165, %v7256
      %v7290 = vadd.f32 %v7166, %v7258
      %v7299 = vrot.slane %v7275, 1
      %v7300 = vrot.slane %v7277, 1
      %v7301 = vrot.slane %v7279, 1
      %v7302 = vrot.slane %v7281, 1
      %v7303 = vrot.slane %v7283, 1
      %v7304 = vrot.slane %v7285, 1
      %v7305 = vrot.slane %v7287, 1
      %v7306 = vrot.slane %v7289, 1
      %v7315 = vrot.slane %v7275, 2
      %v7316 = vrot.slane %v7277, 2
      %v7317 = vrot.slane %v7279, 2
      %v7318 = vrot.slane %v7281, 2
      %v7319 = vrot.slane %v7283, 2
      %v7320 = vrot.slane %v7285, 2
      %v7321 = vrot.slane %v7287, 2
      %v7322 = vrot.slane %v7289, 2
      %v7331 = vrot.slane %v7275, 3
      %v7332 = vrot.slane %v7277, 3
      %v7333 = vrot.slane %v7279, 3
      %v7334 = vrot.slane %v7281, 3
      %v7335 = vrot.slane %v7283, 3
      %v7336 = vrot.slane %v7285, 3
      %v7337 = vrot.slane %v7287, 3
      %v7338 = vrot.slane %v7289, 3
      %v7355 = vrot.slane %v7276, 4
      %v7356 = vrot.slane %v7278, 4
      %v7357 = vrot.slane %v7280, 4
      %v7358 = vrot.slane %v7282, 4
      %v7359 = vrot.slane %v7284, 4
      %v7360 = vrot.slane %v7286, 4
      %v7361 = vrot.slane %v7288, 4
      %v7362 = vrot.slane %v7290, 4
      %v7371 = vrot.slane %v7276, 5
      %v7372 = vrot.slane %v7278, 5
      %v7373 = vrot.slane %v7280, 5
      %v7374 = vrot.slane %v7282, 5
      %v7375 = vrot.slane %v7284, 5
      %v7376 = vrot.slane %v7286, 5
      %v7377 = vrot.slane %v7288, 5
      %v7378 = vrot.slane %v7290, 5
      %v7387 = vrot.slane %v7276, 6
      %v7388 = vrot.slane %v7278, 6
      %v7389 = vrot.slane %v7280, 6
      %v7390 = vrot.slane %v7282, 6
      %v7391 = vrot.slane %v7284, 6
      %v7392 = vrot.slane %v7286, 6
      %v7393 = vrot.slane %v7288, 6
      %v7394 = vrot.slane %v7290, 6
      %v7403 = vrot.slane %v7276, 7
      %v7404 = vrot.slane %v7278, 7
      %v7405 = vrot.slane %v7280, 7
      %v7406 = vrot.slane %v7282, 7
      %v7407 = vrot.slane %v7284, 7
      %v7408 = vrot.slane %v7286, 7
      %v7409 = vrot.slane %v7288, 7
      %v7410 = vrot.slane %v7290, 7
      %v7419 = vsel %vm335, %v7275, %v7299
      %v7420 = vsel %vm335, %v7277, %v7300
      %v7421 = vsel %vm335, %v7279, %v7301
      %v7422 = vsel %vm335, %v7281, %v7302
      %v7423 = vsel %vm335, %v7283, %v7303
      %v7424 = vsel %vm335, %v7285, %v7304
      %v7425 = vsel %vm335, %v7287, %v7305
      %v7426 = vsel %vm335, %v7289, %v7306
      %vm7427 = vcmask 1041408
      %v7428 = vsel %vm7427, %v7419, %v7315
      %v7429 = vsel %vm7427, %v7420, %v7316
      %v7430 = vsel %vm7427, %v7421, %v7317
      %v7431 = vsel %vm7427, %v7422, %v7318
      %v7432 = vsel %vm7427, %v7423, %v7319
      %v7433 = vsel %vm7427, %v7424, %v7320
      %v7434 = vsel %vm7427, %v7425, %v7321
      %v7435 = vsel %vm7427, %v7426, %v7322
      %vm7436 = vcmask 1042432
      %v7437 = vsel %vm7436, %v7428, %v7331
      %v7438 = vsel %vm7436, %v7429, %v7332
      %v7439 = vsel %vm7436, %v7430, %v7333
      %v7440 = vsel %vm7436, %v7431, %v7334
      %v7441 = vsel %vm7436, %v7432, %v7335
      %v7442 = vsel %vm7436, %v7433, %v7336
      %v7443 = vsel %vm7436, %v7434, %v7337
      %v7444 = vsel %vm7436, %v7435, %v7338
      %vm7445 = vcmask 1043456
      %v7446 = vsel %vm7445, %v7437, %v7355
      %v7447 = vsel %vm7445, %v7438, %v7356
      %v7448 = vsel %vm7445, %v7439, %v7357
      %v7449 = vsel %vm7445, %v7440, %v7358
      %v7450 = vsel %vm7445, %v7441, %v7359
      %v7451 = vsel %vm7445, %v7442, %v7360
      %v7452 = vsel %vm7445, %v7443, %v7361
      %v7453 = vsel %vm7445, %v7444, %v7362
      %vm7454 = vcmask 1044480
      %v7455 = vsel %vm7454, %v7446, %v7371
      %v7456 = vsel %vm7454, %v7447, %v7372
      %v7457 = vsel %vm7454, %v7448, %v7373
      %v7458 = vsel %vm7454, %v7449, %v7374
      %v7459 = vsel %vm7454, %v7450, %v7375
      %v7460 = vsel %vm7454, %v7451, %v7376
      %v7461 = vsel %vm7454, %v7452, %v7377
      %v7462 = vsel %vm7454, %v7453, %v7378
      %v7463 = vsel %vm831, %v7455, %v7387
      %v7464 = vsel %vm831, %v7456, %v7388
      %v7465 = vsel %vm831, %v7457, %v7389
      %v7466 = vsel %vm831, %v7458, %v7390
      %v7467 = vsel %vm831, %v7459, %v7391
      %v7468 = vsel %vm831, %v7460, %v7392
      %v7469 = vsel %vm831, %v7461, %v7393
      %v7470 = vsel %vm831, %v7462, %v7394
      %v7471 = vsel %vm595, %v7463, %v7403
      %v7472 = vsel %vm595, %v7464, %v7404
      %v7473 = vsel %vm595, %v7465, %v7405
      %v7474 = vsel %vm595, %v7466, %v7406
      %v7475 = vsel %vm595, %v7467, %v7407
      %v7476 = vsel %vm595, %v7468, %v7408
      %v7477 = vsel %vm595, %v7469, %v7409
      %v7478 = vsel %vm595, %v7470, %v7410
      %7480 = vset.pattern.permute.xlu0 0
      %7481 = vperm.xlu0 %7480, %v7471
      %v7482 = vpop.permute.xlu0 %7481
      %7485 = vset.pattern.permute.xlu0 0
      %7486 = vperm.xlu0 %7485, %v7472
      %v7487 = vpop.permute.xlu0 %7486
      %7490 = vset.pattern.permute.xlu0 0
      %7491 = vperm.xlu0 %7490, %v7473
      %v7492 = vpop.permute.xlu0 %7491
      %7495 = vset.pattern.permute.xlu0 0
      %7496 = vperm.xlu0 %7495, %v7474
      %v7497 = vpop.permute.xlu0 %7496
      %7500 = vset.pattern.permute.xlu0 0
      %7501 = vperm.xlu0 %7500, %v7475
      %v7502 = vpop.permute.xlu0 %7501
      %7505 = vset.pattern.permute.xlu0 0
      %7506 = vperm.xlu0 %7505, %v7476
      %v7507 = vpop.permute.xlu0 %7506
      %7510 = vset.pattern.permute.xlu0 0
      %7511 = vperm.xlu0 %7510, %v7477
      %v7512 = vpop.permute.xlu0 %7511
      %7515 = vset.pattern.permute.xlu0 0
      %7516 = vperm.xlu0 %7515, %v7478
      %v7517 = vpop.permute.xlu0 %7516
      %v7519 = vlaneseq
      %v7520 = vshrl.u32 %v7519, 7
      %v7521 = vsub.s32 0, %v7520
      %v7522 = vrot.slane %v236, %v7521
      %v7523 = vmul.f32 %v7482, %v7522
      %v7524 = vmul.f32 %v7487, %v7522
      %v7525 = vmul.f32 %v7492, %v7522
      %v7526 = vmul.f32 %v7497, %v7522
      %v7527 = vmul.f32 %v7502, %v7522
      %v7528 = vmul.f32 %v7507, %v7522
      %v7529 = vmul.f32 %v7512, %v7522
      %v7530 = vmul.f32 %v7517, %v7522
      %7531 = vset.pattern.permute.xlu0 1
      %7532 = vperm.xlu0 %7531, %v7471
      %v7533 = vpop.permute.xlu0 %7532
      %7535 = vset.pattern.permute.xlu0 1
      %7536 = vperm.xlu0 %7535, %v7472
      %v7537 = vpop.permute.xlu0 %7536
      %7539 = vset.pattern.permute.xlu0 1
      %7540 = vperm.xlu0 %7539, %v7473
      %v7541 = vpop.permute.xlu0 %7540
      %7543 = vset.pattern.permute.xlu0 1
      %7544 = vperm.xlu0 %7543, %v7474
      %v7545 = vpop.permute.xlu0 %7544
      %7547 = vset.pattern.permute.xlu0 1
      %7548 = vperm.xlu0 %7547, %v7475
      %v7549 = vpop.permute.xlu0 %7548
      %7551 = vset.pattern.permute.xlu0 1
      %7552 = vperm.xlu0 %7551, %v7476
      %v7553 = vpop.permute.xlu0 %7552
      %7555 = vset.pattern.permute.xlu0 1
      %7556 = vperm.xlu0 %7555, %v7477
      %v7557 = vpop.permute.xlu0 %7556
      %7559 = vset.pattern.permute.xlu0 1
      %7560 = vperm.xlu0 %7559, %v7478
      %v7561 = vpop.permute.xlu0 %7560
      %v7563 = vlaneseq
      %v7564 = vshrl.u32 %v7563, 7
      %v7565 = vsub.s32 1, %v7564
      %v7566 = vrot.slane %v236, %v7565
      %v7567 = vmul.f32 %v7533, %v7566
      %v7568 = vmul.f32 %v7537, %v7566
      %v7569 = vmul.f32 %v7541, %v7566
      %v7570 = vmul.f32 %v7545, %v7566
      %v7571 = vmul.f32 %v7549, %v7566
      %v7572 = vmul.f32 %v7553, %v7566
      %v7573 = vmul.f32 %v7557, %v7566
      %v7574 = vmul.f32 %v7561, %v7566
      %v7575 = vadd.f32 %v7523, %v7567
      %v7576 = vadd.f32 %v7524, %v7568
      %v7577 = vadd.f32 %v7525, %v7569
      %v7578 = vadd.f32 %v7526, %v7570
      %v7579 = vadd.f32 %v7527, %v7571
      %v7580 = vadd.f32 %v7528, %v7572
      %v7581 = vadd.f32 %v7529, %v7573
      %v7582 = vadd.f32 %v7530, %v7574
      %7583 = vset.pattern.permute.xlu0 2
      %7584 = vperm.xlu0 %7583, %v7471
      %v7585 = vpop.permute.xlu0 %7584
      %7587 = vset.pattern.permute.xlu0 2
      %7588 = vperm.xlu0 %7587, %v7472
      %v7589 = vpop.permute.xlu0 %7588
      %7591 = vset.pattern.permute.xlu0 2
      %7592 = vperm.xlu0 %7591, %v7473
      %v7593 = vpop.permute.xlu0 %7592
      %7595 = vset.pattern.permute.xlu0 2
      %7596 = vperm.xlu0 %7595, %v7474
      %v7597 = vpop.permute.xlu0 %7596
      %7599 = vset.pattern.permute.xlu0 2
      %7600 = vperm.xlu0 %7599, %v7475
      %v7601 = vpop.permute.xlu0 %7600
      %7603 = vset.pattern.permute.xlu0 2
      %7604 = vperm.xlu0 %7603, %v7476
      %v7605 = vpop.permute.xlu0 %7604
      %7607 = vset.pattern.permute.xlu0 2
      %7608 = vperm.xlu0 %7607, %v7477
      %v7609 = vpop.permute.xlu0 %7608
      %7611 = vset.pattern.permute.xlu0 2
      %7612 = vperm.xlu0 %7611, %v7478
      %v7613 = vpop.permute.xlu0 %7612
      %v7615 = vlaneseq
      %v7616 = vshrl.u32 %v7615, 7
      %v7617 = vsub.s32 2, %v7616
      %v7618 = vrot.slane %v236, %v7617
      %v7619 = vmul.f32 %v7585, %v7618
      %v7620 = vmul.f32 %v7589, %v7618
      %v7621 = vmul.f32 %v7593, %v7618
      %v7622 = vmul.f32 %v7597, %v7618
      %v7623 = vmul.f32 %v7601, %v7618
      %v7624 = vmul.f32 %v7605, %v7618
      %v7625 = vmul.f32 %v7609, %v7618
      %v7626 = vmul.f32 %v7613, %v7618
      %v7627 = vadd.f32 %v7575, %v7619
      %v7628 = vadd.f32 %v7576, %v7620
      %v7629 = vadd.f32 %v7577, %v7621
      %v7630 = vadd.f32 %v7578, %v7622
      %v7631 = vadd.f32 %v7579, %v7623
      %v7632 = vadd.f32 %v7580, %v7624
      %v7633 = vadd.f32 %v7581, %v7625
      %v7634 = vadd.f32 %v7582, %v7626
      %7635 = vset.pattern.permute.xlu0 3
      %7636 = vperm.xlu0 %7635, %v7471
      %v7637 = vpop.permute.xlu0 %7636
      %7639 = vset.pattern.permute.xlu0 3
      %7640 = vperm.xlu0 %7639, %v7472
      %v7641 = vpop.permute.xlu0 %7640
      %7643 = vset.pattern.permute.xlu0 3
      %7644 = vperm.xlu0 %7643, %v7473
      %v7645 = vpop.permute.xlu0 %7644
      %7647 = vset.pattern.permute.xlu0 3
      %7648 = vperm.xlu0 %7647, %v7474
      %v7649 = vpop.permute.xlu0 %7648
      %7651 = vset.pattern.permute.xlu0 3
      %7652 = vperm.xlu0 %7651, %v7475
      %v7653 = vpop.permute.xlu0 %7652
      %7655 = vset.pattern.permute.xlu0 3
      %7656 = vperm.xlu0 %7655, %v7476
      %v7657 = vpop.permute.xlu0 %7656
      %7659 = vset.pattern.permute.xlu0 3
      %7660 = vperm.xlu0 %7659, %v7477
      %v7661 = vpop.permute.xlu0 %7660
      %7663 = vset.pattern.permute.xlu0 3
      %7664 = vperm.xlu0 %7663, %v7478
      %v7665 = vpop.permute.xlu0 %7664
      %v7667 = vlaneseq
      %v7668 = vshrl.u32 %v7667, 7
      %v7669 = vsub.s32 3, %v7668
      %v7670 = vrot.slane %v236, %v7669
      %v7671 = vmul.f32 %v7637, %v7670
      %v7672 = vmul.f32 %v7641, %v7670
      %v7673 = vmul.f32 %v7645, %v7670
      %v7674 = vmul.f32 %v7649, %v7670
      %v7675 = vmul.f32 %v7653, %v7670
      %v7676 = vmul.f32 %v7657, %v7670
      %v7677 = vmul.f32 %v7661, %v7670
      %v7678 = vmul.f32 %v7665, %v7670
      %v7679 = vadd.f32 %v7627, %v7671
      %v7680 = vadd.f32 %v7628, %v7672
      %v7681 = vadd.f32 %v7629, %v7673
      %v7682 = vadd.f32 %v7630, %v7674
      %v7683 = vadd.f32 %v7631, %v7675
      %v7684 = vadd.f32 %v7632, %v7676
      %v7685 = vadd.f32 %v7633, %v7677
      %v7686 = vadd.f32 %v7634, %v7678
      %7687 = vset.pattern.permute.xlu0 4
      %7688 = vperm.xlu0 %7687, %v7471
      %v7689 = vpop.permute.xlu0 %7688
      %7691 = vset.pattern.permute.xlu0 4
      %7692 = vperm.xlu0 %7691, %v7472
      %v7693 = vpop.permute.xlu0 %7692
      %7695 = vset.pattern.permute.xlu0 4
      %7696 = vperm.xlu0 %7695, %v7473
      %v7697 = vpop.permute.xlu0 %7696
      %7699 = vset.pattern.permute.xlu0 4
      %7700 = vperm.xlu0 %7699, %v7474
      %v7701 = vpop.permute.xlu0 %7700
      %7703 = vset.pattern.permute.xlu0 4
      %7704 = vperm.xlu0 %7703, %v7475
      %v7705 = vpop.permute.xlu0 %7704
      %7707 = vset.pattern.permute.xlu0 4
      %7708 = vperm.xlu0 %7707, %v7476
      %v7709 = vpop.permute.xlu0 %7708
      %7711 = vset.pattern.permute.xlu0 4
      %7712 = vperm.xlu0 %7711, %v7477
      %v7713 = vpop.permute.xlu0 %7712
      %7715 = vset.pattern.permute.xlu0 4
      %7716 = vperm.xlu0 %7715, %v7478
      %v7717 = vpop.permute.xlu0 %7716
      %v7719 = vlaneseq
      %v7720 = vshrl.u32 %v7719, 7
      %v7721 = vsub.s32 4, %v7720
      %v7722 = vrot.slane %v236, %v7721
      %v7723 = vmul.f32 %v7689, %v7722
      %v7724 = vmul.f32 %v7693, %v7722
      %v7725 = vmul.f32 %v7697, %v7722
      %v7726 = vmul.f32 %v7701, %v7722
      %v7727 = vmul.f32 %v7705, %v7722
      %v7728 = vmul.f32 %v7709, %v7722
      %v7729 = vmul.f32 %v7713, %v7722
      %v7730 = vmul.f32 %v7717, %v7722
      %v7731 = vadd.f32 %v7679, %v7723
      %v7732 = vadd.f32 %v7680, %v7724
      %v7733 = vadd.f32 %v7681, %v7725
      %v7734 = vadd.f32 %v7682, %v7726
      %v7735 = vadd.f32 %v7683, %v7727
      %v7736 = vadd.f32 %v7684, %v7728
      %v7737 = vadd.f32 %v7685, %v7729
      %v7738 = vadd.f32 %v7686, %v7730
      %7739 = vset.pattern.permute.xlu0 5
      %7740 = vperm.xlu0 %7739, %v7471
      %v7741 = vpop.permute.xlu0 %7740
      %7743 = vset.pattern.permute.xlu0 5
      %7744 = vperm.xlu0 %7743, %v7472
      %v7745 = vpop.permute.xlu0 %7744
      %7747 = vset.pattern.permute.xlu0 5
      %7748 = vperm.xlu0 %7747, %v7473
      %v7749 = vpop.permute.xlu0 %7748
      %7751 = vset.pattern.permute.xlu0 5
      %7752 = vperm.xlu0 %7751, %v7474
      %v7753 = vpop.permute.xlu0 %7752
      %7755 = vset.pattern.permute.xlu0 5
      %7756 = vperm.xlu0 %7755, %v7475
      %v7757 = vpop.permute.xlu0 %7756
      %7759 = vset.pattern.permute.xlu0 5
      %7760 = vperm.xlu0 %7759, %v7476
      %v7761 = vpop.permute.xlu0 %7760
      %7763 = vset.pattern.permute.xlu0 5
      %7764 = vperm.xlu0 %7763, %v7477
      %v7765 = vpop.permute.xlu0 %7764
      %7767 = vset.pattern.permute.xlu0 5
      %7768 = vperm.xlu0 %7767, %v7478
      %v7769 = vpop.permute.xlu0 %7768
      %v7771 = vlaneseq
      %v7772 = vshrl.u32 %v7771, 7
      %v7773 = vsub.s32 5, %v7772
      %v7774 = vrot.slane %v236, %v7773
      %v7775 = vmul.f32 %v7741, %v7774
      %v7776 = vmul.f32 %v7745, %v7774
      %v7777 = vmul.f32 %v7749, %v7774
      %v7778 = vmul.f32 %v7753, %v7774
      %v7779 = vmul.f32 %v7757, %v7774
      %v7780 = vmul.f32 %v7761, %v7774
      %v7781 = vmul.f32 %v7765, %v7774
      %v7782 = vmul.f32 %v7769, %v7774
      %v7783 = vadd.f32 %v7731, %v7775
      %v7784 = vadd.f32 %v7732, %v7776
      %v7785 = vadd.f32 %v7733, %v7777
      %v7786 = vadd.f32 %v7734, %v7778
      %v7787 = vadd.f32 %v7735, %v7779
      %v7788 = vadd.f32 %v7736, %v7780
      %v7789 = vadd.f32 %v7737, %v7781
      %v7790 = vadd.f32 %v7738, %v7782
      %7791 = vset.pattern.permute.xlu0 6
      %7792 = vperm.xlu0 %7791, %v7471
      %v7793 = vpop.permute.xlu0 %7792
      %7795 = vset.pattern.permute.xlu0 6
      %7796 = vperm.xlu0 %7795, %v7472
      %v7797 = vpop.permute.xlu0 %7796
      %7799 = vset.pattern.permute.xlu0 6
      %7800 = vperm.xlu0 %7799, %v7473
      %v7801 = vpop.permute.xlu0 %7800
      %7803 = vset.pattern.permute.xlu0 6
      %7804 = vperm.xlu0 %7803, %v7474
      %v7805 = vpop.permute.xlu0 %7804
      %7807 = vset.pattern.permute.xlu0 6
      %7808 = vperm.xlu0 %7807, %v7475
      %v7809 = vpop.permute.xlu0 %7808
      %7811 = vset.pattern.permute.xlu0 6
      %7812 = vperm.xlu0 %7811, %v7476
      %v7813 = vpop.permute.xlu0 %7812
      %7815 = vset.pattern.permute.xlu0 6
      %7816 = vperm.xlu0 %7815, %v7477
      %v7817 = vpop.permute.xlu0 %7816
      %7819 = vset.pattern.permute.xlu0 6
      %7820 = vperm.xlu0 %7819, %v7478
      %v7821 = vpop.permute.xlu0 %7820
      %v7823 = vlaneseq
      %v7824 = vshrl.u32 %v7823, 7
      %v7825 = vsub.s32 6, %v7824
      %v7826 = vrot.slane %v236, %v7825
      %v7827 = vmul.f32 %v7793, %v7826
      %v7828 = vmul.f32 %v7797, %v7826
      %v7829 = vmul.f32 %v7801, %v7826
      %v7830 = vmul.f32 %v7805, %v7826
      %v7831 = vmul.f32 %v7809, %v7826
      %v7832 = vmul.f32 %v7813, %v7826
      %v7833 = vmul.f32 %v7817, %v7826
      %v7834 = vmul.f32 %v7821, %v7826
      %v7835 = vadd.f32 %v7783, %v7827
      %v7836 = vadd.f32 %v7784, %v7828
      %v7837 = vadd.f32 %v7785, %v7829
      %v7838 = vadd.f32 %v7786, %v7830
      %v7839 = vadd.f32 %v7787, %v7831
      %v7840 = vadd.f32 %v7788, %v7832
      %v7841 = vadd.f32 %v7789, %v7833
      %v7842 = vadd.f32 %v7790, %v7834
      %7843 = vset.pattern.permute.xlu0 7
      %7844 = vperm.xlu0 %7843, %v7471
      %v7845 = vpop.permute.xlu0 %7844
      %7847 = vset.pattern.permute.xlu0 7
      %7848 = vperm.xlu0 %7847, %v7472
      %v7849 = vpop.permute.xlu0 %7848
      %7851 = vset.pattern.permute.xlu0 7
      %7852 = vperm.xlu0 %7851, %v7473
      %v7853 = vpop.permute.xlu0 %7852
      %7855 = vset.pattern.permute.xlu0 7
      %7856 = vperm.xlu0 %7855, %v7474
      %v7857 = vpop.permute.xlu0 %7856
      %7859 = vset.pattern.permute.xlu0 7
      %7860 = vperm.xlu0 %7859, %v7475
      %v7861 = vpop.permute.xlu0 %7860
      %7863 = vset.pattern.permute.xlu0 7
      %7864 = vperm.xlu0 %7863, %v7476
      %v7865 = vpop.permute.xlu0 %7864
      %7867 = vset.pattern.permute.xlu0 7
      %7868 = vperm.xlu0 %7867, %v7477
      %v7869 = vpop.permute.xlu0 %7868
      %7871 = vset.pattern.permute.xlu0 7
      %7872 = vperm.xlu0 %7871, %v7478
      %v7873 = vpop.permute.xlu0 %7872
      %v7875 = vlaneseq
      %v7876 = vshrl.u32 %v7875, 7
      %v7877 = vsub.s32 7, %v7876
      %v7878 = vrot.slane %v236, %v7877
      %v7879 = vmul.f32 %v7845, %v7878
      %v7880 = vmul.f32 %v7849, %v7878
      %v7881 = vmul.f32 %v7853, %v7878
      %v7882 = vmul.f32 %v7857, %v7878
      %v7883 = vmul.f32 %v7861, %v7878
      %v7884 = vmul.f32 %v7865, %v7878
      %v7885 = vmul.f32 %v7869, %v7878
      %v7886 = vmul.f32 %v7873, %v7878
      %v7887 = vadd.f32 %v7835, %v7879
      %v7888 = vadd.f32 %v7836, %v7880
      %v7889 = vadd.f32 %v7837, %v7881
      %v7890 = vadd.f32 %v7838, %v7882
      %v7891 = vadd.f32 %v7839, %v7883
      %v7892 = vadd.f32 %v7840, %v7884
      %v7893 = vadd.f32 %v7841, %v7885
      %v7894 = vadd.f32 %v7842, %v7886
      %v7895 = vlaneseq
      %v7896 = vshrl.u32 %v7895, 7
      %v7897 = vsub.s32 2, %v7896
      %v7898 = vrot.slane %v238, %v7897
      %v7899 = vadd.f32 %v7887, %v7898
      %v7900 = vadd.f32 %v7888, %v7898
      %v7901 = vadd.f32 %v7889, %v7898
      %v7902 = vadd.f32 %v7890, %v7898
      %v7903 = vadd.f32 %v7891, %v7898
      %v7904 = vadd.f32 %v7892, %v7898
      %v7905 = vadd.f32 %v7893, %v7898
      %v7906 = vadd.f32 %v7894, %v7898
      %v7915 = vrot.slane %v239, 1
      %v7916 = vrot.slane %v243, 1
      %v7917 = vrot.slane %v247, 1
      %v7918 = vrot.slane %v251, 1
      %v7919 = vrot.slane %v255, 1
      %v7920 = vrot.slane %v259, 1
      %v7921 = vrot.slane %v263, 1
      %v7922 = vrot.slane %v267, 1
      %v7931 = vrot.slane %v239, 2
      %v7932 = vrot.slane %v243, 2
      %v7933 = vrot.slane %v247, 2
      %v7934 = vrot.slane %v251, 2
      %v7935 = vrot.slane %v255, 2
      %v7936 = vrot.slane %v259, 2
      %v7937 = vrot.slane %v263, 2
      %v7938 = vrot.slane %v267, 2
      %v7947 = vrot.slane %v239, 3
      %v7948 = vrot.slane %v243, 3
      %v7949 = vrot.slane %v247, 3
      %v7950 = vrot.slane %v251, 3
      %v7951 = vrot.slane %v255, 3
      %v7952 = vrot.slane %v259, 3
      %v7953 = vrot.slane %v263, 3
      %v7954 = vrot.slane %v267, 3
      %v7971 = vrot.slane %v240, 4
      %v7972 = vrot.slane %v244, 4
      %v7973 = vrot.slane %v248, 4
      %v7974 = vrot.slane %v252, 4
      %v7975 = vrot.slane %v256, 4
      %v7976 = vrot.slane %v260, 4
      %v7977 = vrot.slane %v264, 4
      %v7978 = vrot.slane %v268, 4
      %v7987 = vrot.slane %v240, 5
      %v7988 = vrot.slane %v244, 5
      %v7989 = vrot.slane %v248, 5
      %v7990 = vrot.slane %v252, 5
      %v7991 = vrot.slane %v256, 5
      %v7992 = vrot.slane %v260, 5
      %v7993 = vrot.slane %v264, 5
      %v7994 = vrot.slane %v268, 5
      %v8003 = vrot.slane %v240, 6
      %v8004 = vrot.slane %v244, 6
      %v8005 = vrot.slane %v248, 6
      %v8006 = vrot.slane %v252, 6
      %v8007 = vrot.slane %v256, 6
      %v8008 = vrot.slane %v260, 6
      %v8009 = vrot.slane %v264, 6
      %v8010 = vrot.slane %v268, 6
      %v8019 = vrot.slane %v240, 7
      %v8020 = vrot.slane %v244, 7
      %v8021 = vrot.slane %v248, 7
      %v8022 = vrot.slane %v252, 7
      %v8023 = vrot.slane %v256, 7
      %v8024 = vrot.slane %v260, 7
      %v8025 = vrot.slane %v264, 7
      %v8026 = vrot.slane %v268, 7
      %v8035 = vsel %vm335, %v239, %v7915
      %v8036 = vsel %vm335, %v243, %v7916
      %v8037 = vsel %vm335, %v247, %v7917
      %v8038 = vsel %vm335, %v251, %v7918
      %v8039 = vsel %vm335, %v255, %v7919
      %v8040 = vsel %vm335, %v259, %v7920
      %v8041 = vsel %vm335, %v263, %v7921
      %v8042 = vsel %vm335, %v267, %v7922
      %v8043 = vsel %vm7427, %v8035, %v7931
      %v8044 = vsel %vm7427, %v8036, %v7932
      %v8045 = vsel %vm7427, %v8037, %v7933
      %v8046 = vsel %vm7427, %v8038, %v7934
      %v8047 = vsel %vm7427, %v8039, %v7935
      %v8048 = vsel %vm7427, %v8040, %v7936
      %v8049 = vsel %vm7427, %v8041, %v7937
      %v8050 = vsel %vm7427, %v8042, %v7938
      %v8051 = vsel %vm7436, %v8043, %v7947
      %v8052 = vsel %vm7436, %v8044, %v7948
      %v8053 = vsel %vm7436, %v8045, %v7949
      %v8054 = vsel %vm7436, %v8046, %v7950
      %v8055 = vsel %vm7436, %v8047, %v7951
      %v8056 = vsel %vm7436, %v8048, %v7952
      %v8057 = vsel %vm7436, %v8049, %v7953
      %v8058 = vsel %vm7436, %v8050, %v7954
      %v8059 = vsel %vm7445, %v8051, %v7971
      %v8060 = vsel %vm7445, %v8052, %v7972
      %v8061 = vsel %vm7445, %v8053, %v7973
      %v8062 = vsel %vm7445, %v8054, %v7974
      %v8063 = vsel %vm7445, %v8055, %v7975
      %v8064 = vsel %vm7445, %v8056, %v7976
      %v8065 = vsel %vm7445, %v8057, %v7977
      %v8066 = vsel %vm7445, %v8058, %v7978
      %v8067 = vsel %vm7454, %v8059, %v7987
      %v8068 = vsel %vm7454, %v8060, %v7988
      %v8069 = vsel %vm7454, %v8061, %v7989
      %v8070 = vsel %vm7454, %v8062, %v7990
      %v8071 = vsel %vm7454, %v8063, %v7991
      %v8072 = vsel %vm7454, %v8064, %v7992
      %v8073 = vsel %vm7454, %v8065, %v7993
      %v8074 = vsel %vm7454, %v8066, %v7994
      %v8075 = vsel %vm831, %v8067, %v8003
      %v8076 = vsel %vm831, %v8068, %v8004
      %v8077 = vsel %vm831, %v8069, %v8005
      %v8078 = vsel %vm831, %v8070, %v8006
      %v8079 = vsel %vm831, %v8071, %v8007
      %v8080 = vsel %vm831, %v8072, %v8008
      %v8081 = vsel %vm831, %v8073, %v8009
      %v8082 = vsel %vm831, %v8074, %v8010
      %v8083 = vsel %vm595, %v8075, %v8019
      %v8084 = vsel %vm595, %v8076, %v8020
      %v8085 = vsel %vm595, %v8077, %v8021
      %v8086 = vsel %vm595, %v8078, %v8022
      %v8087 = vsel %vm595, %v8079, %v8023
      %v8088 = vsel %vm595, %v8080, %v8024
      %v8089 = vsel %vm595, %v8081, %v8025
      %v8090 = vsel %vm595, %v8082, %v8026
      %8092 = vset.pattern.permute.xlu0 0
      %8093 = vperm.xlu0 %8092, %v8083
      %v8094 = vpop.permute.xlu0 %8093
      %8097 = vset.pattern.permute.xlu0 0
      %8098 = vperm.xlu0 %8097, %v8084
      %v8099 = vpop.permute.xlu0 %8098
      %8102 = vset.pattern.permute.xlu0 0
      %8103 = vperm.xlu0 %8102, %v8085
      %v8104 = vpop.permute.xlu0 %8103
      %8107 = vset.pattern.permute.xlu0 0
      %8108 = vperm.xlu0 %8107, %v8086
      %v8109 = vpop.permute.xlu0 %8108
      %8112 = vset.pattern.permute.xlu0 0
      %8113 = vperm.xlu0 %8112, %v8087
      %v8114 = vpop.permute.xlu0 %8113
      %8117 = vset.pattern.permute.xlu0 0
      %8118 = vperm.xlu0 %8117, %v8088
      %v8119 = vpop.permute.xlu0 %8118
      %8122 = vset.pattern.permute.xlu0 0
      %8123 = vperm.xlu0 %8122, %v8089
      %v8124 = vpop.permute.xlu0 %8123
      %8127 = vset.pattern.permute.xlu0 0
      %8128 = vperm.xlu0 %8127, %v8090
      %v8129 = vpop.permute.xlu0 %8128
      %v8131 = vlaneseq
      %v8132 = vshrl.u32 %v8131, 7
      %v8133 = vsub.s32 0, %v8132
      %v8134 = vrot.slane %v237, %v8133
      %v8135 = vmul.f32 %v8094, %v8134
      %v8136 = vmul.f32 %v8099, %v8134
      %v8137 = vmul.f32 %v8104, %v8134
      %v8138 = vmul.f32 %v8109, %v8134
      %v8139 = vmul.f32 %v8114, %v8134
      %v8140 = vmul.f32 %v8119, %v8134
      %v8141 = vmul.f32 %v8124, %v8134
      %v8142 = vmul.f32 %v8129, %v8134
      %8143 = vset.pattern.permute.xlu0 1
      %8144 = vperm.xlu0 %8143, %v8083
      %v8145 = vpop.permute.xlu0 %8144
      %8147 = vset.pattern.permute.xlu0 1
      %8148 = vperm.xlu0 %8147, %v8084
      %v8149 = vpop.permute.xlu0 %8148
      %8151 = vset.pattern.permute.xlu0 1
      %8152 = vperm.xlu0 %8151, %v8085
      %v8153 = vpop.permute.xlu0 %8152
      %8155 = vset.pattern.permute.xlu0 1
      %8156 = vperm.xlu0 %8155, %v8086
      %v8157 = vpop.permute.xlu0 %8156
      %8159 = vset.pattern.permute.xlu0 1
      %8160 = vperm.xlu0 %8159, %v8087
      %v8161 = vpop.permute.xlu0 %8160
      %8163 = vset.pattern.permute.xlu0 1
      %8164 = vperm.xlu0 %8163, %v8088
      %v8165 = vpop.permute.xlu0 %8164
      %8167 = vset.pattern.permute.xlu0 1
      %8168 = vperm.xlu0 %8167, %v8089
      %v8169 = vpop.permute.xlu0 %8168
      %8171 = vset.pattern.permute.xlu0 1
      %8172 = vperm.xlu0 %8171, %v8090
      %v8173 = vpop.permute.xlu0 %8172
      %v8175 = vlaneseq
      %v8176 = vshrl.u32 %v8175, 7
      %v8177 = vsub.s32 1, %v8176
      %v8178 = vrot.slane %v237, %v8177
      %v8179 = vmul.f32 %v8145, %v8178
      %v8180 = vmul.f32 %v8149, %v8178
      %v8181 = vmul.f32 %v8153, %v8178
      %v8182 = vmul.f32 %v8157, %v8178
      %v8183 = vmul.f32 %v8161, %v8178
      %v8184 = vmul.f32 %v8165, %v8178
      %v8185 = vmul.f32 %v8169, %v8178
      %v8186 = vmul.f32 %v8173, %v8178
      %v8187 = vadd.f32 %v8135, %v8179
      %v8188 = vadd.f32 %v8136, %v8180
      %v8189 = vadd.f32 %v8137, %v8181
      %v8190 = vadd.f32 %v8138, %v8182
      %v8191 = vadd.f32 %v8139, %v8183
      %v8192 = vadd.f32 %v8140, %v8184
      %v8193 = vadd.f32 %v8141, %v8185
      %v8194 = vadd.f32 %v8142, %v8186
      %8195 = vset.pattern.permute.xlu0 2
      %8196 = vperm.xlu0 %8195, %v8083
      %v8197 = vpop.permute.xlu0 %8196
      %8199 = vset.pattern.permute.xlu0 2
      %8200 = vperm.xlu0 %8199, %v8084
      %v8201 = vpop.permute.xlu0 %8200
      %8203 = vset.pattern.permute.xlu0 2
      %8204 = vperm.xlu0 %8203, %v8085
      %v8205 = vpop.permute.xlu0 %8204
      %8207 = vset.pattern.permute.xlu0 2
      %8208 = vperm.xlu0 %8207, %v8086
      %v8209 = vpop.permute.xlu0 %8208
      %8211 = vset.pattern.permute.xlu0 2
      %8212 = vperm.xlu0 %8211, %v8087
      %v8213 = vpop.permute.xlu0 %8212
      %8215 = vset.pattern.permute.xlu0 2
      %8216 = vperm.xlu0 %8215, %v8088
      %v8217 = vpop.permute.xlu0 %8216
      %8219 = vset.pattern.permute.xlu0 2
      %8220 = vperm.xlu0 %8219, %v8089
      %v8221 = vpop.permute.xlu0 %8220
      %8223 = vset.pattern.permute.xlu0 2
      %8224 = vperm.xlu0 %8223, %v8090
      %v8225 = vpop.permute.xlu0 %8224
      %v8227 = vlaneseq
      %v8228 = vshrl.u32 %v8227, 7
      %v8229 = vsub.s32 2, %v8228
      %v8230 = vrot.slane %v237, %v8229
      %v8231 = vmul.f32 %v8197, %v8230
      %v8232 = vmul.f32 %v8201, %v8230
      %v8233 = vmul.f32 %v8205, %v8230
      %v8234 = vmul.f32 %v8209, %v8230
      %v8235 = vmul.f32 %v8213, %v8230
      %v8236 = vmul.f32 %v8217, %v8230
      %v8237 = vmul.f32 %v8221, %v8230
      %v8238 = vmul.f32 %v8225, %v8230
      %v8239 = vadd.f32 %v8187, %v8231
      %v8240 = vadd.f32 %v8188, %v8232
      %v8241 = vadd.f32 %v8189, %v8233
      %v8242 = vadd.f32 %v8190, %v8234
      %v8243 = vadd.f32 %v8191, %v8235
      %v8244 = vadd.f32 %v8192, %v8236
      %v8245 = vadd.f32 %v8193, %v8237
      %v8246 = vadd.f32 %v8194, %v8238
      %8247 = vset.pattern.permute.xlu0 3
      %8248 = vperm.xlu0 %8247, %v8083
      %v8249 = vpop.permute.xlu0 %8248
      %8251 = vset.pattern.permute.xlu0 3
      %8252 = vperm.xlu0 %8251, %v8084
      %v8253 = vpop.permute.xlu0 %8252
      %8255 = vset.pattern.permute.xlu0 3
      %8256 = vperm.xlu0 %8255, %v8085
      %v8257 = vpop.permute.xlu0 %8256
      %8259 = vset.pattern.permute.xlu0 3
      %8260 = vperm.xlu0 %8259, %v8086
      %v8261 = vpop.permute.xlu0 %8260
      %8263 = vset.pattern.permute.xlu0 3
      %8264 = vperm.xlu0 %8263, %v8087
      %v8265 = vpop.permute.xlu0 %8264
      %8267 = vset.pattern.permute.xlu0 3
      %8268 = vperm.xlu0 %8267, %v8088
      %v8269 = vpop.permute.xlu0 %8268
      %8271 = vset.pattern.permute.xlu0 3
      %8272 = vperm.xlu0 %8271, %v8089
      %v8273 = vpop.permute.xlu0 %8272
      %8275 = vset.pattern.permute.xlu0 3
      %8276 = vperm.xlu0 %8275, %v8090
      %v8277 = vpop.permute.xlu0 %8276
      %v8279 = vlaneseq
      %v8280 = vshrl.u32 %v8279, 7
      %v8281 = vsub.s32 3, %v8280
      %v8282 = vrot.slane %v237, %v8281
      %v8283 = vmul.f32 %v8249, %v8282
      %v8284 = vmul.f32 %v8253, %v8282
      %v8285 = vmul.f32 %v8257, %v8282
      %v8286 = vmul.f32 %v8261, %v8282
      %v8287 = vmul.f32 %v8265, %v8282
      %v8288 = vmul.f32 %v8269, %v8282
      %v8289 = vmul.f32 %v8273, %v8282
      %v8290 = vmul.f32 %v8277, %v8282
      %v8291 = vadd.f32 %v8239, %v8283
      %v8292 = vadd.f32 %v8240, %v8284
      %v8293 = vadd.f32 %v8241, %v8285
      %v8294 = vadd.f32 %v8242, %v8286
      %v8295 = vadd.f32 %v8243, %v8287
      %v8296 = vadd.f32 %v8244, %v8288
      %v8297 = vadd.f32 %v8245, %v8289
      %v8298 = vadd.f32 %v8246, %v8290
      %v8299 = vlaneseq
      %v8300 = vshrl.u32 %v8299, 7
      %v8301 = vsub.s32 3, %v8300
      %v8302 = vrot.slane %v238, %v8301
      %v8303 = vadd.f32 %v8291, %v8302
      %v8304 = vadd.f32 %v8292, %v8302
      %v8305 = vadd.f32 %v8293, %v8302
      %v8306 = vadd.f32 %v8294, %v8302
      %v8307 = vadd.f32 %v8295, %v8302
      %v8308 = vadd.f32 %v8296, %v8302
      %v8309 = vadd.f32 %v8297, %v8302
      %v8310 = vadd.f32 %v8298, %v8302
      %v8311 = vadd.f32 %v7899, %v8303
      %v8312 = vadd.f32 %v7900, %v8304
      %v8313 = vadd.f32 %v7901, %v8305
      %v8314 = vadd.f32 %v7902, %v8306
      %v8315 = vadd.f32 %v7903, %v8307
      %v8316 = vadd.f32 %v7904, %v8308
      %v8317 = vadd.f32 %v7905, %v8309
      %v8318 = vadd.f32 %v7906, %v8310
      %vm8319 = vcmask 64512
      %8320 = vst.msk [vmem:[%s224] sm:$0xff] %vm8319, %v8311
      %8321 = vst.msk [vmem:[%s224 + $0x8] sm:$0xff] %vm8319, %v8312
      %8322 = vst.msk [vmem:[%s224 + $0x10] sm:$0xff] %vm8319, %v8313
      %8323 = vst.msk [vmem:[%s224 + $0x18] sm:$0xff] %vm8319, %v8314
      %8324 = vst.msk [vmem:[%s224 + $0x20] sm:$0xff] %vm8319, %v8315
      %8325 = vst.msk [vmem:[%s224 + $0x28] sm:$0xff] %vm8319, %v8316
      %8326 = vst.msk [vmem:[%s224 + $0x30] sm:$0xff] %vm8319, %v8317
      %8327 = vst.msk [vmem:[%s224 + $0x38] sm:$0xff] %vm8319, %v8318
      %p8328 = scmp.lt.s32.totalorder %s16, 1
      %s8329 = scalar_select %p8328, %s16, 1
      %s8330 = smul.addr %s8329, 8
      %s8331 = smul.addr %s8330, 8
      %s8332 = scalar_lea.vmem %s5, %s8331
      // Predicated region
      $region41: #{block_forward.1} parent=39 // pred_check
        %p8333 = pneg %p144
      $region42: #{block_forward.1} parent=39 // pred_check_branch
        %8335 = sbr.rel (%p8333) target = $region44
      $region43: #{block_forward.1} parent=39 // pred_region
        _
      $region44: #{block_forward.1} parent=39 // pred_fallthru
        _
    $region40: #{block_forward.1} parent=5 // pred_fallthru
      _
    %p8336 = scmp.le.s32.totalorder 2, %s11
    // Predicated region
    $region45: #{block_forward.1} parent=5 // pred_check
      %p8337 = pneg %p8336
    $region46: #{block_forward.1} parent=5 // pred_check_branch
      %8339 = sbr.rel (%p8337) target = $region48
    $region47: #{block_forward.1} parent=5 // pred_region
      %s8340 = ssub.s32 %s11, 2
      // Predicated region
      $region49: #{block_forward.1} parent=47 // pred_check
        %p8341 = pneg %p150
      $region50: #{block_forward.1} parent=47 // pred_check_branch
        %8343 = sbr.rel (%p8341) target = $region52
      $region51: #{block_forward.1} parent=47 // pred_region
        %p8344 = scmp.lt.s32.totalorder %s17, 1
        %s8345 = scalar_select %p8344, %s17, 1
        %s8346 = smul.addr %s8345, 8
        %s8347 = smul.addr %s8346, 8
        %s8348 = scalar_lea.vmem %s5, %s8347
      $region52: #{block_forward.1} parent=47 // pred_fallthru
        _
    $region48: #{block_forward.1} parent=5 // pred_fallthru
      _
  $region6: #{block_forward.1} parent=0 // loop_footer
    %s15 = sadd.s32 1, %s11
  $region7: #{block_forward.1} parent=0 // loop_footer_branch
    %10 = sbr.rel target = $region3
  $region8: #{block_forward.1} parent=0 // loop_exit
    _

</llo_original>
